<compile_context>
chip_gen: v7x
topology: tpu7x:2x2x1
jax: 0.10.0
libtpu: 0.0.40
codegen_flags: <defaults>
</compile_context>

<pallas_src>
import functools
import math

import jax
import jax.numpy as jnp
from jax.experimental import pallas as pl
from jax.experimental.pallas import tpu as pltpu

BN_EPS = 1e-5
NUM_CLASSES = 1000


# ----------------------------------------------------------------------------
# The single fused Pallas kernel (one program = one image)
# ----------------------------------------------------------------------------
def _fused_net_kernel(x_ref, *refs, H, W):
    """Entire SpMobileNetV2 forward for one image.

    Activation layout: (channels, H*W) with the flattened stem-output grid
    (H = W = 32, M = 1024) on the lane axis.  Stride-2 stages keep this
    resolution; later layers use dilated tap offsets and the final avgpool
    masks the valid coarse positions ("embedded grid"), so no in-kernel
    gather / compaction is needed.
    """
    (w_stem, b_stem,
     w1_dw, b1_dw, w1_pb, b1_pb,
     w2_pt, b2_pt, w2_dw, b2_dw, w2_pb, b2_pb,
     w3_pt, b3_pt, w3_dw, b3_dw, w3_pb, b3_pb, w3_res,
     w_last, b_last, w_fc, b_fc,
     out_ref) = refs

    M = H * W
    w_bits = (W - 1).bit_length()
    pos = jax.lax.broadcasted_iota(jnp.int32, (1, M), 1)
    hh = pos >> w_bits            # row index on the fine (stem-output) grid
    ww = pos & (W - 1)            # col index on the fine grid

    def swish(y):
        # y * sigmoid(y); exp and the approximate reciprocal both run on the EUP.
        return y * pl.reciprocal(1.0 + jnp.exp(-y), approx=True)

    mask_cache = {}

    def tap_mask(oh, ow):
        # {0,1} f32 mask implementing zero padding for a tap shifted by (oh, ow).
        key = (oh, ow)
        if key not in mask_cache:
            conds = []
            if oh > 0:
                conds.append(hh < H - oh)
            elif oh < 0:
                conds.append(hh >= -oh)
            if ow > 0:
                conds.append(ww < W - ow)
            elif ow < 0:
                conds.append(ww >= -ow)
            if conds:
                m = conds[0]
                for c in conds[1:]:
                    m = jnp.logical_and(m, c)
                mask_cache[key] = m.astype(jnp.float32)
            else:
                mask_cache[key] = None
        return mask_cache[key]

    def shifted(x, s):
        # tap[p] = x[p + s] on the flattened grid (wrap-around killed by mask).
        return x if s == 0 else pltpu.roll(x, (-s) % M, axis=1)

    def pw(x, w_ref, b_ref=None, act=False):
        # 1x1 conv as (Cout, Cin) @ (Cin, M) MXU matmul; BN scale pre-folded.
        y = jnp.dot(w_ref[...], x.astype(jnp.bfloat16),
                    preferred_element_type=jnp.float32)
        if b_ref is not None:
            y = y + b_ref[...]
        return swish(y) if act else y

    def dw3x3(x, w_ref, b_ref, dil):
        # Depthwise 3x3 (pad=1) at dilation `dil` on the embedded grid + BN + Swish.
        acc = jnp.zeros_like(x)
        k = 0
        for dh in (-1, 0, 1):
            for dw_ in (-1, 0, 1):
                oh, ow = dh * dil, dw_ * dil
                tap = shifted(x, oh * W + ow)
                m = tap_mask(oh, ow)
                if m is not None:
                    tap = tap * m
                acc = acc + tap * w_ref[k]      # w_ref[k]: (C, 1) per-channel tap
                k += 1
        return swish(acc + b_ref[...])

    # stem ConvBlock(3 -> 8, k=3, s=2, p=1): patches prepared outside -> one matmul
    a = swish(jnp.dot(w_stem[...], x_ref[0],
                      preferred_element_type=jnp.float32) + b_stem[...])    # (8, M)

    # block1 (no_expand): dw3x3 s1 + BN + Swish ; 1x1 + BN
    a = dw3x3(a, w1_dw, b1_dw, dil=1)
    a = pw(a, w1_pb, b1_pb)                                                 # (16, M)

    # block2: 1x1 + BN + Swish ; dw3x3 s2 + BN + Swish ; 1x1 + BN
    a = pw(a, w2_pt, b2_pt, act=True)                                       # (24, M)
    a = dw3x3(a, w2_dw, b2_dw, dil=1)        # stride 2 -> valid grid dilation 2
    a = pw(a, w2_pb, b2_pb)                                                 # (16, M)

    # block3 (identity): expand / dw / project, 1x1 residual fused in
    inp = a
    h = pw(a, w3_pt, b3_pt, act=True)                                       # (32, M)
    h = dw3x3(h, w3_dw, b3_dw, dil=2)
    h = pw(h, w3_pb, b3_pb)                                                 # (16, M)
    a = h + pw(inp, w3_res)                  # residual conv: no BN, no bias

    # last ConvBlock(16 -> 32, k=1, s=2): valid grid dilation 4
    a = pw(a, w_last, b_last, act=True)                                     # (32, M)

    # AvgPool2d(7): top-left 7x7 window of the coarse 8x8 (dilation-4) grid
    pool = ((hh & 3) == 0) & ((ww & 3) == 0) & (hh < 28) & (ww < 28)
    pooled = jnp.sum(a * pool.astype(jnp.float32), axis=1, keepdims=True)
    pooled = pooled * (1.0 / 49.0)                                          # (32, 1)

    # classifier Linear(32 -> 1000)
    logits = jnp.dot(w_fc[...], pooled.astype(jnp.bfloat16),
                     preferred_element_type=jnp.float32) + b_fc[...]        # (1000, 1)
    out_ref[0] = logits.astype(out_ref.dtype)


# ----------------------------------------------------------------------------
# Host-side wrappers
# ----------------------------------------------------------------------------
def _stem_patches(x_nchw):
    """3x3 / stride-2 / pad-1 stem patches: (N,3,H,W) -> (N, 32, (H//2)*(W//2)).

    The only data rearrangement done outside the fused Pallas kernel: a cheap
    gather over the 3-channel input (27 rows, zero-padded to 32 so the
    in-kernel stem matmul is tile-aligned), cast to bf16 to halve its DMA.
    """
    N, C, H, W = x_nchw.shape
    Ho, Wo = H // 2, W // 2
    xp = jnp.pad(x_nchw, ((0, 0), (0, 0), (1, 1), (1, 1)))
    taps = [xp[:, :, kh:kh + 2 * Ho - 1:2, kw:kw + 2 * Wo - 1:2]
            for kh in range(3) for kw in range(3)]
    cols = jnp.stack(taps, axis=1).reshape(N, 9 * C, Ho * Wo)   # rows: (kh,kw,cin)
    cols = jnp.pad(cols, ((0, 0), (0, 32 - 9 * C), (0, 0)))
    return cols.astype(jnp.bfloat16)


def forward(kparams, x_nchw):
    """SpMobileNetV2.forward: (N, 3, 64, 64) NCHW input -> (N, 1000) logits."""
    N, Cin, Hi, Wi = x_nchw.shape
    assert Cin == 3 and Hi == Wi and Hi % 32 == 0
    Ho, Wo = Hi // 2, Wi // 2                        # stem-output grid (32 x 32)
    assert (Wo & (Wo - 1)) == 0 and Wo // 4 >= 7     # pow-2 lanes; >=7x7 final map
    M = Ho * Wo

    x_cols = _stem_patches(x_nchw)                   # (N, 32, M) bf16

    in_specs = [pl.BlockSpec((1, 32, M), lambda b: (b, 0, 0))]
    for arr in kparams:                              # whole (tiny) weight per step
        in_specs.append(pl.BlockSpec(arr.shape, lambda b, z=(0,) * arr.ndim: z))

    out = pl.pallas_call(
        functools.partial(_fused_net_kernel, H=Ho, W=Wo),
        out_shape=jax.ShapeDtypeStruct((N, NUM_CLASSES, 1), jnp.float32),
        grid_spec=pltpu.PrefetchScalarGridSpec(
            num_scalar_prefetch=0,
            grid=(N,),                               # one program per image
            in_specs=in_specs,
            out_specs=pl.BlockSpec((1, NUM_CLASSES, 1), lambda b: (b, 0, 0)),
        ),
        compiler_params=pltpu.CompilerParams(
            dimension_semantics=("parallel",),       # megacore: image per TC on v7x
        ),
    )(x_cols, *kparams)
    return out.reshape(N, NUM_CLASSES)


# ----------------------------------------------------------------------------
# Parameters (deterministic, mimicking SpMobileNetV2._initialize_weights)
# ----------------------------------------------------------------------------
def init_params(key):
    ks = jax.random.split(key, 12)

    def conv(k, cout, cin, ksz):                 # Conv2d: N(0, sqrt(2/(k*k*cout)))
        std = math.sqrt(2.0 / (ksz * ksz * cout))
        return std * jax.random.normal(k, (cout, cin, ksz, ksz), jnp.float32)

    def dw(k, c):                                # depthwise Conv2d(c, c, 3, groups=c)
        std = math.sqrt(2.0 / (9 * c))
        return std * jax.random.normal(k, (c, 3, 3), jnp.float32)

    def pwc(k, cout, cin):                       # 1x1 Conv2d
        std = math.sqrt(2.0 / cout)
        return std * jax.random.normal(k, (cout, cin), jnp.float32)

    return {
        "stem_w":  conv(ks[0], 8, 3, 3),         # ConvBlock(3 -> 8, k=3, s=2, p=1)
        "b1_dw_w": dw(ks[1], 8),                 # block1: no_expand, 8 -> dw 8 -> 16
        "b1_pb_w": pwc(ks[2], 16, 8),
        "b2_pt_w": pwc(ks[3], 24, 16),           # block2: 16 -> 24 -> dw s2 -> 16
        "b2_dw_w": dw(ks[4], 24),
        "b2_pb_w": pwc(ks[5], 16, 24),
        "b3_res_w": pwc(ks[6], 16, 16),          # block3 identity residual 1x1
        "b3_pt_w": pwc(ks[7], 32, 16),           # block3: 16 -> 32 -> dw s1 -> 16
        "b3_dw_w": dw(ks[8], 32),
        "b3_pb_w": pwc(ks[9], 16, 32),
        "last_w":  pwc(ks[10], 32, 16),          # ConvBlock(16 -> 32, k=1, s=2)
        "fc_w":    0.01 * jax.random.normal(ks[11], (NUM_CLASSES, 32), jnp.float32),
        "fc_b":    jnp.zeros((NUM_CLASSES,), jnp.float32),
    }


def prepare_kernel_params(p):
    """Fold inference-form BatchNorm (gamma=1, beta=0, mean=0, var=1, eps=1e-5)
    into the conv weights and reformat everything to the kernel's layouts."""
    scale = 1.0 / math.sqrt(1.0 + BN_EPS)        # per-channel BN scale (constant)

    def zb(c):                                    # folded BN bias: beta - mean*scale = 0
        return jnp.zeros((c, 1), jnp.float32)

    def pw_w(w):                                  # 1x1 conv (Cout, Cin), scale folded
        return (w * scale).astype(jnp.bfloat16)

    def dw_w(w):                                  # depthwise (C,3,3) -> (9, C, 1)
        c = w.shape[0]
        return jnp.transpose(w * scale, (1, 2, 0)).reshape(9, c, 1)

    # stem (8,3,3,3) -> (8, 27) rows ordered (kh, kw, cin), zero-padded to (8, 32)
    ws = jnp.transpose(p["stem_w"] * scale, (0, 2, 3, 1)).reshape(8, 27)
    w_stem = jnp.pad(ws, ((0, 0), (0, 5))).astype(jnp.bfloat16)

    return (
        w_stem, zb(8),
        dw_w(p["b1_dw_w"]), zb(8), pw_w(p["b1_pb_w"]), zb(16),
        pw_w(p["b2_pt_w"]), zb(24), dw_w(p["b2_dw_w"]), zb(24),
        pw_w(p["b2_pb_w"]), zb(16),
        pw_w(p["b3_pt_w"]), zb(32), dw_w(p["b3_dw_w"]), zb(32),
        pw_w(p["b3_pb_w"]), zb(16),
        p["b3_res_w"].astype(jnp.bfloat16),        # residual conv: no BN, no bias
        pw_w(p["last_w"]), zb(32),
        p["fc_w"].astype(jnp.bfloat16),
        p["fc_b"].reshape(NUM_CLASSES, 1),
    )


if __name__ == "__main__":
    key = jax.random.PRNGKey(0)
    kx, kp = jax.random.split(key)
    # Small MobileNetV2-style input: batch=2, 3 channels, 64x64 (divisible by 32).
    x = jax.random.normal(kx, (2, 3, 64, 64), jnp.float32)

    kparams = prepare_kernel_params(init_params(kp))
    out = jax.jit(forward)(kparams, x)
    out = jax.block_until_ready(out)

    assert out.shape == (2, NUM_CLASSES), out.shape
    assert bool(jnp.all(jnp.isfinite(out)))
    print("KERNEL_OK")
</pallas_src>

<mosaic_0001>
module attributes {stable_mosaic.version = 11 : i64} {
  func.func @_fused_net_kernel(%arg0: i32, %arg1: memref<1x32x1024xbf16, #tpu.memory_space<vmem>>, %arg2: memref<8x32xbf16, #tpu.memory_space<vmem>>, %arg3: memref<8x1xf32, #tpu.memory_space<vmem>>, %arg4: memref<9x8x1xf32, #tpu.memory_space<vmem>>, %arg5: memref<8x1xf32, #tpu.memory_space<vmem>>, %arg6: memref<16x8xbf16, #tpu.memory_space<vmem>>, %arg7: memref<16x1xf32, #tpu.memory_space<vmem>>, %arg8: memref<24x16xbf16, #tpu.memory_space<vmem>>, %arg9: memref<24x1xf32, #tpu.memory_space<vmem>>, %arg10: memref<9x24x1xf32, #tpu.memory_space<vmem>>, %arg11: memref<24x1xf32, #tpu.memory_space<vmem>>, %arg12: memref<16x24xbf16, #tpu.memory_space<vmem>>, %arg13: memref<16x1xf32, #tpu.memory_space<vmem>>, %arg14: memref<32x16xbf16, #tpu.memory_space<vmem>>, %arg15: memref<32x1xf32, #tpu.memory_space<vmem>>, %arg16: memref<9x32x1xf32, #tpu.memory_space<vmem>>, %arg17: memref<32x1xf32, #tpu.memory_space<vmem>>, %arg18: memref<16x32xbf16, #tpu.memory_space<vmem>>, %arg19: memref<16x1xf32, #tpu.memory_space<vmem>>, %arg20: memref<16x16xbf16, #tpu.memory_space<vmem>>, %arg21: memref<32x16xbf16, #tpu.memory_space<vmem>>, %arg22: memref<32x1xf32, #tpu.memory_space<vmem>>, %arg23: memref<1000x32xbf16, #tpu.memory_space<vmem>>, %arg24: memref<1000x1xf32, #tpu.memory_space<vmem>>, %arg25: memref<1x1000x1xf32, #tpu.memory_space<vmem>>) attributes {dimension_semantics = [#tpu.dimension_semantics<parallel>], iteration_bounds = array<i64: 2>, scalar_prefetch = 0 : i64, scratch_operands = 0 : i64, tpu.core_type = #tpu.core_type<tc>, window_params = [{transform_indices = @transform_0, window_bounds = array<i64: 1, 32, 1024>}, {pipeline_mode = #tpu.pipeline_mode<synchronous>, transform_indices = @transform_1, window_bounds = array<i64: 8, 32>}, {pipeline_mode = #tpu.pipeline_mode<synchronous>, transform_indices = @transform_2, window_bounds = array<i64: 8, 1>}, {pipeline_mode = #tpu.pipeline_mode<synchronous>, transform_indices = @transform_3, window_bounds = array<i64: 9, 8, 1>}, {pipeline_mode = #tpu.pipeline_mode<synchronous>, transform_indices = @transform_4, window_bounds = array<i64: 8, 1>}, {pipeline_mode = #tpu.pipeline_mode<synchronous>, transform_indices = @transform_5, window_bounds = array<i64: 16, 8>}, {pipeline_mode = #tpu.pipeline_mode<synchronous>, transform_indices = @transform_6, window_bounds = array<i64: 16, 1>}, {pipeline_mode = #tpu.pipeline_mode<synchronous>, transform_indices = @transform_7, window_bounds = array<i64: 24, 16>}, {pipeline_mode = #tpu.pipeline_mode<synchronous>, transform_indices = @transform_8, window_bounds = array<i64: 24, 1>}, {pipeline_mode = #tpu.pipeline_mode<synchronous>, transform_indices = @transform_9, window_bounds = array<i64: 9, 24, 1>}, {pipeline_mode = #tpu.pipeline_mode<synchronous>, transform_indices = @transform_10, window_bounds = array<i64: 24, 1>}, {pipeline_mode = #tpu.pipeline_mode<synchronous>, transform_indices = @transform_11, window_bounds = array<i64: 16, 24>}, {pipeline_mode = #tpu.pipeline_mode<synchronous>, transform_indices = @transform_12, window_bounds = array<i64: 16, 1>}, {pipeline_mode = #tpu.pipeline_mode<synchronous>, transform_indices = @transform_13, window_bounds = array<i64: 32, 16>}, {pipeline_mode = #tpu.pipeline_mode<synchronous>, transform_indices = @transform_14, window_bounds = array<i64: 32, 1>}, {pipeline_mode = #tpu.pipeline_mode<synchronous>, transform_indices = @transform_15, window_bounds = array<i64: 9, 32, 1>}, {pipeline_mode = #tpu.pipeline_mode<synchronous>, transform_indices = @transform_16, window_bounds = array<i64: 32, 1>}, {pipeline_mode = #tpu.pipeline_mode<synchronous>, transform_indices = @transform_17, window_bounds = array<i64: 16, 32>}, {pipeline_mode = #tpu.pipeline_mode<synchronous>, transform_indices = @transform_18, window_bounds = array<i64: 16, 1>}, {pipeline_mode = #tpu.pipeline_mode<synchronous>, transform_indices = @transform_19, window_bounds = array<i64: 16, 16>}, {pipeline_mode = #tpu.pipeline_mode<synchronous>, transform_indices = @transform_20, window_bounds = array<i64: 32, 16>}, {pipeline_mode = #tpu.pipeline_mode<synchronous>, transform_indices = @transform_21, window_bounds = array<i64: 32, 1>}, {pipeline_mode = #tpu.pipeline_mode<synchronous>, transform_indices = @transform_22, window_bounds = array<i64: 1000, 32>}, {pipeline_mode = #tpu.pipeline_mode<synchronous>, transform_indices = @transform_23, window_bounds = array<i64: 1000, 1>}, {transform_indices = @transform_24, window_bounds = array<i64: 1, 1000, 1>}]} {
    %0 = tpu.iota {dimensions = array<i32: 1>} : vector<1x1024xi32>
    %c5_i32 = arith.constant 5 : i32
    %1 = vector.broadcast %c5_i32 : i32 to vector<1x1024xi32>
    %2 = arith.shrsi %0, %1 : vector<1x1024xi32>
    %c31_i32 = arith.constant 31 : i32
    %3 = vector.broadcast %c31_i32 : i32 to vector<1x1024xi32>
    %4 = arith.andi %0, %3 : vector<1x1024xi32>
    %c0 = arith.constant 0 : index
    %c0_0 = arith.constant 0 : index
    %5 = vector.load %arg2[%c0, %c0_0] : memref<8x32xbf16, #tpu.memory_space<vmem>>, vector<8x32xbf16>
    %c0_1 = arith.constant 0 : index
    %c0_2 = arith.constant 0 : index
    %c0_3 = arith.constant 0 : index
    %6 = vector.load %arg1[%c0_1, %c0_2, %c0_3] : memref<1x32x1024xbf16, #tpu.memory_space<vmem>>, vector<1x32x1024xbf16>
    %7 = vector.shape_cast %6 : vector<1x32x1024xbf16> to vector<32x1024xbf16>
    %cst = arith.constant dense<0.000000e+00> : vector<8x1024xf32>
    %8 = tpu.matmul %5, %7, %cst {dimension_numbers = #tpu.dot_dimension_numbers<[1], [0], [0], [1], [0, 0, 1, 1], [], []>} : vector<8x32xbf16>, vector<32x1024xbf16>, vector<8x1024xf32> -> vector<8x1024xf32>
    %c0_4 = arith.constant 0 : index
    %c0_5 = arith.constant 0 : index
    %9 = vector.load %arg3[%c0_4, %c0_5] : memref<8x1xf32, #tpu.memory_space<vmem>>, vector<8x1xf32>
    %10 = vector.broadcast %9 : vector<8x1xf32> to vector<8x1024xf32>
    %11 = arith.addf %8, %10 : vector<8x1024xf32>
    %cst_6 = arith.constant 0.000000e+00 : f32
    %12 = vector.broadcast %cst_6 : f32 to vector<8x1024xf32>
    %13 = arith.subf %12, %11 : vector<8x1024xf32>
    %14 = math.exp %13 : vector<8x1024xf32>
    %cst_7 = arith.constant 1.000000e+00 : f32
    %15 = vector.broadcast %cst_7 : f32 to vector<8x1024xf32>
    %16 = arith.addf %15, %14 : vector<8x1024xf32>
    %17 = tpu.reciprocal %16 {approx = true} : vector<8x1024xf32> -> vector<8x1024xf32>
    %18 = arith.mulf %11, %17 : vector<8x1024xf32>
    %cst_8 = arith.constant 0.000000e+00 : f32
    %19 = vector.broadcast %cst_8 : f32 to vector<8x1024xf32>
    %c33_i32 = arith.constant 33 : i32
    %20 = tpu.dynamic_rotate %18 by %c33_i32 dim 1 : vector<8x1024xf32>, i32 -> vector<8x1024xf32>
    %c1_i32 = arith.constant 1 : i32
    %21 = vector.broadcast %c1_i32 : i32 to vector<1x1024xi32>
    %22 = arith.cmpi sge, %2, %21 : vector<1x1024xi32>
    %c1_i32_9 = arith.constant 1 : i32
    %23 = vector.broadcast %c1_i32_9 : i32 to vector<1x1024xi32>
    %24 = arith.cmpi sge, %4, %23 : vector<1x1024xi32>
    %25 = arith.andi %22, %24 : vector<1x1024xi1>
    %26 = arith.extui %25 : vector<1x1024xi1> to vector<1x1024xi32>
    %27 = arith.sitofp %26 : vector<1x1024xi32> to vector<1x1024xf32>
    %28 = vector.broadcast %27 : vector<1x1024xf32> to vector<8x1024xf32>
    %29 = arith.mulf %20, %28 : vector<8x1024xf32>
    %c0_10 = arith.constant 0 : index
    %c0_11 = arith.constant 0 : index
    %c0_12 = arith.constant 0 : index
    %30 = vector.load %arg4[%c0_10, %c0_11, %c0_12] : memref<9x8x1xf32, #tpu.memory_space<vmem>>, vector<1x8x1xf32>
    %31 = vector.shape_cast %30 : vector<1x8x1xf32> to vector<8x1xf32>
    %32 = vector.broadcast %31 : vector<8x1xf32> to vector<8x1024xf32>
    %33 = arith.mulf %29, %32 : vector<8x1024xf32>
    %34 = arith.addf %19, %33 : vector<8x1024xf32>
    %c32_i32 = arith.constant 32 : i32
    %35 = tpu.dynamic_rotate %18 by %c32_i32 dim 1 : vector<8x1024xf32>, i32 -> vector<8x1024xf32>
    %c1_i32_13 = arith.constant 1 : i32
    %36 = vector.broadcast %c1_i32_13 : i32 to vector<1x1024xi32>
    %37 = arith.cmpi sge, %2, %36 : vector<1x1024xi32>
    %38 = arith.extui %37 : vector<1x1024xi1> to vector<1x1024xi32>
    %39 = arith.sitofp %38 : vector<1x1024xi32> to vector<1x1024xf32>
    %40 = vector.broadcast %39 : vector<1x1024xf32> to vector<8x1024xf32>
    %41 = arith.mulf %35, %40 : vector<8x1024xf32>
    %c1 = arith.constant 1 : index
    %c0_14 = arith.constant 0 : index
    %c0_15 = arith.constant 0 : index
    %42 = vector.load %arg4[%c1, %c0_14, %c0_15] : memref<9x8x1xf32, #tpu.memory_space<vmem>>, vector<1x8x1xf32>
    %43 = vector.shape_cast %42 : vector<1x8x1xf32> to vector<8x1xf32>
    %44 = vector.broadcast %43 : vector<8x1xf32> to vector<8x1024xf32>
    %45 = arith.mulf %41, %44 : vector<8x1024xf32>
    %46 = arith.addf %34, %45 : vector<8x1024xf32>
    %c31_i32_16 = arith.constant 31 : i32
    %47 = tpu.dynamic_rotate %18 by %c31_i32_16 dim 1 : vector<8x1024xf32>, i32 -> vector<8x1024xf32>
    %c1_i32_17 = arith.constant 1 : i32
    %48 = vector.broadcast %c1_i32_17 : i32 to vector<1x1024xi32>
    %49 = arith.cmpi sge, %2, %48 : vector<1x1024xi32>
    %c31_i32_18 = arith.constant 31 : i32
    %50 = vector.broadcast %c31_i32_18 : i32 to vector<1x1024xi32>
    %51 = arith.cmpi slt, %4, %50 : vector<1x1024xi32>
    %52 = arith.andi %49, %51 : vector<1x1024xi1>
    %53 = arith.extui %52 : vector<1x1024xi1> to vector<1x1024xi32>
    %54 = arith.sitofp %53 : vector<1x1024xi32> to vector<1x1024xf32>
    %55 = vector.broadcast %54 : vector<1x1024xf32> to vector<8x1024xf32>
    %56 = arith.mulf %47, %55 : vector<8x1024xf32>
    %c2 = arith.constant 2 : index
    %c0_19 = arith.constant 0 : index
    %c0_20 = arith.constant 0 : index
    %57 = vector.load %arg4[%c2, %c0_19, %c0_20] : memref<9x8x1xf32, #tpu.memory_space<vmem>>, vector<1x8x1xf32>
    %58 = vector.shape_cast %57 : vector<1x8x1xf32> to vector<8x1xf32>
    %59 = vector.broadcast %58 : vector<8x1xf32> to vector<8x1024xf32>
    %60 = arith.mulf %56, %59 : vector<8x1024xf32>
    %61 = arith.addf %46, %60 : vector<8x1024xf32>
    %c1_i32_21 = arith.constant 1 : i32
    %62 = tpu.dynamic_rotate %18 by %c1_i32_21 dim 1 : vector<8x1024xf32>, i32 -> vector<8x1024xf32>
    %c1_i32_22 = arith.constant 1 : i32
    %63 = vector.broadcast %c1_i32_22 : i32 to vector<1x1024xi32>
    %64 = arith.cmpi sge, %4, %63 : vector<1x1024xi32>
    %65 = arith.extui %64 : vector<1x1024xi1> to vector<1x1024xi32>
    %66 = arith.sitofp %65 : vector<1x1024xi32> to vector<1x1024xf32>
    %67 = vector.broadcast %66 : vector<1x1024xf32> to vector<8x1024xf32>
    %68 = arith.mulf %62, %67 : vector<8x1024xf32>
    %c3 = arith.constant 3 : index
    %c0_23 = arith.constant 0 : index
    %c0_24 = arith.constant 0 : index
    %69 = vector.load %arg4[%c3, %c0_23, %c0_24] : memref<9x8x1xf32, #tpu.memory_space<vmem>>, vector<1x8x1xf32>
    %70 = vector.shape_cast %69 : vector<1x8x1xf32> to vector<8x1xf32>
    %71 = vector.broadcast %70 : vector<8x1xf32> to vector<8x1024xf32>
    %72 = arith.mulf %68, %71 : vector<8x1024xf32>
    %73 = arith.addf %61, %72 : vector<8x1024xf32>
    %c4 = arith.constant 4 : index
    %c0_25 = arith.constant 0 : index
    %c0_26 = arith.constant 0 : index
    %74 = vector.load %arg4[%c4, %c0_25, %c0_26] : memref<9x8x1xf32, #tpu.memory_space<vmem>>, vector<1x8x1xf32>
    %75 = vector.shape_cast %74 : vector<1x8x1xf32> to vector<8x1xf32>
    %76 = vector.broadcast %75 : vector<8x1xf32> to vector<8x1024xf32>
    %77 = arith.mulf %18, %76 : vector<8x1024xf32>
    %78 = arith.addf %73, %77 : vector<8x1024xf32>
    %c1023_i32 = arith.constant 1023 : i32
    %79 = tpu.dynamic_rotate %18 by %c1023_i32 dim 1 : vector<8x1024xf32>, i32 -> vector<8x1024xf32>
    %c31_i32_27 = arith.constant 31 : i32
    %80 = vector.broadcast %c31_i32_27 : i32 to vector<1x1024xi32>
    %81 = arith.cmpi slt, %4, %80 : vector<1x1024xi32>
    %82 = arith.extui %81 : vector<1x1024xi1> to vector<1x1024xi32>
    %83 = arith.sitofp %82 : vector<1x1024xi32> to vector<1x1024xf32>
    %84 = vector.broadcast %83 : vector<1x1024xf32> to vector<8x1024xf32>
    %85 = arith.mulf %79, %84 : vector<8x1024xf32>
    %c5 = arith.constant 5 : index
    %c0_28 = arith.constant 0 : index
    %c0_29 = arith.constant 0 : index
    %86 = vector.load %arg4[%c5, %c0_28, %c0_29] : memref<9x8x1xf32, #tpu.memory_space<vmem>>, vector<1x8x1xf32>
    %87 = vector.shape_cast %86 : vector<1x8x1xf32> to vector<8x1xf32>
    %88 = vector.broadcast %87 : vector<8x1xf32> to vector<8x1024xf32>
    %89 = arith.mulf %85, %88 : vector<8x1024xf32>
    %90 = arith.addf %78, %89 : vector<8x1024xf32>
    %c993_i32 = arith.constant 993 : i32
    %91 = tpu.dynamic_rotate %18 by %c993_i32 dim 1 : vector<8x1024xf32>, i32 -> vector<8x1024xf32>
    %c31_i32_30 = arith.constant 31 : i32
    %92 = vector.broadcast %c31_i32_30 : i32 to vector<1x1024xi32>
    %93 = arith.cmpi slt, %2, %92 : vector<1x1024xi32>
    %c1_i32_31 = arith.constant 1 : i32
    %94 = vector.broadcast %c1_i32_31 : i32 to vector<1x1024xi32>
    %95 = arith.cmpi sge, %4, %94 : vector<1x1024xi32>
    %96 = arith.andi %93, %95 : vector<1x1024xi1>
    %97 = arith.extui %96 : vector<1x1024xi1> to vector<1x1024xi32>
    %98 = arith.sitofp %97 : vector<1x1024xi32> to vector<1x1024xf32>
    %99 = vector.broadcast %98 : vector<1x1024xf32> to vector<8x1024xf32>
    %100 = arith.mulf %91, %99 : vector<8x1024xf32>
    %c6 = arith.constant 6 : index
    %c0_32 = arith.constant 0 : index
    %c0_33 = arith.constant 0 : index
    %101 = vector.load %arg4[%c6, %c0_32, %c0_33] : memref<9x8x1xf32, #tpu.memory_space<vmem>>, vector<1x8x1xf32>
    %102 = vector.shape_cast %101 : vector<1x8x1xf32> to vector<8x1xf32>
    %103 = vector.broadcast %102 : vector<8x1xf32> to vector<8x1024xf32>
    %104 = arith.mulf %100, %103 : vector<8x1024xf32>
    %105 = arith.addf %90, %104 : vector<8x1024xf32>
    %c992_i32 = arith.constant 992 : i32
    %106 = tpu.dynamic_rotate %18 by %c992_i32 dim 1 : vector<8x1024xf32>, i32 -> vector<8x1024xf32>
    %c31_i32_34 = arith.constant 31 : i32
    %107 = vector.broadcast %c31_i32_34 : i32 to vector<1x1024xi32>
    %108 = arith.cmpi slt, %2, %107 : vector<1x1024xi32>
    %109 = arith.extui %108 : vector<1x1024xi1> to vector<1x1024xi32>
    %110 = arith.sitofp %109 : vector<1x1024xi32> to vector<1x1024xf32>
    %111 = vector.broadcast %110 : vector<1x1024xf32> to vector<8x1024xf32>
    %112 = arith.mulf %106, %111 : vector<8x1024xf32>
    %c7 = arith.constant 7 : index
    %c0_35 = arith.constant 0 : index
    %c0_36 = arith.constant 0 : index
    %113 = vector.load %arg4[%c7, %c0_35, %c0_36] : memref<9x8x1xf32, #tpu.memory_space<vmem>>, vector<1x8x1xf32>
    %114 = vector.shape_cast %113 : vector<1x8x1xf32> to vector<8x1xf32>
    %115 = vector.broadcast %114 : vector<8x1xf32> to vector<8x1024xf32>
    %116 = arith.mulf %112, %115 : vector<8x1024xf32>
    %117 = arith.addf %105, %116 : vector<8x1024xf32>
    %c991_i32 = arith.constant 991 : i32
    %118 = tpu.dynamic_rotate %18 by %c991_i32 dim 1 : vector<8x1024xf32>, i32 -> vector<8x1024xf32>
    %c31_i32_37 = arith.constant 31 : i32
    %119 = vector.broadcast %c31_i32_37 : i32 to vector<1x1024xi32>
    %120 = arith.cmpi slt, %2, %119 : vector<1x1024xi32>
    %c31_i32_38 = arith.constant 31 : i32
    %121 = vector.broadcast %c31_i32_38 : i32 to vector<1x1024xi32>
    %122 = arith.cmpi slt, %4, %121 : vector<1x1024xi32>
    %123 = arith.andi %120, %122 : vector<1x1024xi1>
    %124 = arith.extui %123 : vector<1x1024xi1> to vector<1x1024xi32>
    %125 = arith.sitofp %124 : vector<1x1024xi32> to vector<1x1024xf32>
    %126 = vector.broadcast %125 : vector<1x1024xf32> to vector<8x1024xf32>
    %127 = arith.mulf %118, %126 : vector<8x1024xf32>
    %c8 = arith.constant 8 : index
    %c0_39 = arith.constant 0 : index
    %c0_40 = arith.constant 0 : index
    %128 = vector.load %arg4[%c8, %c0_39, %c0_40] : memref<9x8x1xf32, #tpu.memory_space<vmem>>, vector<1x8x1xf32>
    %129 = vector.shape_cast %128 : vector<1x8x1xf32> to vector<8x1xf32>
    %130 = vector.broadcast %129 : vector<8x1xf32> to vector<8x1024xf32>
    %131 = arith.mulf %127, %130 : vector<8x1024xf32>
    %132 = arith.addf %117, %131 : vector<8x1024xf32>
    %c0_41 = arith.constant 0 : index
    %c0_42 = arith.constant 0 : index
    %133 = vector.load %arg5[%c0_41, %c0_42] : memref<8x1xf32, #tpu.memory_space<vmem>>, vector<8x1xf32>
    %134 = vector.broadcast %133 : vector<8x1xf32> to vector<8x1024xf32>
    %135 = arith.addf %132, %134 : vector<8x1024xf32>
    %cst_43 = arith.constant 0.000000e+00 : f32
    %136 = vector.broadcast %cst_43 : f32 to vector<8x1024xf32>
    %137 = arith.subf %136, %135 : vector<8x1024xf32>
    %138 = math.exp %137 : vector<8x1024xf32>
    %cst_44 = arith.constant 1.000000e+00 : f32
    %139 = vector.broadcast %cst_44 : f32 to vector<8x1024xf32>
    %140 = arith.addf %139, %138 : vector<8x1024xf32>
    %141 = tpu.reciprocal %140 {approx = true} : vector<8x1024xf32> -> vector<8x1024xf32>
    %142 = arith.mulf %135, %141 : vector<8x1024xf32>
    %c0_45 = arith.constant 0 : index
    %c0_46 = arith.constant 0 : index
    %143 = vector.load %arg6[%c0_45, %c0_46] : memref<16x8xbf16, #tpu.memory_space<vmem>>, vector<16x8xbf16>
    %144 = arith.truncf %142 : vector<8x1024xf32> to vector<8x1024xbf16>
    %cst_47 = arith.constant dense<0.000000e+00> : vector<16x1024xf32>
    %145 = tpu.matmul %143, %144, %cst_47 {dimension_numbers = #tpu.dot_dimension_numbers<[1], [0], [0], [1], [0, 0, 1, 1], [], []>} : vector<16x8xbf16>, vector<8x1024xbf16>, vector<16x1024xf32> -> vector<16x1024xf32>
    %c0_48 = arith.constant 0 : index
    %c0_49 = arith.constant 0 : index
    %146 = vector.load %arg7[%c0_48, %c0_49] : memref<16x1xf32, #tpu.memory_space<vmem>>, vector<16x1xf32>
    %147 = vector.broadcast %146 : vector<16x1xf32> to vector<16x1024xf32>
    %148 = arith.addf %145, %147 : vector<16x1024xf32>
    %c0_50 = arith.constant 0 : index
    %c0_51 = arith.constant 0 : index
    %149 = vector.load %arg8[%c0_50, %c0_51] : memref<24x16xbf16, #tpu.memory_space<vmem>>, vector<24x16xbf16>
    %150 = arith.truncf %148 : vector<16x1024xf32> to vector<16x1024xbf16>
    %cst_52 = arith.constant dense<0.000000e+00> : vector<24x1024xf32>
    %151 = tpu.matmul %149, %150, %cst_52 {dimension_numbers = #tpu.dot_dimension_numbers<[1], [0], [0], [1], [0, 0, 1, 1], [], []>} : vector<24x16xbf16>, vector<16x1024xbf16>, vector<24x1024xf32> -> vector<24x1024xf32>
    %c0_53 = arith.constant 0 : index
    %c0_54 = arith.constant 0 : index
    %152 = vector.load %arg9[%c0_53, %c0_54] : memref<24x1xf32, #tpu.memory_space<vmem>>, vector<24x1xf32>
    %153 = vector.broadcast %152 : vector<24x1xf32> to vector<24x1024xf32>
    %154 = arith.addf %151, %153 : vector<24x1024xf32>
    %cst_55 = arith.constant 0.000000e+00 : f32
    %155 = vector.broadcast %cst_55 : f32 to vector<24x1024xf32>
    %156 = arith.subf %155, %154 : vector<24x1024xf32>
    %157 = math.exp %156 : vector<24x1024xf32>
    %cst_56 = arith.constant 1.000000e+00 : f32
    %158 = vector.broadcast %cst_56 : f32 to vector<24x1024xf32>
    %159 = arith.addf %158, %157 : vector<24x1024xf32>
    %160 = tpu.reciprocal %159 {approx = true} : vector<24x1024xf32> -> vector<24x1024xf32>
    %161 = arith.mulf %154, %160 : vector<24x1024xf32>
    %cst_57 = arith.constant 0.000000e+00 : f32
    %162 = vector.broadcast %cst_57 : f32 to vector<24x1024xf32>
    %c33_i32_58 = arith.constant 33 : i32
    %163 = tpu.dynamic_rotate %161 by %c33_i32_58 dim 1 : vector<24x1024xf32>, i32 -> vector<24x1024xf32>
    %164 = vector.broadcast %27 : vector<1x1024xf32> to vector<24x1024xf32>
    %165 = arith.mulf %163, %164 : vector<24x1024xf32>
    %c0_59 = arith.constant 0 : index
    %c0_60 = arith.constant 0 : index
    %c0_61 = arith.constant 0 : index
    %166 = vector.load %arg10[%c0_59, %c0_60, %c0_61] : memref<9x24x1xf32, #tpu.memory_space<vmem>>, vector<1x24x1xf32>
    %167 = vector.shape_cast %166 : vector<1x24x1xf32> to vector<24x1xf32>
    %168 = vector.broadcast %167 : vector<24x1xf32> to vector<24x1024xf32>
    %169 = arith.mulf %165, %168 : vector<24x1024xf32>
    %170 = arith.addf %162, %169 : vector<24x1024xf32>
    %c32_i32_62 = arith.constant 32 : i32
    %171 = tpu.dynamic_rotate %161 by %c32_i32_62 dim 1 : vector<24x1024xf32>, i32 -> vector<24x1024xf32>
    %172 = vector.broadcast %39 : vector<1x1024xf32> to vector<24x1024xf32>
    %173 = arith.mulf %171, %172 : vector<24x1024xf32>
    %c1_63 = arith.constant 1 : index
    %c0_64 = arith.constant 0 : index
    %c0_65 = arith.constant 0 : index
    %174 = vector.load %arg10[%c1_63, %c0_64, %c0_65] : memref<9x24x1xf32, #tpu.memory_space<vmem>>, vector<1x24x1xf32>
    %175 = vector.shape_cast %174 : vector<1x24x1xf32> to vector<24x1xf32>
    %176 = vector.broadcast %175 : vector<24x1xf32> to vector<24x1024xf32>
    %177 = arith.mulf %173, %176 : vector<24x1024xf32>
    %178 = arith.addf %170, %177 : vector<24x1024xf32>
    %c31_i32_66 = arith.constant 31 : i32
    %179 = tpu.dynamic_rotate %161 by %c31_i32_66 dim 1 : vector<24x1024xf32>, i32 -> vector<24x1024xf32>
    %180 = vector.broadcast %54 : vector<1x1024xf32> to vector<24x1024xf32>
    %181 = arith.mulf %179, %180 : vector<24x1024xf32>
    %c2_67 = arith.constant 2 : index
    %c0_68 = arith.constant 0 : index
    %c0_69 = arith.constant 0 : index
    %182 = vector.load %arg10[%c2_67, %c0_68, %c0_69] : memref<9x24x1xf32, #tpu.memory_space<vmem>>, vector<1x24x1xf32>
    %183 = vector.shape_cast %182 : vector<1x24x1xf32> to vector<24x1xf32>
    %184 = vector.broadcast %183 : vector<24x1xf32> to vector<24x1024xf32>
    %185 = arith.mulf %181, %184 : vector<24x1024xf32>
    %186 = arith.addf %178, %185 : vector<24x1024xf32>
    %c1_i32_70 = arith.constant 1 : i32
    %187 = tpu.dynamic_rotate %161 by %c1_i32_70 dim 1 : vector<24x1024xf32>, i32 -> vector<24x1024xf32>
    %188 = vector.broadcast %66 : vector<1x1024xf32> to vector<24x1024xf32>
    %189 = arith.mulf %187, %188 : vector<24x1024xf32>
    %c3_71 = arith.constant 3 : index
    %c0_72 = arith.constant 0 : index
    %c0_73 = arith.constant 0 : index
    %190 = vector.load %arg10[%c3_71, %c0_72, %c0_73] : memref<9x24x1xf32, #tpu.memory_space<vmem>>, vector<1x24x1xf32>
    %191 = vector.shape_cast %190 : vector<1x24x1xf32> to vector<24x1xf32>
    %192 = vector.broadcast %191 : vector<24x1xf32> to vector<24x1024xf32>
    %193 = arith.mulf %189, %192 : vector<24x1024xf32>
    %194 = arith.addf %186, %193 : vector<24x1024xf32>
    %c4_74 = arith.constant 4 : index
    %c0_75 = arith.constant 0 : index
    %c0_76 = arith.constant 0 : index
    %195 = vector.load %arg10[%c4_74, %c0_75, %c0_76] : memref<9x24x1xf32, #tpu.memory_space<vmem>>, vector<1x24x1xf32>
    %196 = vector.shape_cast %195 : vector<1x24x1xf32> to vector<24x1xf32>
    %197 = vector.broadcast %196 : vector<24x1xf32> to vector<24x1024xf32>
    %198 = arith.mulf %161, %197 : vector<24x1024xf32>
    %199 = arith.addf %194, %198 : vector<24x1024xf32>
    %c1023_i32_77 = arith.constant 1023 : i32
    %200 = tpu.dynamic_rotate %161 by %c1023_i32_77 dim 1 : vector<24x1024xf32>, i32 -> vector<24x1024xf32>
    %201 = vector.broadcast %83 : vector<1x1024xf32> to vector<24x1024xf32>
    %202 = arith.mulf %200, %201 : vector<24x1024xf32>
    %c5_78 = arith.constant 5 : index
    %c0_79 = arith.constant 0 : index
    %c0_80 = arith.constant 0 : index
    %203 = vector.load %arg10[%c5_78, %c0_79, %c0_80] : memref<9x24x1xf32, #tpu.memory_space<vmem>>, vector<1x24x1xf32>
    %204 = vector.shape_cast %203 : vector<1x24x1xf32> to vector<24x1xf32>
    %205 = vector.broadcast %204 : vector<24x1xf32> to vector<24x1024xf32>
    %206 = arith.mulf %202, %205 : vector<24x1024xf32>
    %207 = arith.addf %199, %206 : vector<24x1024xf32>
    %c993_i32_81 = arith.constant 993 : i32
    %208 = tpu.dynamic_rotate %161 by %c993_i32_81 dim 1 : vector<24x1024xf32>, i32 -> vector<24x1024xf32>
    %209 = vector.broadcast %98 : vector<1x1024xf32> to vector<24x1024xf32>
    %210 = arith.mulf %208, %209 : vector<24x1024xf32>
    %c6_82 = arith.constant 6 : index
    %c0_83 = arith.constant 0 : index
    %c0_84 = arith.constant 0 : index
    %211 = vector.load %arg10[%c6_82, %c0_83, %c0_84] : memref<9x24x1xf32, #tpu.memory_space<vmem>>, vector<1x24x1xf32>
    %212 = vector.shape_cast %211 : vector<1x24x1xf32> to vector<24x1xf32>
    %213 = vector.broadcast %212 : vector<24x1xf32> to vector<24x1024xf32>
    %214 = arith.mulf %210, %213 : vector<24x1024xf32>
    %215 = arith.addf %207, %214 : vector<24x1024xf32>
    %c992_i32_85 = arith.constant 992 : i32
    %216 = tpu.dynamic_rotate %161 by %c992_i32_85 dim 1 : vector<24x1024xf32>, i32 -> vector<24x1024xf32>
    %217 = vector.broadcast %110 : vector<1x1024xf32> to vector<24x1024xf32>
    %218 = arith.mulf %216, %217 : vector<24x1024xf32>
    %c7_86 = arith.constant 7 : index
    %c0_87 = arith.constant 0 : index
    %c0_88 = arith.constant 0 : index
    %219 = vector.load %arg10[%c7_86, %c0_87, %c0_88] : memref<9x24x1xf32, #tpu.memory_space<vmem>>, vector<1x24x1xf32>
    %220 = vector.shape_cast %219 : vector<1x24x1xf32> to vector<24x1xf32>
    %221 = vector.broadcast %220 : vector<24x1xf32> to vector<24x1024xf32>
    %222 = arith.mulf %218, %221 : vector<24x1024xf32>
    %223 = arith.addf %215, %222 : vector<24x1024xf32>
    %c991_i32_89 = arith.constant 991 : i32
    %224 = tpu.dynamic_rotate %161 by %c991_i32_89 dim 1 : vector<24x1024xf32>, i32 -> vector<24x1024xf32>
    %225 = vector.broadcast %125 : vector<1x1024xf32> to vector<24x1024xf32>
    %226 = arith.mulf %224, %225 : vector<24x1024xf32>
    %c8_90 = arith.constant 8 : index
    %c0_91 = arith.constant 0 : index
    %c0_92 = arith.constant 0 : index
    %227 = vector.load %arg10[%c8_90, %c0_91, %c0_92] : memref<9x24x1xf32, #tpu.memory_space<vmem>>, vector<1x24x1xf32>
    %228 = vector.shape_cast %227 : vector<1x24x1xf32> to vector<24x1xf32>
    %229 = vector.broadcast %228 : vector<24x1xf32> to vector<24x1024xf32>
    %230 = arith.mulf %226, %229 : vector<24x1024xf32>
    %231 = arith.addf %223, %230 : vector<24x1024xf32>
    %c0_93 = arith.constant 0 : index
    %c0_94 = arith.constant 0 : index
    %232 = vector.load %arg11[%c0_93, %c0_94] : memref<24x1xf32, #tpu.memory_space<vmem>>, vector<24x1xf32>
    %233 = vector.broadcast %232 : vector<24x1xf32> to vector<24x1024xf32>
    %234 = arith.addf %231, %233 : vector<24x1024xf32>
    %cst_95 = arith.constant 0.000000e+00 : f32
    %235 = vector.broadcast %cst_95 : f32 to vector<24x1024xf32>
    %236 = arith.subf %235, %234 : vector<24x1024xf32>
    %237 = math.exp %236 : vector<24x1024xf32>
    %cst_96 = arith.constant 1.000000e+00 : f32
    %238 = vector.broadcast %cst_96 : f32 to vector<24x1024xf32>
    %239 = arith.addf %238, %237 : vector<24x1024xf32>
    %240 = tpu.reciprocal %239 {approx = true} : vector<24x1024xf32> -> vector<24x1024xf32>
    %241 = arith.mulf %234, %240 : vector<24x1024xf32>
    %c0_97 = arith.constant 0 : index
    %c0_98 = arith.constant 0 : index
    %242 = vector.load %arg12[%c0_97, %c0_98] : memref<16x24xbf16, #tpu.memory_space<vmem>>, vector<16x24xbf16>
    %243 = arith.truncf %241 : vector<24x1024xf32> to vector<24x1024xbf16>
    %cst_99 = arith.constant dense<0.000000e+00> : vector<16x1024xf32>
    %244 = tpu.matmul %242, %243, %cst_99 {dimension_numbers = #tpu.dot_dimension_numbers<[1], [0], [0], [1], [0, 0, 1, 1], [], []>} : vector<16x24xbf16>, vector<24x1024xbf16>, vector<16x1024xf32> -> vector<16x1024xf32>
    %c0_100 = arith.constant 0 : index
    %c0_101 = arith.constant 0 : index
    %245 = vector.load %arg13[%c0_100, %c0_101] : memref<16x1xf32, #tpu.memory_space<vmem>>, vector<16x1xf32>
    %246 = vector.broadcast %245 : vector<16x1xf32> to vector<16x1024xf32>
    %247 = arith.addf %244, %246 : vector<16x1024xf32>
    %c0_102 = arith.constant 0 : index
    %c0_103 = arith.constant 0 : index
    %248 = vector.load %arg14[%c0_102, %c0_103] : memref<32x16xbf16, #tpu.memory_space<vmem>>, vector<32x16xbf16>
    %249 = arith.truncf %247 : vector<16x1024xf32> to vector<16x1024xbf16>
    %cst_104 = arith.constant dense<0.000000e+00> : vector<32x1024xf32>
    %250 = tpu.matmul %248, %249, %cst_104 {dimension_numbers = #tpu.dot_dimension_numbers<[1], [0], [0], [1], [0, 0, 1, 1], [], []>} : vector<32x16xbf16>, vector<16x1024xbf16>, vector<32x1024xf32> -> vector<32x1024xf32>
    %c0_105 = arith.constant 0 : index
    %c0_106 = arith.constant 0 : index
    %251 = vector.load %arg15[%c0_105, %c0_106] : memref<32x1xf32, #tpu.memory_space<vmem>>, vector<32x1xf32>
    %252 = vector.broadcast %251 : vector<32x1xf32> to vector<32x1024xf32>
    %253 = arith.addf %250, %252 : vector<32x1024xf32>
    %cst_107 = arith.constant 0.000000e+00 : f32
    %254 = vector.broadcast %cst_107 : f32 to vector<32x1024xf32>
    %255 = arith.subf %254, %253 : vector<32x1024xf32>
    %256 = math.exp %255 : vector<32x1024xf32>
    %cst_108 = arith.constant 1.000000e+00 : f32
    %257 = vector.broadcast %cst_108 : f32 to vector<32x1024xf32>
    %258 = arith.addf %257, %256 : vector<32x1024xf32>
    %259 = tpu.reciprocal %258 {approx = true} : vector<32x1024xf32> -> vector<32x1024xf32>
    %260 = arith.mulf %253, %259 : vector<32x1024xf32>
    %cst_109 = arith.constant 0.000000e+00 : f32
    %261 = vector.broadcast %cst_109 : f32 to vector<32x1024xf32>
    %c66_i32 = arith.constant 66 : i32
    %262 = tpu.dynamic_rotate %260 by %c66_i32 dim 1 : vector<32x1024xf32>, i32 -> vector<32x1024xf32>
    %c2_i32 = arith.constant 2 : i32
    %263 = vector.broadcast %c2_i32 : i32 to vector<1x1024xi32>
    %264 = arith.cmpi sge, %2, %263 : vector<1x1024xi32>
    %c2_i32_110 = arith.constant 2 : i32
    %265 = vector.broadcast %c2_i32_110 : i32 to vector<1x1024xi32>
    %266 = arith.cmpi sge, %4, %265 : vector<1x1024xi32>
    %267 = arith.andi %264, %266 : vector<1x1024xi1>
    %268 = arith.extui %267 : vector<1x1024xi1> to vector<1x1024xi32>
    %269 = arith.sitofp %268 : vector<1x1024xi32> to vector<1x1024xf32>
    %270 = vector.broadcast %269 : vector<1x1024xf32> to vector<32x1024xf32>
    %271 = arith.mulf %262, %270 : vector<32x1024xf32>
    %c0_111 = arith.constant 0 : index
    %c0_112 = arith.constant 0 : index
    %c0_113 = arith.constant 0 : index
    %272 = vector.load %arg16[%c0_111, %c0_112, %c0_113] : memref<9x32x1xf32, #tpu.memory_space<vmem>>, vector<1x32x1xf32>
    %273 = vector.shape_cast %272 : vector<1x32x1xf32> to vector<32x1xf32>
    %274 = vector.broadcast %273 : vector<32x1xf32> to vector<32x1024xf32>
    %275 = arith.mulf %271, %274 : vector<32x1024xf32>
    %276 = arith.addf %261, %275 : vector<32x1024xf32>
    %c64_i32 = arith.constant 64 : i32
    %277 = tpu.dynamic_rotate %260 by %c64_i32 dim 1 : vector<32x1024xf32>, i32 -> vector<32x1024xf32>
    %c2_i32_114 = arith.constant 2 : i32
    %278 = vector.broadcast %c2_i32_114 : i32 to vector<1x1024xi32>
    %279 = arith.cmpi sge, %2, %278 : vector<1x1024xi32>
    %280 = arith.extui %279 : vector<1x1024xi1> to vector<1x1024xi32>
    %281 = arith.sitofp %280 : vector<1x1024xi32> to vector<1x1024xf32>
    %282 = vector.broadcast %281 : vector<1x1024xf32> to vector<32x1024xf32>
    %283 = arith.mulf %277, %282 : vector<32x1024xf32>
    %c1_115 = arith.constant 1 : index
    %c0_116 = arith.constant 0 : index
    %c0_117 = arith.constant 0 : index
    %284 = vector.load %arg16[%c1_115, %c0_116, %c0_117] : memref<9x32x1xf32, #tpu.memory_space<vmem>>, vector<1x32x1xf32>
    %285 = vector.shape_cast %284 : vector<1x32x1xf32> to vector<32x1xf32>
    %286 = vector.broadcast %285 : vector<32x1xf32> to vector<32x1024xf32>
    %287 = arith.mulf %283, %286 : vector<32x1024xf32>
    %288 = arith.addf %276, %287 : vector<32x1024xf32>
    %c62_i32 = arith.constant 62 : i32
    %289 = tpu.dynamic_rotate %260 by %c62_i32 dim 1 : vector<32x1024xf32>, i32 -> vector<32x1024xf32>
    %c2_i32_118 = arith.constant 2 : i32
    %290 = vector.broadcast %c2_i32_118 : i32 to vector<1x1024xi32>
    %291 = arith.cmpi sge, %2, %290 : vector<1x1024xi32>
    %c30_i32 = arith.constant 30 : i32
    %292 = vector.broadcast %c30_i32 : i32 to vector<1x1024xi32>
    %293 = arith.cmpi slt, %4, %292 : vector<1x1024xi32>
    %294 = arith.andi %291, %293 : vector<1x1024xi1>
    %295 = arith.extui %294 : vector<1x1024xi1> to vector<1x1024xi32>
    %296 = arith.sitofp %295 : vector<1x1024xi32> to vector<1x1024xf32>
    %297 = vector.broadcast %296 : vector<1x1024xf32> to vector<32x1024xf32>
    %298 = arith.mulf %289, %297 : vector<32x1024xf32>
    %c2_119 = arith.constant 2 : index
    %c0_120 = arith.constant 0 : index
    %c0_121 = arith.constant 0 : index
    %299 = vector.load %arg16[%c2_119, %c0_120, %c0_121] : memref<9x32x1xf32, #tpu.memory_space<vmem>>, vector<1x32x1xf32>
    %300 = vector.shape_cast %299 : vector<1x32x1xf32> to vector<32x1xf32>
    %301 = vector.broadcast %300 : vector<32x1xf32> to vector<32x1024xf32>
    %302 = arith.mulf %298, %301 : vector<32x1024xf32>
    %303 = arith.addf %288, %302 : vector<32x1024xf32>
    %c2_i32_122 = arith.constant 2 : i32
    %304 = tpu.dynamic_rotate %260 by %c2_i32_122 dim 1 : vector<32x1024xf32>, i32 -> vector<32x1024xf32>
    %c2_i32_123 = arith.constant 2 : i32
    %305 = vector.broadcast %c2_i32_123 : i32 to vector<1x1024xi32>
    %306 = arith.cmpi sge, %4, %305 : vector<1x1024xi32>
    %307 = arith.extui %306 : vector<1x1024xi1> to vector<1x1024xi32>
    %308 = arith.sitofp %307 : vector<1x1024xi32> to vector<1x1024xf32>
    %309 = vector.broadcast %308 : vector<1x1024xf32> to vector<32x1024xf32>
    %310 = arith.mulf %304, %309 : vector<32x1024xf32>
    %c3_124 = arith.constant 3 : index
    %c0_125 = arith.constant 0 : index
    %c0_126 = arith.constant 0 : index
    %311 = vector.load %arg16[%c3_124, %c0_125, %c0_126] : memref<9x32x1xf32, #tpu.memory_space<vmem>>, vector<1x32x1xf32>
    %312 = vector.shape_cast %311 : vector<1x32x1xf32> to vector<32x1xf32>
    %313 = vector.broadcast %312 : vector<32x1xf32> to vector<32x1024xf32>
    %314 = arith.mulf %310, %313 : vector<32x1024xf32>
    %315 = arith.addf %303, %314 : vector<32x1024xf32>
    %c4_127 = arith.constant 4 : index
    %c0_128 = arith.constant 0 : index
    %c0_129 = arith.constant 0 : index
    %316 = vector.load %arg16[%c4_127, %c0_128, %c0_129] : memref<9x32x1xf32, #tpu.memory_space<vmem>>, vector<1x32x1xf32>
    %317 = vector.shape_cast %316 : vector<1x32x1xf32> to vector<32x1xf32>
    %318 = vector.broadcast %317 : vector<32x1xf32> to vector<32x1024xf32>
    %319 = arith.mulf %260, %318 : vector<32x1024xf32>
    %320 = arith.addf %315, %319 : vector<32x1024xf32>
    %c1022_i32 = arith.constant 1022 : i32
    %321 = tpu.dynamic_rotate %260 by %c1022_i32 dim 1 : vector<32x1024xf32>, i32 -> vector<32x1024xf32>
    %c30_i32_130 = arith.constant 30 : i32
    %322 = vector.broadcast %c30_i32_130 : i32 to vector<1x1024xi32>
    %323 = arith.cmpi slt, %4, %322 : vector<1x1024xi32>
    %324 = arith.extui %323 : vector<1x1024xi1> to vector<1x1024xi32>
    %325 = arith.sitofp %324 : vector<1x1024xi32> to vector<1x1024xf32>
    %326 = vector.broadcast %325 : vector<1x1024xf32> to vector<32x1024xf32>
    %327 = arith.mulf %321, %326 : vector<32x1024xf32>
    %c5_131 = arith.constant 5 : index
    %c0_132 = arith.constant 0 : index
    %c0_133 = arith.constant 0 : index
    %328 = vector.load %arg16[%c5_131, %c0_132, %c0_133] : memref<9x32x1xf32, #tpu.memory_space<vmem>>, vector<1x32x1xf32>
    %329 = vector.shape_cast %328 : vector<1x32x1xf32> to vector<32x1xf32>
    %330 = vector.broadcast %329 : vector<32x1xf32> to vector<32x1024xf32>
    %331 = arith.mulf %327, %330 : vector<32x1024xf32>
    %332 = arith.addf %320, %331 : vector<32x1024xf32>
    %c962_i32 = arith.constant 962 : i32
    %333 = tpu.dynamic_rotate %260 by %c962_i32 dim 1 : vector<32x1024xf32>, i32 -> vector<32x1024xf32>
    %c30_i32_134 = arith.constant 30 : i32
    %334 = vector.broadcast %c30_i32_134 : i32 to vector<1x1024xi32>
    %335 = arith.cmpi slt, %2, %334 : vector<1x1024xi32>
    %c2_i32_135 = arith.constant 2 : i32
    %336 = vector.broadcast %c2_i32_135 : i32 to vector<1x1024xi32>
    %337 = arith.cmpi sge, %4, %336 : vector<1x1024xi32>
    %338 = arith.andi %335, %337 : vector<1x1024xi1>
    %339 = arith.extui %338 : vector<1x1024xi1> to vector<1x1024xi32>
    %340 = arith.sitofp %339 : vector<1x1024xi32> to vector<1x1024xf32>
    %341 = vector.broadcast %340 : vector<1x1024xf32> to vector<32x1024xf32>
    %342 = arith.mulf %333, %341 : vector<32x1024xf32>
    %c6_136 = arith.constant 6 : index
    %c0_137 = arith.constant 0 : index
    %c0_138 = arith.constant 0 : index
    %343 = vector.load %arg16[%c6_136, %c0_137, %c0_138] : memref<9x32x1xf32, #tpu.memory_space<vmem>>, vector<1x32x1xf32>
    %344 = vector.shape_cast %343 : vector<1x32x1xf32> to vector<32x1xf32>
    %345 = vector.broadcast %344 : vector<32x1xf32> to vector<32x1024xf32>
    %346 = arith.mulf %342, %345 : vector<32x1024xf32>
    %347 = arith.addf %332, %346 : vector<32x1024xf32>
    %c960_i32 = arith.constant 960 : i32
    %348 = tpu.dynamic_rotate %260 by %c960_i32 dim 1 : vector<32x1024xf32>, i32 -> vector<32x1024xf32>
    %c30_i32_139 = arith.constant 30 : i32
    %349 = vector.broadcast %c30_i32_139 : i32 to vector<1x1024xi32>
    %350 = arith.cmpi slt, %2, %349 : vector<1x1024xi32>
    %351 = arith.extui %350 : vector<1x1024xi1> to vector<1x1024xi32>
    %352 = arith.sitofp %351 : vector<1x1024xi32> to vector<1x1024xf32>
    %353 = vector.broadcast %352 : vector<1x1024xf32> to vector<32x1024xf32>
    %354 = arith.mulf %348, %353 : vector<32x1024xf32>
    %c7_140 = arith.constant 7 : index
    %c0_141 = arith.constant 0 : index
    %c0_142 = arith.constant 0 : index
    %355 = vector.load %arg16[%c7_140, %c0_141, %c0_142] : memref<9x32x1xf32, #tpu.memory_space<vmem>>, vector<1x32x1xf32>
    %356 = vector.shape_cast %355 : vector<1x32x1xf32> to vector<32x1xf32>
    %357 = vector.broadcast %356 : vector<32x1xf32> to vector<32x1024xf32>
    %358 = arith.mulf %354, %357 : vector<32x1024xf32>
    %359 = arith.addf %347, %358 : vector<32x1024xf32>
    %c958_i32 = arith.constant 958 : i32
    %360 = tpu.dynamic_rotate %260 by %c958_i32 dim 1 : vector<32x1024xf32>, i32 -> vector<32x1024xf32>
    %c30_i32_143 = arith.constant 30 : i32
    %361 = vector.broadcast %c30_i32_143 : i32 to vector<1x1024xi32>
    %362 = arith.cmpi slt, %2, %361 : vector<1x1024xi32>
    %c30_i32_144 = arith.constant 30 : i32
    %363 = vector.broadcast %c30_i32_144 : i32 to vector<1x1024xi32>
    %364 = arith.cmpi slt, %4, %363 : vector<1x1024xi32>
    %365 = arith.andi %362, %364 : vector<1x1024xi1>
    %366 = arith.extui %365 : vector<1x1024xi1> to vector<1x1024xi32>
    %367 = arith.sitofp %366 : vector<1x1024xi32> to vector<1x1024xf32>
    %368 = vector.broadcast %367 : vector<1x1024xf32> to vector<32x1024xf32>
    %369 = arith.mulf %360, %368 : vector<32x1024xf32>
    %c8_145 = arith.constant 8 : index
    %c0_146 = arith.constant 0 : index
    %c0_147 = arith.constant 0 : index
    %370 = vector.load %arg16[%c8_145, %c0_146, %c0_147] : memref<9x32x1xf32, #tpu.memory_space<vmem>>, vector<1x32x1xf32>
    %371 = vector.shape_cast %370 : vector<1x32x1xf32> to vector<32x1xf32>
    %372 = vector.broadcast %371 : vector<32x1xf32> to vector<32x1024xf32>
    %373 = arith.mulf %369, %372 : vector<32x1024xf32>
    %374 = arith.addf %359, %373 : vector<32x1024xf32>
    %c0_148 = arith.constant 0 : index
    %c0_149 = arith.constant 0 : index
    %375 = vector.load %arg17[%c0_148, %c0_149] : memref<32x1xf32, #tpu.memory_space<vmem>>, vector<32x1xf32>
    %376 = vector.broadcast %375 : vector<32x1xf32> to vector<32x1024xf32>
    %377 = arith.addf %374, %376 : vector<32x1024xf32>
    %cst_150 = arith.constant 0.000000e+00 : f32
    %378 = vector.broadcast %cst_150 : f32 to vector<32x1024xf32>
    %379 = arith.subf %378, %377 : vector<32x1024xf32>
    %380 = math.exp %379 : vector<32x1024xf32>
    %cst_151 = arith.constant 1.000000e+00 : f32
    %381 = vector.broadcast %cst_151 : f32 to vector<32x1024xf32>
    %382 = arith.addf %381, %380 : vector<32x1024xf32>
    %383 = tpu.reciprocal %382 {approx = true} : vector<32x1024xf32> -> vector<32x1024xf32>
    %384 = arith.mulf %377, %383 : vector<32x1024xf32>
    %c0_152 = arith.constant 0 : index
    %c0_153 = arith.constant 0 : index
    %385 = vector.load %arg18[%c0_152, %c0_153] : memref<16x32xbf16, #tpu.memory_space<vmem>>, vector<16x32xbf16>
    %386 = arith.truncf %384 : vector<32x1024xf32> to vector<32x1024xbf16>
    %cst_154 = arith.constant dense<0.000000e+00> : vector<16x1024xf32>
    %387 = tpu.matmul %385, %386, %cst_154 {dimension_numbers = #tpu.dot_dimension_numbers<[1], [0], [0], [1], [0, 0, 1, 1], [], []>} : vector<16x32xbf16>, vector<32x1024xbf16>, vector<16x1024xf32> -> vector<16x1024xf32>
    %c0_155 = arith.constant 0 : index
    %c0_156 = arith.constant 0 : index
    %388 = vector.load %arg19[%c0_155, %c0_156] : memref<16x1xf32, #tpu.memory_space<vmem>>, vector<16x1xf32>
    %389 = vector.broadcast %388 : vector<16x1xf32> to vector<16x1024xf32>
    %390 = arith.addf %387, %389 : vector<16x1024xf32>
    %c0_157 = arith.constant 0 : index
    %c0_158 = arith.constant 0 : index
    %391 = vector.load %arg20[%c0_157, %c0_158] : memref<16x16xbf16, #tpu.memory_space<vmem>>, vector<16x16xbf16>
    %392 = arith.truncf %247 : vector<16x1024xf32> to vector<16x1024xbf16>
    %cst_159 = arith.constant dense<0.000000e+00> : vector<16x1024xf32>
    %393 = tpu.matmul %391, %392, %cst_159 {dimension_numbers = #tpu.dot_dimension_numbers<[1], [0], [0], [1], [0, 0, 1, 1], [], []>} : vector<16x16xbf16>, vector<16x1024xbf16>, vector<16x1024xf32> -> vector<16x1024xf32>
    %394 = arith.addf %390, %393 : vector<16x1024xf32>
    %c0_160 = arith.constant 0 : index
    %c0_161 = arith.constant 0 : index
    %395 = vector.load %arg21[%c0_160, %c0_161] : memref<32x16xbf16, #tpu.memory_space<vmem>>, vector<32x16xbf16>
    %396 = arith.truncf %394 : vector<16x1024xf32> to vector<16x1024xbf16>
    %cst_162 = arith.constant dense<0.000000e+00> : vector<32x1024xf32>
    %397 = tpu.matmul %395, %396, %cst_162 {dimension_numbers = #tpu.dot_dimension_numbers<[1], [0], [0], [1], [0, 0, 1, 1], [], []>} : vector<32x16xbf16>, vector<16x1024xbf16>, vector<32x1024xf32> -> vector<32x1024xf32>
    %c0_163 = arith.constant 0 : index
    %c0_164 = arith.constant 0 : index
    %398 = vector.load %arg22[%c0_163, %c0_164] : memref<32x1xf32, #tpu.memory_space<vmem>>, vector<32x1xf32>
    %399 = vector.broadcast %398 : vector<32x1xf32> to vector<32x1024xf32>
    %400 = arith.addf %397, %399 : vector<32x1024xf32>
    %cst_165 = arith.constant 0.000000e+00 : f32
    %401 = vector.broadcast %cst_165 : f32 to vector<32x1024xf32>
    %402 = arith.subf %401, %400 : vector<32x1024xf32>
    %403 = math.exp %402 : vector<32x1024xf32>
    %cst_166 = arith.constant 1.000000e+00 : f32
    %404 = vector.broadcast %cst_166 : f32 to vector<32x1024xf32>
    %405 = arith.addf %404, %403 : vector<32x1024xf32>
    %406 = tpu.reciprocal %405 {approx = true} : vector<32x1024xf32> -> vector<32x1024xf32>
    %407 = arith.mulf %400, %406 : vector<32x1024xf32>
    %c3_i32 = arith.constant 3 : i32
    %408 = vector.broadcast %c3_i32 : i32 to vector<1x1024xi32>
    %409 = arith.andi %2, %408 : vector<1x1024xi32>
    %c0_i32 = arith.constant 0 : i32
    %410 = vector.broadcast %c0_i32 : i32 to vector<1x1024xi32>
    %411 = arith.cmpi eq, %409, %410 : vector<1x1024xi32>
    %c3_i32_167 = arith.constant 3 : i32
    %412 = vector.broadcast %c3_i32_167 : i32 to vector<1x1024xi32>
    %413 = arith.andi %4, %412 : vector<1x1024xi32>
    %c0_i32_168 = arith.constant 0 : i32
    %414 = vector.broadcast %c0_i32_168 : i32 to vector<1x1024xi32>
    %415 = arith.cmpi eq, %413, %414 : vector<1x1024xi32>
    %416 = arith.andi %411, %415 : vector<1x1024xi1>
    %c28_i32 = arith.constant 28 : i32
    %417 = vector.broadcast %c28_i32 : i32 to vector<1x1024xi32>
    %418 = arith.cmpi slt, %2, %417 : vector<1x1024xi32>
    %419 = arith.andi %416, %418 : vector<1x1024xi1>
    %c28_i32_169 = arith.constant 28 : i32
    %420 = vector.broadcast %c28_i32_169 : i32 to vector<1x1024xi32>
    %421 = arith.cmpi slt, %4, %420 : vector<1x1024xi32>
    %422 = arith.andi %419, %421 : vector<1x1024xi1>
    %423 = arith.extui %422 : vector<1x1024xi1> to vector<1x1024xi32>
    %424 = arith.sitofp %423 : vector<1x1024xi32> to vector<1x1024xf32>
    %425 = vector.broadcast %424 : vector<1x1024xf32> to vector<32x1024xf32>
    %426 = arith.mulf %407, %425 : vector<32x1024xf32>
    %cst_170 = arith.constant dense<0.000000e+00> : vector<32xf32>
    %427 = vector.multi_reduction <add>, %426, %cst_170 [1] : vector<32x1024xf32> to vector<32xf32>
    %428 = vector.shape_cast %427 : vector<32xf32> to vector<32x1xf32>
    %cst_171 = arith.constant 0.0204081628 : f32
    %429 = vector.broadcast %cst_171 : f32 to vector<32x1xf32>
    %430 = arith.mulf %428, %429 : vector<32x1xf32>
    %c0_172 = arith.constant 0 : index
    %c0_173 = arith.constant 0 : index
    %431 = vector.load %arg23[%c0_172, %c0_173] : memref<1000x32xbf16, #tpu.memory_space<vmem>>, vector<1000x32xbf16>
    %432 = arith.truncf %430 : vector<32x1xf32> to vector<32x1xbf16>
    %cst_174 = arith.constant dense<0.000000e+00> : vector<1000x1xf32>
    %433 = tpu.matmul %431, %432, %cst_174 {dimension_numbers = #tpu.dot_dimension_numbers<[1], [0], [0], [1], [0, 0, 1, 1], [], []>} : vector<1000x32xbf16>, vector<32x1xbf16>, vector<1000x1xf32> -> vector<1000x1xf32>
    %c0_175 = arith.constant 0 : index
    %c0_176 = arith.constant 0 : index
    %434 = vector.load %arg24[%c0_175, %c0_176] : memref<1000x1xf32, #tpu.memory_space<vmem>>, vector<1000x1xf32>
    %435 = arith.addf %433, %434 : vector<1000x1xf32>
    %c0_177 = arith.constant 0 : index
    %c0_178 = arith.constant 0 : index
    %c0_179 = arith.constant 0 : index
    %436 = vector.load %arg25[%c0_177, %c0_178, %c0_179] : memref<1x1000x1xf32, #tpu.memory_space<vmem>>, vector<1x1000x1xf32>
    %437 = vector.shape_cast %436 : vector<1x1000x1xf32> to vector<1000x1xf32>
    %438 = vector.shape_cast %435 : vector<1000x1xf32> to vector<1x1000x1xf32>
    tpu.vector_store %arg25[%c0_177, %c0_178, %c0_179], %438 {strides = array<i32>} : memref<1x1000x1xf32, #tpu.memory_space<vmem>>, vector<1x1000x1xf32>,
    return
  }
  func.func @transform_0(%arg0: i32) -> (i32, i32, i32) {
    %c0_i32 = arith.constant 0 : i32
    %c0_i32_0 = arith.constant 0 : i32
    %c0_i32_1 = arith.constant 0 : i32
    return %arg0, %c0_i32, %c0_i32_0 : i32, i32, i32
  }
  func.func @transform_1(%arg0: i32) -> (i32, i32) {
    %c0_i32 = arith.constant 0 : i32
    %c0_i32_0 = arith.constant 0 : i32
    %c0_i32_1 = arith.constant 0 : i32
    return %c0_i32, %c0_i32_0 : i32, i32
  }
  func.func @transform_2(%arg0: i32) -> (i32, i32) {
    %c0_i32 = arith.constant 0 : i32
    %c0_i32_0 = arith.constant 0 : i32
    %c0_i32_1 = arith.constant 0 : i32
    return %c0_i32, %c0_i32_0 : i32, i32
  }
  func.func @transform_3(%arg0: i32) -> (i32, i32, i32) {
    %c0_i32 = arith.constant 0 : i32
    %c0_i32_0 = arith.constant 0 : i32
    %c0_i32_1 = arith.constant 0 : i32
    %c0_i32_2 = arith.constant 0 : i32
    return %c0_i32, %c0_i32_0, %c0_i32_1 : i32, i32, i32
  }
  func.func @transform_4(%arg0: i32) -> (i32, i32) {
    %c0_i32 = arith.constant 0 : i32
    %c0_i32_0 = arith.constant 0 : i32
    %c0_i32_1 = arith.constant 0 : i32
    return %c0_i32, %c0_i32_0 : i32, i32
  }
  func.func @transform_5(%arg0: i32) -> (i32, i32) {
    %c0_i32 = arith.constant 0 : i32
    %c0_i32_0 = arith.constant 0 : i32
    %c0_i32_1 = arith.constant 0 : i32
    return %c0_i32, %c0_i32_0 : i32, i32
  }
  func.func @transform_6(%arg0: i32) -> (i32, i32) {
    %c0_i32 = arith.constant 0 : i32
    %c0_i32_0 = arith.constant 0 : i32
    %c0_i32_1 = arith.constant 0 : i32
    return %c0_i32, %c0_i32_0 : i32, i32
  }
  func.func @transform_7(%arg0: i32) -> (i32, i32) {
    %c0_i32 = arith.constant 0 : i32
    %c0_i32_0 = arith.constant 0 : i32
    %c0_i32_1 = arith.constant 0 : i32
    return %c0_i32, %c0_i32_0 : i32, i32
  }
  func.func @transform_8(%arg0: i32) -> (i32, i32) {
    %c0_i32 = arith.constant 0 : i32
    %c0_i32_0 = arith.constant 0 : i32
    %c0_i32_1 = arith.constant 0 : i32
    return %c0_i32, %c0_i32_0 : i32, i32
  }
  func.func @transform_9(%arg0: i32) -> (i32, i32, i32) {
    %c0_i32 = arith.constant 0 : i32
    %c0_i32_0 = arith.constant 0 : i32
    %c0_i32_1 = arith.constant 0 : i32
    %c0_i32_2 = arith.constant 0 : i32
    return %c0_i32, %c0_i32_0, %c0_i32_1 : i32, i32, i32
  }
  func.func @transform_10(%arg0: i32) -> (i32, i32) {
    %c0_i32 = arith.constant 0 : i32
    %c0_i32_0 = arith.constant 0 : i32
    %c0_i32_1 = arith.constant 0 : i32
    return %c0_i32, %c0_i32_0 : i32, i32
  }
  func.func @transform_11(%arg0: i32) -> (i32, i32) {
    %c0_i32 = arith.constant 0 : i32
    %c0_i32_0 = arith.constant 0 : i32
    %c0_i32_1 = arith.constant 0 : i32
    return %c0_i32, %c0_i32_0 : i32, i32
  }
  func.func @transform_12(%arg0: i32) -> (i32, i32) {
    %c0_i32 = arith.constant 0 : i32
    %c0_i32_0 = arith.constant 0 : i32
    %c0_i32_1 = arith.constant 0 : i32
    return %c0_i32, %c0_i32_0 : i32, i32
  }
  func.func @transform_13(%arg0: i32) -> (i32, i32) {
    %c0_i32 = arith.constant 0 : i32
    %c0_i32_0 = arith.constant 0 : i32
    %c0_i32_1 = arith.constant 0 : i32
    return %c0_i32, %c0_i32_0 : i32, i32
  }
  func.func @transform_14(%arg0: i32) -> (i32, i32) {
    %c0_i32 = arith.constant 0 : i32
    %c0_i32_0 = arith.constant 0 : i32
    %c0_i32_1 = arith.constant 0 : i32
    return %c0_i32, %c0_i32_0 : i32, i32
  }
  func.func @transform_15(%arg0: i32) -> (i32, i32, i32) {
    %c0_i32 = arith.constant 0 : i32
    %c0_i32_0 = arith.constant 0 : i32
    %c0_i32_1 = arith.constant 0 : i32
    %c0_i32_2 = arith.constant 0 : i32
    return %c0_i32, %c0_i32_0, %c0_i32_1 : i32, i32, i32
  }
  func.func @transform_16(%arg0: i32) -> (i32, i32) {
    %c0_i32 = arith.constant 0 : i32
    %c0_i32_0 = arith.constant 0 : i32
    %c0_i32_1 = arith.constant 0 : i32
    return %c0_i32, %c0_i32_0 : i32, i32
  }
  func.func @transform_17(%arg0: i32) -> (i32, i32) {
    %c0_i32 = arith.constant 0 : i32
    %c0_i32_0 = arith.constant 0 : i32
    %c0_i32_1 = arith.constant 0 : i32
    return %c0_i32, %c0_i32_0 : i32, i32
  }
  func.func @transform_18(%arg0: i32) -> (i32, i32) {
    %c0_i32 = arith.constant 0 : i32
    %c0_i32_0 = arith.constant 0 : i32
    %c0_i32_1 = arith.constant 0 : i32
    return %c0_i32, %c0_i32_0 : i32, i32
  }
  func.func @transform_19(%arg0: i32) -> (i32, i32) {
    %c0_i32 = arith.constant 0 : i32
    %c0_i32_0 = arith.constant 0 : i32
    %c0_i32_1 = arith.constant 0 : i32
    return %c0_i32, %c0_i32_0 : i32, i32
  }
  func.func @transform_20(%arg0: i32) -> (i32, i32) {
    %c0_i32 = arith.constant 0 : i32
    %c0_i32_0 = arith.constant 0 : i32
    %c0_i32_1 = arith.constant 0 : i32
    return %c0_i32, %c0_i32_0 : i32, i32
  }
  func.func @transform_21(%arg0: i32) -> (i32, i32) {
    %c0_i32 = arith.constant 0 : i32
    %c0_i32_0 = arith.constant 0 : i32
    %c0_i32_1 = arith.constant 0 : i32
    return %c0_i32, %c0_i32_0 : i32, i32
  }
  func.func @transform_22(%arg0: i32) -> (i32, i32) {
    %c0_i32 = arith.constant 0 : i32
    %c0_i32_0 = arith.constant 0 : i32
    %c0_i32_1 = arith.constant 0 : i32
    return %c0_i32, %c0_i32_0 : i32, i32
  }
  func.func @transform_23(%arg0: i32) -> (i32, i32) {
    %c0_i32 = arith.constant 0 : i32
    %c0_i32_0 = arith.constant 0 : i32
    %c0_i32_1 = arith.constant 0 : i32
    return %c0_i32, %c0_i32_0 : i32, i32
  }
  func.func @transform_24(%arg0: i32) -> (i32, i32, i32) {
    %c0_i32 = arith.constant 0 : i32
    %c0_i32_0 = arith.constant 0 : i32
    %c0_i32_1 = arith.constant 0 : i32
    return %arg0, %c0_i32, %c0_i32_0 : i32, i32, i32
  }
}

</mosaic_0001>

<llo_original>
// kernel: forward.1
$region0: #{forward.1}
  #allocation0 [shape = 'u32[]', space=smem, size = 0x4, offset = 0x4, fixed_abs, tag = 'smem constant byte address 0x4 - core index']
  #allocation1 [shape = 'u32[144,128]{1,0:T(1,128)}', space=vmem, size = 0x12000, scoped, tag = 'internal scratch']
  %s0 = inlined_call_operand.vmem [shape: bf16[2,32,1024], index: 0, kind: input, shape index: {}]
  %s1 = inlined_call_operand.vmem [shape: bf16[8,32], index: 1, kind: input, shape index: {}]
  %s2 = inlined_call_operand.vmem [shape: f32[8,1], index: 2, kind: input, shape index: {}]
  %s3 = inlined_call_operand.vmem [shape: f32[9,8,1], index: 3, kind: input, shape index: {}]
  %s4 = inlined_call_operand.vmem [shape: f32[8,1], index: 4, kind: input, shape index: {}]
  %s5 = inlined_call_operand.vmem [shape: bf16[16,8], index: 5, kind: input, shape index: {}]
  %s6 = inlined_call_operand.vmem [shape: f32[16,1], index: 6, kind: input, shape index: {}]
  %s7 = inlined_call_operand.vmem [shape: bf16[24,16], index: 7, kind: input, shape index: {}]
  %s8 = inlined_call_operand.vmem [shape: f32[24,1], index: 8, kind: input, shape index: {}]
  %s9 = inlined_call_operand.vmem [shape: f32[9,24,1], index: 9, kind: input, shape index: {}]
  %s10 = inlined_call_operand.vmem [shape: f32[24,1], index: 10, kind: input, shape index: {}]
  %s11 = inlined_call_operand.vmem [shape: bf16[16,24], index: 11, kind: input, shape index: {}]
  %s12 = inlined_call_operand.vmem [shape: f32[16,1], index: 12, kind: input, shape index: {}]
  %s13 = inlined_call_operand.vmem [shape: bf16[32,16], index: 13, kind: input, shape index: {}]
  %s14 = inlined_call_operand.vmem [shape: f32[32,1], index: 14, kind: input, shape index: {}]
  %s15 = inlined_call_operand.vmem [shape: f32[9,32,1], index: 15, kind: input, shape index: {}]
  %s16 = inlined_call_operand.vmem [shape: f32[32,1], index: 16, kind: input, shape index: {}]
  %s17 = inlined_call_operand.vmem [shape: bf16[16,32], index: 17, kind: input, shape index: {}]
  %s18 = inlined_call_operand.vmem [shape: f32[16,1], index: 18, kind: input, shape index: {}]
  %s19 = inlined_call_operand.vmem [shape: bf16[16,16], index: 19, kind: input, shape index: {}]
  %s20 = inlined_call_operand.vmem [shape: bf16[32,16], index: 20, kind: input, shape index: {}]
  %s21 = inlined_call_operand.vmem [shape: f32[32,1], index: 21, kind: input, shape index: {}]
  %s22 = inlined_call_operand.vmem [shape: bf16[1000,32], index: 22, kind: input, shape index: {}]
  %s23 = inlined_call_operand.vmem [shape: f32[1000,1], index: 23, kind: input, shape index: {}]
  %s24 = inlined_call_operand.vmem [shape: f32[2,1000,1], index: 24, kind: output, shape index: {}]
  %s25 = sld [smem:[#allocation0]]
  $region129: #{forward.1} parent=0
    _
  %s27 = ssub.s32 1, %s25
  %s28 = scalar_select 0, %s27, %s25
  loop: start=0, step=1, limit=4
  $region2: #{forward.1} parent=0 // loop_pre_header
    _
  $region3: #{forward.1} parent=0 // loop_header
    %s30 = sphi 0, %s34
    %p31 = scmp.ge.s32.totalorder %s30, 4
    %s40 = sphi 0, %s42
    %s43 = sphi 0, %s40
    %s44 = sphi 0, %s43
    %s60 = sphi 0, %s44
    %s64 = sphi 0, %s64
    %s66 = sphi 0, %s64
    %s67 = sphi 0, %s66
    %s81 = sphi 0, %s67
    %s85 = sphi 0, %s85
    %s87 = sphi 0, %s85
    %s88 = sphi 0, %s87
    %s102 = sphi 0, %s88
    %s106 = sphi 0, %s106
    %s108 = sphi 0, %s106
    %s109 = sphi 0, %s108
    %s123 = sphi 0, %s109
    %s127 = sphi 0, %s127
    %s129 = sphi 0, %s127
    %s130 = sphi 0, %s129
    %s144 = sphi 0, %s130
    %s148 = sphi 0, %s148
    %s150 = sphi 0, %s148
    %s151 = sphi 0, %s150
    %s165 = sphi 0, %s151
    %s169 = sphi 0, %s169
    %s171 = sphi 0, %s169
    %s172 = sphi 0, %s171
    %s186 = sphi 0, %s172
    %s190 = sphi 0, %s190
    %s192 = sphi 0, %s190
    %s193 = sphi 0, %s192
    %s207 = sphi 0, %s193
    %s211 = sphi 0, %s211
    %s213 = sphi 0, %s211
    %s214 = sphi 0, %s213
    %s228 = sphi 0, %s214
    %s232 = sphi 0, %s232
    %s234 = sphi 0, %s232
    %s235 = sphi 0, %s234
    %s249 = sphi 0, %s235
    %s253 = sphi 0, %s253
    %s255 = sphi 0, %s253
    %s256 = sphi 0, %s255
    %s270 = sphi 0, %s256
    %s274 = sphi 0, %s274
    %s276 = sphi 0, %s274
    %s277 = sphi 0, %s276
    %s291 = sphi 0, %s277
    %s295 = sphi 0, %s295
    %s297 = sphi 0, %s295
    %s298 = sphi 0, %s297
    %s312 = sphi 0, %s298
    %s316 = sphi 0, %s316
    %s318 = sphi 0, %s316
    %s319 = sphi 0, %s318
    %s333 = sphi 0, %s319
    %s337 = sphi 0, %s337
    %s339 = sphi 0, %s337
    %s340 = sphi 0, %s339
    %s354 = sphi 0, %s340
    %s358 = sphi 0, %s358
    %s360 = sphi 0, %s358
    %s361 = sphi 0, %s360
    %s375 = sphi 0, %s361
    %s379 = sphi 0, %s379
    %s381 = sphi 0, %s379
    %s382 = sphi 0, %s381
    %s396 = sphi 0, %s382
    %s400 = sphi 0, %s400
    %s402 = sphi 0, %s400
    %s403 = sphi 0, %s402
    %s417 = sphi 0, %s403
    %s421 = sphi 0, %s421
    %s423 = sphi 0, %s421
    %s424 = sphi 0, %s423
    %s438 = sphi 0, %s424
    %s442 = sphi 0, %s442
    %s444 = sphi 0, %s442
    %s445 = sphi 0, %s444
    %s459 = sphi 0, %s445
    %s463 = sphi 0, %s463
    %s465 = sphi 0, %s463
    %s466 = sphi 0, %s465
    %s480 = sphi 0, %s466
    %s484 = sphi 0, %s484
    %s486 = sphi 0, %s484
    %s487 = sphi 0, %s486
    %s501 = sphi 0, %s487
    %s505 = sphi 0, %s505
    %s507 = sphi 0, %s505
    %s508 = sphi 0, %s507
    %s522 = sphi 0, %s508
    %s526 = sphi 0, %s526
    %s528 = sphi 0, %s526
    %s529 = sphi 0, %s528
    %s543 = sphi 0, %s529
    %s549 = sphi 0, %s551
    %s552 = sphi 0, %s549
    %s553 = sphi 0, %s552
    %s569 = sphi 0, %s553
  $region4: #{forward.1} parent=0 // loop_header_branch
    %33 = sbr.rel (%p31) target = $region8
  $region5: #{forward.1} parent=0 // loop_body
    %s35 = ssub.s32 %s30, 1
    %s36 = ssub.s32 %s30, 2
    %s37 = sadd.s32 %s30, 1
    %s38 = ssub.s32 %s30, %s37
    %p39 = scmp.eq.s32.totalorder %s38, 0
    %s41 = sadd.s32 %s40, 1
    %s42 = scalar_select %p39, %s40, %s41
    %p45 = pneg %p39
    %p46 = scmp.eq.s32.totalorder %s30, 1
    %p47 = por %p45, %p46
    %p48 = scmp.ne.s32.totalorder %s40, %s43
    %p49 = scmp.eq.s32.totalorder %s30, 0
    %p50 = por %p48, %p49
    %p51 = scmp.ne.s32.totalorder %s40, %s43
    %p52 = scmp.eq.s32.totalorder %s35, 1
    %p53 = por %p51, %p52
    %p54 = scmp.ne.s32.totalorder %s43, %s44
    %p55 = scmp.eq.s32.totalorder %s35, 0
    %p56 = por %p54, %p55
    %p57 = scmp.ne.s32.totalorder %s43, %s44
    %p58 = scmp.eq.s32.totalorder %s36, 1
    %p59 = por %p57, %p58
    %p61 = scmp.ne.s32.totalorder %s44, %s60
    %p62 = scmp.eq.s32.totalorder %s36, 0
    %p63 = por %p61, %p62
    %s65 = sadd.s32 %s64, 1
    %p68 = scmp.eq.s32.totalorder %s30, 1
    %p69 = scmp.ne.s32.totalorder %s64, %s66
    %p70 = scmp.eq.s32.totalorder %s30, 0
    %p71 = por %p69, %p70
    %p72 = scmp.ne.s32.totalorder %s64, %s66
    %p73 = scmp.eq.s32.totalorder %s35, 1
    %p74 = por %p72, %p73
    %p75 = scmp.ne.s32.totalorder %s66, %s67
    %p76 = scmp.eq.s32.totalorder %s35, 0
    %p77 = por %p75, %p76
    %p78 = scmp.ne.s32.totalorder %s66, %s67
    %p79 = scmp.eq.s32.totalorder %s36, 1
    %p80 = por %p78, %p79
    %p82 = scmp.ne.s32.totalorder %s67, %s81
    %p83 = scmp.eq.s32.totalorder %s36, 0
    %p84 = por %p82, %p83
    %s86 = sadd.s32 %s85, 1
    %p89 = scmp.eq.s32.totalorder %s30, 1
    %p90 = scmp.ne.s32.totalorder %s85, %s87
    %p91 = scmp.eq.s32.totalorder %s30, 0
    %p92 = por %p90, %p91
    %p93 = scmp.ne.s32.totalorder %s85, %s87
    %p94 = scmp.eq.s32.totalorder %s35, 1
    %p95 = por %p93, %p94
    %p96 = scmp.ne.s32.totalorder %s87, %s88
    %p97 = scmp.eq.s32.totalorder %s35, 0
    %p98 = por %p96, %p97
    %p99 = scmp.ne.s32.totalorder %s87, %s88
    %p100 = scmp.eq.s32.totalorder %s36, 1
    %p101 = por %p99, %p100
    %p103 = scmp.ne.s32.totalorder %s88, %s102
    %p104 = scmp.eq.s32.totalorder %s36, 0
    %p105 = por %p103, %p104
    %s107 = sadd.s32 %s106, 1
    %p110 = scmp.eq.s32.totalorder %s30, 1
    %p111 = scmp.ne.s32.totalorder %s106, %s108
    %p112 = scmp.eq.s32.totalorder %s30, 0
    %p113 = por %p111, %p112
    %p114 = scmp.ne.s32.totalorder %s106, %s108
    %p115 = scmp.eq.s32.totalorder %s35, 1
    %p116 = por %p114, %p115
    %p117 = scmp.ne.s32.totalorder %s108, %s109
    %p118 = scmp.eq.s32.totalorder %s35, 0
    %p119 = por %p117, %p118
    %p120 = scmp.ne.s32.totalorder %s108, %s109
    %p121 = scmp.eq.s32.totalorder %s36, 1
    %p122 = por %p120, %p121
    %p124 = scmp.ne.s32.totalorder %s109, %s123
    %p125 = scmp.eq.s32.totalorder %s36, 0
    %p126 = por %p124, %p125
    %s128 = sadd.s32 %s127, 1
    %p131 = scmp.eq.s32.totalorder %s30, 1
    %p132 = scmp.ne.s32.totalorder %s127, %s129
    %p133 = scmp.eq.s32.totalorder %s30, 0
    %p134 = por %p132, %p133
    %p135 = scmp.ne.s32.totalorder %s127, %s129
    %p136 = scmp.eq.s32.totalorder %s35, 1
    %p137 = por %p135, %p136
    %p138 = scmp.ne.s32.totalorder %s129, %s130
    %p139 = scmp.eq.s32.totalorder %s35, 0
    %p140 = por %p138, %p139
    %p141 = scmp.ne.s32.totalorder %s129, %s130
    %p142 = scmp.eq.s32.totalorder %s36, 1
    %p143 = por %p141, %p142
    %p145 = scmp.ne.s32.totalorder %s130, %s144
    %p146 = scmp.eq.s32.totalorder %s36, 0
    %p147 = por %p145, %p146
    %s149 = sadd.s32 %s148, 1
    %p152 = scmp.eq.s32.totalorder %s30, 1
    %p153 = scmp.ne.s32.totalorder %s148, %s150
    %p154 = scmp.eq.s32.totalorder %s30, 0
    %p155 = por %p153, %p154
    %p156 = scmp.ne.s32.totalorder %s148, %s150
    %p157 = scmp.eq.s32.totalorder %s35, 1
    %p158 = por %p156, %p157
    %p159 = scmp.ne.s32.totalorder %s150, %s151
    %p160 = scmp.eq.s32.totalorder %s35, 0
    %p161 = por %p159, %p160
    %p162 = scmp.ne.s32.totalorder %s150, %s151
    %p163 = scmp.eq.s32.totalorder %s36, 1
    %p164 = por %p162, %p163
    %p166 = scmp.ne.s32.totalorder %s151, %s165
    %p167 = scmp.eq.s32.totalorder %s36, 0
    %p168 = por %p166, %p167
    %s170 = sadd.s32 %s169, 1
    %p173 = scmp.eq.s32.totalorder %s30, 1
    %p174 = scmp.ne.s32.totalorder %s169, %s171
    %p175 = scmp.eq.s32.totalorder %s30, 0
    %p176 = por %p174, %p175
    %p177 = scmp.ne.s32.totalorder %s169, %s171
    %p178 = scmp.eq.s32.totalorder %s35, 1
    %p179 = por %p177, %p178
    %p180 = scmp.ne.s32.totalorder %s171, %s172
    %p181 = scmp.eq.s32.totalorder %s35, 0
    %p182 = por %p180, %p181
    %p183 = scmp.ne.s32.totalorder %s171, %s172
    %p184 = scmp.eq.s32.totalorder %s36, 1
    %p185 = por %p183, %p184
    %p187 = scmp.ne.s32.totalorder %s172, %s186
    %p188 = scmp.eq.s32.totalorder %s36, 0
    %p189 = por %p187, %p188
    %s191 = sadd.s32 %s190, 1
    %p194 = scmp.eq.s32.totalorder %s30, 1
    %p195 = scmp.ne.s32.totalorder %s190, %s192
    %p196 = scmp.eq.s32.totalorder %s30, 0
    %p197 = por %p195, %p196
    %p198 = scmp.ne.s32.totalorder %s190, %s192
    %p199 = scmp.eq.s32.totalorder %s35, 1
    %p200 = por %p198, %p199
    %p201 = scmp.ne.s32.totalorder %s192, %s193
    %p202 = scmp.eq.s32.totalorder %s35, 0
    %p203 = por %p201, %p202
    %p204 = scmp.ne.s32.totalorder %s192, %s193
    %p205 = scmp.eq.s32.totalorder %s36, 1
    %p206 = por %p204, %p205
    %p208 = scmp.ne.s32.totalorder %s193, %s207
    %p209 = scmp.eq.s32.totalorder %s36, 0
    %p210 = por %p208, %p209
    %s212 = sadd.s32 %s211, 1
    %p215 = scmp.eq.s32.totalorder %s30, 1
    %p216 = scmp.ne.s32.totalorder %s211, %s213
    %p217 = scmp.eq.s32.totalorder %s30, 0
    %p218 = por %p216, %p217
    %p219 = scmp.ne.s32.totalorder %s211, %s213
    %p220 = scmp.eq.s32.totalorder %s35, 1
    %p221 = por %p219, %p220
    %p222 = scmp.ne.s32.totalorder %s213, %s214
    %p223 = scmp.eq.s32.totalorder %s35, 0
    %p224 = por %p222, %p223
    %p225 = scmp.ne.s32.totalorder %s213, %s214
    %p226 = scmp.eq.s32.totalorder %s36, 1
    %p227 = por %p225, %p226
    %p229 = scmp.ne.s32.totalorder %s214, %s228
    %p230 = scmp.eq.s32.totalorder %s36, 0
    %p231 = por %p229, %p230
    %s233 = sadd.s32 %s232, 1
    %p236 = scmp.eq.s32.totalorder %s30, 1
    %p237 = scmp.ne.s32.totalorder %s232, %s234
    %p238 = scmp.eq.s32.totalorder %s30, 0
    %p239 = por %p237, %p238
    %p240 = scmp.ne.s32.totalorder %s232, %s234
    %p241 = scmp.eq.s32.totalorder %s35, 1
    %p242 = por %p240, %p241
    %p243 = scmp.ne.s32.totalorder %s234, %s235
    %p244 = scmp.eq.s32.totalorder %s35, 0
    %p245 = por %p243, %p244
    %p246 = scmp.ne.s32.totalorder %s234, %s235
    %p247 = scmp.eq.s32.totalorder %s36, 1
    %p248 = por %p246, %p247
    %p250 = scmp.ne.s32.totalorder %s235, %s249
    %p251 = scmp.eq.s32.totalorder %s36, 0
    %p252 = por %p250, %p251
    %s254 = sadd.s32 %s253, 1
    %p257 = scmp.eq.s32.totalorder %s30, 1
    %p258 = scmp.ne.s32.totalorder %s253, %s255
    %p259 = scmp.eq.s32.totalorder %s30, 0
    %p260 = por %p258, %p259
    %p261 = scmp.ne.s32.totalorder %s253, %s255
    %p262 = scmp.eq.s32.totalorder %s35, 1
    %p263 = por %p261, %p262
    %p264 = scmp.ne.s32.totalorder %s255, %s256
    %p265 = scmp.eq.s32.totalorder %s35, 0
    %p266 = por %p264, %p265
    %p267 = scmp.ne.s32.totalorder %s255, %s256
    %p268 = scmp.eq.s32.totalorder %s36, 1
    %p269 = por %p267, %p268
    %p271 = scmp.ne.s32.totalorder %s256, %s270
    %p272 = scmp.eq.s32.totalorder %s36, 0
    %p273 = por %p271, %p272
    %s275 = sadd.s32 %s274, 1
    %p278 = scmp.eq.s32.totalorder %s30, 1
    %p279 = scmp.ne.s32.totalorder %s274, %s276
    %p280 = scmp.eq.s32.totalorder %s30, 0
    %p281 = por %p279, %p280
    %p282 = scmp.ne.s32.totalorder %s274, %s276
    %p283 = scmp.eq.s32.totalorder %s35, 1
    %p284 = por %p282, %p283
    %p285 = scmp.ne.s32.totalorder %s276, %s277
    %p286 = scmp.eq.s32.totalorder %s35, 0
    %p287 = por %p285, %p286
    %p288 = scmp.ne.s32.totalorder %s276, %s277
    %p289 = scmp.eq.s32.totalorder %s36, 1
    %p290 = por %p288, %p289
    %p292 = scmp.ne.s32.totalorder %s277, %s291
    %p293 = scmp.eq.s32.totalorder %s36, 0
    %p294 = por %p292, %p293
    %s296 = sadd.s32 %s295, 1
    %p299 = scmp.eq.s32.totalorder %s30, 1
    %p300 = scmp.ne.s32.totalorder %s295, %s297
    %p301 = scmp.eq.s32.totalorder %s30, 0
    %p302 = por %p300, %p301
    %p303 = scmp.ne.s32.totalorder %s295, %s297
    %p304 = scmp.eq.s32.totalorder %s35, 1
    %p305 = por %p303, %p304
    %p306 = scmp.ne.s32.totalorder %s297, %s298
    %p307 = scmp.eq.s32.totalorder %s35, 0
    %p308 = por %p306, %p307
    %p309 = scmp.ne.s32.totalorder %s297, %s298
    %p310 = scmp.eq.s32.totalorder %s36, 1
    %p311 = por %p309, %p310
    %p313 = scmp.ne.s32.totalorder %s298, %s312
    %p314 = scmp.eq.s32.totalorder %s36, 0
    %p315 = por %p313, %p314
    %s317 = sadd.s32 %s316, 1
    %p320 = scmp.eq.s32.totalorder %s30, 1
    %p321 = scmp.ne.s32.totalorder %s316, %s318
    %p322 = scmp.eq.s32.totalorder %s30, 0
    %p323 = por %p321, %p322
    %p324 = scmp.ne.s32.totalorder %s316, %s318
    %p325 = scmp.eq.s32.totalorder %s35, 1
    %p326 = por %p324, %p325
    %p327 = scmp.ne.s32.totalorder %s318, %s319
    %p328 = scmp.eq.s32.totalorder %s35, 0
    %p329 = por %p327, %p328
    %p330 = scmp.ne.s32.totalorder %s318, %s319
    %p331 = scmp.eq.s32.totalorder %s36, 1
    %p332 = por %p330, %p331
    %p334 = scmp.ne.s32.totalorder %s319, %s333
    %p335 = scmp.eq.s32.totalorder %s36, 0
    %p336 = por %p334, %p335
    %s338 = sadd.s32 %s337, 1
    %p341 = scmp.eq.s32.totalorder %s30, 1
    %p342 = scmp.ne.s32.totalorder %s337, %s339
    %p343 = scmp.eq.s32.totalorder %s30, 0
    %p344 = por %p342, %p343
    %p345 = scmp.ne.s32.totalorder %s337, %s339
    %p346 = scmp.eq.s32.totalorder %s35, 1
    %p347 = por %p345, %p346
    %p348 = scmp.ne.s32.totalorder %s339, %s340
    %p349 = scmp.eq.s32.totalorder %s35, 0
    %p350 = por %p348, %p349
    %p351 = scmp.ne.s32.totalorder %s339, %s340
    %p352 = scmp.eq.s32.totalorder %s36, 1
    %p353 = por %p351, %p352
    %p355 = scmp.ne.s32.totalorder %s340, %s354
    %p356 = scmp.eq.s32.totalorder %s36, 0
    %p357 = por %p355, %p356
    %s359 = sadd.s32 %s358, 1
    %p362 = scmp.eq.s32.totalorder %s30, 1
    %p363 = scmp.ne.s32.totalorder %s358, %s360
    %p364 = scmp.eq.s32.totalorder %s30, 0
    %p365 = por %p363, %p364
    %p366 = scmp.ne.s32.totalorder %s358, %s360
    %p367 = scmp.eq.s32.totalorder %s35, 1
    %p368 = por %p366, %p367
    %p369 = scmp.ne.s32.totalorder %s360, %s361
    %p370 = scmp.eq.s32.totalorder %s35, 0
    %p371 = por %p369, %p370
    %p372 = scmp.ne.s32.totalorder %s360, %s361
    %p373 = scmp.eq.s32.totalorder %s36, 1
    %p374 = por %p372, %p373
    %p376 = scmp.ne.s32.totalorder %s361, %s375
    %p377 = scmp.eq.s32.totalorder %s36, 0
    %p378 = por %p376, %p377
    %s380 = sadd.s32 %s379, 1
    %p383 = scmp.eq.s32.totalorder %s30, 1
    %p384 = scmp.ne.s32.totalorder %s379, %s381
    %p385 = scmp.eq.s32.totalorder %s30, 0
    %p386 = por %p384, %p385
    %p387 = scmp.ne.s32.totalorder %s379, %s381
    %p388 = scmp.eq.s32.totalorder %s35, 1
    %p389 = por %p387, %p388
    %p390 = scmp.ne.s32.totalorder %s381, %s382
    %p391 = scmp.eq.s32.totalorder %s35, 0
    %p392 = por %p390, %p391
    %p393 = scmp.ne.s32.totalorder %s381, %s382
    %p394 = scmp.eq.s32.totalorder %s36, 1
    %p395 = por %p393, %p394
    %p397 = scmp.ne.s32.totalorder %s382, %s396
    %p398 = scmp.eq.s32.totalorder %s36, 0
    %p399 = por %p397, %p398
    %s401 = sadd.s32 %s400, 1
    %p404 = scmp.eq.s32.totalorder %s30, 1
    %p405 = scmp.ne.s32.totalorder %s400, %s402
    %p406 = scmp.eq.s32.totalorder %s30, 0
    %p407 = por %p405, %p406
    %p408 = scmp.ne.s32.totalorder %s400, %s402
    %p409 = scmp.eq.s32.totalorder %s35, 1
    %p410 = por %p408, %p409
    %p411 = scmp.ne.s32.totalorder %s402, %s403
    %p412 = scmp.eq.s32.totalorder %s35, 0
    %p413 = por %p411, %p412
    %p414 = scmp.ne.s32.totalorder %s402, %s403
    %p415 = scmp.eq.s32.totalorder %s36, 1
    %p416 = por %p414, %p415
    %p418 = scmp.ne.s32.totalorder %s403, %s417
    %p419 = scmp.eq.s32.totalorder %s36, 0
    %p420 = por %p418, %p419
    %s422 = sadd.s32 %s421, 1
    %p425 = scmp.eq.s32.totalorder %s30, 1
    %p426 = scmp.ne.s32.totalorder %s421, %s423
    %p427 = scmp.eq.s32.totalorder %s30, 0
    %p428 = por %p426, %p427
    %p429 = scmp.ne.s32.totalorder %s421, %s423
    %p430 = scmp.eq.s32.totalorder %s35, 1
    %p431 = por %p429, %p430
    %p432 = scmp.ne.s32.totalorder %s423, %s424
    %p433 = scmp.eq.s32.totalorder %s35, 0
    %p434 = por %p432, %p433
    %p435 = scmp.ne.s32.totalorder %s423, %s424
    %p436 = scmp.eq.s32.totalorder %s36, 1
    %p437 = por %p435, %p436
    %p439 = scmp.ne.s32.totalorder %s424, %s438
    %p440 = scmp.eq.s32.totalorder %s36, 0
    %p441 = por %p439, %p440
    %s443 = sadd.s32 %s442, 1
    %p446 = scmp.eq.s32.totalorder %s30, 1
    %p447 = scmp.ne.s32.totalorder %s442, %s444
    %p448 = scmp.eq.s32.totalorder %s30, 0
    %p449 = por %p447, %p448
    %p450 = scmp.ne.s32.totalorder %s442, %s444
    %p451 = scmp.eq.s32.totalorder %s35, 1
    %p452 = por %p450, %p451
    %p453 = scmp.ne.s32.totalorder %s444, %s445
    %p454 = scmp.eq.s32.totalorder %s35, 0
    %p455 = por %p453, %p454
    %p456 = scmp.ne.s32.totalorder %s444, %s445
    %p457 = scmp.eq.s32.totalorder %s36, 1
    %p458 = por %p456, %p457
    %p460 = scmp.ne.s32.totalorder %s445, %s459
    %p461 = scmp.eq.s32.totalorder %s36, 0
    %p462 = por %p460, %p461
    %s464 = sadd.s32 %s463, 1
    %p467 = scmp.eq.s32.totalorder %s30, 1
    %p468 = scmp.ne.s32.totalorder %s463, %s465
    %p469 = scmp.eq.s32.totalorder %s30, 0
    %p470 = por %p468, %p469
    %p471 = scmp.ne.s32.totalorder %s463, %s465
    %p472 = scmp.eq.s32.totalorder %s35, 1
    %p473 = por %p471, %p472
    %p474 = scmp.ne.s32.totalorder %s465, %s466
    %p475 = scmp.eq.s32.totalorder %s35, 0
    %p476 = por %p474, %p475
    %p477 = scmp.ne.s32.totalorder %s465, %s466
    %p478 = scmp.eq.s32.totalorder %s36, 1
    %p479 = por %p477, %p478
    %p481 = scmp.ne.s32.totalorder %s466, %s480
    %p482 = scmp.eq.s32.totalorder %s36, 0
    %p483 = por %p481, %p482
    %s485 = sadd.s32 %s484, 1
    %p488 = scmp.eq.s32.totalorder %s30, 1
    %p489 = scmp.ne.s32.totalorder %s484, %s486
    %p490 = scmp.eq.s32.totalorder %s30, 0
    %p491 = por %p489, %p490
    %p492 = scmp.ne.s32.totalorder %s484, %s486
    %p493 = scmp.eq.s32.totalorder %s35, 1
    %p494 = por %p492, %p493
    %p495 = scmp.ne.s32.totalorder %s486, %s487
    %p496 = scmp.eq.s32.totalorder %s35, 0
    %p497 = por %p495, %p496
    %p498 = scmp.ne.s32.totalorder %s486, %s487
    %p499 = scmp.eq.s32.totalorder %s36, 1
    %p500 = por %p498, %p499
    %p502 = scmp.ne.s32.totalorder %s487, %s501
    %p503 = scmp.eq.s32.totalorder %s36, 0
    %p504 = por %p502, %p503
    %s506 = sadd.s32 %s505, 1
    %p509 = scmp.eq.s32.totalorder %s30, 1
    %p510 = scmp.ne.s32.totalorder %s505, %s507
    %p511 = scmp.eq.s32.totalorder %s30, 0
    %p512 = por %p510, %p511
    %p513 = scmp.ne.s32.totalorder %s505, %s507
    %p514 = scmp.eq.s32.totalorder %s35, 1
    %p515 = por %p513, %p514
    %p516 = scmp.ne.s32.totalorder %s507, %s508
    %p517 = scmp.eq.s32.totalorder %s35, 0
    %p518 = por %p516, %p517
    %p519 = scmp.ne.s32.totalorder %s507, %s508
    %p520 = scmp.eq.s32.totalorder %s36, 1
    %p521 = por %p519, %p520
    %p523 = scmp.ne.s32.totalorder %s508, %s522
    %p524 = scmp.eq.s32.totalorder %s36, 0
    %p525 = por %p523, %p524
    %s527 = sadd.s32 %s526, 1
    %p530 = scmp.eq.s32.totalorder %s30, 1
    %p531 = scmp.ne.s32.totalorder %s526, %s528
    %p532 = scmp.eq.s32.totalorder %s30, 0
    %p533 = por %p531, %p532
    %p534 = scmp.ne.s32.totalorder %s526, %s528
    %p535 = scmp.eq.s32.totalorder %s35, 1
    %p536 = por %p534, %p535
    %p537 = scmp.ne.s32.totalorder %s528, %s529
    %p538 = scmp.eq.s32.totalorder %s35, 0
    %p539 = por %p537, %p538
    %p540 = scmp.ne.s32.totalorder %s528, %s529
    %p541 = scmp.eq.s32.totalorder %s36, 1
    %p542 = por %p540, %p541
    %p544 = scmp.ne.s32.totalorder %s529, %s543
    %p545 = scmp.eq.s32.totalorder %s36, 0
    %p546 = por %p544, %p545
    %s547 = ssub.s32 %s30, %s37
    %p548 = scmp.eq.s32.totalorder %s547, 0
    %s550 = sadd.s32 %s549, 1
    %s551 = scalar_select %p548, %s549, %s550
    %p554 = pneg %p548
    %p555 = scmp.eq.s32.totalorder %s30, 1
    %p556 = por %p554, %p555
    %p557 = scmp.ne.s32.totalorder %s549, %s552
    %p558 = scmp.eq.s32.totalorder %s30, 0
    %p559 = por %p557, %p558
    %p560 = scmp.ne.s32.totalorder %s549, %s552
    %p561 = scmp.eq.s32.totalorder %s35, 1
    %p562 = por %p560, %p561
    %p563 = scmp.ne.s32.totalorder %s552, %s553
    %p564 = scmp.eq.s32.totalorder %s35, 0
    %p565 = por %p563, %p564
    %p566 = scmp.ne.s32.totalorder %s552, %s553
    %p567 = scmp.eq.s32.totalorder %s36, 1
    %p568 = por %p566, %p567
    %p570 = scmp.ne.s32.totalorder %s553, %s569
    %p571 = scmp.eq.s32.totalorder %s36, 0
    %p572 = por %p570, %p571
    %p573 = scmp.le.s32.totalorder 1, %s30
    %p574 = scmp.lt.s32.totalorder %s30, 3
    %p575 = pnand %p573, %p574
    %p576 = pneg %p575
    // Predicated region
    $region9: #{forward.1} parent=5 // pred_check
      _
    $region10: #{forward.1} parent=5 // pred_check_branch
      %578 = sbr.rel (%p575) target = $region12
    $region11: #{forward.1} parent=5 // pred_region
      %s579 = ssub.s32 %s30, 1
      // Predicated region
      $region13: #{forward.1} parent=11 // pred_check
        %p580 = pneg %p77
      $region14: #{forward.1} parent=11 // pred_check_branch
        %582 = sbr.rel (%p580) target = $region16
      $region15: #{forward.1} parent=11 // pred_region
        _
      $region16: #{forward.1} parent=11 // pred_fallthru
        _
      // Predicated region
      $region17: #{forward.1} parent=11 // pred_check
        %p583 = pneg %p98
      $region18: #{forward.1} parent=11 // pred_check_branch
        %585 = sbr.rel (%p583) target = $region20
      $region19: #{forward.1} parent=11 // pred_region
        _
      $region20: #{forward.1} parent=11 // pred_fallthru
        _
      // Predicated region
      $region21: #{forward.1} parent=11 // pred_check
        %p586 = pneg %p119
      $region22: #{forward.1} parent=11 // pred_check_branch
        %588 = sbr.rel (%p586) target = $region24
      $region23: #{forward.1} parent=11 // pred_region
        _
      $region24: #{forward.1} parent=11 // pred_fallthru
        _
      // Predicated region
      $region25: #{forward.1} parent=11 // pred_check
        %p589 = pneg %p140
      $region26: #{forward.1} parent=11 // pred_check_branch
        %591 = sbr.rel (%p589) target = $region28
      $region27: #{forward.1} parent=11 // pred_region
        _
      $region28: #{forward.1} parent=11 // pred_fallthru
        _
      // Predicated region
      $region29: #{forward.1} parent=11 // pred_check
        %p592 = pneg %p161
      $region30: #{forward.1} parent=11 // pred_check_branch
        %594 = sbr.rel (%p592) target = $region32
      $region31: #{forward.1} parent=11 // pred_region
        _
      $region32: #{forward.1} parent=11 // pred_fallthru
        _
      // Predicated region
      $region33: #{forward.1} parent=11 // pred_check
        %p595 = pneg %p182
      $region34: #{forward.1} parent=11 // pred_check_branch
        %597 = sbr.rel (%p595) target = $region36
      $region35: #{forward.1} parent=11 // pred_region
        _
      $region36: #{forward.1} parent=11 // pred_fallthru
        _
      // Predicated region
      $region37: #{forward.1} parent=11 // pred_check
        %p598 = pneg %p203
      $region38: #{forward.1} parent=11 // pred_check_branch
        %600 = sbr.rel (%p598) target = $region40
      $region39: #{forward.1} parent=11 // pred_region
        _
      $region40: #{forward.1} parent=11 // pred_fallthru
        _
      // Predicated region
      $region41: #{forward.1} parent=11 // pred_check
        %p601 = pneg %p224
      $region42: #{forward.1} parent=11 // pred_check_branch
        %603 = sbr.rel (%p601) target = $region44
      $region43: #{forward.1} parent=11 // pred_region
        _
      $region44: #{forward.1} parent=11 // pred_fallthru
        _
      // Predicated region
      $region45: #{forward.1} parent=11 // pred_check
        %p604 = pneg %p245
      $region46: #{forward.1} parent=11 // pred_check_branch
        %606 = sbr.rel (%p604) target = $region48
      $region47: #{forward.1} parent=11 // pred_region
        _
      $region48: #{forward.1} parent=11 // pred_fallthru
        _
      // Predicated region
      $region49: #{forward.1} parent=11 // pred_check
        %p607 = pneg %p266
      $region50: #{forward.1} parent=11 // pred_check_branch
        %609 = sbr.rel (%p607) target = $region52
      $region51: #{forward.1} parent=11 // pred_region
        _
      $region52: #{forward.1} parent=11 // pred_fallthru
        _
      // Predicated region
      $region53: #{forward.1} parent=11 // pred_check
        %p610 = pneg %p287
      $region54: #{forward.1} parent=11 // pred_check_branch
        %612 = sbr.rel (%p610) target = $region56
      $region55: #{forward.1} parent=11 // pred_region
        _
      $region56: #{forward.1} parent=11 // pred_fallthru
        _
      // Predicated region
      $region57: #{forward.1} parent=11 // pred_check
        %p613 = pneg %p308
      $region58: #{forward.1} parent=11 // pred_check_branch
        %615 = sbr.rel (%p613) target = $region60
      $region59: #{forward.1} parent=11 // pred_region
        _
      $region60: #{forward.1} parent=11 // pred_fallthru
        _
      // Predicated region
      $region61: #{forward.1} parent=11 // pred_check
        %p616 = pneg %p329
      $region62: #{forward.1} parent=11 // pred_check_branch
        %618 = sbr.rel (%p616) target = $region64
      $region63: #{forward.1} parent=11 // pred_region
        _
      $region64: #{forward.1} parent=11 // pred_fallthru
        _
      // Predicated region
      $region65: #{forward.1} parent=11 // pred_check
        %p619 = pneg %p350
      $region66: #{forward.1} parent=11 // pred_check_branch
        %621 = sbr.rel (%p619) target = $region68
      $region67: #{forward.1} parent=11 // pred_region
        _
      $region68: #{forward.1} parent=11 // pred_fallthru
        _
      // Predicated region
      $region69: #{forward.1} parent=11 // pred_check
        %p622 = pneg %p371
      $region70: #{forward.1} parent=11 // pred_check_branch
        %624 = sbr.rel (%p622) target = $region72
      $region71: #{forward.1} parent=11 // pred_region
        _
      $region72: #{forward.1} parent=11 // pred_fallthru
        _
      // Predicated region
      $region73: #{forward.1} parent=11 // pred_check
        %p625 = pneg %p392
      $region74: #{forward.1} parent=11 // pred_check_branch
        %627 = sbr.rel (%p625) target = $region76
      $region75: #{forward.1} parent=11 // pred_region
        _
      $region76: #{forward.1} parent=11 // pred_fallthru
        _
      // Predicated region
      $region77: #{forward.1} parent=11 // pred_check
        %p628 = pneg %p413
      $region78: #{forward.1} parent=11 // pred_check_branch
        %630 = sbr.rel (%p628) target = $region80
      $region79: #{forward.1} parent=11 // pred_region
        _
      $region80: #{forward.1} parent=11 // pred_fallthru
        _
      // Predicated region
      $region81: #{forward.1} parent=11 // pred_check
        %p631 = pneg %p434
      $region82: #{forward.1} parent=11 // pred_check_branch
        %633 = sbr.rel (%p631) target = $region84
      $region83: #{forward.1} parent=11 // pred_region
        _
      $region84: #{forward.1} parent=11 // pred_fallthru
        _
      // Predicated region
      $region85: #{forward.1} parent=11 // pred_check
        %p634 = pneg %p455
      $region86: #{forward.1} parent=11 // pred_check_branch
        %636 = sbr.rel (%p634) target = $region88
      $region87: #{forward.1} parent=11 // pred_region
        _
      $region88: #{forward.1} parent=11 // pred_fallthru
        _
      // Predicated region
      $region89: #{forward.1} parent=11 // pred_check
        %p637 = pneg %p476
      $region90: #{forward.1} parent=11 // pred_check_branch
        %639 = sbr.rel (%p637) target = $region92
      $region91: #{forward.1} parent=11 // pred_region
        _
      $region92: #{forward.1} parent=11 // pred_fallthru
        _
      // Predicated region
      $region93: #{forward.1} parent=11 // pred_check
        %p640 = pneg %p497
      $region94: #{forward.1} parent=11 // pred_check_branch
        %642 = sbr.rel (%p640) target = $region96
      $region95: #{forward.1} parent=11 // pred_region
        _
      $region96: #{forward.1} parent=11 // pred_fallthru
        _
      // Predicated region
      $region97: #{forward.1} parent=11 // pred_check
        %p643 = pneg %p518
      $region98: #{forward.1} parent=11 // pred_check_branch
        %645 = sbr.rel (%p643) target = $region100
      $region99: #{forward.1} parent=11 // pred_region
        _
      $region100: #{forward.1} parent=11 // pred_fallthru
        _
      // Predicated region
      $region101: #{forward.1} parent=11 // pred_check
        %p646 = pneg %p539
      $region102: #{forward.1} parent=11 // pred_check_branch
        %648 = sbr.rel (%p646) target = $region104
      $region103: #{forward.1} parent=11 // pred_region
        _
      $region104: #{forward.1} parent=11 // pred_fallthru
        _
    $region12: #{forward.1} parent=5 // pred_fallthru
      _
    %p649 = scmp.lt.s32.totalorder %s30, 2
    // Predicated region
    $region105: #{forward.1} parent=5 // pred_check
      %p650 = pneg %p649
    $region106: #{forward.1} parent=5 // pred_check_branch
      %652 = sbr.rel (%p650) target = $region108
    $region107: #{forward.1} parent=5 // pred_region
      // Predicated region
      $region109: #{forward.1} parent=107 // pred_check
        %p653 = pneg %p50
      $region110: #{forward.1} parent=107 // pred_check_branch
        %655 = sbr.rel (%p653) target = $region112
      $region111: #{forward.1} parent=107 // pred_region
        %p656 = scmp.lt.s32.totalorder %s30, 1
        %s657 = scalar_select %p656, %s30, 1
        %s658 = smul.addr %s657, 32
        %s659 = smul.addr %s658, 4
        %s660 = scalar_lea.vmem %s0, %s659
      $region112: #{forward.1} parent=107 // pred_fallthru
        _
    $region108: #{forward.1} parent=5 // pred_fallthru
      _
    %p661 = scmp.le.s32.totalorder 1, %s30
    %p662 = scmp.lt.s32.totalorder %s30, 3
    %p663 = pnand %p661, %p662
    %p664 = pneg %p663
    // Predicated region
    $region113: #{forward.1} parent=5 // pred_check
      _
    $region114: #{forward.1} parent=5 // pred_check_branch
      %666 = sbr.rel (%p663) target = $region116
    $region115: #{forward.1} parent=5 // pred_region
      %s667 = ssub.s32 %s30, 1
      %p668 = scmp.lt.s32.totalorder %s35, 1
      %s669 = scalar_select %p668, %s35, 1
      %s670 = smul.addr %s669, 32
      %s671 = smul.addr %s670, 4
      %s672 = scalar_lea.vmem %s0, %s671
      %p673 = pneg %p56
      %p674 = pneg %p53
      %p675 = pneg %p77
      %p676 = pneg %p74
      %p677 = pneg %p98
      %p678 = pneg %p95
      %p679 = pneg %p119
      %p680 = pneg %p116
      %p681 = pneg %p140
      %p682 = pneg %p137
      %p683 = pneg %p161
      %p684 = pneg %p158
      %p685 = pneg %p182
      %p686 = pneg %p179
      %p687 = pneg %p203
      %p688 = pneg %p200
      %p689 = pneg %p224
      %p690 = pneg %p221
      %p691 = pneg %p245
      %p692 = pneg %p242
      %p693 = pneg %p266
      %p694 = pneg %p263
      %p695 = pneg %p287
      %p696 = pneg %p284
      %p697 = pneg %p308
      %p698 = pneg %p305
      %p699 = pneg %p329
      %p700 = pneg %p326
      %p701 = pneg %p350
      %p702 = pneg %p347
      %p703 = pneg %p371
      %p704 = pneg %p368
      %p705 = pneg %p392
      %p706 = pneg %p389
      %p707 = pneg %p413
      %p708 = pneg %p410
      %p709 = pneg %p434
      %p710 = pneg %p431
      %p711 = pneg %p455
      %p712 = pneg %p452
      %p713 = pneg %p476
      %p714 = pneg %p473
      %p715 = pneg %p497
      %p716 = pneg %p494
      %p717 = pneg %p518
      %p718 = pneg %p515
      %p719 = pneg %p539
      %p720 = pneg %p536
      %p721 = pneg %p565
      %p722 = pneg %p562
      %p723 = scmp.lt.s32.totalorder %s35, 1
      %s724 = scalar_select %p723, %s35, 1
      %s725 = smul.addr %s724, 125
      %s726 = smul.addr %s725, 8
      %s727 = scalar_lea.vmem %s24, %s726
      %p728 = scmp.lt.s32.totalorder %s35, 1
      %s729 = scalar_select %p728, %s35, 1
      %s730 = smul.addr %s729, 32
      %s731 = smul.addr %s730, 4
      %s732 = scalar_lea.vmem %s0, %s731
      %p733 = scmp.lt.s32.totalorder %s35, 1
      %s734 = scalar_select %p733, %s35, 1
      %s735 = smul.addr %s734, 125
      %s736 = smul.addr %s735, 8
      %s737 = scalar_lea.vmem %s24, %s736
      %v739 = vlaneseq
      %v740 = vand.u32 %v739, 127
      %v741 = vadd.s32 %v740, 128
      %v742 = vadd.s32 %v740, 256
      %v743 = vadd.s32 %v740, 384
      %v744 = vadd.s32 %v740, 512
      %v745 = vadd.s32 %v740, 640
      %v746 = vadd.s32 %v740, 768
      %v747 = vadd.s32 %v740, 896
      %v748 = vshra.s32 %v740, 5
      %v749 = vshra.s32 %v741, 5
      %v750 = vshra.s32 %v742, 5
      %v751 = vshra.s32 %v743, 5
      %v752 = vshra.s32 %v744, 5
      %v753 = vshra.s32 %v745, 5
      %v754 = vshra.s32 %v746, 5
      %v755 = vshra.s32 %v747, 5
      %v756 = vand.u32 %v740, 31
      %v757 = vand.u32 %v741, 31
      %v758 = vand.u32 %v742, 31
      %v759 = vand.u32 %v743, 31
      %v760 = vand.u32 %v744, 31
      %v761 = vand.u32 %v745, 31
      %v762 = vand.u32 %v746, 31
      %v763 = vand.u32 %v747, 31
      %v764 = vld [vmem:[%s1] sm:$0xf]
      %v765 = vld [vmem:[%s732] sm:$0xff]
      %v766 = vld [vmem:[%s732 + $0x8] sm:$0xff]
      %v767 = vld [vmem:[%s732 + $0x10] sm:$0xff]
      %v768 = vld [vmem:[%s732 + $0x18] sm:$0xff]
      %v769 = vld [vmem:[%s732 + $0x20] sm:$0xff]
      %v770 = vld [vmem:[%s732 + $0x28] sm:$0xff]
      %v771 = vld [vmem:[%s732 + $0x30] sm:$0xff]
      %v772 = vld [vmem:[%s732 + $0x38] sm:$0xff]
      %v773 = vld [vmem:[%s732 + $0x40] sm:$0xff]
      %v774 = vld [vmem:[%s732 + $0x48] sm:$0xff]
      %v775 = vld [vmem:[%s732 + $0x50] sm:$0xff]
      %v776 = vld [vmem:[%s732 + $0x58] sm:$0xff]
      %v777 = vld [vmem:[%s732 + $0x60] sm:$0xff]
      %v778 = vld [vmem:[%s732 + $0x68] sm:$0xff]
      %v779 = vld [vmem:[%s732 + $0x70] sm:$0xff]
      %v780 = vld [vmem:[%s732 + $0x78] sm:$0xff]
      %v781 = vld [vmem:[%s2] sm:$0xff]
      %783 = vset.pattern.permute.xlu0 0
      %784 = vperm.xlu0 %783, %v781
      %v785 = vpop.permute.xlu0 %784
      %v803 = vunpack.c.l.b16 %v765
      %v804 = vunpack.c.h.b16 %v765
      %v805 = vunpack.c.l.b16 %v766
      %v806 = vunpack.c.h.b16 %v766
      %v807 = vunpack.c.l.b16 %v767
      %v808 = vunpack.c.h.b16 %v767
      %v809 = vunpack.c.l.b16 %v768
      %v810 = vunpack.c.h.b16 %v768
      %v811 = vunpack.c.l.b16 %v769
      %v812 = vunpack.c.h.b16 %v769
      %v813 = vunpack.c.l.b16 %v770
      %v814 = vunpack.c.h.b16 %v770
      %v815 = vunpack.c.l.b16 %v771
      %v816 = vunpack.c.h.b16 %v771
      %v817 = vunpack.c.l.b16 %v772
      %v818 = vunpack.c.h.b16 %v772
      %v819 = vunpack.c.l.b16 %v773
      %v820 = vunpack.c.h.b16 %v773
      %v821 = vunpack.c.l.b16 %v774
      %v822 = vunpack.c.h.b16 %v774
      %v823 = vunpack.c.l.b16 %v775
      %v824 = vunpack.c.h.b16 %v775
      %v825 = vunpack.c.l.b16 %v776
      %v826 = vunpack.c.h.b16 %v776
      %v827 = vunpack.c.l.b16 %v777
      %v828 = vunpack.c.h.b16 %v777
      %v829 = vunpack.c.l.b16 %v778
      %v830 = vunpack.c.h.b16 %v778
      %v831 = vunpack.c.l.b16 %v779
      %v832 = vunpack.c.h.b16 %v779
      %v833 = vunpack.c.l.b16 %v780
      %v834 = vunpack.c.h.b16 %v780
      %v835 = vpack.c.b16 %v811, %v803
      %v836 = vpack.c.b16 %v812, %v804
      %v837 = vpack.c.b16 %v813, %v805
      %v838 = vpack.c.b16 %v814, %v806
      %v839 = vpack.c.b16 %v815, %v807
      %v840 = vpack.c.b16 %v816, %v808
      %v841 = vpack.c.b16 %v817, %v809
      %v842 = vpack.c.b16 %v818, %v810
      %v843 = vpack.c.b16 %v827, %v819
      %v844 = vpack.c.b16 %v828, %v820
      %v845 = vpack.c.b16 %v829, %v821
      %v846 = vpack.c.b16 %v830, %v822
      %v847 = vpack.c.b16 %v831, %v823
      %v848 = vpack.c.b16 %v832, %v824
      %v849 = vpack.c.b16 %v833, %v825
      %v850 = vpack.c.b16 %v834, %v826
      %vm867 = vcmask 261120
      %v869 = vsel %vm867, %v764, 0
      %871 = vmatprep.subr.bf16.mxu0 %v836
      %872 = vmatpush1.bf16.msra.mxu0 %v835
      %873 = vmatprep.subr.bf16.mxu0 %v844
      %874 = vmatpush1.bf16.msra.mxu0 %v843
      %875 = vmatprep.subr.bf16.mxu0 0
      %876 = vmatpush1.bf16.msra.mxu0 0
      %877 = vmatprep.subr.bf16.mxu0 0
      %878 = vmatpush1.bf16.msra.mxu0 0
      %879 = vmatprep.subr.bf16.mxu0 0
      %880 = vmatpush1.bf16.msra.mxu0 0
      %881 = vmatprep.subr.bf16.mxu0 0
      %882 = vmatpush1.bf16.msra.mxu0 0
      %883 = vmatprep.subr.bf16.mxu0 0
      %884 = vmatpush1.bf16.msra.mxu0 0
      %885 = vmatprep.subr.bf16.mxu0 0
      %886 = vmatpush1.bf16.msra.mxu0 0
      %887 = vmatprep.subr.bf16.mxu0 0
      %888 = vmatpush1.bf16.msra.mxu0 0
      %889 = vmatprep.subr.bf16.mxu0 0
      %890 = vmatpush1.bf16.msra.mxu0 0
      %891 = vmatprep.subr.bf16.mxu0 0
      %892 = vmatpush1.bf16.msra.mxu0 0
      %893 = vmatprep.subr.bf16.mxu0 0
      %894 = vmatpush1.bf16.msra.mxu0 0
      %895 = vmatprep.subr.bf16.mxu0 0
      %896 = vmatpush1.bf16.msra.mxu0 0
      %897 = vmatprep.subr.bf16.mxu0 0
      %898 = vmatpush1.bf16.msra.mxu0 0
      %899 = vmatprep.subr.bf16.mxu0 0
      %900 = vmatpush1.bf16.msra.mxu0 0
      %901 = vmatprep.subr.bf16.mxu0 0
      %902 = vmatpush1.bf16.msra.mxu0 0
      %903 = vmatprep.mubr.bf16.mxu0 0
      %904 = vmatmul.mubr.bf16.gmra.mrb[0].mxu0 %v869
      %v905 = vpop.f32.mrb[0].mxu0
      %v906 = vadd.f32 %v785, %v905
      %v907 = vpop.f32.mrb[0].mxu0
      %v908 = vadd.f32 %v785, %v907
      %v909 = vpop.f32.mrb[0].mxu0
      %v910 = vpop.f32.mrb[0].mxu0
      %911 = vdwg.mxu0
      %912 = vmatprep.subr.bf16.mxu0 %v838
      %913 = vmatpush1.bf16.msra.mxu0 %v837
      %914 = vmatprep.subr.bf16.mxu0 %v846
      %915 = vmatpush1.bf16.msra.mxu0 %v845
      %916 = vmatprep.subr.bf16.mxu0 0
      %917 = vmatpush1.bf16.msra.mxu0 0
      %918 = vmatprep.subr.bf16.mxu0 0
      %919 = vmatpush1.bf16.msra.mxu0 0
      %920 = vmatprep.subr.bf16.mxu0 0
      %921 = vmatpush1.bf16.msra.mxu0 0
      %922 = vmatprep.subr.bf16.mxu0 0
      %923 = vmatpush1.bf16.msra.mxu0 0
      %924 = vmatprep.subr.bf16.mxu0 0
      %925 = vmatpush1.bf16.msra.mxu0 0
      %926 = vmatprep.subr.bf16.mxu0 0
      %927 = vmatpush1.bf16.msra.mxu0 0
      %928 = vmatprep.subr.bf16.mxu0 0
      %929 = vmatpush1.bf16.msra.mxu0 0
      %930 = vmatprep.subr.bf16.mxu0 0
      %931 = vmatpush1.bf16.msra.mxu0 0
      %932 = vmatprep.subr.bf16.mxu0 0
      %933 = vmatpush1.bf16.msra.mxu0 0
      %934 = vmatprep.subr.bf16.mxu0 0
      %935 = vmatpush1.bf16.msra.mxu0 0
      %936 = vmatprep.subr.bf16.mxu0 0
      %937 = vmatpush1.bf16.msra.mxu0 0
      %938 = vmatprep.subr.bf16.mxu0 0
      %939 = vmatpush1.bf16.msra.mxu0 0
      %940 = vmatprep.subr.bf16.mxu0 0
      %941 = vmatpush1.bf16.msra.mxu0 0
      %942 = vmatprep.subr.bf16.mxu0 0
      %943 = vmatpush1.bf16.msra.mxu0 0
      %944 = vmatprep.mubr.bf16.mxu0 0
      %945 = vmatmul.mubr.bf16.gmra.mrb[0].mxu0 %v869
      %v946 = vpop.f32.mrb[0].mxu0
      %v947 = vadd.f32 %v785, %v946
      %v948 = vpop.f32.mrb[0].mxu0
      %v949 = vadd.f32 %v785, %v948
      %v950 = vpop.f32.mrb[0].mxu0
      %v951 = vpop.f32.mrb[0].mxu0
      %952 = vdwg.mxu0
      %953 = vmatprep.subr.bf16.mxu0 %v840
      %954 = vmatpush1.bf16.msra.mxu0 %v839
      %955 = vmatprep.subr.bf16.mxu0 %v848
      %956 = vmatpush1.bf16.msra.mxu0 %v847
      %957 = vmatprep.subr.bf16.mxu0 0
      %958 = vmatpush1.bf16.msra.mxu0 0
      %959 = vmatprep.subr.bf16.mxu0 0
      %960 = vmatpush1.bf16.msra.mxu0 0
      %961 = vmatprep.subr.bf16.mxu0 0
      %962 = vmatpush1.bf16.msra.mxu0 0
      %963 = vmatprep.subr.bf16.mxu0 0
      %964 = vmatpush1.bf16.msra.mxu0 0
      %965 = vmatprep.subr.bf16.mxu0 0
      %966 = vmatpush1.bf16.msra.mxu0 0
      %967 = vmatprep.subr.bf16.mxu0 0
      %968 = vmatpush1.bf16.msra.mxu0 0
      %969 = vmatprep.subr.bf16.mxu0 0
      %970 = vmatpush1.bf16.msra.mxu0 0
      %971 = vmatprep.subr.bf16.mxu0 0
      %972 = vmatpush1.bf16.msra.mxu0 0
      %973 = vmatprep.subr.bf16.mxu0 0
      %974 = vmatpush1.bf16.msra.mxu0 0
      %975 = vmatprep.subr.bf16.mxu0 0
      %976 = vmatpush1.bf16.msra.mxu0 0
      %977 = vmatprep.subr.bf16.mxu0 0
      %978 = vmatpush1.bf16.msra.mxu0 0
      %979 = vmatprep.subr.bf16.mxu0 0
      %980 = vmatpush1.bf16.msra.mxu0 0
      %981 = vmatprep.subr.bf16.mxu0 0
      %982 = vmatpush1.bf16.msra.mxu0 0
      %983 = vmatprep.subr.bf16.mxu0 0
      %984 = vmatpush1.bf16.msra.mxu0 0
      %985 = vmatprep.mubr.bf16.mxu0 0
      %986 = vmatmul.mubr.bf16.gmra.mrb[0].mxu0 %v869
      %v987 = vpop.f32.mrb[0].mxu0
      %v988 = vadd.f32 %v785, %v987
      %v989 = vpop.f32.mrb[0].mxu0
      %v990 = vadd.f32 %v785, %v989
      %v991 = vpop.f32.mrb[0].mxu0
      %v992 = vpop.f32.mrb[0].mxu0
      %993 = vdwg.mxu0
      %994 = vmatprep.subr.bf16.mxu0 %v842
      %995 = vmatpush1.bf16.msra.mxu0 %v841
      %996 = vmatprep.subr.bf16.mxu0 %v850
      %997 = vmatpush1.bf16.msra.mxu0 %v849
      %998 = vmatprep.subr.bf16.mxu0 0
      %999 = vmatpush1.bf16.msra.mxu0 0
      %1000 = vmatprep.subr.bf16.mxu0 0
      %1001 = vmatpush1.bf16.msra.mxu0 0
      %1002 = vmatprep.subr.bf16.mxu0 0
      %1003 = vmatpush1.bf16.msra.mxu0 0
      %1004 = vmatprep.subr.bf16.mxu0 0
      %1005 = vmatpush1.bf16.msra.mxu0 0
      %1006 = vmatprep.subr.bf16.mxu0 0
      %1007 = vmatpush1.bf16.msra.mxu0 0
      %1008 = vmatprep.subr.bf16.mxu0 0
      %1009 = vmatpush1.bf16.msra.mxu0 0
      %1010 = vmatprep.subr.bf16.mxu0 0
      %1011 = vmatpush1.bf16.msra.mxu0 0
      %1012 = vmatprep.subr.bf16.mxu0 0
      %1013 = vmatpush1.bf16.msra.mxu0 0
      %1014 = vmatprep.subr.bf16.mxu0 0
      %1015 = vmatpush1.bf16.msra.mxu0 0
      %1016 = vmatprep.subr.bf16.mxu0 0
      %1017 = vmatpush1.bf16.msra.mxu0 0
      %1018 = vmatprep.subr.bf16.mxu0 0
      %1019 = vmatpush1.bf16.msra.mxu0 0
      %1020 = vmatprep.subr.bf16.mxu0 0
      %1021 = vmatpush1.bf16.msra.mxu0 0
      %1022 = vmatprep.subr.bf16.mxu0 0
      %1023 = vmatpush1.bf16.msra.mxu0 0
      %1024 = vmatprep.subr.bf16.mxu0 0
      %1025 = vmatpush1.bf16.msra.mxu0 0
      %1026 = vmatprep.mubr.bf16.mxu0 0
      %1027 = vmatmul.mubr.bf16.gmra.mrb[0].mxu0 %v869
      %v1028 = vpop.f32.mrb[0].mxu0
      %v1029 = vadd.f32 %v785, %v1028
      %v1030 = vpop.f32.mrb[0].mxu0
      %v1031 = vadd.f32 %v785, %v1030
      %v1032 = vpop.f32.mrb[0].mxu0
      %v1033 = vpop.f32.mrb[0].mxu0
      %1034 = vdwg.mxu0
      %v1035 = vsub.f32 0.0, %v906
      %v1036 = vsub.f32 0.0, %v908
      %v1037 = vsub.f32 0.0, %v947
      %v1038 = vsub.f32 0.0, %v949
      %v1039 = vsub.f32 0.0, %v988
      %v1040 = vsub.f32 0.0, %v990
      %v1041 = vsub.f32 0.0, %v1029
      %v1042 = vsub.f32 0.0, %v1031
      %v1043 = vmul.f32 %v1035, 1.442695
      %v1044 = vpow.pop %v1043
      %v1045 = vmul.f32 %v1036, 1.442695
      %v1046 = vpow.pop %v1045
      %v1047 = vmul.f32 %v1037, 1.442695
      %v1048 = vpow.pop %v1047
      %v1049 = vmul.f32 %v1038, 1.442695
      %v1050 = vpow.pop %v1049
      %v1051 = vmul.f32 %v1039, 1.442695
      %v1052 = vpow.pop %v1051
      %v1053 = vmul.f32 %v1040, 1.442695
      %v1054 = vpow.pop %v1053
      %v1055 = vmul.f32 %v1041, 1.442695
      %v1056 = vpow.pop %v1055
      %v1057 = vmul.f32 %v1042, 1.442695
      %v1058 = vpow.pop %v1057
      %v1059 = vadd.f32 %v1044, 1.0
      %v1060 = vadd.f32 %v1046, 1.0
      %v1061 = vadd.f32 %v1048, 1.0
      %v1062 = vadd.f32 %v1050, 1.0
      %v1063 = vadd.f32 %v1052, 1.0
      %v1064 = vadd.f32 %v1054, 1.0
      %v1065 = vadd.f32 %v1056, 1.0
      %v1066 = vadd.f32 %v1058, 1.0
      %v1067 = vrcp.pop %v1059
      %v1068 = vrcp.pop %v1060
      %v1069 = vrcp.pop %v1061
      %v1070 = vrcp.pop %v1062
      %v1071 = vrcp.pop %v1063
      %v1072 = vrcp.pop %v1064
      %v1073 = vrcp.pop %v1065
      %v1074 = vrcp.pop %v1066
      %v1075 = vmul.f32 %v906, %v1067
      %v1076 = vmul.f32 %v908, %v1068
      %v1077 = vmul.f32 %v947, %v1069
      %v1078 = vmul.f32 %v949, %v1070
      %v1079 = vmul.f32 %v988, %v1071
      %v1080 = vmul.f32 %v990, %v1072
      %v1081 = vmul.f32 %v1029, %v1073
      %v1082 = vmul.f32 %v1031, %v1074
      %1083 = vrot.lane.b32.xlu0 %v1075, 33
      %v1084 = vpop.permute.xlu0 %1083
      %1085 = vrot.lane.b32.xlu0 %v1076, 33
      %v1086 = vpop.permute.xlu0 %1085
      %1087 = vrot.lane.b32.xlu0 %v1077, 33
      %v1088 = vpop.permute.xlu0 %1087
      %1089 = vrot.lane.b32.xlu0 %v1078, 33
      %v1090 = vpop.permute.xlu0 %1089
      %1091 = vrot.lane.b32.xlu0 %v1079, 33
      %v1092 = vpop.permute.xlu0 %1091
      %1093 = vrot.lane.b32.xlu0 %v1080, 33
      %v1094 = vpop.permute.xlu0 %1093
      %1095 = vrot.lane.b32.xlu0 %v1081, 33
      %v1096 = vpop.permute.xlu0 %1095
      %1097 = vrot.lane.b32.xlu0 %v1082, 33
      %v1098 = vpop.permute.xlu0 %1097
      %vm1099 = vcmp.lt.s32.totalorder %v740, 33
      %v1100 = vsel %vm1099, %v1096, %v1098
      %v1101 = vsel %vm1099, %v1094, %v1096
      %v1102 = vsel %vm1099, %v1092, %v1094
      %v1103 = vsel %vm1099, %v1090, %v1092
      %v1104 = vsel %vm1099, %v1088, %v1090
      %v1105 = vsel %vm1099, %v1086, %v1088
      %v1106 = vsel %vm1099, %v1084, %v1086
      %v1107 = vsel %vm1099, %v1098, %v1084
      %vm1108 = vcmp.ge.s32.totalorder %v748, 1
      %vm1109 = vcmp.ge.s32.totalorder %v749, 1
      %vm1110 = vcmp.ge.s32.totalorder %v750, 1
      %vm1111 = vcmp.ge.s32.totalorder %v751, 1
      %vm1112 = vcmp.ge.s32.totalorder %v752, 1
      %vm1113 = vcmp.ge.s32.totalorder %v753, 1
      %vm1114 = vcmp.ge.s32.totalorder %v754, 1
      %vm1115 = vcmp.ge.s32.totalorder %v755, 1
      %vm1116 = vcmp.ge.s32.totalorder %v756, 1
      %vm1117 = vcmp.ge.s32.totalorder %v757, 1
      %vm1118 = vcmp.ge.s32.totalorder %v758, 1
      %vm1119 = vcmp.ge.s32.totalorder %v759, 1
      %vm1120 = vcmp.ge.s32.totalorder %v760, 1
      %vm1121 = vcmp.ge.s32.totalorder %v761, 1
      %vm1122 = vcmp.ge.s32.totalorder %v762, 1
      %vm1123 = vcmp.ge.s32.totalorder %v763, 1
      %vm1124 = vmand %vm1108, %vm1116
      %vm1125 = vmand %vm1109, %vm1117
      %vm1126 = vmand %vm1110, %vm1118
      %vm1127 = vmand %vm1111, %vm1119
      %vm1128 = vmand %vm1112, %vm1120
      %vm1129 = vmand %vm1113, %vm1121
      %vm1130 = vmand %vm1114, %vm1122
      %vm1131 = vmand %vm1115, %vm1123
      %v1132 = vsel %vm1124, 1, 0
      %v1133 = vsel %vm1125, 1, 0
      %v1134 = vsel %vm1126, 1, 0
      %v1135 = vsel %vm1127, 1, 0
      %v1136 = vsel %vm1128, 1, 0
      %v1137 = vsel %vm1129, 1, 0
      %v1138 = vsel %vm1130, 1, 0
      %v1139 = vsel %vm1131, 1, 0
      %v1140 = vcvt.s32.f32 %v1132
      %v1141 = vcvt.s32.f32 %v1133
      %v1142 = vcvt.s32.f32 %v1134
      %v1143 = vcvt.s32.f32 %v1135
      %v1144 = vcvt.s32.f32 %v1136
      %v1145 = vcvt.s32.f32 %v1137
      %v1146 = vcvt.s32.f32 %v1138
      %v1147 = vcvt.s32.f32 %v1139
      %v1148 = vmul.f32 %v1107, %v1140
      %v1149 = vmul.f32 %v1106, %v1141
      %v1150 = vmul.f32 %v1105, %v1142
      %v1151 = vmul.f32 %v1104, %v1143
      %v1152 = vmul.f32 %v1103, %v1144
      %v1153 = vmul.f32 %v1102, %v1145
      %v1154 = vmul.f32 %v1101, %v1146
      %v1155 = vmul.f32 %v1100, %v1147
      %v1156 = vld [vmem:[%s3] sm:$0xff]
      %1158 = vset.pattern.permute.xlu0 0
      %1159 = vperm.xlu0 %1158, %v1156
      %v1160 = vpop.permute.xlu0 %1159
      %v1162 = vmul.f32 %v1148, %v1160
      %v1163 = vmul.f32 %v1149, %v1160
      %v1164 = vmul.f32 %v1150, %v1160
      %v1165 = vmul.f32 %v1151, %v1160
      %v1166 = vmul.f32 %v1152, %v1160
      %v1167 = vmul.f32 %v1153, %v1160
      %v1168 = vmul.f32 %v1154, %v1160
      %v1169 = vmul.f32 %v1155, %v1160
      %v1170 = vadd.f32 %v1162, 0.0
      %v1171 = vadd.f32 %v1163, 0.0
      %v1172 = vadd.f32 %v1164, 0.0
      %v1173 = vadd.f32 %v1165, 0.0
      %v1174 = vadd.f32 %v1166, 0.0
      %v1175 = vadd.f32 %v1167, 0.0
      %v1176 = vadd.f32 %v1168, 0.0
      %v1177 = vadd.f32 %v1169, 0.0
      %1178 = vrot.lane.b32.xlu0 %v1075, 32
      %v1179 = vpop.permute.xlu0 %1178
      %1180 = vrot.lane.b32.xlu0 %v1076, 32
      %v1181 = vpop.permute.xlu0 %1180
      %1182 = vrot.lane.b32.xlu0 %v1077, 32
      %v1183 = vpop.permute.xlu0 %1182
      %1184 = vrot.lane.b32.xlu0 %v1078, 32
      %v1185 = vpop.permute.xlu0 %1184
      %1186 = vrot.lane.b32.xlu0 %v1079, 32
      %v1187 = vpop.permute.xlu0 %1186
      %1188 = vrot.lane.b32.xlu0 %v1080, 32
      %v1189 = vpop.permute.xlu0 %1188
      %1190 = vrot.lane.b32.xlu0 %v1081, 32
      %v1191 = vpop.permute.xlu0 %1190
      %1192 = vrot.lane.b32.xlu0 %v1082, 32
      %v1193 = vpop.permute.xlu0 %1192
      %vm1194 = vcmp.lt.s32.totalorder %v740, 32
      %v1195 = vsel %vm1194, %v1191, %v1193
      %v1196 = vsel %vm1194, %v1189, %v1191
      %v1197 = vsel %vm1194, %v1187, %v1189
      %v1198 = vsel %vm1194, %v1185, %v1187
      %v1199 = vsel %vm1194, %v1183, %v1185
      %v1200 = vsel %vm1194, %v1181, %v1183
      %v1201 = vsel %vm1194, %v1179, %v1181
      %v1202 = vsel %vm1194, %v1193, %v1179
      %v1203 = vsel %vm1108, 1, 0
      %v1204 = vsel %vm1109, 1, 0
      %v1205 = vsel %vm1110, 1, 0
      %v1206 = vsel %vm1111, 1, 0
      %v1207 = vsel %vm1112, 1, 0
      %v1208 = vsel %vm1113, 1, 0
      %v1209 = vsel %vm1114, 1, 0
      %v1210 = vsel %vm1115, 1, 0
      %v1211 = vcvt.s32.f32 %v1203
      %v1212 = vcvt.s32.f32 %v1204
      %v1213 = vcvt.s32.f32 %v1205
      %v1214 = vcvt.s32.f32 %v1206
      %v1215 = vcvt.s32.f32 %v1207
      %v1216 = vcvt.s32.f32 %v1208
      %v1217 = vcvt.s32.f32 %v1209
      %v1218 = vcvt.s32.f32 %v1210
      %v1219 = vmul.f32 %v1202, %v1211
      %v1220 = vmul.f32 %v1201, %v1212
      %v1221 = vmul.f32 %v1200, %v1213
      %v1222 = vmul.f32 %v1199, %v1214
      %v1223 = vmul.f32 %v1198, %v1215
      %v1224 = vmul.f32 %v1197, %v1216
      %v1225 = vmul.f32 %v1196, %v1217
      %v1226 = vmul.f32 %v1195, %v1218
      %s1227 = scalar_lea.vmem %s3, 8
      %v1228 = vld [vmem:[%s1227] sm:$0xff]
      %1230 = vset.pattern.permute.xlu0 0
      %1231 = vperm.xlu0 %1230, %v1228
      %v1232 = vpop.permute.xlu0 %1231
      %v1234 = vmul.f32 %v1219, %v1232
      %v1235 = vmul.f32 %v1220, %v1232
      %v1236 = vmul.f32 %v1221, %v1232
      %v1237 = vmul.f32 %v1222, %v1232
      %v1238 = vmul.f32 %v1223, %v1232
      %v1239 = vmul.f32 %v1224, %v1232
      %v1240 = vmul.f32 %v1225, %v1232
      %v1241 = vmul.f32 %v1226, %v1232
      %v1242 = vadd.f32 %v1170, %v1234
      %v1243 = vadd.f32 %v1171, %v1235
      %v1244 = vadd.f32 %v1172, %v1236
      %v1245 = vadd.f32 %v1173, %v1237
      %v1246 = vadd.f32 %v1174, %v1238
      %v1247 = vadd.f32 %v1175, %v1239
      %v1248 = vadd.f32 %v1176, %v1240
      %v1249 = vadd.f32 %v1177, %v1241
      %1250 = vrot.lane.b32.xlu0 %v1075, 31
      %v1251 = vpop.permute.xlu0 %1250
      %1252 = vrot.lane.b32.xlu0 %v1076, 31
      %v1253 = vpop.permute.xlu0 %1252
      %1254 = vrot.lane.b32.xlu0 %v1077, 31
      %v1255 = vpop.permute.xlu0 %1254
      %1256 = vrot.lane.b32.xlu0 %v1078, 31
      %v1257 = vpop.permute.xlu0 %1256
      %1258 = vrot.lane.b32.xlu0 %v1079, 31
      %v1259 = vpop.permute.xlu0 %1258
      %1260 = vrot.lane.b32.xlu0 %v1080, 31
      %v1261 = vpop.permute.xlu0 %1260
      %1262 = vrot.lane.b32.xlu0 %v1081, 31
      %v1263 = vpop.permute.xlu0 %1262
      %1264 = vrot.lane.b32.xlu0 %v1082, 31
      %v1265 = vpop.permute.xlu0 %1264
      %vm1266 = vcmp.lt.s32.totalorder %v740, 31
      %v1267 = vsel %vm1266, %v1263, %v1265
      %v1268 = vsel %vm1266, %v1261, %v1263
      %v1269 = vsel %vm1266, %v1259, %v1261
      %v1270 = vsel %vm1266, %v1257, %v1259
      %v1271 = vsel %vm1266, %v1255, %v1257
      %v1272 = vsel %vm1266, %v1253, %v1255
      %v1273 = vsel %vm1266, %v1251, %v1253
      %v1274 = vsel %vm1266, %v1265, %v1251
      %vm1275 = vcmp.lt.s32.totalorder %v756, 31
      %vm1276 = vcmp.lt.s32.totalorder %v757, 31
      %vm1277 = vcmp.lt.s32.totalorder %v758, 31
      %vm1278 = vcmp.lt.s32.totalorder %v759, 31
      %vm1279 = vcmp.lt.s32.totalorder %v760, 31
      %vm1280 = vcmp.lt.s32.totalorder %v761, 31
      %vm1281 = vcmp.lt.s32.totalorder %v762, 31
      %vm1282 = vcmp.lt.s32.totalorder %v763, 31
      %vm1283 = vmand %vm1108, %vm1275
      %vm1284 = vmand %vm1109, %vm1276
      %vm1285 = vmand %vm1110, %vm1277
      %vm1286 = vmand %vm1111, %vm1278
      %vm1287 = vmand %vm1112, %vm1279
      %vm1288 = vmand %vm1113, %vm1280
      %vm1289 = vmand %vm1114, %vm1281
      %vm1290 = vmand %vm1115, %vm1282
      %v1291 = vsel %vm1283, 1, 0
      %v1292 = vsel %vm1284, 1, 0
      %v1293 = vsel %vm1285, 1, 0
      %v1294 = vsel %vm1286, 1, 0
      %v1295 = vsel %vm1287, 1, 0
      %v1296 = vsel %vm1288, 1, 0
      %v1297 = vsel %vm1289, 1, 0
      %v1298 = vsel %vm1290, 1, 0
      %v1299 = vcvt.s32.f32 %v1291
      %v1300 = vcvt.s32.f32 %v1292
      %v1301 = vcvt.s32.f32 %v1293
      %v1302 = vcvt.s32.f32 %v1294
      %v1303 = vcvt.s32.f32 %v1295
      %v1304 = vcvt.s32.f32 %v1296
      %v1305 = vcvt.s32.f32 %v1297
      %v1306 = vcvt.s32.f32 %v1298
      %v1307 = vmul.f32 %v1274, %v1299
      %v1308 = vmul.f32 %v1273, %v1300
      %v1309 = vmul.f32 %v1272, %v1301
      %v1310 = vmul.f32 %v1271, %v1302
      %v1311 = vmul.f32 %v1270, %v1303
      %v1312 = vmul.f32 %v1269, %v1304
      %v1313 = vmul.f32 %v1268, %v1305
      %v1314 = vmul.f32 %v1267, %v1306
      %s1315 = scalar_lea.vmem %s3, 16
      %v1316 = vld [vmem:[%s1315] sm:$0xff]
      %1318 = vset.pattern.permute.xlu0 0
      %1319 = vperm.xlu0 %1318, %v1316
      %v1320 = vpop.permute.xlu0 %1319
      %v1322 = vmul.f32 %v1307, %v1320
      %v1323 = vmul.f32 %v1308, %v1320
      %v1324 = vmul.f32 %v1309, %v1320
      %v1325 = vmul.f32 %v1310, %v1320
      %v1326 = vmul.f32 %v1311, %v1320
      %v1327 = vmul.f32 %v1312, %v1320
      %v1328 = vmul.f32 %v1313, %v1320
      %v1329 = vmul.f32 %v1314, %v1320
      %v1330 = vadd.f32 %v1242, %v1322
      %v1331 = vadd.f32 %v1243, %v1323
      %v1332 = vadd.f32 %v1244, %v1324
      %v1333 = vadd.f32 %v1245, %v1325
      %v1334 = vadd.f32 %v1246, %v1326
      %v1335 = vadd.f32 %v1247, %v1327
      %v1336 = vadd.f32 %v1248, %v1328
      %v1337 = vadd.f32 %v1249, %v1329
      %1338 = vrot.lane.b32.xlu0 %v1075, 1
      %v1339 = vpop.permute.xlu0 %1338
      %1340 = vrot.lane.b32.xlu0 %v1076, 1
      %v1341 = vpop.permute.xlu0 %1340
      %1342 = vrot.lane.b32.xlu0 %v1077, 1
      %v1343 = vpop.permute.xlu0 %1342
      %1344 = vrot.lane.b32.xlu0 %v1078, 1
      %v1345 = vpop.permute.xlu0 %1344
      %1346 = vrot.lane.b32.xlu0 %v1079, 1
      %v1347 = vpop.permute.xlu0 %1346
      %1348 = vrot.lane.b32.xlu0 %v1080, 1
      %v1349 = vpop.permute.xlu0 %1348
      %1350 = vrot.lane.b32.xlu0 %v1081, 1
      %v1351 = vpop.permute.xlu0 %1350
      %1352 = vrot.lane.b32.xlu0 %v1082, 1
      %v1353 = vpop.permute.xlu0 %1352
      %vm1354 = vcmp.lt.s32.totalorder %v740, 1
      %v1355 = vsel %vm1354, %v1351, %v1353
      %v1356 = vsel %vm1354, %v1349, %v1351
      %v1357 = vsel %vm1354, %v1347, %v1349
      %v1358 = vsel %vm1354, %v1345, %v1347
      %v1359 = vsel %vm1354, %v1343, %v1345
      %v1360 = vsel %vm1354, %v1341, %v1343
      %v1361 = vsel %vm1354, %v1339, %v1341
      %v1362 = vsel %vm1354, %v1353, %v1339
      %v1363 = vsel %vm1116, 1, 0
      %v1364 = vsel %vm1117, 1, 0
      %v1365 = vsel %vm1118, 1, 0
      %v1366 = vsel %vm1119, 1, 0
      %v1367 = vsel %vm1120, 1, 0
      %v1368 = vsel %vm1121, 1, 0
      %v1369 = vsel %vm1122, 1, 0
      %v1370 = vsel %vm1123, 1, 0
      %v1371 = vcvt.s32.f32 %v1363
      %v1372 = vcvt.s32.f32 %v1364
      %v1373 = vcvt.s32.f32 %v1365
      %v1374 = vcvt.s32.f32 %v1366
      %v1375 = vcvt.s32.f32 %v1367
      %v1376 = vcvt.s32.f32 %v1368
      %v1377 = vcvt.s32.f32 %v1369
      %v1378 = vcvt.s32.f32 %v1370
      %v1379 = vmul.f32 %v1362, %v1371
      %v1380 = vmul.f32 %v1361, %v1372
      %v1381 = vmul.f32 %v1360, %v1373
      %v1382 = vmul.f32 %v1359, %v1374
      %v1383 = vmul.f32 %v1358, %v1375
      %v1384 = vmul.f32 %v1357, %v1376
      %v1385 = vmul.f32 %v1356, %v1377
      %v1386 = vmul.f32 %v1355, %v1378
      %s1387 = scalar_lea.vmem %s3, 24
      %v1388 = vld [vmem:[%s1387] sm:$0xff]
      %1390 = vset.pattern.permute.xlu0 0
      %1391 = vperm.xlu0 %1390, %v1388
      %v1392 = vpop.permute.xlu0 %1391
      %v1394 = vmul.f32 %v1379, %v1392
      %v1395 = vmul.f32 %v1380, %v1392
      %v1396 = vmul.f32 %v1381, %v1392
      %v1397 = vmul.f32 %v1382, %v1392
      %v1398 = vmul.f32 %v1383, %v1392
      %v1399 = vmul.f32 %v1384, %v1392
      %v1400 = vmul.f32 %v1385, %v1392
      %v1401 = vmul.f32 %v1386, %v1392
      %v1402 = vadd.f32 %v1330, %v1394
      %v1403 = vadd.f32 %v1331, %v1395
      %v1404 = vadd.f32 %v1332, %v1396
      %v1405 = vadd.f32 %v1333, %v1397
      %v1406 = vadd.f32 %v1334, %v1398
      %v1407 = vadd.f32 %v1335, %v1399
      %v1408 = vadd.f32 %v1336, %v1400
      %v1409 = vadd.f32 %v1337, %v1401
      %s1410 = scalar_lea.vmem %s3, 32
      %v1411 = vld [vmem:[%s1410] sm:$0xff]
      %1413 = vset.pattern.permute.xlu0 0
      %1414 = vperm.xlu0 %1413, %v1411
      %v1415 = vpop.permute.xlu0 %1414
      %v1417 = vmul.f32 %v1075, %v1415
      %v1418 = vmul.f32 %v1076, %v1415
      %v1419 = vmul.f32 %v1077, %v1415
      %v1420 = vmul.f32 %v1078, %v1415
      %v1421 = vmul.f32 %v1079, %v1415
      %v1422 = vmul.f32 %v1080, %v1415
      %v1423 = vmul.f32 %v1081, %v1415
      %v1424 = vmul.f32 %v1082, %v1415
      %v1425 = vadd.f32 %v1402, %v1417
      %v1426 = vadd.f32 %v1403, %v1418
      %v1427 = vadd.f32 %v1404, %v1419
      %v1428 = vadd.f32 %v1405, %v1420
      %v1429 = vadd.f32 %v1406, %v1421
      %v1430 = vadd.f32 %v1407, %v1422
      %v1431 = vadd.f32 %v1408, %v1423
      %v1432 = vadd.f32 %v1409, %v1424
      %1433 = vrot.lane.b32.xlu0 %v1075, 127
      %v1434 = vpop.permute.xlu0 %1433
      %1435 = vrot.lane.b32.xlu0 %v1076, 127
      %v1436 = vpop.permute.xlu0 %1435
      %1437 = vrot.lane.b32.xlu0 %v1077, 127
      %v1438 = vpop.permute.xlu0 %1437
      %1439 = vrot.lane.b32.xlu0 %v1078, 127
      %v1440 = vpop.permute.xlu0 %1439
      %1441 = vrot.lane.b32.xlu0 %v1079, 127
      %v1442 = vpop.permute.xlu0 %1441
      %1443 = vrot.lane.b32.xlu0 %v1080, 127
      %v1444 = vpop.permute.xlu0 %1443
      %1445 = vrot.lane.b32.xlu0 %v1081, 127
      %v1446 = vpop.permute.xlu0 %1445
      %1447 = vrot.lane.b32.xlu0 %v1082, 127
      %v1448 = vpop.permute.xlu0 %1447
      %vm1449 = vcmp.lt.s32.totalorder %v740, 127
      %v1450 = vsel %vm1449, %v1446, %v1448
      %v1451 = vsel %vm1449, %v1444, %v1446
      %v1452 = vsel %vm1449, %v1442, %v1444
      %v1453 = vsel %vm1449, %v1440, %v1442
      %v1454 = vsel %vm1449, %v1438, %v1440
      %v1455 = vsel %vm1449, %v1436, %v1438
      %v1456 = vsel %vm1449, %v1434, %v1436
      %v1457 = vsel %vm1449, %v1448, %v1434
      %v1458 = vsel %vm1275, 1, 0
      %v1459 = vsel %vm1276, 1, 0
      %v1460 = vsel %vm1277, 1, 0
      %v1461 = vsel %vm1278, 1, 0
      %v1462 = vsel %vm1279, 1, 0
      %v1463 = vsel %vm1280, 1, 0
      %v1464 = vsel %vm1281, 1, 0
      %v1465 = vsel %vm1282, 1, 0
      %v1466 = vcvt.s32.f32 %v1458
      %v1467 = vcvt.s32.f32 %v1459
      %v1468 = vcvt.s32.f32 %v1460
      %v1469 = vcvt.s32.f32 %v1461
      %v1470 = vcvt.s32.f32 %v1462
      %v1471 = vcvt.s32.f32 %v1463
      %v1472 = vcvt.s32.f32 %v1464
      %v1473 = vcvt.s32.f32 %v1465
      %v1474 = vmul.f32 %v1456, %v1466
      %v1475 = vmul.f32 %v1455, %v1467
      %v1476 = vmul.f32 %v1454, %v1468
      %v1477 = vmul.f32 %v1453, %v1469
      %v1478 = vmul.f32 %v1452, %v1470
      %v1479 = vmul.f32 %v1451, %v1471
      %v1480 = vmul.f32 %v1450, %v1472
      %v1481 = vmul.f32 %v1457, %v1473
      %s1482 = scalar_lea.vmem %s3, 40
      %v1483 = vld [vmem:[%s1482] sm:$0xff]
      %1485 = vset.pattern.permute.xlu0 0
      %1486 = vperm.xlu0 %1485, %v1483
      %v1487 = vpop.permute.xlu0 %1486
      %v1489 = vmul.f32 %v1474, %v1487
      %v1490 = vmul.f32 %v1475, %v1487
      %v1491 = vmul.f32 %v1476, %v1487
      %v1492 = vmul.f32 %v1477, %v1487
      %v1493 = vmul.f32 %v1478, %v1487
      %v1494 = vmul.f32 %v1479, %v1487
      %v1495 = vmul.f32 %v1480, %v1487
      %v1496 = vmul.f32 %v1481, %v1487
      %v1497 = vadd.f32 %v1425, %v1489
      %v1498 = vadd.f32 %v1426, %v1490
      %v1499 = vadd.f32 %v1427, %v1491
      %v1500 = vadd.f32 %v1428, %v1492
      %v1501 = vadd.f32 %v1429, %v1493
      %v1502 = vadd.f32 %v1430, %v1494
      %v1503 = vadd.f32 %v1431, %v1495
      %v1504 = vadd.f32 %v1432, %v1496
      %1505 = vrot.lane.b32.xlu0 %v1075, 97
      %v1506 = vpop.permute.xlu0 %1505
      %1507 = vrot.lane.b32.xlu0 %v1076, 97
      %v1508 = vpop.permute.xlu0 %1507
      %1509 = vrot.lane.b32.xlu0 %v1077, 97
      %v1510 = vpop.permute.xlu0 %1509
      %1511 = vrot.lane.b32.xlu0 %v1078, 97
      %v1512 = vpop.permute.xlu0 %1511
      %1513 = vrot.lane.b32.xlu0 %v1079, 97
      %v1514 = vpop.permute.xlu0 %1513
      %1515 = vrot.lane.b32.xlu0 %v1080, 97
      %v1516 = vpop.permute.xlu0 %1515
      %1517 = vrot.lane.b32.xlu0 %v1081, 97
      %v1518 = vpop.permute.xlu0 %1517
      %1519 = vrot.lane.b32.xlu0 %v1082, 97
      %v1520 = vpop.permute.xlu0 %1519
      %vm1521 = vcmp.lt.s32.totalorder %v740, 97
      %v1522 = vsel %vm1521, %v1518, %v1520
      %v1523 = vsel %vm1521, %v1516, %v1518
      %v1524 = vsel %vm1521, %v1514, %v1516
      %v1525 = vsel %vm1521, %v1512, %v1514
      %v1526 = vsel %vm1521, %v1510, %v1512
      %v1527 = vsel %vm1521, %v1508, %v1510
      %v1528 = vsel %vm1521, %v1506, %v1508
      %v1529 = vsel %vm1521, %v1520, %v1506
      %vm1530 = vcmp.lt.s32.totalorder %v748, 31
      %vm1531 = vcmp.lt.s32.totalorder %v749, 31
      %vm1532 = vcmp.lt.s32.totalorder %v750, 31
      %vm1533 = vcmp.lt.s32.totalorder %v751, 31
      %vm1534 = vcmp.lt.s32.totalorder %v752, 31
      %vm1535 = vcmp.lt.s32.totalorder %v753, 31
      %vm1536 = vcmp.lt.s32.totalorder %v754, 31
      %vm1537 = vcmp.lt.s32.totalorder %v755, 31
      %vm1538 = vmand %vm1530, %vm1116
      %vm1539 = vmand %vm1531, %vm1117
      %vm1540 = vmand %vm1532, %vm1118
      %vm1541 = vmand %vm1533, %vm1119
      %vm1542 = vmand %vm1534, %vm1120
      %vm1543 = vmand %vm1535, %vm1121
      %vm1544 = vmand %vm1536, %vm1122
      %vm1545 = vmand %vm1537, %vm1123
      %v1546 = vsel %vm1538, 1, 0
      %v1547 = vsel %vm1539, 1, 0
      %v1548 = vsel %vm1540, 1, 0
      %v1549 = vsel %vm1541, 1, 0
      %v1550 = vsel %vm1542, 1, 0
      %v1551 = vsel %vm1543, 1, 0
      %v1552 = vsel %vm1544, 1, 0
      %v1553 = vsel %vm1545, 1, 0
      %v1554 = vcvt.s32.f32 %v1546
      %v1555 = vcvt.s32.f32 %v1547
      %v1556 = vcvt.s32.f32 %v1548
      %v1557 = vcvt.s32.f32 %v1549
      %v1558 = vcvt.s32.f32 %v1550
      %v1559 = vcvt.s32.f32 %v1551
      %v1560 = vcvt.s32.f32 %v1552
      %v1561 = vcvt.s32.f32 %v1553
      %v1562 = vmul.f32 %v1528, %v1554
      %v1563 = vmul.f32 %v1527, %v1555
      %v1564 = vmul.f32 %v1526, %v1556
      %v1565 = vmul.f32 %v1525, %v1557
      %v1566 = vmul.f32 %v1524, %v1558
      %v1567 = vmul.f32 %v1523, %v1559
      %v1568 = vmul.f32 %v1522, %v1560
      %v1569 = vmul.f32 %v1529, %v1561
      %s1570 = scalar_lea.vmem %s3, 48
      %v1571 = vld [vmem:[%s1570] sm:$0xff]
      %1573 = vset.pattern.permute.xlu0 0
      %1574 = vperm.xlu0 %1573, %v1571
      %v1575 = vpop.permute.xlu0 %1574
      %v1577 = vmul.f32 %v1562, %v1575
      %v1578 = vmul.f32 %v1563, %v1575
      %v1579 = vmul.f32 %v1564, %v1575
      %v1580 = vmul.f32 %v1565, %v1575
      %v1581 = vmul.f32 %v1566, %v1575
      %v1582 = vmul.f32 %v1567, %v1575
      %v1583 = vmul.f32 %v1568, %v1575
      %v1584 = vmul.f32 %v1569, %v1575
      %v1585 = vadd.f32 %v1497, %v1577
      %v1586 = vadd.f32 %v1498, %v1578
      %v1587 = vadd.f32 %v1499, %v1579
      %v1588 = vadd.f32 %v1500, %v1580
      %v1589 = vadd.f32 %v1501, %v1581
      %v1590 = vadd.f32 %v1502, %v1582
      %v1591 = vadd.f32 %v1503, %v1583
      %v1592 = vadd.f32 %v1504, %v1584
      %1593 = vrot.lane.b32.xlu0 %v1075, 96
      %v1594 = vpop.permute.xlu0 %1593
      %1595 = vrot.lane.b32.xlu0 %v1076, 96
      %v1596 = vpop.permute.xlu0 %1595
      %1597 = vrot.lane.b32.xlu0 %v1077, 96
      %v1598 = vpop.permute.xlu0 %1597
      %1599 = vrot.lane.b32.xlu0 %v1078, 96
      %v1600 = vpop.permute.xlu0 %1599
      %1601 = vrot.lane.b32.xlu0 %v1079, 96
      %v1602 = vpop.permute.xlu0 %1601
      %1603 = vrot.lane.b32.xlu0 %v1080, 96
      %v1604 = vpop.permute.xlu0 %1603
      %1605 = vrot.lane.b32.xlu0 %v1081, 96
      %v1606 = vpop.permute.xlu0 %1605
      %1607 = vrot.lane.b32.xlu0 %v1082, 96
      %v1608 = vpop.permute.xlu0 %1607
      %vm1609 = vcmp.lt.s32.totalorder %v740, 96
      %v1610 = vsel %vm1609, %v1606, %v1608
      %v1611 = vsel %vm1609, %v1604, %v1606
      %v1612 = vsel %vm1609, %v1602, %v1604
      %v1613 = vsel %vm1609, %v1600, %v1602
      %v1614 = vsel %vm1609, %v1598, %v1600
      %v1615 = vsel %vm1609, %v1596, %v1598
      %v1616 = vsel %vm1609, %v1594, %v1596
      %v1617 = vsel %vm1609, %v1608, %v1594
      %v1618 = vsel %vm1530, 1, 0
      %v1619 = vsel %vm1531, 1, 0
      %v1620 = vsel %vm1532, 1, 0
      %v1621 = vsel %vm1533, 1, 0
      %v1622 = vsel %vm1534, 1, 0
      %v1623 = vsel %vm1535, 1, 0
      %v1624 = vsel %vm1536, 1, 0
      %v1625 = vsel %vm1537, 1, 0
      %v1626 = vcvt.s32.f32 %v1618
      %v1627 = vcvt.s32.f32 %v1619
      %v1628 = vcvt.s32.f32 %v1620
      %v1629 = vcvt.s32.f32 %v1621
      %v1630 = vcvt.s32.f32 %v1622
      %v1631 = vcvt.s32.f32 %v1623
      %v1632 = vcvt.s32.f32 %v1624
      %v1633 = vcvt.s32.f32 %v1625
      %v1634 = vmul.f32 %v1616, %v1626
      %v1635 = vmul.f32 %v1615, %v1627
      %v1636 = vmul.f32 %v1614, %v1628
      %v1637 = vmul.f32 %v1613, %v1629
      %v1638 = vmul.f32 %v1612, %v1630
      %v1639 = vmul.f32 %v1611, %v1631
      %v1640 = vmul.f32 %v1610, %v1632
      %v1641 = vmul.f32 %v1617, %v1633
      %s1642 = scalar_lea.vmem %s3, 56
      %v1643 = vld [vmem:[%s1642] sm:$0xff]
      %1645 = vset.pattern.permute.xlu0 0
      %1646 = vperm.xlu0 %1645, %v1643
      %v1647 = vpop.permute.xlu0 %1646
      %v1649 = vmul.f32 %v1634, %v1647
      %v1650 = vmul.f32 %v1635, %v1647
      %v1651 = vmul.f32 %v1636, %v1647
      %v1652 = vmul.f32 %v1637, %v1647
      %v1653 = vmul.f32 %v1638, %v1647
      %v1654 = vmul.f32 %v1639, %v1647
      %v1655 = vmul.f32 %v1640, %v1647
      %v1656 = vmul.f32 %v1641, %v1647
      %v1657 = vadd.f32 %v1585, %v1649
      %v1658 = vadd.f32 %v1586, %v1650
      %v1659 = vadd.f32 %v1587, %v1651
      %v1660 = vadd.f32 %v1588, %v1652
      %v1661 = vadd.f32 %v1589, %v1653
      %v1662 = vadd.f32 %v1590, %v1654
      %v1663 = vadd.f32 %v1591, %v1655
      %v1664 = vadd.f32 %v1592, %v1656
      %1665 = vrot.lane.b32.xlu0 %v1075, 95
      %v1666 = vpop.permute.xlu0 %1665
      %1667 = vrot.lane.b32.xlu0 %v1076, 95
      %v1668 = vpop.permute.xlu0 %1667
      %1669 = vrot.lane.b32.xlu0 %v1077, 95
      %v1670 = vpop.permute.xlu0 %1669
      %1671 = vrot.lane.b32.xlu0 %v1078, 95
      %v1672 = vpop.permute.xlu0 %1671
      %1673 = vrot.lane.b32.xlu0 %v1079, 95
      %v1674 = vpop.permute.xlu0 %1673
      %1675 = vrot.lane.b32.xlu0 %v1080, 95
      %v1676 = vpop.permute.xlu0 %1675
      %1677 = vrot.lane.b32.xlu0 %v1081, 95
      %v1678 = vpop.permute.xlu0 %1677
      %1679 = vrot.lane.b32.xlu0 %v1082, 95
      %v1680 = vpop.permute.xlu0 %1679
      %vm1681 = vcmp.lt.s32.totalorder %v740, 95
      %v1682 = vsel %vm1681, %v1678, %v1680
      %v1683 = vsel %vm1681, %v1676, %v1678
      %v1684 = vsel %vm1681, %v1674, %v1676
      %v1685 = vsel %vm1681, %v1672, %v1674
      %v1686 = vsel %vm1681, %v1670, %v1672
      %v1687 = vsel %vm1681, %v1668, %v1670
      %v1688 = vsel %vm1681, %v1666, %v1668
      %v1689 = vsel %vm1681, %v1680, %v1666
      %vm1690 = vmand %vm1530, %vm1275
      %vm1691 = vmand %vm1531, %vm1276
      %vm1692 = vmand %vm1532, %vm1277
      %vm1693 = vmand %vm1533, %vm1278
      %vm1694 = vmand %vm1534, %vm1279
      %vm1695 = vmand %vm1535, %vm1280
      %vm1696 = vmand %vm1536, %vm1281
      %vm1697 = vmand %vm1537, %vm1282
      %v1698 = vsel %vm1690, 1, 0
      %v1699 = vsel %vm1691, 1, 0
      %v1700 = vsel %vm1692, 1, 0
      %v1701 = vsel %vm1693, 1, 0
      %v1702 = vsel %vm1694, 1, 0
      %v1703 = vsel %vm1695, 1, 0
      %v1704 = vsel %vm1696, 1, 0
      %v1705 = vsel %vm1697, 1, 0
      %v1706 = vcvt.s32.f32 %v1698
      %v1707 = vcvt.s32.f32 %v1699
      %v1708 = vcvt.s32.f32 %v1700
      %v1709 = vcvt.s32.f32 %v1701
      %v1710 = vcvt.s32.f32 %v1702
      %v1711 = vcvt.s32.f32 %v1703
      %v1712 = vcvt.s32.f32 %v1704
      %v1713 = vcvt.s32.f32 %v1705
      %v1714 = vmul.f32 %v1688, %v1706
      %v1715 = vmul.f32 %v1687, %v1707
      %v1716 = vmul.f32 %v1686, %v1708
      %v1717 = vmul.f32 %v1685, %v1709
      %v1718 = vmul.f32 %v1684, %v1710
      %v1719 = vmul.f32 %v1683, %v1711
      %v1720 = vmul.f32 %v1682, %v1712
      %v1721 = vmul.f32 %v1689, %v1713
      %s1722 = scalar_lea.vmem %s3, 64
      %v1723 = vld [vmem:[%s1722] sm:$0xff]
      %1725 = vset.pattern.permute.xlu0 0
      %1726 = vperm.xlu0 %1725, %v1723
      %v1727 = vpop.permute.xlu0 %1726
      %v1729 = vmul.f32 %v1714, %v1727
      %v1730 = vmul.f32 %v1715, %v1727
      %v1731 = vmul.f32 %v1716, %v1727
      %v1732 = vmul.f32 %v1717, %v1727
      %v1733 = vmul.f32 %v1718, %v1727
      %v1734 = vmul.f32 %v1719, %v1727
      %v1735 = vmul.f32 %v1720, %v1727
      %v1736 = vmul.f32 %v1721, %v1727
      %v1737 = vadd.f32 %v1657, %v1729
      %v1738 = vadd.f32 %v1658, %v1730
      %v1739 = vadd.f32 %v1659, %v1731
      %v1740 = vadd.f32 %v1660, %v1732
      %v1741 = vadd.f32 %v1661, %v1733
      %v1742 = vadd.f32 %v1662, %v1734
      %v1743 = vadd.f32 %v1663, %v1735
      %v1744 = vadd.f32 %v1664, %v1736
      %v1745 = vld [vmem:[%s4] sm:$0xff]
      %1747 = vset.pattern.permute.xlu0 0
      %1748 = vperm.xlu0 %1747, %v1745
      %v1749 = vpop.permute.xlu0 %1748
      %v1751 = vadd.f32 %v1737, %v1749
      %v1752 = vadd.f32 %v1738, %v1749
      %v1753 = vadd.f32 %v1739, %v1749
      %v1754 = vadd.f32 %v1740, %v1749
      %v1755 = vadd.f32 %v1741, %v1749
      %v1756 = vadd.f32 %v1742, %v1749
      %v1757 = vadd.f32 %v1743, %v1749
      %v1758 = vadd.f32 %v1744, %v1749
      %v1759 = vsub.f32 0.0, %v1751
      %v1760 = vsub.f32 0.0, %v1752
      %v1761 = vsub.f32 0.0, %v1753
      %v1762 = vsub.f32 0.0, %v1754
      %v1763 = vsub.f32 0.0, %v1755
      %v1764 = vsub.f32 0.0, %v1756
      %v1765 = vsub.f32 0.0, %v1757
      %v1766 = vsub.f32 0.0, %v1758
      %v1767 = vmul.f32 %v1759, 1.442695
      %v1768 = vpow.pop %v1767
      %v1769 = vmul.f32 %v1760, 1.442695
      %v1770 = vpow.pop %v1769
      %v1771 = vmul.f32 %v1761, 1.442695
      %v1772 = vpow.pop %v1771
      %v1773 = vmul.f32 %v1762, 1.442695
      %v1774 = vpow.pop %v1773
      %v1775 = vmul.f32 %v1763, 1.442695
      %v1776 = vpow.pop %v1775
      %v1777 = vmul.f32 %v1764, 1.442695
      %v1778 = vpow.pop %v1777
      %v1779 = vmul.f32 %v1765, 1.442695
      %v1780 = vpow.pop %v1779
      %v1781 = vmul.f32 %v1766, 1.442695
      %v1782 = vpow.pop %v1781
      %v1783 = vadd.f32 %v1768, 1.0
      %v1784 = vadd.f32 %v1770, 1.0
      %v1785 = vadd.f32 %v1772, 1.0
      %v1786 = vadd.f32 %v1774, 1.0
      %v1787 = vadd.f32 %v1776, 1.0
      %v1788 = vadd.f32 %v1778, 1.0
      %v1789 = vadd.f32 %v1780, 1.0
      %v1790 = vadd.f32 %v1782, 1.0
      %v1791 = vrcp.pop %v1783
      %v1792 = vrcp.pop %v1784
      %v1793 = vrcp.pop %v1785
      %v1794 = vrcp.pop %v1786
      %v1795 = vrcp.pop %v1787
      %v1796 = vrcp.pop %v1788
      %v1797 = vrcp.pop %v1789
      %v1798 = vrcp.pop %v1790
      %v1799 = vmul.f32 %v1751, %v1791
      %v1800 = vmul.f32 %v1752, %v1792
      %v1801 = vmul.f32 %v1753, %v1793
      %v1802 = vmul.f32 %v1754, %v1794
      %v1803 = vmul.f32 %v1755, %v1795
      %v1804 = vmul.f32 %v1756, %v1796
      %v1805 = vmul.f32 %v1757, %v1797
      %v1806 = vmul.f32 %v1758, %v1798
      %v1807 = vld [vmem:[%s5] sm:$0xf]
      %v1808 = vld [vmem:[%s5 + $0x4] sm:$0xf]
      %v1809 = vpack.c.bf16 %v1799, %v1799
      %v1810 = vpack.c.bf16 %v1800, %v1800
      %v1811 = vpack.c.bf16 %v1801, %v1801
      %v1812 = vpack.c.bf16 %v1802, %v1802
      %v1813 = vpack.c.bf16 %v1803, %v1803
      %v1814 = vpack.c.bf16 %v1804, %v1804
      %v1815 = vpack.c.bf16 %v1805, %v1805
      %v1816 = vpack.c.bf16 %v1806, %v1806
      %v1817 = vld [vmem:[%s6] sm:$0xff]
      %v1818 = vld [vmem:[%s6 + $0x8] sm:$0xff]
      %1820 = vset.pattern.permute.xlu0 0
      %1821 = vperm.xlu0 %1820, %v1817
      %v1822 = vpop.permute.xlu0 %1821
      %1825 = vset.pattern.permute.xlu0 0
      %1826 = vperm.xlu0 %1825, %v1818
      %v1827 = vpop.permute.xlu0 %1826
      %v1831 = vunpack.c.l.b16 %v1807
      %v1832 = vunpack.c.l.b16 %v1808
      %v1833 = vpack.c.b16 %v1832, %v1831
      %vm1834 = vcmask 64512
      %v1836 = vsel %vm1834, %v1833, 0
      %vm1838 = vcmask 1043456
      %v1840 = vsel %vm1838, %v1809, 0
      %v1843 = vsel %vm1838, %v1810, 0
      %v1846 = vsel %vm1838, %v1811, 0
      %v1849 = vsel %vm1838, %v1812, 0
      %v1852 = vsel %vm1838, %v1813, 0
      %v1855 = vsel %vm1838, %v1814, 0
      %v1858 = vsel %vm1838, %v1815, 0
      %v1861 = vsel %vm1838, %v1816, 0
      %1863 = vmatprep.subr.bf16.mxu0 %v1843
      %1864 = vmatpush1.bf16.msra.mxu0 %v1840
      %1865 = vmatprep.subr.bf16.mxu0 0
      %1866 = vmatpush1.bf16.msra.mxu0 0
      %1867 = vmatprep.subr.bf16.mxu0 0
      %1868 = vmatpush1.bf16.msra.mxu0 0
      %1869 = vmatprep.subr.bf16.mxu0 0
      %1870 = vmatpush1.bf16.msra.mxu0 0
      %1871 = vmatprep.subr.bf16.mxu0 0
      %1872 = vmatpush1.bf16.msra.mxu0 0
      %1873 = vmatprep.subr.bf16.mxu0 0
      %1874 = vmatpush1.bf16.msra.mxu0 0
      %1875 = vmatprep.subr.bf16.mxu0 0
      %1876 = vmatpush1.bf16.msra.mxu0 0
      %1877 = vmatprep.subr.bf16.mxu0 0
      %1878 = vmatpush1.bf16.msra.mxu0 0
      %1879 = vmatprep.subr.bf16.mxu0 0
      %1880 = vmatpush1.bf16.msra.mxu0 0
      %1881 = vmatprep.subr.bf16.mxu0 0
      %1882 = vmatpush1.bf16.msra.mxu0 0
      %1883 = vmatprep.subr.bf16.mxu0 0
      %1884 = vmatpush1.bf16.msra.mxu0 0
      %1885 = vmatprep.subr.bf16.mxu0 0
      %1886 = vmatpush1.bf16.msra.mxu0 0
      %1887 = vmatprep.subr.bf16.mxu0 0
      %1888 = vmatpush1.bf16.msra.mxu0 0
      %1889 = vmatprep.subr.bf16.mxu0 0
      %1890 = vmatpush1.bf16.msra.mxu0 0
      %1891 = vmatprep.subr.bf16.mxu0 0
      %1892 = vmatpush1.bf16.msra.mxu0 0
      %1893 = vmatprep.subr.bf16.mxu0 0
      %1894 = vmatpush1.bf16.msra.mxu0 0
      %1895 = vmatprep.mubr.bf16.mxu0 0
      %1896 = vmatmul.mubr.bf16.gmra.mrb[0].mxu0 %v1836
      %v1897 = vpop.f32.mrb[0].mxu0
      %v1898 = vadd.f32 %v1822, %v1897
      %v1899 = vpop.f32.mrb[0].mxu0
      %v1900 = vadd.f32 %v1822, %v1899
      %v1901 = vpop.f32.mrb[0].mxu0
      %v1902 = vadd.f32 %v1827, %v1901
      %v1903 = vpop.f32.mrb[0].mxu0
      %v1904 = vadd.f32 %v1827, %v1903
      %1905 = vdwg.mxu0
      %1906 = vmatprep.subr.bf16.mxu0 %v1849
      %1907 = vmatpush1.bf16.msra.mxu0 %v1846
      %1908 = vmatprep.subr.bf16.mxu0 0
      %1909 = vmatpush1.bf16.msra.mxu0 0
      %1910 = vmatprep.subr.bf16.mxu0 0
      %1911 = vmatpush1.bf16.msra.mxu0 0
      %1912 = vmatprep.subr.bf16.mxu0 0
      %1913 = vmatpush1.bf16.msra.mxu0 0
      %1914 = vmatprep.subr.bf16.mxu0 0
      %1915 = vmatpush1.bf16.msra.mxu0 0
      %1916 = vmatprep.subr.bf16.mxu0 0
      %1917 = vmatpush1.bf16.msra.mxu0 0
      %1918 = vmatprep.subr.bf16.mxu0 0
      %1919 = vmatpush1.bf16.msra.mxu0 0
      %1920 = vmatprep.subr.bf16.mxu0 0
      %1921 = vmatpush1.bf16.msra.mxu0 0
      %1922 = vmatprep.subr.bf16.mxu0 0
      %1923 = vmatpush1.bf16.msra.mxu0 0
      %1924 = vmatprep.subr.bf16.mxu0 0
      %1925 = vmatpush1.bf16.msra.mxu0 0
      %1926 = vmatprep.subr.bf16.mxu0 0
      %1927 = vmatpush1.bf16.msra.mxu0 0
      %1928 = vmatprep.subr.bf16.mxu0 0
      %1929 = vmatpush1.bf16.msra.mxu0 0
      %1930 = vmatprep.subr.bf16.mxu0 0
      %1931 = vmatpush1.bf16.msra.mxu0 0
      %1932 = vmatprep.subr.bf16.mxu0 0
      %1933 = vmatpush1.bf16.msra.mxu0 0
      %1934 = vmatprep.subr.bf16.mxu0 0
      %1935 = vmatpush1.bf16.msra.mxu0 0
      %1936 = vmatprep.subr.bf16.mxu0 0
      %1937 = vmatpush1.bf16.msra.mxu0 0
      %1938 = vmatprep.mubr.bf16.mxu0 0
      %1939 = vmatmul.mubr.bf16.gmra.mrb[0].mxu0 %v1836
      %v1940 = vpop.f32.mrb[0].mxu0
      %v1941 = vadd.f32 %v1822, %v1940
      %v1942 = vpop.f32.mrb[0].mxu0
      %v1943 = vadd.f32 %v1822, %v1942
      %v1944 = vpop.f32.mrb[0].mxu0
      %v1945 = vadd.f32 %v1827, %v1944
      %v1946 = vpop.f32.mrb[0].mxu0
      %v1947 = vadd.f32 %v1827, %v1946
      %1948 = vdwg.mxu0
      %1949 = vmatprep.subr.bf16.mxu0 %v1855
      %1950 = vmatpush1.bf16.msra.mxu0 %v1852
      %1951 = vmatprep.subr.bf16.mxu0 0
      %1952 = vmatpush1.bf16.msra.mxu0 0
      %1953 = vmatprep.subr.bf16.mxu0 0
      %1954 = vmatpush1.bf16.msra.mxu0 0
      %1955 = vmatprep.subr.bf16.mxu0 0
      %1956 = vmatpush1.bf16.msra.mxu0 0
      %1957 = vmatprep.subr.bf16.mxu0 0
      %1958 = vmatpush1.bf16.msra.mxu0 0
      %1959 = vmatprep.subr.bf16.mxu0 0
      %1960 = vmatpush1.bf16.msra.mxu0 0
      %1961 = vmatprep.subr.bf16.mxu0 0
      %1962 = vmatpush1.bf16.msra.mxu0 0
      %1963 = vmatprep.subr.bf16.mxu0 0
      %1964 = vmatpush1.bf16.msra.mxu0 0
      %1965 = vmatprep.subr.bf16.mxu0 0
      %1966 = vmatpush1.bf16.msra.mxu0 0
      %1967 = vmatprep.subr.bf16.mxu0 0
      %1968 = vmatpush1.bf16.msra.mxu0 0
      %1969 = vmatprep.subr.bf16.mxu0 0
      %1970 = vmatpush1.bf16.msra.mxu0 0
      %1971 = vmatprep.subr.bf16.mxu0 0
      %1972 = vmatpush1.bf16.msra.mxu0 0
      %1973 = vmatprep.subr.bf16.mxu0 0
      %1974 = vmatpush1.bf16.msra.mxu0 0
      %1975 = vmatprep.subr.bf16.mxu0 0
      %1976 = vmatpush1.bf16.msra.mxu0 0
      %1977 = vmatprep.subr.bf16.mxu0 0
      %1978 = vmatpush1.bf16.msra.mxu0 0
      %1979 = vmatprep.subr.bf16.mxu0 0
      %1980 = vmatpush1.bf16.msra.mxu0 0
      %1981 = vmatprep.mubr.bf16.mxu0 0
      %1982 = vmatmul.mubr.bf16.gmra.mrb[0].mxu0 %v1836
      %v1983 = vpop.f32.mrb[0].mxu0
      %v1984 = vadd.f32 %v1822, %v1983
      %v1985 = vpop.f32.mrb[0].mxu0
      %v1986 = vadd.f32 %v1822, %v1985
      %v1987 = vpop.f32.mrb[0].mxu0
      %v1988 = vadd.f32 %v1827, %v1987
      %v1989 = vpop.f32.mrb[0].mxu0
      %v1990 = vadd.f32 %v1827, %v1989
      %1991 = vdwg.mxu0
      %1992 = vmatprep.subr.bf16.mxu0 %v1861
      %1993 = vmatpush1.bf16.msra.mxu0 %v1858
      %1994 = vmatprep.subr.bf16.mxu0 0
      %1995 = vmatpush1.bf16.msra.mxu0 0
      %1996 = vmatprep.subr.bf16.mxu0 0
      %1997 = vmatpush1.bf16.msra.mxu0 0
      %1998 = vmatprep.subr.bf16.mxu0 0
      %1999 = vmatpush1.bf16.msra.mxu0 0
      %2000 = vmatprep.subr.bf16.mxu0 0
      %2001 = vmatpush1.bf16.msra.mxu0 0
      %2002 = vmatprep.subr.bf16.mxu0 0
      %2003 = vmatpush1.bf16.msra.mxu0 0
      %2004 = vmatprep.subr.bf16.mxu0 0
      %2005 = vmatpush1.bf16.msra.mxu0 0
      %2006 = vmatprep.subr.bf16.mxu0 0
      %2007 = vmatpush1.bf16.msra.mxu0 0
      %2008 = vmatprep.subr.bf16.mxu0 0
      %2009 = vmatpush1.bf16.msra.mxu0 0
      %2010 = vmatprep.subr.bf16.mxu0 0
      %2011 = vmatpush1.bf16.msra.mxu0 0
      %2012 = vmatprep.subr.bf16.mxu0 0
      %2013 = vmatpush1.bf16.msra.mxu0 0
      %2014 = vmatprep.subr.bf16.mxu0 0
      %2015 = vmatpush1.bf16.msra.mxu0 0
      %2016 = vmatprep.subr.bf16.mxu0 0
      %2017 = vmatpush1.bf16.msra.mxu0 0
      %2018 = vmatprep.subr.bf16.mxu0 0
      %2019 = vmatpush1.bf16.msra.mxu0 0
      %2020 = vmatprep.subr.bf16.mxu0 0
      %2021 = vmatpush1.bf16.msra.mxu0 0
      %2022 = vmatprep.subr.bf16.mxu0 0
      %2023 = vmatpush1.bf16.msra.mxu0 0
      %2024 = vmatprep.mubr.bf16.mxu0 0
      %2025 = vmatmul.mubr.bf16.gmra.mrb[0].mxu0 %v1836
      %v2026 = vpop.f32.mrb[0].mxu0
      %v2027 = vadd.f32 %v1822, %v2026
      %v2028 = vpop.f32.mrb[0].mxu0
      %v2029 = vadd.f32 %v1822, %v2028
      %v2030 = vpop.f32.mrb[0].mxu0
      %v2031 = vadd.f32 %v1827, %v2030
      %v2032 = vpop.f32.mrb[0].mxu0
      %v2033 = vadd.f32 %v1827, %v2032
      %2034 = vdwg.mxu0
      %v2035 = vld [vmem:[%s7] sm:$0xf]
      %v2036 = vld [vmem:[%s7 + $0x4] sm:$0xf]
      %v2037 = vld [vmem:[%s7 + $0x8] sm:$0xf]
      %v2038 = vpack.c.bf16 %v1902, %v1898
      %v2039 = vpack.c.bf16 %v1904, %v1900
      %v2040 = vpack.c.bf16 %v1945, %v1941
      %v2041 = vpack.c.bf16 %v1947, %v1943
      %v2042 = vpack.c.bf16 %v1988, %v1984
      %v2043 = vpack.c.bf16 %v1990, %v1986
      %v2044 = vpack.c.bf16 %v2031, %v2027
      %v2045 = vpack.c.bf16 %v2033, %v2029
      %v2046 = vld [vmem:[%s8] sm:$0xff]
      %v2047 = vld [vmem:[%s8 + $0x8] sm:$0xff]
      %v2048 = vld [vmem:[%s8 + $0x10] sm:$0xff]
      %2050 = vset.pattern.permute.xlu0 0
      %2051 = vperm.xlu0 %2050, %v2046
      %v2052 = vpop.permute.xlu0 %2051
      %2055 = vset.pattern.permute.xlu0 0
      %2056 = vperm.xlu0 %2055, %v2047
      %v2057 = vpop.permute.xlu0 %2056
      %2060 = vset.pattern.permute.xlu0 0
      %2061 = vperm.xlu0 %2060, %v2048
      %v2062 = vpop.permute.xlu0 %2061
      %v2067 = vunpack.c.l.b16 %v2035
      %v2068 = vunpack.c.l.b16 %v2036
      %v2069 = vunpack.c.l.b16 %v2037
      %v2070 = vpack.c.b16 %v2068, %v2067
      %v2071 = vpack.c.b16 %v2069, %v2069
      %vm2072 = vcmask 130048
      %v2074 = vsel %vm2072, %v2070, 0
      %v2077 = vsel %vm2072, %v2071, 0
      %2079 = vmatprep.subr.bf16.mxu0 %v2039
      %2080 = vmatpush1.bf16.msra.mxu0 %v2038
      %2081 = vmatprep.subr.bf16.mxu0 0
      %2082 = vmatpush1.bf16.msra.mxu0 0
      %2083 = vmatprep.subr.bf16.mxu0 0
      %2084 = vmatpush1.bf16.msra.mxu0 0
      %2085 = vmatprep.subr.bf16.mxu0 0
      %2086 = vmatpush1.bf16.msra.mxu0 0
      %2087 = vmatprep.subr.bf16.mxu0 0
      %2088 = vmatpush1.bf16.msra.mxu0 0
      %2089 = vmatprep.subr.bf16.mxu0 0
      %2090 = vmatpush1.bf16.msra.mxu0 0
      %2091 = vmatprep.subr.bf16.mxu0 0
      %2092 = vmatpush1.bf16.msra.mxu0 0
      %2093 = vmatprep.subr.bf16.mxu0 0
      %2094 = vmatpush1.bf16.msra.mxu0 0
      %2095 = vmatprep.subr.bf16.mxu0 0
      %2096 = vmatpush1.bf16.msra.mxu0 0
      %2097 = vmatprep.subr.bf16.mxu0 0
      %2098 = vmatpush1.bf16.msra.mxu0 0
      %2099 = vmatprep.subr.bf16.mxu0 0
      %2100 = vmatpush1.bf16.msra.mxu0 0
      %2101 = vmatprep.subr.bf16.mxu0 0
      %2102 = vmatpush1.bf16.msra.mxu0 0
      %2103 = vmatprep.subr.bf16.mxu0 0
      %2104 = vmatpush1.bf16.msra.mxu0 0
      %2105 = vmatprep.subr.bf16.mxu0 0
      %2106 = vmatpush1.bf16.msra.mxu0 0
      %2107 = vmatprep.subr.bf16.mxu0 0
      %2108 = vmatpush1.bf16.msra.mxu0 0
      %2109 = vmatprep.subr.bf16.mxu0 0
      %2110 = vmatpush1.bf16.msra.mxu0 0
      %2111 = vmatprep.mubr.bf16.mxu0 0
      %2112 = vmatmul.mubr.bf16.gmra.mrb[0].mxu0 %v2074
      %v2113 = vpop.f32.mrb[0].mxu0
      %v2114 = vadd.f32 %v2052, %v2113
      %v2115 = vpop.f32.mrb[0].mxu0
      %v2116 = vadd.f32 %v2052, %v2115
      %v2117 = vpop.f32.mrb[0].mxu0
      %v2118 = vadd.f32 %v2057, %v2117
      %v2119 = vpop.f32.mrb[0].mxu0
      %v2120 = vadd.f32 %v2057, %v2119
      %2121 = vmatprep.mubr.bf16.mxu0 0
      %2122 = vmatmul.mubr.bf16.gmra.mrb[0].mxu0 %v2077
      %v2123 = vpop.f32.mrb[0].mxu0
      %v2124 = vadd.f32 %v2062, %v2123
      %v2125 = vpop.f32.mrb[0].mxu0
      %v2126 = vadd.f32 %v2062, %v2125
      %v2127 = vpop.f32.mrb[0].mxu0
      %v2128 = vpop.f32.mrb[0].mxu0
      %2129 = vdwg.mxu0
      %2130 = vmatprep.subr.bf16.mxu0 %v2041
      %2131 = vmatpush1.bf16.msra.mxu0 %v2040
      %2132 = vmatprep.subr.bf16.mxu0 0
      %2133 = vmatpush1.bf16.msra.mxu0 0
      %2134 = vmatprep.subr.bf16.mxu0 0
      %2135 = vmatpush1.bf16.msra.mxu0 0
      %2136 = vmatprep.subr.bf16.mxu0 0
      %2137 = vmatpush1.bf16.msra.mxu0 0
      %2138 = vmatprep.subr.bf16.mxu0 0
      %2139 = vmatpush1.bf16.msra.mxu0 0
      %2140 = vmatprep.subr.bf16.mxu0 0
      %2141 = vmatpush1.bf16.msra.mxu0 0
      %2142 = vmatprep.subr.bf16.mxu0 0
      %2143 = vmatpush1.bf16.msra.mxu0 0
      %2144 = vmatprep.subr.bf16.mxu0 0
      %2145 = vmatpush1.bf16.msra.mxu0 0
      %2146 = vmatprep.subr.bf16.mxu0 0
      %2147 = vmatpush1.bf16.msra.mxu0 0
      %2148 = vmatprep.subr.bf16.mxu0 0
      %2149 = vmatpush1.bf16.msra.mxu0 0
      %2150 = vmatprep.subr.bf16.mxu0 0
      %2151 = vmatpush1.bf16.msra.mxu0 0
      %2152 = vmatprep.subr.bf16.mxu0 0
      %2153 = vmatpush1.bf16.msra.mxu0 0
      %2154 = vmatprep.subr.bf16.mxu0 0
      %2155 = vmatpush1.bf16.msra.mxu0 0
      %2156 = vmatprep.subr.bf16.mxu0 0
      %2157 = vmatpush1.bf16.msra.mxu0 0
      %2158 = vmatprep.subr.bf16.mxu0 0
      %2159 = vmatpush1.bf16.msra.mxu0 0
      %2160 = vmatprep.subr.bf16.mxu0 0
      %2161 = vmatpush1.bf16.msra.mxu0 0
      %2162 = vmatprep.mubr.bf16.mxu0 0
      %2163 = vmatmul.mubr.bf16.gmra.mrb[0].mxu0 %v2074
      %v2164 = vpop.f32.mrb[0].mxu0
      %v2165 = vadd.f32 %v2052, %v2164
      %v2166 = vpop.f32.mrb[0].mxu0
      %v2167 = vadd.f32 %v2052, %v2166
      %v2168 = vpop.f32.mrb[0].mxu0
      %v2169 = vadd.f32 %v2057, %v2168
      %v2170 = vpop.f32.mrb[0].mxu0
      %v2171 = vadd.f32 %v2057, %v2170
      %2172 = vmatprep.mubr.bf16.mxu0 0
      %2173 = vmatmul.mubr.bf16.gmra.mrb[0].mxu0 %v2077
      %v2174 = vpop.f32.mrb[0].mxu0
      %v2175 = vadd.f32 %v2062, %v2174
      %v2176 = vpop.f32.mrb[0].mxu0
      %v2177 = vadd.f32 %v2062, %v2176
      %v2178 = vpop.f32.mrb[0].mxu0
      %v2179 = vpop.f32.mrb[0].mxu0
      %2180 = vdwg.mxu0
      %2181 = vmatprep.subr.bf16.mxu0 %v2043
      %2182 = vmatpush1.bf16.msra.mxu0 %v2042
      %2183 = vmatprep.subr.bf16.mxu0 0
      %2184 = vmatpush1.bf16.msra.mxu0 0
      %2185 = vmatprep.subr.bf16.mxu0 0
      %2186 = vmatpush1.bf16.msra.mxu0 0
      %2187 = vmatprep.subr.bf16.mxu0 0
      %2188 = vmatpush1.bf16.msra.mxu0 0
      %2189 = vmatprep.subr.bf16.mxu0 0
      %2190 = vmatpush1.bf16.msra.mxu0 0
      %2191 = vmatprep.subr.bf16.mxu0 0
      %2192 = vmatpush1.bf16.msra.mxu0 0
      %2193 = vmatprep.subr.bf16.mxu0 0
      %2194 = vmatpush1.bf16.msra.mxu0 0
      %2195 = vmatprep.subr.bf16.mxu0 0
      %2196 = vmatpush1.bf16.msra.mxu0 0
      %2197 = vmatprep.subr.bf16.mxu0 0
      %2198 = vmatpush1.bf16.msra.mxu0 0
      %2199 = vmatprep.subr.bf16.mxu0 0
      %2200 = vmatpush1.bf16.msra.mxu0 0
      %2201 = vmatprep.subr.bf16.mxu0 0
      %2202 = vmatpush1.bf16.msra.mxu0 0
      %2203 = vmatprep.subr.bf16.mxu0 0
      %2204 = vmatpush1.bf16.msra.mxu0 0
      %2205 = vmatprep.subr.bf16.mxu0 0
      %2206 = vmatpush1.bf16.msra.mxu0 0
      %2207 = vmatprep.subr.bf16.mxu0 0
      %2208 = vmatpush1.bf16.msra.mxu0 0
      %2209 = vmatprep.subr.bf16.mxu0 0
      %2210 = vmatpush1.bf16.msra.mxu0 0
      %2211 = vmatprep.subr.bf16.mxu0 0
      %2212 = vmatpush1.bf16.msra.mxu0 0
      %2213 = vmatprep.mubr.bf16.mxu0 0
      %2214 = vmatmul.mubr.bf16.gmra.mrb[0].mxu0 %v2074
      %v2215 = vpop.f32.mrb[0].mxu0
      %v2216 = vadd.f32 %v2052, %v2215
      %v2217 = vpop.f32.mrb[0].mxu0
      %v2218 = vadd.f32 %v2052, %v2217
      %v2219 = vpop.f32.mrb[0].mxu0
      %v2220 = vadd.f32 %v2057, %v2219
      %v2221 = vpop.f32.mrb[0].mxu0
      %v2222 = vadd.f32 %v2057, %v2221
      %2223 = vmatprep.mubr.bf16.mxu0 0
      %2224 = vmatmul.mubr.bf16.gmra.mrb[0].mxu0 %v2077
      %v2225 = vpop.f32.mrb[0].mxu0
      %v2226 = vadd.f32 %v2062, %v2225
      %v2227 = vpop.f32.mrb[0].mxu0
      %v2228 = vadd.f32 %v2062, %v2227
      %v2229 = vpop.f32.mrb[0].mxu0
      %v2230 = vpop.f32.mrb[0].mxu0
      %2231 = vdwg.mxu0
      %2232 = vmatprep.subr.bf16.mxu0 %v2045
      %2233 = vmatpush1.bf16.msra.mxu0 %v2044
      %2234 = vmatprep.subr.bf16.mxu0 0
      %2235 = vmatpush1.bf16.msra.mxu0 0
      %2236 = vmatprep.subr.bf16.mxu0 0
      %2237 = vmatpush1.bf16.msra.mxu0 0
      %2238 = vmatprep.subr.bf16.mxu0 0
      %2239 = vmatpush1.bf16.msra.mxu0 0
      %2240 = vmatprep.subr.bf16.mxu0 0
      %2241 = vmatpush1.bf16.msra.mxu0 0
      %2242 = vmatprep.subr.bf16.mxu0 0
      %2243 = vmatpush1.bf16.msra.mxu0 0
      %2244 = vmatprep.subr.bf16.mxu0 0
      %2245 = vmatpush1.bf16.msra.mxu0 0
      %2246 = vmatprep.subr.bf16.mxu0 0
      %2247 = vmatpush1.bf16.msra.mxu0 0
      %2248 = vmatprep.subr.bf16.mxu0 0
      %2249 = vmatpush1.bf16.msra.mxu0 0
      %2250 = vmatprep.subr.bf16.mxu0 0
      %2251 = vmatpush1.bf16.msra.mxu0 0
      %2252 = vmatprep.subr.bf16.mxu0 0
      %2253 = vmatpush1.bf16.msra.mxu0 0
      %2254 = vmatprep.subr.bf16.mxu0 0
      %2255 = vmatpush1.bf16.msra.mxu0 0
      %2256 = vmatprep.subr.bf16.mxu0 0
      %2257 = vmatpush1.bf16.msra.mxu0 0
      %2258 = vmatprep.subr.bf16.mxu0 0
      %2259 = vmatpush1.bf16.msra.mxu0 0
      %2260 = vmatprep.subr.bf16.mxu0 0
      %2261 = vmatpush1.bf16.msra.mxu0 0
      %2262 = vmatprep.subr.bf16.mxu0 0
      %2263 = vmatpush1.bf16.msra.mxu0 0
      %2264 = vmatprep.mubr.bf16.mxu0 0
      %2265 = vmatmul.mubr.bf16.gmra.mrb[0].mxu0 %v2074
      %v2266 = vpop.f32.mrb[0].mxu0
      %v2267 = vadd.f32 %v2052, %v2266
      %v2268 = vpop.f32.mrb[0].mxu0
      %v2269 = vadd.f32 %v2052, %v2268
      %v2270 = vpop.f32.mrb[0].mxu0
      %v2271 = vadd.f32 %v2057, %v2270
      %v2272 = vpop.f32.mrb[0].mxu0
      %v2273 = vadd.f32 %v2057, %v2272
      %2274 = vmatprep.mubr.bf16.mxu0 0
      %2275 = vmatmul.mubr.bf16.gmra.mrb[0].mxu0 %v2077
      %v2276 = vpop.f32.mrb[0].mxu0
      %v2277 = vadd.f32 %v2062, %v2276
      %v2278 = vpop.f32.mrb[0].mxu0
      %v2279 = vadd.f32 %v2062, %v2278
      %v2280 = vpop.f32.mrb[0].mxu0
      %v2281 = vpop.f32.mrb[0].mxu0
      %2282 = vdwg.mxu0
      %v2283 = vsub.f32 0.0, %v2114
      %v2284 = vsub.f32 0.0, %v2116
      %v2285 = vsub.f32 0.0, %v2165
      %v2286 = vsub.f32 0.0, %v2167
      %v2287 = vsub.f32 0.0, %v2216
      %v2288 = vsub.f32 0.0, %v2218
      %v2289 = vsub.f32 0.0, %v2267
      %v2290 = vsub.f32 0.0, %v2269
      %v2291 = vsub.f32 0.0, %v2118
      %v2292 = vsub.f32 0.0, %v2120
      %v2293 = vsub.f32 0.0, %v2169
      %v2294 = vsub.f32 0.0, %v2171
      %v2295 = vsub.f32 0.0, %v2220
      %v2296 = vsub.f32 0.0, %v2222
      %v2297 = vsub.f32 0.0, %v2271
      %v2298 = vsub.f32 0.0, %v2273
      %v2299 = vsub.f32 0.0, %v2124
      %v2300 = vsub.f32 0.0, %v2126
      %v2301 = vsub.f32 0.0, %v2175
      %v2302 = vsub.f32 0.0, %v2177
      %v2303 = vsub.f32 0.0, %v2226
      %v2304 = vsub.f32 0.0, %v2228
      %v2305 = vsub.f32 0.0, %v2277
      %v2306 = vsub.f32 0.0, %v2279
      %v2307 = vmul.f32 %v2283, 1.442695
      %v2308 = vpow.pop %v2307
      %v2309 = vmul.f32 %v2284, 1.442695
      %v2310 = vpow.pop %v2309
      %v2311 = vmul.f32 %v2285, 1.442695
      %v2312 = vpow.pop %v2311
      %v2313 = vmul.f32 %v2286, 1.442695
      %v2314 = vpow.pop %v2313
      %v2315 = vmul.f32 %v2287, 1.442695
      %v2316 = vpow.pop %v2315
      %v2317 = vmul.f32 %v2288, 1.442695
      %v2318 = vpow.pop %v2317
      %v2319 = vmul.f32 %v2289, 1.442695
      %v2320 = vpow.pop %v2319
      %v2321 = vmul.f32 %v2290, 1.442695
      %v2322 = vpow.pop %v2321
      %v2323 = vmul.f32 %v2291, 1.442695
      %v2324 = vpow.pop %v2323
      %v2325 = vmul.f32 %v2292, 1.442695
      %v2326 = vpow.pop %v2325
      %v2327 = vmul.f32 %v2293, 1.442695
      %v2328 = vpow.pop %v2327
      %v2329 = vmul.f32 %v2294, 1.442695
      %v2330 = vpow.pop %v2329
      %v2331 = vmul.f32 %v2295, 1.442695
      %v2332 = vpow.pop %v2331
      %v2333 = vmul.f32 %v2296, 1.442695
      %v2334 = vpow.pop %v2333
      %v2335 = vmul.f32 %v2297, 1.442695
      %v2336 = vpow.pop %v2335
      %v2337 = vmul.f32 %v2298, 1.442695
      %v2338 = vpow.pop %v2337
      %v2339 = vmul.f32 %v2299, 1.442695
      %v2340 = vpow.pop %v2339
      %v2341 = vmul.f32 %v2300, 1.442695
      %v2342 = vpow.pop %v2341
      %v2343 = vmul.f32 %v2301, 1.442695
      %v2344 = vpow.pop %v2343
      %v2345 = vmul.f32 %v2302, 1.442695
      %v2346 = vpow.pop %v2345
      %v2347 = vmul.f32 %v2303, 1.442695
      %v2348 = vpow.pop %v2347
      %v2349 = vmul.f32 %v2304, 1.442695
      %v2350 = vpow.pop %v2349
      %v2351 = vmul.f32 %v2305, 1.442695
      %v2352 = vpow.pop %v2351
      %v2353 = vmul.f32 %v2306, 1.442695
      %v2354 = vpow.pop %v2353
      %v2355 = vadd.f32 %v2308, 1.0
      %v2356 = vadd.f32 %v2310, 1.0
      %v2357 = vadd.f32 %v2312, 1.0
      %v2358 = vadd.f32 %v2314, 1.0
      %v2359 = vadd.f32 %v2316, 1.0
      %v2360 = vadd.f32 %v2318, 1.0
      %v2361 = vadd.f32 %v2320, 1.0
      %v2362 = vadd.f32 %v2322, 1.0
      %v2363 = vadd.f32 %v2324, 1.0
      %v2364 = vadd.f32 %v2326, 1.0
      %v2365 = vadd.f32 %v2328, 1.0
      %v2366 = vadd.f32 %v2330, 1.0
      %v2367 = vadd.f32 %v2332, 1.0
      %v2368 = vadd.f32 %v2334, 1.0
      %v2369 = vadd.f32 %v2336, 1.0
      %v2370 = vadd.f32 %v2338, 1.0
      %v2371 = vadd.f32 %v2340, 1.0
      %v2372 = vadd.f32 %v2342, 1.0
      %v2373 = vadd.f32 %v2344, 1.0
      %v2374 = vadd.f32 %v2346, 1.0
      %v2375 = vadd.f32 %v2348, 1.0
      %v2376 = vadd.f32 %v2350, 1.0
      %v2377 = vadd.f32 %v2352, 1.0
      %v2378 = vadd.f32 %v2354, 1.0
      %v2379 = vrcp.pop %v2355
      %v2380 = vrcp.pop %v2356
      %v2381 = vrcp.pop %v2357
      %v2382 = vrcp.pop %v2358
      %v2383 = vrcp.pop %v2359
      %v2384 = vrcp.pop %v2360
      %v2385 = vrcp.pop %v2361
      %v2386 = vrcp.pop %v2362
      %v2387 = vrcp.pop %v2363
      %v2388 = vrcp.pop %v2364
      %v2389 = vrcp.pop %v2365
      %v2390 = vrcp.pop %v2366
      %v2391 = vrcp.pop %v2367
      %v2392 = vrcp.pop %v2368
      %v2393 = vrcp.pop %v2369
      %v2394 = vrcp.pop %v2370
      %v2395 = vrcp.pop %v2371
      %v2396 = vrcp.pop %v2372
      %v2397 = vrcp.pop %v2373
      %v2398 = vrcp.pop %v2374
      %v2399 = vrcp.pop %v2375
      %v2400 = vrcp.pop %v2376
      %v2401 = vrcp.pop %v2377
      %v2402 = vrcp.pop %v2378
      %v2403 = vmul.f32 %v2114, %v2379
      %v2404 = vmul.f32 %v2116, %v2380
      %v2405 = vmul.f32 %v2165, %v2381
      %v2406 = vmul.f32 %v2167, %v2382
      %v2407 = vmul.f32 %v2216, %v2383
      %v2408 = vmul.f32 %v2218, %v2384
      %v2409 = vmul.f32 %v2267, %v2385
      %v2410 = vmul.f32 %v2269, %v2386
      %v2411 = vmul.f32 %v2118, %v2387
      %v2412 = vmul.f32 %v2120, %v2388
      %v2413 = vmul.f32 %v2169, %v2389
      %v2414 = vmul.f32 %v2171, %v2390
      %v2415 = vmul.f32 %v2220, %v2391
      %v2416 = vmul.f32 %v2222, %v2392
      %v2417 = vmul.f32 %v2271, %v2393
      %v2418 = vmul.f32 %v2273, %v2394
      %v2419 = vmul.f32 %v2124, %v2395
      %v2420 = vmul.f32 %v2126, %v2396
      %v2421 = vmul.f32 %v2175, %v2397
      %v2422 = vmul.f32 %v2177, %v2398
      %v2423 = vmul.f32 %v2226, %v2399
      %v2424 = vmul.f32 %v2228, %v2400
      %v2425 = vmul.f32 %v2277, %v2401
      %v2426 = vmul.f32 %v2279, %v2402
      %2427 = vrot.lane.b32.xlu0 %v2403, 33
      %v2428 = vpop.permute.xlu0 %2427
      %2429 = vrot.lane.b32.xlu0 %v2411, 33
      %v2430 = vpop.permute.xlu0 %2429
      %2431 = vrot.lane.b32.xlu0 %v2419, 33
      %v2432 = vpop.permute.xlu0 %2431
      %2433 = vrot.lane.b32.xlu0 %v2404, 33
      %v2434 = vpop.permute.xlu0 %2433
      %2435 = vrot.lane.b32.xlu0 %v2412, 33
      %v2436 = vpop.permute.xlu0 %2435
      %2437 = vrot.lane.b32.xlu0 %v2420, 33
      %v2438 = vpop.permute.xlu0 %2437
      %2439 = vrot.lane.b32.xlu0 %v2405, 33
      %v2440 = vpop.permute.xlu0 %2439
      %2441 = vrot.lane.b32.xlu0 %v2413, 33
      %v2442 = vpop.permute.xlu0 %2441
      %2443 = vrot.lane.b32.xlu0 %v2421, 33
      %v2444 = vpop.permute.xlu0 %2443
      %2445 = vrot.lane.b32.xlu0 %v2406, 33
      %v2446 = vpop.permute.xlu0 %2445
      %2447 = vrot.lane.b32.xlu0 %v2414, 33
      %v2448 = vpop.permute.xlu0 %2447
      %2449 = vrot.lane.b32.xlu0 %v2422, 33
      %v2450 = vpop.permute.xlu0 %2449
      %2451 = vrot.lane.b32.xlu0 %v2407, 33
      %v2452 = vpop.permute.xlu0 %2451
      %2453 = vrot.lane.b32.xlu0 %v2415, 33
      %v2454 = vpop.permute.xlu0 %2453
      %2455 = vrot.lane.b32.xlu0 %v2423, 33
      %v2456 = vpop.permute.xlu0 %2455
      %2457 = vrot.lane.b32.xlu0 %v2408, 33
      %v2458 = vpop.permute.xlu0 %2457
      %2459 = vrot.lane.b32.xlu0 %v2416, 33
      %v2460 = vpop.permute.xlu0 %2459
      %2461 = vrot.lane.b32.xlu0 %v2424, 33
      %v2462 = vpop.permute.xlu0 %2461
      %2463 = vrot.lane.b32.xlu0 %v2409, 33
      %v2464 = vpop.permute.xlu0 %2463
      %2465 = vrot.lane.b32.xlu0 %v2417, 33
      %v2466 = vpop.permute.xlu0 %2465
      %2467 = vrot.lane.b32.xlu0 %v2425, 33
      %v2468 = vpop.permute.xlu0 %2467
      %2469 = vrot.lane.b32.xlu0 %v2410, 33
      %v2470 = vpop.permute.xlu0 %2469
      %2471 = vrot.lane.b32.xlu0 %v2418, 33
      %v2472 = vpop.permute.xlu0 %2471
      %2473 = vrot.lane.b32.xlu0 %v2426, 33
      %v2474 = vpop.permute.xlu0 %2473
      %v2475 = vsel %vm1099, %v2464, %v2470
      %v2476 = vsel %vm1099, %v2466, %v2472
      %v2477 = vsel %vm1099, %v2468, %v2474
      %v2478 = vsel %vm1099, %v2458, %v2464
      %v2479 = vsel %vm1099, %v2460, %v2466
      %v2480 = vsel %vm1099, %v2462, %v2468
      %v2481 = vsel %vm1099, %v2452, %v2458
      %v2482 = vsel %vm1099, %v2454, %v2460
      %v2483 = vsel %vm1099, %v2456, %v2462
      %v2484 = vsel %vm1099, %v2446, %v2452
      %v2485 = vsel %vm1099, %v2448, %v2454
      %v2486 = vsel %vm1099, %v2450, %v2456
      %v2487 = vsel %vm1099, %v2440, %v2446
      %v2488 = vsel %vm1099, %v2442, %v2448
      %v2489 = vsel %vm1099, %v2444, %v2450
      %v2490 = vsel %vm1099, %v2434, %v2440
      %v2491 = vsel %vm1099, %v2436, %v2442
      %v2492 = vsel %vm1099, %v2438, %v2444
      %v2493 = vsel %vm1099, %v2428, %v2434
      %v2494 = vsel %vm1099, %v2430, %v2436
      %v2495 = vsel %vm1099, %v2432, %v2438
      %v2496 = vsel %vm1099, %v2470, %v2428
      %v2497 = vsel %vm1099, %v2472, %v2430
      %v2498 = vsel %vm1099, %v2474, %v2432
      %v2499 = vmul.f32 %v2496, %v1140
      %v2500 = vmul.f32 %v2493, %v1141
      %v2501 = vmul.f32 %v2490, %v1142
      %v2502 = vmul.f32 %v2487, %v1143
      %v2503 = vmul.f32 %v2484, %v1144
      %v2504 = vmul.f32 %v2481, %v1145
      %v2505 = vmul.f32 %v2478, %v1146
      %v2506 = vmul.f32 %v2475, %v1147
      %v2507 = vmul.f32 %v2497, %v1140
      %v2508 = vmul.f32 %v2494, %v1141
      %v2509 = vmul.f32 %v2491, %v1142
      %v2510 = vmul.f32 %v2488, %v1143
      %v2511 = vmul.f32 %v2485, %v1144
      %v2512 = vmul.f32 %v2482, %v1145
      %v2513 = vmul.f32 %v2479, %v1146
      %v2514 = vmul.f32 %v2476, %v1147
      %v2515 = vmul.f32 %v2498, %v1140
      %v2516 = vmul.f32 %v2495, %v1141
      %v2517 = vmul.f32 %v2492, %v1142
      %v2518 = vmul.f32 %v2489, %v1143
      %v2519 = vmul.f32 %v2486, %v1144
      %v2520 = vmul.f32 %v2483, %v1145
      %v2521 = vmul.f32 %v2480, %v1146
      %v2522 = vmul.f32 %v2477, %v1147
      %v2523 = vld [vmem:[%s9] sm:$0xff]
      %v2524 = vld [vmem:[%s9 + $0x8] sm:$0xff]
      %v2525 = vld [vmem:[%s9 + $0x10] sm:$0xff]
      %2527 = vset.pattern.permute.xlu0 0
      %2528 = vperm.xlu0 %2527, %v2523
      %v2529 = vpop.permute.xlu0 %2528
      %2532 = vset.pattern.permute.xlu0 0
      %2533 = vperm.xlu0 %2532, %v2524
      %v2534 = vpop.permute.xlu0 %2533
      %2537 = vset.pattern.permute.xlu0 0
      %2538 = vperm.xlu0 %2537, %v2525
      %v2539 = vpop.permute.xlu0 %2538
      %v2541 = vmul.f32 %v2499, %v2529
      %v2542 = vmul.f32 %v2500, %v2529
      %v2543 = vmul.f32 %v2501, %v2529
      %v2544 = vmul.f32 %v2502, %v2529
      %v2545 = vmul.f32 %v2503, %v2529
      %v2546 = vmul.f32 %v2504, %v2529
      %v2547 = vmul.f32 %v2505, %v2529
      %v2548 = vmul.f32 %v2506, %v2529
      %v2549 = vmul.f32 %v2507, %v2534
      %v2550 = vmul.f32 %v2508, %v2534
      %v2551 = vmul.f32 %v2509, %v2534
      %v2552 = vmul.f32 %v2510, %v2534
      %v2553 = vmul.f32 %v2511, %v2534
      %v2554 = vmul.f32 %v2512, %v2534
      %v2555 = vmul.f32 %v2513, %v2534
      %v2556 = vmul.f32 %v2514, %v2534
      %v2557 = vmul.f32 %v2515, %v2539
      %v2558 = vmul.f32 %v2516, %v2539
      %v2559 = vmul.f32 %v2517, %v2539
      %v2560 = vmul.f32 %v2518, %v2539
      %v2561 = vmul.f32 %v2519, %v2539
      %v2562 = vmul.f32 %v2520, %v2539
      %v2563 = vmul.f32 %v2521, %v2539
      %v2564 = vmul.f32 %v2522, %v2539
      %v2565 = vadd.f32 %v2541, 0.0
      %v2566 = vadd.f32 %v2542, 0.0
      %v2567 = vadd.f32 %v2543, 0.0
      %v2568 = vadd.f32 %v2544, 0.0
      %v2569 = vadd.f32 %v2545, 0.0
      %v2570 = vadd.f32 %v2546, 0.0
      %v2571 = vadd.f32 %v2547, 0.0
      %v2572 = vadd.f32 %v2548, 0.0
      %v2573 = vadd.f32 %v2549, 0.0
      %v2574 = vadd.f32 %v2550, 0.0
      %v2575 = vadd.f32 %v2551, 0.0
      %v2576 = vadd.f32 %v2552, 0.0
      %v2577 = vadd.f32 %v2553, 0.0
      %v2578 = vadd.f32 %v2554, 0.0
      %v2579 = vadd.f32 %v2555, 0.0
      %v2580 = vadd.f32 %v2556, 0.0
      %v2581 = vadd.f32 %v2557, 0.0
      %v2582 = vadd.f32 %v2558, 0.0
      %v2583 = vadd.f32 %v2559, 0.0
      %v2584 = vadd.f32 %v2560, 0.0
      %v2585 = vadd.f32 %v2561, 0.0
      %v2586 = vadd.f32 %v2562, 0.0
      %v2587 = vadd.f32 %v2563, 0.0
      %v2588 = vadd.f32 %v2564, 0.0
      %2589 = vrot.lane.b32.xlu0 %v2403, 32
      %v2590 = vpop.permute.xlu0 %2589
      %2591 = vrot.lane.b32.xlu0 %v2411, 32
      %v2592 = vpop.permute.xlu0 %2591
      %2593 = vrot.lane.b32.xlu0 %v2419, 32
      %v2594 = vpop.permute.xlu0 %2593
      %2595 = vrot.lane.b32.xlu0 %v2404, 32
      %v2596 = vpop.permute.xlu0 %2595
      %2597 = vrot.lane.b32.xlu0 %v2412, 32
      %v2598 = vpop.permute.xlu0 %2597
      %2599 = vrot.lane.b32.xlu0 %v2420, 32
      %v2600 = vpop.permute.xlu0 %2599
      %2601 = vrot.lane.b32.xlu0 %v2405, 32
      %v2602 = vpop.permute.xlu0 %2601
      %2603 = vrot.lane.b32.xlu0 %v2413, 32
      %v2604 = vpop.permute.xlu0 %2603
      %2605 = vrot.lane.b32.xlu0 %v2421, 32
      %v2606 = vpop.permute.xlu0 %2605
      %2607 = vrot.lane.b32.xlu0 %v2406, 32
      %v2608 = vpop.permute.xlu0 %2607
      %2609 = vrot.lane.b32.xlu0 %v2414, 32
      %v2610 = vpop.permute.xlu0 %2609
      %2611 = vrot.lane.b32.xlu0 %v2422, 32
      %v2612 = vpop.permute.xlu0 %2611
      %2613 = vrot.lane.b32.xlu0 %v2407, 32
      %v2614 = vpop.permute.xlu0 %2613
      %2615 = vrot.lane.b32.xlu0 %v2415, 32
      %v2616 = vpop.permute.xlu0 %2615
      %2617 = vrot.lane.b32.xlu0 %v2423, 32
      %v2618 = vpop.permute.xlu0 %2617
      %2619 = vrot.lane.b32.xlu0 %v2408, 32
      %v2620 = vpop.permute.xlu0 %2619
      %2621 = vrot.lane.b32.xlu0 %v2416, 32
      %v2622 = vpop.permute.xlu0 %2621
      %2623 = vrot.lane.b32.xlu0 %v2424, 32
      %v2624 = vpop.permute.xlu0 %2623
      %2625 = vrot.lane.b32.xlu0 %v2409, 32
      %v2626 = vpop.permute.xlu0 %2625
      %2627 = vrot.lane.b32.xlu0 %v2417, 32
      %v2628 = vpop.permute.xlu0 %2627
      %2629 = vrot.lane.b32.xlu0 %v2425, 32
      %v2630 = vpop.permute.xlu0 %2629
      %2631 = vrot.lane.b32.xlu0 %v2410, 32
      %v2632 = vpop.permute.xlu0 %2631
      %2633 = vrot.lane.b32.xlu0 %v2418, 32
      %v2634 = vpop.permute.xlu0 %2633
      %2635 = vrot.lane.b32.xlu0 %v2426, 32
      %v2636 = vpop.permute.xlu0 %2635
      %v2637 = vsel %vm1194, %v2626, %v2632
      %v2638 = vsel %vm1194, %v2628, %v2634
      %v2639 = vsel %vm1194, %v2630, %v2636
      %v2640 = vsel %vm1194, %v2620, %v2626
      %v2641 = vsel %vm1194, %v2622, %v2628
      %v2642 = vsel %vm1194, %v2624, %v2630
      %v2643 = vsel %vm1194, %v2614, %v2620
      %v2644 = vsel %vm1194, %v2616, %v2622
      %v2645 = vsel %vm1194, %v2618, %v2624
      %v2646 = vsel %vm1194, %v2608, %v2614
      %v2647 = vsel %vm1194, %v2610, %v2616
      %v2648 = vsel %vm1194, %v2612, %v2618
      %v2649 = vsel %vm1194, %v2602, %v2608
      %v2650 = vsel %vm1194, %v2604, %v2610
      %v2651 = vsel %vm1194, %v2606, %v2612
      %v2652 = vsel %vm1194, %v2596, %v2602
      %v2653 = vsel %vm1194, %v2598, %v2604
      %v2654 = vsel %vm1194, %v2600, %v2606
      %v2655 = vsel %vm1194, %v2590, %v2596
      %v2656 = vsel %vm1194, %v2592, %v2598
      %v2657 = vsel %vm1194, %v2594, %v2600
      %v2658 = vsel %vm1194, %v2632, %v2590
      %v2659 = vsel %vm1194, %v2634, %v2592
      %v2660 = vsel %vm1194, %v2636, %v2594
      %v2661 = vmul.f32 %v2658, %v1211
      %v2662 = vmul.f32 %v2655, %v1212
      %v2663 = vmul.f32 %v2652, %v1213
      %v2664 = vmul.f32 %v2649, %v1214
      %v2665 = vmul.f32 %v2646, %v1215
      %v2666 = vmul.f32 %v2643, %v1216
      %v2667 = vmul.f32 %v2640, %v1217
      %v2668 = vmul.f32 %v2637, %v1218
      %v2669 = vmul.f32 %v2659, %v1211
      %v2670 = vmul.f32 %v2656, %v1212
      %v2671 = vmul.f32 %v2653, %v1213
      %v2672 = vmul.f32 %v2650, %v1214
      %v2673 = vmul.f32 %v2647, %v1215
      %v2674 = vmul.f32 %v2644, %v1216
      %v2675 = vmul.f32 %v2641, %v1217
      %v2676 = vmul.f32 %v2638, %v1218
      %v2677 = vmul.f32 %v2660, %v1211
      %v2678 = vmul.f32 %v2657, %v1212
      %v2679 = vmul.f32 %v2654, %v1213
      %v2680 = vmul.f32 %v2651, %v1214
      %v2681 = vmul.f32 %v2648, %v1215
      %v2682 = vmul.f32 %v2645, %v1216
      %v2683 = vmul.f32 %v2642, %v1217
      %v2684 = vmul.f32 %v2639, %v1218
      %s2685 = scalar_lea.vmem %s9, 24
      %v2686 = vld [vmem:[%s2685] sm:$0xff]
      %v2687 = vld [vmem:[%s2685 + $0x8] sm:$0xff]
      %v2688 = vld [vmem:[%s2685 + $0x10] sm:$0xff]
      %2690 = vset.pattern.permute.xlu0 0
      %2691 = vperm.xlu0 %2690, %v2686
      %v2692 = vpop.permute.xlu0 %2691
      %2695 = vset.pattern.permute.xlu0 0
      %2696 = vperm.xlu0 %2695, %v2687
      %v2697 = vpop.permute.xlu0 %2696
      %2700 = vset.pattern.permute.xlu0 0
      %2701 = vperm.xlu0 %2700, %v2688
      %v2702 = vpop.permute.xlu0 %2701
      %v2704 = vmul.f32 %v2661, %v2692
      %v2705 = vmul.f32 %v2662, %v2692
      %v2706 = vmul.f32 %v2663, %v2692
      %v2707 = vmul.f32 %v2664, %v2692
      %v2708 = vmul.f32 %v2665, %v2692
      %v2709 = vmul.f32 %v2666, %v2692
      %v2710 = vmul.f32 %v2667, %v2692
      %v2711 = vmul.f32 %v2668, %v2692
      %v2712 = vmul.f32 %v2669, %v2697
      %v2713 = vmul.f32 %v2670, %v2697
      %v2714 = vmul.f32 %v2671, %v2697
      %v2715 = vmul.f32 %v2672, %v2697
      %v2716 = vmul.f32 %v2673, %v2697
      %v2717 = vmul.f32 %v2674, %v2697
      %v2718 = vmul.f32 %v2675, %v2697
      %v2719 = vmul.f32 %v2676, %v2697
      %v2720 = vmul.f32 %v2677, %v2702
      %v2721 = vmul.f32 %v2678, %v2702
      %v2722 = vmul.f32 %v2679, %v2702
      %v2723 = vmul.f32 %v2680, %v2702
      %v2724 = vmul.f32 %v2681, %v2702
      %v2725 = vmul.f32 %v2682, %v2702
      %v2726 = vmul.f32 %v2683, %v2702
      %v2727 = vmul.f32 %v2684, %v2702
      %v2728 = vadd.f32 %v2565, %v2704
      %v2729 = vadd.f32 %v2566, %v2705
      %v2730 = vadd.f32 %v2567, %v2706
      %v2731 = vadd.f32 %v2568, %v2707
      %v2732 = vadd.f32 %v2569, %v2708
      %v2733 = vadd.f32 %v2570, %v2709
      %v2734 = vadd.f32 %v2571, %v2710
      %v2735 = vadd.f32 %v2572, %v2711
      %v2736 = vadd.f32 %v2573, %v2712
      %v2737 = vadd.f32 %v2574, %v2713
      %v2738 = vadd.f32 %v2575, %v2714
      %v2739 = vadd.f32 %v2576, %v2715
      %v2740 = vadd.f32 %v2577, %v2716
      %v2741 = vadd.f32 %v2578, %v2717
      %v2742 = vadd.f32 %v2579, %v2718
      %v2743 = vadd.f32 %v2580, %v2719
      %v2744 = vadd.f32 %v2581, %v2720
      %v2745 = vadd.f32 %v2582, %v2721
      %v2746 = vadd.f32 %v2583, %v2722
      %v2747 = vadd.f32 %v2584, %v2723
      %v2748 = vadd.f32 %v2585, %v2724
      %v2749 = vadd.f32 %v2586, %v2725
      %v2750 = vadd.f32 %v2587, %v2726
      %v2751 = vadd.f32 %v2588, %v2727
      %2752 = vrot.lane.b32.xlu0 %v2403, 31
      %v2753 = vpop.permute.xlu0 %2752
      %2754 = vrot.lane.b32.xlu0 %v2411, 31
      %v2755 = vpop.permute.xlu0 %2754
      %2756 = vrot.lane.b32.xlu0 %v2419, 31
      %v2757 = vpop.permute.xlu0 %2756
      %2758 = vrot.lane.b32.xlu0 %v2404, 31
      %v2759 = vpop.permute.xlu0 %2758
      %2760 = vrot.lane.b32.xlu0 %v2412, 31
      %v2761 = vpop.permute.xlu0 %2760
      %2762 = vrot.lane.b32.xlu0 %v2420, 31
      %v2763 = vpop.permute.xlu0 %2762
      %2764 = vrot.lane.b32.xlu0 %v2405, 31
      %v2765 = vpop.permute.xlu0 %2764
      %2766 = vrot.lane.b32.xlu0 %v2413, 31
      %v2767 = vpop.permute.xlu0 %2766
      %2768 = vrot.lane.b32.xlu0 %v2421, 31
      %v2769 = vpop.permute.xlu0 %2768
      %2770 = vrot.lane.b32.xlu0 %v2406, 31
      %v2771 = vpop.permute.xlu0 %2770
      %2772 = vrot.lane.b32.xlu0 %v2414, 31
      %v2773 = vpop.permute.xlu0 %2772
      %2774 = vrot.lane.b32.xlu0 %v2422, 31
      %v2775 = vpop.permute.xlu0 %2774
      %2776 = vrot.lane.b32.xlu0 %v2407, 31
      %v2777 = vpop.permute.xlu0 %2776
      %2778 = vrot.lane.b32.xlu0 %v2415, 31
      %v2779 = vpop.permute.xlu0 %2778
      %2780 = vrot.lane.b32.xlu0 %v2423, 31
      %v2781 = vpop.permute.xlu0 %2780
      %2782 = vrot.lane.b32.xlu0 %v2408, 31
      %v2783 = vpop.permute.xlu0 %2782
      %2784 = vrot.lane.b32.xlu0 %v2416, 31
      %v2785 = vpop.permute.xlu0 %2784
      %2786 = vrot.lane.b32.xlu0 %v2424, 31
      %v2787 = vpop.permute.xlu0 %2786
      %2788 = vrot.lane.b32.xlu0 %v2409, 31
      %v2789 = vpop.permute.xlu0 %2788
      %2790 = vrot.lane.b32.xlu0 %v2417, 31
      %v2791 = vpop.permute.xlu0 %2790
      %2792 = vrot.lane.b32.xlu0 %v2425, 31
      %v2793 = vpop.permute.xlu0 %2792
      %2794 = vrot.lane.b32.xlu0 %v2410, 31
      %v2795 = vpop.permute.xlu0 %2794
      %2796 = vrot.lane.b32.xlu0 %v2418, 31
      %v2797 = vpop.permute.xlu0 %2796
      %2798 = vrot.lane.b32.xlu0 %v2426, 31
      %v2799 = vpop.permute.xlu0 %2798
      %v2800 = vsel %vm1266, %v2789, %v2795
      %v2801 = vsel %vm1266, %v2791, %v2797
      %v2802 = vsel %vm1266, %v2793, %v2799
      %v2803 = vsel %vm1266, %v2783, %v2789
      %v2804 = vsel %vm1266, %v2785, %v2791
      %v2805 = vsel %vm1266, %v2787, %v2793
      %v2806 = vsel %vm1266, %v2777, %v2783
      %v2807 = vsel %vm1266, %v2779, %v2785
      %v2808 = vsel %vm1266, %v2781, %v2787
      %v2809 = vsel %vm1266, %v2771, %v2777
      %v2810 = vsel %vm1266, %v2773, %v2779
      %v2811 = vsel %vm1266, %v2775, %v2781
      %v2812 = vsel %vm1266, %v2765, %v2771
      %v2813 = vsel %vm1266, %v2767, %v2773
      %v2814 = vsel %vm1266, %v2769, %v2775
      %v2815 = vsel %vm1266, %v2759, %v2765
      %v2816 = vsel %vm1266, %v2761, %v2767
      %v2817 = vsel %vm1266, %v2763, %v2769
      %v2818 = vsel %vm1266, %v2753, %v2759
      %v2819 = vsel %vm1266, %v2755, %v2761
      %v2820 = vsel %vm1266, %v2757, %v2763
      %v2821 = vsel %vm1266, %v2795, %v2753
      %v2822 = vsel %vm1266, %v2797, %v2755
      %v2823 = vsel %vm1266, %v2799, %v2757
      %v2824 = vmul.f32 %v2821, %v1299
      %v2825 = vmul.f32 %v2818, %v1300
      %v2826 = vmul.f32 %v2815, %v1301
      %v2827 = vmul.f32 %v2812, %v1302
      %v2828 = vmul.f32 %v2809, %v1303
      %v2829 = vmul.f32 %v2806, %v1304
      %v2830 = vmul.f32 %v2803, %v1305
      %v2831 = vmul.f32 %v2800, %v1306
      %v2832 = vmul.f32 %v2822, %v1299
      %v2833 = vmul.f32 %v2819, %v1300
      %v2834 = vmul.f32 %v2816, %v1301
      %v2835 = vmul.f32 %v2813, %v1302
      %v2836 = vmul.f32 %v2810, %v1303
      %v2837 = vmul.f32 %v2807, %v1304
      %v2838 = vmul.f32 %v2804, %v1305
      %v2839 = vmul.f32 %v2801, %v1306
      %v2840 = vmul.f32 %v2823, %v1299
      %v2841 = vmul.f32 %v2820, %v1300
      %v2842 = vmul.f32 %v2817, %v1301
      %v2843 = vmul.f32 %v2814, %v1302
      %v2844 = vmul.f32 %v2811, %v1303
      %v2845 = vmul.f32 %v2808, %v1304
      %v2846 = vmul.f32 %v2805, %v1305
      %v2847 = vmul.f32 %v2802, %v1306
      %s2848 = scalar_lea.vmem %s9, 48
      %v2849 = vld [vmem:[%s2848] sm:$0xff]
      %v2850 = vld [vmem:[%s2848 + $0x8] sm:$0xff]
      %v2851 = vld [vmem:[%s2848 + $0x10] sm:$0xff]
      %2853 = vset.pattern.permute.xlu0 0
      %2854 = vperm.xlu0 %2853, %v2849
      %v2855 = vpop.permute.xlu0 %2854
      %2858 = vset.pattern.permute.xlu0 0
      %2859 = vperm.xlu0 %2858, %v2850
      %v2860 = vpop.permute.xlu0 %2859
      %2863 = vset.pattern.permute.xlu0 0
      %2864 = vperm.xlu0 %2863, %v2851
      %v2865 = vpop.permute.xlu0 %2864
      %v2867 = vmul.f32 %v2824, %v2855
      %v2868 = vmul.f32 %v2825, %v2855
      %v2869 = vmul.f32 %v2826, %v2855
      %v2870 = vmul.f32 %v2827, %v2855
      %v2871 = vmul.f32 %v2828, %v2855
      %v2872 = vmul.f32 %v2829, %v2855
      %v2873 = vmul.f32 %v2830, %v2855
      %v2874 = vmul.f32 %v2831, %v2855
      %v2875 = vmul.f32 %v2832, %v2860
      %v2876 = vmul.f32 %v2833, %v2860
      %v2877 = vmul.f32 %v2834, %v2860
      %v2878 = vmul.f32 %v2835, %v2860
      %v2879 = vmul.f32 %v2836, %v2860
      %v2880 = vmul.f32 %v2837, %v2860
      %v2881 = vmul.f32 %v2838, %v2860
      %v2882 = vmul.f32 %v2839, %v2860
      %v2883 = vmul.f32 %v2840, %v2865
      %v2884 = vmul.f32 %v2841, %v2865
      %v2885 = vmul.f32 %v2842, %v2865
      %v2886 = vmul.f32 %v2843, %v2865
      %v2887 = vmul.f32 %v2844, %v2865
      %v2888 = vmul.f32 %v2845, %v2865
      %v2889 = vmul.f32 %v2846, %v2865
      %v2890 = vmul.f32 %v2847, %v2865
      %v2891 = vadd.f32 %v2728, %v2867
      %v2892 = vadd.f32 %v2729, %v2868
      %v2893 = vadd.f32 %v2730, %v2869
      %v2894 = vadd.f32 %v2731, %v2870
      %v2895 = vadd.f32 %v2732, %v2871
      %v2896 = vadd.f32 %v2733, %v2872
      %v2897 = vadd.f32 %v2734, %v2873
      %v2898 = vadd.f32 %v2735, %v2874
      %v2899 = vadd.f32 %v2736, %v2875
      %v2900 = vadd.f32 %v2737, %v2876
      %v2901 = vadd.f32 %v2738, %v2877
      %v2902 = vadd.f32 %v2739, %v2878
      %v2903 = vadd.f32 %v2740, %v2879
      %v2904 = vadd.f32 %v2741, %v2880
      %v2905 = vadd.f32 %v2742, %v2881
      %v2906 = vadd.f32 %v2743, %v2882
      %v2907 = vadd.f32 %v2744, %v2883
      %v2908 = vadd.f32 %v2745, %v2884
      %v2909 = vadd.f32 %v2746, %v2885
      %v2910 = vadd.f32 %v2747, %v2886
      %v2911 = vadd.f32 %v2748, %v2887
      %v2912 = vadd.f32 %v2749, %v2888
      %v2913 = vadd.f32 %v2750, %v2889
      %v2914 = vadd.f32 %v2751, %v2890
      %2915 = vrot.lane.b32.xlu0 %v2403, 1
      %v2916 = vpop.permute.xlu0 %2915
      %2917 = vrot.lane.b32.xlu0 %v2411, 1
      %v2918 = vpop.permute.xlu0 %2917
      %2919 = vrot.lane.b32.xlu0 %v2419, 1
      %v2920 = vpop.permute.xlu0 %2919
      %2921 = vrot.lane.b32.xlu0 %v2404, 1
      %v2922 = vpop.permute.xlu0 %2921
      %2923 = vrot.lane.b32.xlu0 %v2412, 1
      %v2924 = vpop.permute.xlu0 %2923
      %2925 = vrot.lane.b32.xlu0 %v2420, 1
      %v2926 = vpop.permute.xlu0 %2925
      %2927 = vrot.lane.b32.xlu0 %v2405, 1
      %v2928 = vpop.permute.xlu0 %2927
      %2929 = vrot.lane.b32.xlu0 %v2413, 1
      %v2930 = vpop.permute.xlu0 %2929
      %2931 = vrot.lane.b32.xlu0 %v2421, 1
      %v2932 = vpop.permute.xlu0 %2931
      %2933 = vrot.lane.b32.xlu0 %v2406, 1
      %v2934 = vpop.permute.xlu0 %2933
      %2935 = vrot.lane.b32.xlu0 %v2414, 1
      %v2936 = vpop.permute.xlu0 %2935
      %2937 = vrot.lane.b32.xlu0 %v2422, 1
      %v2938 = vpop.permute.xlu0 %2937
      %2939 = vrot.lane.b32.xlu0 %v2407, 1
      %v2940 = vpop.permute.xlu0 %2939
      %2941 = vrot.lane.b32.xlu0 %v2415, 1
      %v2942 = vpop.permute.xlu0 %2941
      %2943 = vrot.lane.b32.xlu0 %v2423, 1
      %v2944 = vpop.permute.xlu0 %2943
      %2945 = vrot.lane.b32.xlu0 %v2408, 1
      %v2946 = vpop.permute.xlu0 %2945
      %2947 = vrot.lane.b32.xlu0 %v2416, 1
      %v2948 = vpop.permute.xlu0 %2947
      %2949 = vrot.lane.b32.xlu0 %v2424, 1
      %v2950 = vpop.permute.xlu0 %2949
      %2951 = vrot.lane.b32.xlu0 %v2409, 1
      %v2952 = vpop.permute.xlu0 %2951
      %2953 = vrot.lane.b32.xlu0 %v2417, 1
      %v2954 = vpop.permute.xlu0 %2953
      %2955 = vrot.lane.b32.xlu0 %v2425, 1
      %v2956 = vpop.permute.xlu0 %2955
      %2957 = vrot.lane.b32.xlu0 %v2410, 1
      %v2958 = vpop.permute.xlu0 %2957
      %2959 = vrot.lane.b32.xlu0 %v2418, 1
      %v2960 = vpop.permute.xlu0 %2959
      %2961 = vrot.lane.b32.xlu0 %v2426, 1
      %v2962 = vpop.permute.xlu0 %2961
      %v2963 = vsel %vm1354, %v2952, %v2958
      %v2964 = vsel %vm1354, %v2954, %v2960
      %v2965 = vsel %vm1354, %v2956, %v2962
      %v2966 = vsel %vm1354, %v2946, %v2952
      %v2967 = vsel %vm1354, %v2948, %v2954
      %v2968 = vsel %vm1354, %v2950, %v2956
      %v2969 = vsel %vm1354, %v2940, %v2946
      %v2970 = vsel %vm1354, %v2942, %v2948
      %v2971 = vsel %vm1354, %v2944, %v2950
      %v2972 = vsel %vm1354, %v2934, %v2940
      %v2973 = vsel %vm1354, %v2936, %v2942
      %v2974 = vsel %vm1354, %v2938, %v2944
      %v2975 = vsel %vm1354, %v2928, %v2934
      %v2976 = vsel %vm1354, %v2930, %v2936
      %v2977 = vsel %vm1354, %v2932, %v2938
      %v2978 = vsel %vm1354, %v2922, %v2928
      %v2979 = vsel %vm1354, %v2924, %v2930
      %v2980 = vsel %vm1354, %v2926, %v2932
      %v2981 = vsel %vm1354, %v2916, %v2922
      %v2982 = vsel %vm1354, %v2918, %v2924
      %v2983 = vsel %vm1354, %v2920, %v2926
      %v2984 = vsel %vm1354, %v2958, %v2916
      %v2985 = vsel %vm1354, %v2960, %v2918
      %v2986 = vsel %vm1354, %v2962, %v2920
      %v2987 = vmul.f32 %v2984, %v1371
      %v2988 = vmul.f32 %v2981, %v1372
      %v2989 = vmul.f32 %v2978, %v1373
      %v2990 = vmul.f32 %v2975, %v1374
      %v2991 = vmul.f32 %v2972, %v1375
      %v2992 = vmul.f32 %v2969, %v1376
      %v2993 = vmul.f32 %v2966, %v1377
      %v2994 = vmul.f32 %v2963, %v1378
      %v2995 = vmul.f32 %v2985, %v1371
      %v2996 = vmul.f32 %v2982, %v1372
      %v2997 = vmul.f32 %v2979, %v1373
      %v2998 = vmul.f32 %v2976, %v1374
      %v2999 = vmul.f32 %v2973, %v1375
      %v3000 = vmul.f32 %v2970, %v1376
      %v3001 = vmul.f32 %v2967, %v1377
      %v3002 = vmul.f32 %v2964, %v1378
      %v3003 = vmul.f32 %v2986, %v1371
      %v3004 = vmul.f32 %v2983, %v1372
      %v3005 = vmul.f32 %v2980, %v1373
      %v3006 = vmul.f32 %v2977, %v1374
      %v3007 = vmul.f32 %v2974, %v1375
      %v3008 = vmul.f32 %v2971, %v1376
      %v3009 = vmul.f32 %v2968, %v1377
      %v3010 = vmul.f32 %v2965, %v1378
      %s3011 = scalar_lea.vmem %s9, 72
      %v3012 = vld [vmem:[%s3011] sm:$0xff]
      %v3013 = vld [vmem:[%s3011 + $0x8] sm:$0xff]
      %v3014 = vld [vmem:[%s3011 + $0x10] sm:$0xff]
      %3016 = vset.pattern.permute.xlu0 0
      %3017 = vperm.xlu0 %3016, %v3012
      %v3018 = vpop.permute.xlu0 %3017
      %3021 = vset.pattern.permute.xlu0 0
      %3022 = vperm.xlu0 %3021, %v3013
      %v3023 = vpop.permute.xlu0 %3022
      %3026 = vset.pattern.permute.xlu0 0
      %3027 = vperm.xlu0 %3026, %v3014
      %v3028 = vpop.permute.xlu0 %3027
      %v3030 = vmul.f32 %v2987, %v3018
      %v3031 = vmul.f32 %v2988, %v3018
      %v3032 = vmul.f32 %v2989, %v3018
      %v3033 = vmul.f32 %v2990, %v3018
      %v3034 = vmul.f32 %v2991, %v3018
      %v3035 = vmul.f32 %v2992, %v3018
      %v3036 = vmul.f32 %v2993, %v3018
      %v3037 = vmul.f32 %v2994, %v3018
      %v3038 = vmul.f32 %v2995, %v3023
      %v3039 = vmul.f32 %v2996, %v3023
      %v3040 = vmul.f32 %v2997, %v3023
      %v3041 = vmul.f32 %v2998, %v3023
      %v3042 = vmul.f32 %v2999, %v3023
      %v3043 = vmul.f32 %v3000, %v3023
      %v3044 = vmul.f32 %v3001, %v3023
      %v3045 = vmul.f32 %v3002, %v3023
      %v3046 = vmul.f32 %v3003, %v3028
      %v3047 = vmul.f32 %v3004, %v3028
      %v3048 = vmul.f32 %v3005, %v3028
      %v3049 = vmul.f32 %v3006, %v3028
      %v3050 = vmul.f32 %v3007, %v3028
      %v3051 = vmul.f32 %v3008, %v3028
      %v3052 = vmul.f32 %v3009, %v3028
      %v3053 = vmul.f32 %v3010, %v3028
      %v3054 = vadd.f32 %v2891, %v3030
      %v3055 = vadd.f32 %v2892, %v3031
      %v3056 = vadd.f32 %v2893, %v3032
      %v3057 = vadd.f32 %v2894, %v3033
      %v3058 = vadd.f32 %v2895, %v3034
      %v3059 = vadd.f32 %v2896, %v3035
      %v3060 = vadd.f32 %v2897, %v3036
      %v3061 = vadd.f32 %v2898, %v3037
      %v3062 = vadd.f32 %v2899, %v3038
      %v3063 = vadd.f32 %v2900, %v3039
      %v3064 = vadd.f32 %v2901, %v3040
      %v3065 = vadd.f32 %v2902, %v3041
      %v3066 = vadd.f32 %v2903, %v3042
      %v3067 = vadd.f32 %v2904, %v3043
      %v3068 = vadd.f32 %v2905, %v3044
      %v3069 = vadd.f32 %v2906, %v3045
      %v3070 = vadd.f32 %v2907, %v3046
      %v3071 = vadd.f32 %v2908, %v3047
      %v3072 = vadd.f32 %v2909, %v3048
      %v3073 = vadd.f32 %v2910, %v3049
      %v3074 = vadd.f32 %v2911, %v3050
      %v3075 = vadd.f32 %v2912, %v3051
      %v3076 = vadd.f32 %v2913, %v3052
      %v3077 = vadd.f32 %v2914, %v3053
      %s3078 = scalar_lea.vmem %s9, 96
      %v3079 = vld [vmem:[%s3078] sm:$0xff]
      %v3080 = vld [vmem:[%s3078 + $0x8] sm:$0xff]
      %v3081 = vld [vmem:[%s3078 + $0x10] sm:$0xff]
      %3083 = vset.pattern.permute.xlu0 0
      %3084 = vperm.xlu0 %3083, %v3079
      %v3085 = vpop.permute.xlu0 %3084
      %3088 = vset.pattern.permute.xlu0 0
      %3089 = vperm.xlu0 %3088, %v3080
      %v3090 = vpop.permute.xlu0 %3089
      %3093 = vset.pattern.permute.xlu0 0
      %3094 = vperm.xlu0 %3093, %v3081
      %v3095 = vpop.permute.xlu0 %3094
      %v3097 = vmul.f32 %v2403, %v3085
      %v3098 = vmul.f32 %v2404, %v3085
      %v3099 = vmul.f32 %v2405, %v3085
      %v3100 = vmul.f32 %v2406, %v3085
      %v3101 = vmul.f32 %v2407, %v3085
      %v3102 = vmul.f32 %v2408, %v3085
      %v3103 = vmul.f32 %v2409, %v3085
      %v3104 = vmul.f32 %v2410, %v3085
      %v3105 = vmul.f32 %v2411, %v3090
      %v3106 = vmul.f32 %v2412, %v3090
      %v3107 = vmul.f32 %v2413, %v3090
      %v3108 = vmul.f32 %v2414, %v3090
      %v3109 = vmul.f32 %v2415, %v3090
      %v3110 = vmul.f32 %v2416, %v3090
      %v3111 = vmul.f32 %v2417, %v3090
      %v3112 = vmul.f32 %v2418, %v3090
      %v3113 = vmul.f32 %v2419, %v3095
      %v3114 = vmul.f32 %v2420, %v3095
      %v3115 = vmul.f32 %v2421, %v3095
      %v3116 = vmul.f32 %v2422, %v3095
      %v3117 = vmul.f32 %v2423, %v3095
      %v3118 = vmul.f32 %v2424, %v3095
      %v3119 = vmul.f32 %v2425, %v3095
      %v3120 = vmul.f32 %v2426, %v3095
      %v3121 = vadd.f32 %v3054, %v3097
      %v3122 = vadd.f32 %v3055, %v3098
      %v3123 = vadd.f32 %v3056, %v3099
      %v3124 = vadd.f32 %v3057, %v3100
      %v3125 = vadd.f32 %v3058, %v3101
      %v3126 = vadd.f32 %v3059, %v3102
      %v3127 = vadd.f32 %v3060, %v3103
      %v3128 = vadd.f32 %v3061, %v3104
      %v3129 = vadd.f32 %v3062, %v3105
      %v3130 = vadd.f32 %v3063, %v3106
      %v3131 = vadd.f32 %v3064, %v3107
      %v3132 = vadd.f32 %v3065, %v3108
      %v3133 = vadd.f32 %v3066, %v3109
      %v3134 = vadd.f32 %v3067, %v3110
      %v3135 = vadd.f32 %v3068, %v3111
      %v3136 = vadd.f32 %v3069, %v3112
      %v3137 = vadd.f32 %v3070, %v3113
      %v3138 = vadd.f32 %v3071, %v3114
      %v3139 = vadd.f32 %v3072, %v3115
      %v3140 = vadd.f32 %v3073, %v3116
      %v3141 = vadd.f32 %v3074, %v3117
      %v3142 = vadd.f32 %v3075, %v3118
      %v3143 = vadd.f32 %v3076, %v3119
      %v3144 = vadd.f32 %v3077, %v3120
      %3145 = vrot.lane.b32.xlu0 %v2403, 127
      %v3146 = vpop.permute.xlu0 %3145
      %3147 = vrot.lane.b32.xlu0 %v2411, 127
      %v3148 = vpop.permute.xlu0 %3147
      %3149 = vrot.lane.b32.xlu0 %v2419, 127
      %v3150 = vpop.permute.xlu0 %3149
      %3151 = vrot.lane.b32.xlu0 %v2404, 127
      %v3152 = vpop.permute.xlu0 %3151
      %3153 = vrot.lane.b32.xlu0 %v2412, 127
      %v3154 = vpop.permute.xlu0 %3153
      %3155 = vrot.lane.b32.xlu0 %v2420, 127
      %v3156 = vpop.permute.xlu0 %3155
      %3157 = vrot.lane.b32.xlu0 %v2405, 127
      %v3158 = vpop.permute.xlu0 %3157
      %3159 = vrot.lane.b32.xlu0 %v2413, 127
      %v3160 = vpop.permute.xlu0 %3159
      %3161 = vrot.lane.b32.xlu0 %v2421, 127
      %v3162 = vpop.permute.xlu0 %3161
      %3163 = vrot.lane.b32.xlu0 %v2406, 127
      %v3164 = vpop.permute.xlu0 %3163
      %3165 = vrot.lane.b32.xlu0 %v2414, 127
      %v3166 = vpop.permute.xlu0 %3165
      %3167 = vrot.lane.b32.xlu0 %v2422, 127
      %v3168 = vpop.permute.xlu0 %3167
      %3169 = vrot.lane.b32.xlu0 %v2407, 127
      %v3170 = vpop.permute.xlu0 %3169
      %3171 = vrot.lane.b32.xlu0 %v2415, 127
      %v3172 = vpop.permute.xlu0 %3171
      %3173 = vrot.lane.b32.xlu0 %v2423, 127
      %v3174 = vpop.permute.xlu0 %3173
      %3175 = vrot.lane.b32.xlu0 %v2408, 127
      %v3176 = vpop.permute.xlu0 %3175
      %3177 = vrot.lane.b32.xlu0 %v2416, 127
      %v3178 = vpop.permute.xlu0 %3177
      %3179 = vrot.lane.b32.xlu0 %v2424, 127
      %v3180 = vpop.permute.xlu0 %3179
      %3181 = vrot.lane.b32.xlu0 %v2409, 127
      %v3182 = vpop.permute.xlu0 %3181
      %3183 = vrot.lane.b32.xlu0 %v2417, 127
      %v3184 = vpop.permute.xlu0 %3183
      %3185 = vrot.lane.b32.xlu0 %v2425, 127
      %v3186 = vpop.permute.xlu0 %3185
      %3187 = vrot.lane.b32.xlu0 %v2410, 127
      %v3188 = vpop.permute.xlu0 %3187
      %3189 = vrot.lane.b32.xlu0 %v2418, 127
      %v3190 = vpop.permute.xlu0 %3189
      %3191 = vrot.lane.b32.xlu0 %v2426, 127
      %v3192 = vpop.permute.xlu0 %3191
      %v3193 = vsel %vm1449, %v3182, %v3188
      %v3194 = vsel %vm1449, %v3184, %v3190
      %v3195 = vsel %vm1449, %v3186, %v3192
      %v3196 = vsel %vm1449, %v3176, %v3182
      %v3197 = vsel %vm1449, %v3178, %v3184
      %v3198 = vsel %vm1449, %v3180, %v3186
      %v3199 = vsel %vm1449, %v3170, %v3176
      %v3200 = vsel %vm1449, %v3172, %v3178
      %v3201 = vsel %vm1449, %v3174, %v3180
      %v3202 = vsel %vm1449, %v3164, %v3170
      %v3203 = vsel %vm1449, %v3166, %v3172
      %v3204 = vsel %vm1449, %v3168, %v3174
      %v3205 = vsel %vm1449, %v3158, %v3164
      %v3206 = vsel %vm1449, %v3160, %v3166
      %v3207 = vsel %vm1449, %v3162, %v3168
      %v3208 = vsel %vm1449, %v3152, %v3158
      %v3209 = vsel %vm1449, %v3154, %v3160
      %v3210 = vsel %vm1449, %v3156, %v3162
      %v3211 = vsel %vm1449, %v3146, %v3152
      %v3212 = vsel %vm1449, %v3148, %v3154
      %v3213 = vsel %vm1449, %v3150, %v3156
      %v3214 = vsel %vm1449, %v3188, %v3146
      %v3215 = vsel %vm1449, %v3190, %v3148
      %v3216 = vsel %vm1449, %v3192, %v3150
      %v3217 = vmul.f32 %v3211, %v1466
      %v3218 = vmul.f32 %v3208, %v1467
      %v3219 = vmul.f32 %v3205, %v1468
      %v3220 = vmul.f32 %v3202, %v1469
      %v3221 = vmul.f32 %v3199, %v1470
      %v3222 = vmul.f32 %v3196, %v1471
      %v3223 = vmul.f32 %v3193, %v1472
      %v3224 = vmul.f32 %v3214, %v1473
      %v3225 = vmul.f32 %v3212, %v1466
      %v3226 = vmul.f32 %v3209, %v1467
      %v3227 = vmul.f32 %v3206, %v1468
      %v3228 = vmul.f32 %v3203, %v1469
      %v3229 = vmul.f32 %v3200, %v1470
      %v3230 = vmul.f32 %v3197, %v1471
      %v3231 = vmul.f32 %v3194, %v1472
      %v3232 = vmul.f32 %v3215, %v1473
      %v3233 = vmul.f32 %v3213, %v1466
      %v3234 = vmul.f32 %v3210, %v1467
      %v3235 = vmul.f32 %v3207, %v1468
      %v3236 = vmul.f32 %v3204, %v1469
      %v3237 = vmul.f32 %v3201, %v1470
      %v3238 = vmul.f32 %v3198, %v1471
      %v3239 = vmul.f32 %v3195, %v1472
      %v3240 = vmul.f32 %v3216, %v1473
      %s3241 = scalar_lea.vmem %s9, 120
      %v3242 = vld [vmem:[%s3241] sm:$0xff]
      %v3243 = vld [vmem:[%s3241 + $0x8] sm:$0xff]
      %v3244 = vld [vmem:[%s3241 + $0x10] sm:$0xff]
      %3246 = vset.pattern.permute.xlu0 0
      %3247 = vperm.xlu0 %3246, %v3242
      %v3248 = vpop.permute.xlu0 %3247
      %3251 = vset.pattern.permute.xlu0 0
      %3252 = vperm.xlu0 %3251, %v3243
      %v3253 = vpop.permute.xlu0 %3252
      %3256 = vset.pattern.permute.xlu0 0
      %3257 = vperm.xlu0 %3256, %v3244
      %v3258 = vpop.permute.xlu0 %3257
      %v3260 = vmul.f32 %v3217, %v3248
      %v3261 = vmul.f32 %v3218, %v3248
      %v3262 = vmul.f32 %v3219, %v3248
      %v3263 = vmul.f32 %v3220, %v3248
      %v3264 = vmul.f32 %v3221, %v3248
      %v3265 = vmul.f32 %v3222, %v3248
      %v3266 = vmul.f32 %v3223, %v3248
      %v3267 = vmul.f32 %v3224, %v3248
      %v3268 = vmul.f32 %v3225, %v3253
      %v3269 = vmul.f32 %v3226, %v3253
      %v3270 = vmul.f32 %v3227, %v3253
      %v3271 = vmul.f32 %v3228, %v3253
      %v3272 = vmul.f32 %v3229, %v3253
      %v3273 = vmul.f32 %v3230, %v3253
      %v3274 = vmul.f32 %v3231, %v3253
      %v3275 = vmul.f32 %v3232, %v3253
      %v3276 = vmul.f32 %v3233, %v3258
      %v3277 = vmul.f32 %v3234, %v3258
      %v3278 = vmul.f32 %v3235, %v3258
      %v3279 = vmul.f32 %v3236, %v3258
      %v3280 = vmul.f32 %v3237, %v3258
      %v3281 = vmul.f32 %v3238, %v3258
      %v3282 = vmul.f32 %v3239, %v3258
      %v3283 = vmul.f32 %v3240, %v3258
      %v3284 = vadd.f32 %v3121, %v3260
      %v3285 = vadd.f32 %v3122, %v3261
      %v3286 = vadd.f32 %v3123, %v3262
      %v3287 = vadd.f32 %v3124, %v3263
      %v3288 = vadd.f32 %v3125, %v3264
      %v3289 = vadd.f32 %v3126, %v3265
      %v3290 = vadd.f32 %v3127, %v3266
      %v3291 = vadd.f32 %v3128, %v3267
      %v3292 = vadd.f32 %v3129, %v3268
      %v3293 = vadd.f32 %v3130, %v3269
      %v3294 = vadd.f32 %v3131, %v3270
      %v3295 = vadd.f32 %v3132, %v3271
      %v3296 = vadd.f32 %v3133, %v3272
      %v3297 = vadd.f32 %v3134, %v3273
      %v3298 = vadd.f32 %v3135, %v3274
      %v3299 = vadd.f32 %v3136, %v3275
      %v3300 = vadd.f32 %v3137, %v3276
      %v3301 = vadd.f32 %v3138, %v3277
      %v3302 = vadd.f32 %v3139, %v3278
      %v3303 = vadd.f32 %v3140, %v3279
      %v3304 = vadd.f32 %v3141, %v3280
      %v3305 = vadd.f32 %v3142, %v3281
      %v3306 = vadd.f32 %v3143, %v3282
      %v3307 = vadd.f32 %v3144, %v3283
      %3308 = vrot.lane.b32.xlu0 %v2403, 97
      %v3309 = vpop.permute.xlu0 %3308
      %3310 = vrot.lane.b32.xlu0 %v2411, 97
      %v3311 = vpop.permute.xlu0 %3310
      %3312 = vrot.lane.b32.xlu0 %v2419, 97
      %v3313 = vpop.permute.xlu0 %3312
      %3314 = vrot.lane.b32.xlu0 %v2404, 97
      %v3315 = vpop.permute.xlu0 %3314
      %3316 = vrot.lane.b32.xlu0 %v2412, 97
      %v3317 = vpop.permute.xlu0 %3316
      %3318 = vrot.lane.b32.xlu0 %v2420, 97
      %v3319 = vpop.permute.xlu0 %3318
      %3320 = vrot.lane.b32.xlu0 %v2405, 97
      %v3321 = vpop.permute.xlu0 %3320
      %3322 = vrot.lane.b32.xlu0 %v2413, 97
      %v3323 = vpop.permute.xlu0 %3322
      %3324 = vrot.lane.b32.xlu0 %v2421, 97
      %v3325 = vpop.permute.xlu0 %3324
      %3326 = vrot.lane.b32.xlu0 %v2406, 97
      %v3327 = vpop.permute.xlu0 %3326
      %3328 = vrot.lane.b32.xlu0 %v2414, 97
      %v3329 = vpop.permute.xlu0 %3328
      %3330 = vrot.lane.b32.xlu0 %v2422, 97
      %v3331 = vpop.permute.xlu0 %3330
      %3332 = vrot.lane.b32.xlu0 %v2407, 97
      %v3333 = vpop.permute.xlu0 %3332
      %3334 = vrot.lane.b32.xlu0 %v2415, 97
      %v3335 = vpop.permute.xlu0 %3334
      %3336 = vrot.lane.b32.xlu0 %v2423, 97
      %v3337 = vpop.permute.xlu0 %3336
      %3338 = vrot.lane.b32.xlu0 %v2408, 97
      %v3339 = vpop.permute.xlu0 %3338
      %3340 = vrot.lane.b32.xlu0 %v2416, 97
      %v3341 = vpop.permute.xlu0 %3340
      %3342 = vrot.lane.b32.xlu0 %v2424, 97
      %v3343 = vpop.permute.xlu0 %3342
      %3344 = vrot.lane.b32.xlu0 %v2409, 97
      %v3345 = vpop.permute.xlu0 %3344
      %3346 = vrot.lane.b32.xlu0 %v2417, 97
      %v3347 = vpop.permute.xlu0 %3346
      %3348 = vrot.lane.b32.xlu0 %v2425, 97
      %v3349 = vpop.permute.xlu0 %3348
      %3350 = vrot.lane.b32.xlu0 %v2410, 97
      %v3351 = vpop.permute.xlu0 %3350
      %3352 = vrot.lane.b32.xlu0 %v2418, 97
      %v3353 = vpop.permute.xlu0 %3352
      %3354 = vrot.lane.b32.xlu0 %v2426, 97
      %v3355 = vpop.permute.xlu0 %3354
      %v3356 = vsel %vm1521, %v3345, %v3351
      %v3357 = vsel %vm1521, %v3347, %v3353
      %v3358 = vsel %vm1521, %v3349, %v3355
      %v3359 = vsel %vm1521, %v3339, %v3345
      %v3360 = vsel %vm1521, %v3341, %v3347
      %v3361 = vsel %vm1521, %v3343, %v3349
      %v3362 = vsel %vm1521, %v3333, %v3339
      %v3363 = vsel %vm1521, %v3335, %v3341
      %v3364 = vsel %vm1521, %v3337, %v3343
      %v3365 = vsel %vm1521, %v3327, %v3333
      %v3366 = vsel %vm1521, %v3329, %v3335
      %v3367 = vsel %vm1521, %v3331, %v3337
      %v3368 = vsel %vm1521, %v3321, %v3327
      %v3369 = vsel %vm1521, %v3323, %v3329
      %v3370 = vsel %vm1521, %v3325, %v3331
      %v3371 = vsel %vm1521, %v3315, %v3321
      %v3372 = vsel %vm1521, %v3317, %v3323
      %v3373 = vsel %vm1521, %v3319, %v3325
      %v3374 = vsel %vm1521, %v3309, %v3315
      %v3375 = vsel %vm1521, %v3311, %v3317
      %v3376 = vsel %vm1521, %v3313, %v3319
      %v3377 = vsel %vm1521, %v3351, %v3309
      %v3378 = vsel %vm1521, %v3353, %v3311
      %v3379 = vsel %vm1521, %v3355, %v3313
      %v3380 = vmul.f32 %v3374, %v1554
      %v3381 = vmul.f32 %v3371, %v1555
      %v3382 = vmul.f32 %v3368, %v1556
      %v3383 = vmul.f32 %v3365, %v1557
      %v3384 = vmul.f32 %v3362, %v1558
      %v3385 = vmul.f32 %v3359, %v1559
      %v3386 = vmul.f32 %v3356, %v1560
      %v3387 = vmul.f32 %v3377, %v1561
      %v3388 = vmul.f32 %v3375, %v1554
      %v3389 = vmul.f32 %v3372, %v1555
      %v3390 = vmul.f32 %v3369, %v1556
      %v3391 = vmul.f32 %v3366, %v1557
      %v3392 = vmul.f32 %v3363, %v1558
      %v3393 = vmul.f32 %v3360, %v1559
      %v3394 = vmul.f32 %v3357, %v1560
      %v3395 = vmul.f32 %v3378, %v1561
      %v3396 = vmul.f32 %v3376, %v1554
      %v3397 = vmul.f32 %v3373, %v1555
      %v3398 = vmul.f32 %v3370, %v1556
      %v3399 = vmul.f32 %v3367, %v1557
      %v3400 = vmul.f32 %v3364, %v1558
      %v3401 = vmul.f32 %v3361, %v1559
      %v3402 = vmul.f32 %v3358, %v1560
      %v3403 = vmul.f32 %v3379, %v1561
      %s3404 = scalar_lea.vmem %s9, 144
      %v3405 = vld [vmem:[%s3404] sm:$0xff]
      %v3406 = vld [vmem:[%s3404 + $0x8] sm:$0xff]
      %v3407 = vld [vmem:[%s3404 + $0x10] sm:$0xff]
      %3409 = vset.pattern.permute.xlu0 0
      %3410 = vperm.xlu0 %3409, %v3405
      %v3411 = vpop.permute.xlu0 %3410
      %3414 = vset.pattern.permute.xlu0 0
      %3415 = vperm.xlu0 %3414, %v3406
      %v3416 = vpop.permute.xlu0 %3415
      %3419 = vset.pattern.permute.xlu0 0
      %3420 = vperm.xlu0 %3419, %v3407
      %v3421 = vpop.permute.xlu0 %3420
      %v3423 = vmul.f32 %v3380, %v3411
      %v3424 = vmul.f32 %v3381, %v3411
      %v3425 = vmul.f32 %v3382, %v3411
      %v3426 = vmul.f32 %v3383, %v3411
      %v3427 = vmul.f32 %v3384, %v3411
      %v3428 = vmul.f32 %v3385, %v3411
      %v3429 = vmul.f32 %v3386, %v3411
      %v3430 = vmul.f32 %v3387, %v3411
      %v3431 = vmul.f32 %v3388, %v3416
      %v3432 = vmul.f32 %v3389, %v3416
      %v3433 = vmul.f32 %v3390, %v3416
      %v3434 = vmul.f32 %v3391, %v3416
      %v3435 = vmul.f32 %v3392, %v3416
      %v3436 = vmul.f32 %v3393, %v3416
      %v3437 = vmul.f32 %v3394, %v3416
      %v3438 = vmul.f32 %v3395, %v3416
      %v3439 = vmul.f32 %v3396, %v3421
      %v3440 = vmul.f32 %v3397, %v3421
      %v3441 = vmul.f32 %v3398, %v3421
      %v3442 = vmul.f32 %v3399, %v3421
      %v3443 = vmul.f32 %v3400, %v3421
      %v3444 = vmul.f32 %v3401, %v3421
      %v3445 = vmul.f32 %v3402, %v3421
      %v3446 = vmul.f32 %v3403, %v3421
      %v3447 = vadd.f32 %v3284, %v3423
      %v3448 = vadd.f32 %v3285, %v3424
      %v3449 = vadd.f32 %v3286, %v3425
      %v3450 = vadd.f32 %v3287, %v3426
      %v3451 = vadd.f32 %v3288, %v3427
      %v3452 = vadd.f32 %v3289, %v3428
      %v3453 = vadd.f32 %v3290, %v3429
      %v3454 = vadd.f32 %v3291, %v3430
      %v3455 = vadd.f32 %v3292, %v3431
      %v3456 = vadd.f32 %v3293, %v3432
      %v3457 = vadd.f32 %v3294, %v3433
      %v3458 = vadd.f32 %v3295, %v3434
      %v3459 = vadd.f32 %v3296, %v3435
      %v3460 = vadd.f32 %v3297, %v3436
      %v3461 = vadd.f32 %v3298, %v3437
      %v3462 = vadd.f32 %v3299, %v3438
      %v3463 = vadd.f32 %v3300, %v3439
      %v3464 = vadd.f32 %v3301, %v3440
      %v3465 = vadd.f32 %v3302, %v3441
      %v3466 = vadd.f32 %v3303, %v3442
      %v3467 = vadd.f32 %v3304, %v3443
      %v3468 = vadd.f32 %v3305, %v3444
      %v3469 = vadd.f32 %v3306, %v3445
      %v3470 = vadd.f32 %v3307, %v3446
      %3471 = vrot.lane.b32.xlu0 %v2403, 96
      %v3472 = vpop.permute.xlu0 %3471
      %3473 = vrot.lane.b32.xlu0 %v2411, 96
      %v3474 = vpop.permute.xlu0 %3473
      %3475 = vrot.lane.b32.xlu0 %v2419, 96
      %v3476 = vpop.permute.xlu0 %3475
      %3477 = vrot.lane.b32.xlu0 %v2404, 96
      %v3478 = vpop.permute.xlu0 %3477
      %3479 = vrot.lane.b32.xlu0 %v2412, 96
      %v3480 = vpop.permute.xlu0 %3479
      %3481 = vrot.lane.b32.xlu0 %v2420, 96
      %v3482 = vpop.permute.xlu0 %3481
      %3483 = vrot.lane.b32.xlu0 %v2405, 96
      %v3484 = vpop.permute.xlu0 %3483
      %3485 = vrot.lane.b32.xlu0 %v2413, 96
      %v3486 = vpop.permute.xlu0 %3485
      %3487 = vrot.lane.b32.xlu0 %v2421, 96
      %v3488 = vpop.permute.xlu0 %3487
      %3489 = vrot.lane.b32.xlu0 %v2406, 96
      %v3490 = vpop.permute.xlu0 %3489
      %3491 = vrot.lane.b32.xlu0 %v2414, 96
      %v3492 = vpop.permute.xlu0 %3491
      %3493 = vrot.lane.b32.xlu0 %v2422, 96
      %v3494 = vpop.permute.xlu0 %3493
      %3495 = vrot.lane.b32.xlu0 %v2407, 96
      %v3496 = vpop.permute.xlu0 %3495
      %3497 = vrot.lane.b32.xlu0 %v2415, 96
      %v3498 = vpop.permute.xlu0 %3497
      %3499 = vrot.lane.b32.xlu0 %v2423, 96
      %v3500 = vpop.permute.xlu0 %3499
      %3501 = vrot.lane.b32.xlu0 %v2408, 96
      %v3502 = vpop.permute.xlu0 %3501
      %3503 = vrot.lane.b32.xlu0 %v2416, 96
      %v3504 = vpop.permute.xlu0 %3503
      %3505 = vrot.lane.b32.xlu0 %v2424, 96
      %v3506 = vpop.permute.xlu0 %3505
      %3507 = vrot.lane.b32.xlu0 %v2409, 96
      %v3508 = vpop.permute.xlu0 %3507
      %3509 = vrot.lane.b32.xlu0 %v2417, 96
      %v3510 = vpop.permute.xlu0 %3509
      %3511 = vrot.lane.b32.xlu0 %v2425, 96
      %v3512 = vpop.permute.xlu0 %3511
      %3513 = vrot.lane.b32.xlu0 %v2410, 96
      %v3514 = vpop.permute.xlu0 %3513
      %3515 = vrot.lane.b32.xlu0 %v2418, 96
      %v3516 = vpop.permute.xlu0 %3515
      %3517 = vrot.lane.b32.xlu0 %v2426, 96
      %v3518 = vpop.permute.xlu0 %3517
      %v3519 = vsel %vm1609, %v3508, %v3514
      %v3520 = vsel %vm1609, %v3510, %v3516
      %v3521 = vsel %vm1609, %v3512, %v3518
      %v3522 = vsel %vm1609, %v3502, %v3508
      %v3523 = vsel %vm1609, %v3504, %v3510
      %v3524 = vsel %vm1609, %v3506, %v3512
      %v3525 = vsel %vm1609, %v3496, %v3502
      %v3526 = vsel %vm1609, %v3498, %v3504
      %v3527 = vsel %vm1609, %v3500, %v3506
      %v3528 = vsel %vm1609, %v3490, %v3496
      %v3529 = vsel %vm1609, %v3492, %v3498
      %v3530 = vsel %vm1609, %v3494, %v3500
      %v3531 = vsel %vm1609, %v3484, %v3490
      %v3532 = vsel %vm1609, %v3486, %v3492
      %v3533 = vsel %vm1609, %v3488, %v3494
      %v3534 = vsel %vm1609, %v3478, %v3484
      %v3535 = vsel %vm1609, %v3480, %v3486
      %v3536 = vsel %vm1609, %v3482, %v3488
      %v3537 = vsel %vm1609, %v3472, %v3478
      %v3538 = vsel %vm1609, %v3474, %v3480
      %v3539 = vsel %vm1609, %v3476, %v3482
      %v3540 = vsel %vm1609, %v3514, %v3472
      %v3541 = vsel %vm1609, %v3516, %v3474
      %v3542 = vsel %vm1609, %v3518, %v3476
      %v3543 = vmul.f32 %v3537, %v1626
      %v3544 = vmul.f32 %v3534, %v1627
      %v3545 = vmul.f32 %v3531, %v1628
      %v3546 = vmul.f32 %v3528, %v1629
      %v3547 = vmul.f32 %v3525, %v1630
      %v3548 = vmul.f32 %v3522, %v1631
      %v3549 = vmul.f32 %v3519, %v1632
      %v3550 = vmul.f32 %v3540, %v1633
      %v3551 = vmul.f32 %v3538, %v1626
      %v3552 = vmul.f32 %v3535, %v1627
      %v3553 = vmul.f32 %v3532, %v1628
      %v3554 = vmul.f32 %v3529, %v1629
      %v3555 = vmul.f32 %v3526, %v1630
      %v3556 = vmul.f32 %v3523, %v1631
      %v3557 = vmul.f32 %v3520, %v1632
      %v3558 = vmul.f32 %v3541, %v1633
      %v3559 = vmul.f32 %v3539, %v1626
      %v3560 = vmul.f32 %v3536, %v1627
      %v3561 = vmul.f32 %v3533, %v1628
      %v3562 = vmul.f32 %v3530, %v1629
      %v3563 = vmul.f32 %v3527, %v1630
      %v3564 = vmul.f32 %v3524, %v1631
      %v3565 = vmul.f32 %v3521, %v1632
      %v3566 = vmul.f32 %v3542, %v1633
      %s3567 = scalar_lea.vmem %s9, 168
      %v3568 = vld [vmem:[%s3567] sm:$0xff]
      %v3569 = vld [vmem:[%s3567 + $0x8] sm:$0xff]
      %v3570 = vld [vmem:[%s3567 + $0x10] sm:$0xff]
      %3572 = vset.pattern.permute.xlu0 0
      %3573 = vperm.xlu0 %3572, %v3568
      %v3574 = vpop.permute.xlu0 %3573
      %3577 = vset.pattern.permute.xlu0 0
      %3578 = vperm.xlu0 %3577, %v3569
      %v3579 = vpop.permute.xlu0 %3578
      %3582 = vset.pattern.permute.xlu0 0
      %3583 = vperm.xlu0 %3582, %v3570
      %v3584 = vpop.permute.xlu0 %3583
      %v3586 = vmul.f32 %v3543, %v3574
      %v3587 = vmul.f32 %v3544, %v3574
      %v3588 = vmul.f32 %v3545, %v3574
      %v3589 = vmul.f32 %v3546, %v3574
      %v3590 = vmul.f32 %v3547, %v3574
      %v3591 = vmul.f32 %v3548, %v3574
      %v3592 = vmul.f32 %v3549, %v3574
      %v3593 = vmul.f32 %v3550, %v3574
      %v3594 = vmul.f32 %v3551, %v3579
      %v3595 = vmul.f32 %v3552, %v3579
      %v3596 = vmul.f32 %v3553, %v3579
      %v3597 = vmul.f32 %v3554, %v3579
      %v3598 = vmul.f32 %v3555, %v3579
      %v3599 = vmul.f32 %v3556, %v3579
      %v3600 = vmul.f32 %v3557, %v3579
      %v3601 = vmul.f32 %v3558, %v3579
      %v3602 = vmul.f32 %v3559, %v3584
      %v3603 = vmul.f32 %v3560, %v3584
      %v3604 = vmul.f32 %v3561, %v3584
      %v3605 = vmul.f32 %v3562, %v3584
      %v3606 = vmul.f32 %v3563, %v3584
      %v3607 = vmul.f32 %v3564, %v3584
      %v3608 = vmul.f32 %v3565, %v3584
      %v3609 = vmul.f32 %v3566, %v3584
      %v3610 = vadd.f32 %v3447, %v3586
      %v3611 = vadd.f32 %v3448, %v3587
      %v3612 = vadd.f32 %v3449, %v3588
      %v3613 = vadd.f32 %v3450, %v3589
      %v3614 = vadd.f32 %v3451, %v3590
      %v3615 = vadd.f32 %v3452, %v3591
      %v3616 = vadd.f32 %v3453, %v3592
      %v3617 = vadd.f32 %v3454, %v3593
      %v3618 = vadd.f32 %v3455, %v3594
      %v3619 = vadd.f32 %v3456, %v3595
      %v3620 = vadd.f32 %v3457, %v3596
      %v3621 = vadd.f32 %v3458, %v3597
      %v3622 = vadd.f32 %v3459, %v3598
      %v3623 = vadd.f32 %v3460, %v3599
      %v3624 = vadd.f32 %v3461, %v3600
      %v3625 = vadd.f32 %v3462, %v3601
      %v3626 = vadd.f32 %v3463, %v3602
      %v3627 = vadd.f32 %v3464, %v3603
      %v3628 = vadd.f32 %v3465, %v3604
      %v3629 = vadd.f32 %v3466, %v3605
      %v3630 = vadd.f32 %v3467, %v3606
      %v3631 = vadd.f32 %v3468, %v3607
      %v3632 = vadd.f32 %v3469, %v3608
      %v3633 = vadd.f32 %v3470, %v3609
      %3634 = vrot.lane.b32.xlu0 %v2403, 95
      %v3635 = vpop.permute.xlu0 %3634
      %3636 = vrot.lane.b32.xlu0 %v2411, 95
      %v3637 = vpop.permute.xlu0 %3636
      %3638 = vrot.lane.b32.xlu0 %v2419, 95
      %v3639 = vpop.permute.xlu0 %3638
      %3640 = vrot.lane.b32.xlu0 %v2404, 95
      %v3641 = vpop.permute.xlu0 %3640
      %3642 = vrot.lane.b32.xlu0 %v2412, 95
      %v3643 = vpop.permute.xlu0 %3642
      %3644 = vrot.lane.b32.xlu0 %v2420, 95
      %v3645 = vpop.permute.xlu0 %3644
      %3646 = vrot.lane.b32.xlu0 %v2405, 95
      %v3647 = vpop.permute.xlu0 %3646
      %3648 = vrot.lane.b32.xlu0 %v2413, 95
      %v3649 = vpop.permute.xlu0 %3648
      %3650 = vrot.lane.b32.xlu0 %v2421, 95
      %v3651 = vpop.permute.xlu0 %3650
      %3652 = vrot.lane.b32.xlu0 %v2406, 95
      %v3653 = vpop.permute.xlu0 %3652
      %3654 = vrot.lane.b32.xlu0 %v2414, 95
      %v3655 = vpop.permute.xlu0 %3654
      %3656 = vrot.lane.b32.xlu0 %v2422, 95
      %v3657 = vpop.permute.xlu0 %3656
      %3658 = vrot.lane.b32.xlu0 %v2407, 95
      %v3659 = vpop.permute.xlu0 %3658
      %3660 = vrot.lane.b32.xlu0 %v2415, 95
      %v3661 = vpop.permute.xlu0 %3660
      %3662 = vrot.lane.b32.xlu0 %v2423, 95
      %v3663 = vpop.permute.xlu0 %3662
      %3664 = vrot.lane.b32.xlu0 %v2408, 95
      %v3665 = vpop.permute.xlu0 %3664
      %3666 = vrot.lane.b32.xlu0 %v2416, 95
      %v3667 = vpop.permute.xlu0 %3666
      %3668 = vrot.lane.b32.xlu0 %v2424, 95
      %v3669 = vpop.permute.xlu0 %3668
      %3670 = vrot.lane.b32.xlu0 %v2409, 95
      %v3671 = vpop.permute.xlu0 %3670
      %3672 = vrot.lane.b32.xlu0 %v2417, 95
      %v3673 = vpop.permute.xlu0 %3672
      %3674 = vrot.lane.b32.xlu0 %v2425, 95
      %v3675 = vpop.permute.xlu0 %3674
      %3676 = vrot.lane.b32.xlu0 %v2410, 95
      %v3677 = vpop.permute.xlu0 %3676
      %3678 = vrot.lane.b32.xlu0 %v2418, 95
      %v3679 = vpop.permute.xlu0 %3678
      %3680 = vrot.lane.b32.xlu0 %v2426, 95
      %v3681 = vpop.permute.xlu0 %3680
      %v3682 = vsel %vm1681, %v3671, %v3677
      %v3683 = vsel %vm1681, %v3673, %v3679
      %v3684 = vsel %vm1681, %v3675, %v3681
      %v3685 = vsel %vm1681, %v3665, %v3671
      %v3686 = vsel %vm1681, %v3667, %v3673
      %v3687 = vsel %vm1681, %v3669, %v3675
      %v3688 = vsel %vm1681, %v3659, %v3665
      %v3689 = vsel %vm1681, %v3661, %v3667
      %v3690 = vsel %vm1681, %v3663, %v3669
      %v3691 = vsel %vm1681, %v3653, %v3659
      %v3692 = vsel %vm1681, %v3655, %v3661
      %v3693 = vsel %vm1681, %v3657, %v3663
      %v3694 = vsel %vm1681, %v3647, %v3653
      %v3695 = vsel %vm1681, %v3649, %v3655
      %v3696 = vsel %vm1681, %v3651, %v3657
      %v3697 = vsel %vm1681, %v3641, %v3647
      %v3698 = vsel %vm1681, %v3643, %v3649
      %v3699 = vsel %vm1681, %v3645, %v3651
      %v3700 = vsel %vm1681, %v3635, %v3641
      %v3701 = vsel %vm1681, %v3637, %v3643
      %v3702 = vsel %vm1681, %v3639, %v3645
      %v3703 = vsel %vm1681, %v3677, %v3635
      %v3704 = vsel %vm1681, %v3679, %v3637
      %v3705 = vsel %vm1681, %v3681, %v3639
      %v3706 = vmul.f32 %v3700, %v1706
      %v3707 = vmul.f32 %v3697, %v1707
      %v3708 = vmul.f32 %v3694, %v1708
      %v3709 = vmul.f32 %v3691, %v1709
      %v3710 = vmul.f32 %v3688, %v1710
      %v3711 = vmul.f32 %v3685, %v1711
      %v3712 = vmul.f32 %v3682, %v1712
      %v3713 = vmul.f32 %v3703, %v1713
      %v3714 = vmul.f32 %v3701, %v1706
      %v3715 = vmul.f32 %v3698, %v1707
      %v3716 = vmul.f32 %v3695, %v1708
      %v3717 = vmul.f32 %v3692, %v1709
      %v3718 = vmul.f32 %v3689, %v1710
      %v3719 = vmul.f32 %v3686, %v1711
      %v3720 = vmul.f32 %v3683, %v1712
      %v3721 = vmul.f32 %v3704, %v1713
      %v3722 = vmul.f32 %v3702, %v1706
      %v3723 = vmul.f32 %v3699, %v1707
      %v3724 = vmul.f32 %v3696, %v1708
      %v3725 = vmul.f32 %v3693, %v1709
      %v3726 = vmul.f32 %v3690, %v1710
      %v3727 = vmul.f32 %v3687, %v1711
      %v3728 = vmul.f32 %v3684, %v1712
      %v3729 = vmul.f32 %v3705, %v1713
      %s3730 = scalar_lea.vmem %s9, 192
      %v3731 = vld [vmem:[%s3730] sm:$0xff]
      %v3732 = vld [vmem:[%s3730 + $0x8] sm:$0xff]
      %v3733 = vld [vmem:[%s3730 + $0x10] sm:$0xff]
      %3735 = vset.pattern.permute.xlu0 0
      %3736 = vperm.xlu0 %3735, %v3731
      %v3737 = vpop.permute.xlu0 %3736
      %3740 = vset.pattern.permute.xlu0 0
      %3741 = vperm.xlu0 %3740, %v3732
      %v3742 = vpop.permute.xlu0 %3741
      %3745 = vset.pattern.permute.xlu0 0
      %3746 = vperm.xlu0 %3745, %v3733
      %v3747 = vpop.permute.xlu0 %3746
      %v3749 = vmul.f32 %v3706, %v3737
      %v3750 = vmul.f32 %v3707, %v3737
      %v3751 = vmul.f32 %v3708, %v3737
      %v3752 = vmul.f32 %v3709, %v3737
      %v3753 = vmul.f32 %v3710, %v3737
      %v3754 = vmul.f32 %v3711, %v3737
      %v3755 = vmul.f32 %v3712, %v3737
      %v3756 = vmul.f32 %v3713, %v3737
      %v3757 = vmul.f32 %v3714, %v3742
      %v3758 = vmul.f32 %v3715, %v3742
      %v3759 = vmul.f32 %v3716, %v3742
      %v3760 = vmul.f32 %v3717, %v3742
      %v3761 = vmul.f32 %v3718, %v3742
      %v3762 = vmul.f32 %v3719, %v3742
      %v3763 = vmul.f32 %v3720, %v3742
      %v3764 = vmul.f32 %v3721, %v3742
      %v3765 = vmul.f32 %v3722, %v3747
      %v3766 = vmul.f32 %v3723, %v3747
      %v3767 = vmul.f32 %v3724, %v3747
      %v3768 = vmul.f32 %v3725, %v3747
      %v3769 = vmul.f32 %v3726, %v3747
      %v3770 = vmul.f32 %v3727, %v3747
      %v3771 = vmul.f32 %v3728, %v3747
      %v3772 = vmul.f32 %v3729, %v3747
      %v3773 = vadd.f32 %v3610, %v3749
      %v3774 = vadd.f32 %v3611, %v3750
      %v3775 = vadd.f32 %v3612, %v3751
      %v3776 = vadd.f32 %v3613, %v3752
      %v3777 = vadd.f32 %v3614, %v3753
      %v3778 = vadd.f32 %v3615, %v3754
      %v3779 = vadd.f32 %v3616, %v3755
      %v3780 = vadd.f32 %v3617, %v3756
      %v3781 = vadd.f32 %v3618, %v3757
      %v3782 = vadd.f32 %v3619, %v3758
      %v3783 = vadd.f32 %v3620, %v3759
      %v3784 = vadd.f32 %v3621, %v3760
      %v3785 = vadd.f32 %v3622, %v3761
      %v3786 = vadd.f32 %v3623, %v3762
      %v3787 = vadd.f32 %v3624, %v3763
      %v3788 = vadd.f32 %v3625, %v3764
      %v3789 = vadd.f32 %v3626, %v3765
      %v3790 = vadd.f32 %v3627, %v3766
      %v3791 = vadd.f32 %v3628, %v3767
      %v3792 = vadd.f32 %v3629, %v3768
      %v3793 = vadd.f32 %v3630, %v3769
      %v3794 = vadd.f32 %v3631, %v3770
      %v3795 = vadd.f32 %v3632, %v3771
      %v3796 = vadd.f32 %v3633, %v3772
      %v3797 = vld [vmem:[%s10] sm:$0xff]
      %v3798 = vld [vmem:[%s10 + $0x8] sm:$0xff]
      %v3799 = vld [vmem:[%s10 + $0x10] sm:$0xff]
      %3801 = vset.pattern.permute.xlu0 0
      %3802 = vperm.xlu0 %3801, %v3797
      %v3803 = vpop.permute.xlu0 %3802
      %3806 = vset.pattern.permute.xlu0 0
      %3807 = vperm.xlu0 %3806, %v3798
      %v3808 = vpop.permute.xlu0 %3807
      %3811 = vset.pattern.permute.xlu0 0
      %3812 = vperm.xlu0 %3811, %v3799
      %v3813 = vpop.permute.xlu0 %3812
      %v3815 = vadd.f32 %v3773, %v3803
      %v3816 = vadd.f32 %v3774, %v3803
      %v3817 = vadd.f32 %v3775, %v3803
      %v3818 = vadd.f32 %v3776, %v3803
      %v3819 = vadd.f32 %v3777, %v3803
      %v3820 = vadd.f32 %v3778, %v3803
      %v3821 = vadd.f32 %v3779, %v3803
      %v3822 = vadd.f32 %v3780, %v3803
      %v3823 = vadd.f32 %v3781, %v3808
      %v3824 = vadd.f32 %v3782, %v3808
      %v3825 = vadd.f32 %v3783, %v3808
      %v3826 = vadd.f32 %v3784, %v3808
      %v3827 = vadd.f32 %v3785, %v3808
      %v3828 = vadd.f32 %v3786, %v3808
      %v3829 = vadd.f32 %v3787, %v3808
      %v3830 = vadd.f32 %v3788, %v3808
      %v3831 = vadd.f32 %v3789, %v3813
      %v3832 = vadd.f32 %v3790, %v3813
      %v3833 = vadd.f32 %v3791, %v3813
      %v3834 = vadd.f32 %v3792, %v3813
      %v3835 = vadd.f32 %v3793, %v3813
      %v3836 = vadd.f32 %v3794, %v3813
      %v3837 = vadd.f32 %v3795, %v3813
      %v3838 = vadd.f32 %v3796, %v3813
      %v3839 = vsub.f32 0.0, %v3815
      %v3840 = vsub.f32 0.0, %v3816
      %v3841 = vsub.f32 0.0, %v3817
      %v3842 = vsub.f32 0.0, %v3818
      %v3843 = vsub.f32 0.0, %v3819
      %v3844 = vsub.f32 0.0, %v3820
      %v3845 = vsub.f32 0.0, %v3821
      %v3846 = vsub.f32 0.0, %v3822
      %v3847 = vsub.f32 0.0, %v3823
      %v3848 = vsub.f32 0.0, %v3824
      %v3849 = vsub.f32 0.0, %v3825
      %v3850 = vsub.f32 0.0, %v3826
      %v3851 = vsub.f32 0.0, %v3827
      %v3852 = vsub.f32 0.0, %v3828
      %v3853 = vsub.f32 0.0, %v3829
      %v3854 = vsub.f32 0.0, %v3830
      %v3855 = vsub.f32 0.0, %v3831
      %v3856 = vsub.f32 0.0, %v3832
      %v3857 = vsub.f32 0.0, %v3833
      %v3858 = vsub.f32 0.0, %v3834
      %v3859 = vsub.f32 0.0, %v3835
      %v3860 = vsub.f32 0.0, %v3836
      %v3861 = vsub.f32 0.0, %v3837
      %v3862 = vsub.f32 0.0, %v3838
      %v3863 = vmul.f32 %v3839, 1.442695
      %v3864 = vpow.pop %v3863
      %v3865 = vmul.f32 %v3840, 1.442695
      %v3866 = vpow.pop %v3865
      %v3867 = vmul.f32 %v3841, 1.442695
      %v3868 = vpow.pop %v3867
      %v3869 = vmul.f32 %v3842, 1.442695
      %v3870 = vpow.pop %v3869
      %v3871 = vmul.f32 %v3843, 1.442695
      %v3872 = vpow.pop %v3871
      %v3873 = vmul.f32 %v3844, 1.442695
      %v3874 = vpow.pop %v3873
      %v3875 = vmul.f32 %v3845, 1.442695
      %v3876 = vpow.pop %v3875
      %v3877 = vmul.f32 %v3846, 1.442695
      %v3878 = vpow.pop %v3877
      %v3879 = vmul.f32 %v3847, 1.442695
      %v3880 = vpow.pop %v3879
      %v3881 = vmul.f32 %v3848, 1.442695
      %v3882 = vpow.pop %v3881
      %v3883 = vmul.f32 %v3849, 1.442695
      %v3884 = vpow.pop %v3883
      %v3885 = vmul.f32 %v3850, 1.442695
      %v3886 = vpow.pop %v3885
      %v3887 = vmul.f32 %v3851, 1.442695
      %v3888 = vpow.pop %v3887
      %v3889 = vmul.f32 %v3852, 1.442695
      %v3890 = vpow.pop %v3889
      %v3891 = vmul.f32 %v3853, 1.442695
      %v3892 = vpow.pop %v3891
      %v3893 = vmul.f32 %v3854, 1.442695
      %v3894 = vpow.pop %v3893
      %v3895 = vmul.f32 %v3855, 1.442695
      %v3896 = vpow.pop %v3895
      %v3897 = vmul.f32 %v3856, 1.442695
      %v3898 = vpow.pop %v3897
      %v3899 = vmul.f32 %v3857, 1.442695
      %v3900 = vpow.pop %v3899
      %v3901 = vmul.f32 %v3858, 1.442695
      %v3902 = vpow.pop %v3901
      %v3903 = vmul.f32 %v3859, 1.442695
      %v3904 = vpow.pop %v3903
      %v3905 = vmul.f32 %v3860, 1.442695
      %v3906 = vpow.pop %v3905
      %v3907 = vmul.f32 %v3861, 1.442695
      %v3908 = vpow.pop %v3907
      %v3909 = vmul.f32 %v3862, 1.442695
      %v3910 = vpow.pop %v3909
      %v3911 = vadd.f32 %v3864, 1.0
      %v3912 = vadd.f32 %v3866, 1.0
      %v3913 = vadd.f32 %v3868, 1.0
      %v3914 = vadd.f32 %v3870, 1.0
      %v3915 = vadd.f32 %v3872, 1.0
      %v3916 = vadd.f32 %v3874, 1.0
      %v3917 = vadd.f32 %v3876, 1.0
      %v3918 = vadd.f32 %v3878, 1.0
      %v3919 = vadd.f32 %v3880, 1.0
      %v3920 = vadd.f32 %v3882, 1.0
      %v3921 = vadd.f32 %v3884, 1.0
      %v3922 = vadd.f32 %v3886, 1.0
      %v3923 = vadd.f32 %v3888, 1.0
      %v3924 = vadd.f32 %v3890, 1.0
      %v3925 = vadd.f32 %v3892, 1.0
      %v3926 = vadd.f32 %v3894, 1.0
      %v3927 = vadd.f32 %v3896, 1.0
      %v3928 = vadd.f32 %v3898, 1.0
      %v3929 = vadd.f32 %v3900, 1.0
      %v3930 = vadd.f32 %v3902, 1.0
      %v3931 = vadd.f32 %v3904, 1.0
      %v3932 = vadd.f32 %v3906, 1.0
      %v3933 = vadd.f32 %v3908, 1.0
      %v3934 = vadd.f32 %v3910, 1.0
      %v3935 = vrcp.pop %v3911
      %v3936 = vrcp.pop %v3912
      %v3937 = vrcp.pop %v3913
      %v3938 = vrcp.pop %v3914
      %v3939 = vrcp.pop %v3915
      %v3940 = vrcp.pop %v3916
      %v3941 = vrcp.pop %v3917
      %v3942 = vrcp.pop %v3918
      %v3943 = vrcp.pop %v3919
      %v3944 = vrcp.pop %v3920
      %v3945 = vrcp.pop %v3921
      %v3946 = vrcp.pop %v3922
      %v3947 = vrcp.pop %v3923
      %v3948 = vrcp.pop %v3924
      %v3949 = vrcp.pop %v3925
      %v3950 = vrcp.pop %v3926
      %v3951 = vrcp.pop %v3927
      %v3952 = vrcp.pop %v3928
      %v3953 = vrcp.pop %v3929
      %v3954 = vrcp.pop %v3930
      %v3955 = vrcp.pop %v3931
      %v3956 = vrcp.pop %v3932
      %v3957 = vrcp.pop %v3933
      %v3958 = vrcp.pop %v3934
      %v3959 = vmul.f32 %v3815, %v3935
      %v3960 = vmul.f32 %v3816, %v3936
      %v3961 = vmul.f32 %v3817, %v3937
      %v3962 = vmul.f32 %v3818, %v3938
      %v3963 = vmul.f32 %v3819, %v3939
      %v3964 = vmul.f32 %v3820, %v3940
      %v3965 = vmul.f32 %v3821, %v3941
      %v3966 = vmul.f32 %v3822, %v3942
      %v3967 = vmul.f32 %v3823, %v3943
      %v3968 = vmul.f32 %v3824, %v3944
      %v3969 = vmul.f32 %v3825, %v3945
      %v3970 = vmul.f32 %v3826, %v3946
      %v3971 = vmul.f32 %v3827, %v3947
      %v3972 = vmul.f32 %v3828, %v3948
      %v3973 = vmul.f32 %v3829, %v3949
      %v3974 = vmul.f32 %v3830, %v3950
      %v3975 = vmul.f32 %v3831, %v3951
      %v3976 = vmul.f32 %v3832, %v3952
      %v3977 = vmul.f32 %v3833, %v3953
      %v3978 = vmul.f32 %v3834, %v3954
      %v3979 = vmul.f32 %v3835, %v3955
      %v3980 = vmul.f32 %v3836, %v3956
      %v3981 = vmul.f32 %v3837, %v3957
      %v3982 = vmul.f32 %v3838, %v3958
      %v3983 = vld [vmem:[%s11] sm:$0xf]
      %v3984 = vld [vmem:[%s11 + $0x4] sm:$0xf]
      %v3985 = vpack.c.bf16 %v3967, %v3959
      %v3986 = vpack.c.bf16 %v3968, %v3960
      %v3987 = vpack.c.bf16 %v3969, %v3961
      %v3988 = vpack.c.bf16 %v3970, %v3962
      %v3989 = vpack.c.bf16 %v3971, %v3963
      %v3990 = vpack.c.bf16 %v3972, %v3964
      %v3991 = vpack.c.bf16 %v3973, %v3965
      %v3992 = vpack.c.bf16 %v3974, %v3966
      %v3993 = vpack.c.bf16 %v3975, %v3975
      %v3994 = vpack.c.bf16 %v3976, %v3976
      %v3995 = vpack.c.bf16 %v3977, %v3977
      %v3996 = vpack.c.bf16 %v3978, %v3978
      %v3997 = vpack.c.bf16 %v3979, %v3979
      %v3998 = vpack.c.bf16 %v3980, %v3980
      %v3999 = vpack.c.bf16 %v3981, %v3981
      %v4000 = vpack.c.bf16 %v3982, %v3982
      %v4001 = vld [vmem:[%s12] sm:$0xff]
      %v4002 = vld [vmem:[%s12 + $0x8] sm:$0xff]
      %4004 = vset.pattern.permute.xlu0 0
      %4005 = vperm.xlu0 %4004, %v4001
      %v4006 = vpop.permute.xlu0 %4005
      %4009 = vset.pattern.permute.xlu0 0
      %4010 = vperm.xlu0 %4009, %v4002
      %v4011 = vpop.permute.xlu0 %4010
      %v4015 = vunpack.c.l.b16 %v3983
      %v4016 = vunpack.c.l.b16 %v3984
      %v4017 = vpack.c.b16 %v4016, %v4015
      %vm4018 = vcmask 195584
      %v4020 = vsel %vm4018, %v4017, 0
      %v4023 = vsel %vm1838, %v3993, 0
      %v4026 = vsel %vm1838, %v3994, 0
      %v4029 = vsel %vm1838, %v3995, 0
      %v4032 = vsel %vm1838, %v3996, 0
      %v4035 = vsel %vm1838, %v3997, 0
      %v4038 = vsel %vm1838, %v3998, 0
      %v4041 = vsel %vm1838, %v3999, 0
      %v4044 = vsel %vm1838, %v4000, 0
      %4046 = vmatprep.subr.bf16.mxu0 %v3986
      %4047 = vmatpush1.bf16.msra.mxu0 %v3985
      %4048 = vmatprep.subr.bf16.mxu0 %v4026
      %4049 = vmatpush1.bf16.msra.mxu0 %v4023
      %4050 = vmatprep.subr.bf16.mxu0 0
      %4051 = vmatpush1.bf16.msra.mxu0 0
      %4052 = vmatprep.subr.bf16.mxu0 0
      %4053 = vmatpush1.bf16.msra.mxu0 0
      %4054 = vmatprep.subr.bf16.mxu0 0
      %4055 = vmatpush1.bf16.msra.mxu0 0
      %4056 = vmatprep.subr.bf16.mxu0 0
      %4057 = vmatpush1.bf16.msra.mxu0 0
      %4058 = vmatprep.subr.bf16.mxu0 0
      %4059 = vmatpush1.bf16.msra.mxu0 0
      %4060 = vmatprep.subr.bf16.mxu0 0
      %4061 = vmatpush1.bf16.msra.mxu0 0
      %4062 = vmatprep.subr.bf16.mxu0 0
      %4063 = vmatpush1.bf16.msra.mxu0 0
      %4064 = vmatprep.subr.bf16.mxu0 0
      %4065 = vmatpush1.bf16.msra.mxu0 0
      %4066 = vmatprep.subr.bf16.mxu0 0
      %4067 = vmatpush1.bf16.msra.mxu0 0
      %4068 = vmatprep.subr.bf16.mxu0 0
      %4069 = vmatpush1.bf16.msra.mxu0 0
      %4070 = vmatprep.subr.bf16.mxu0 0
      %4071 = vmatpush1.bf16.msra.mxu0 0
      %4072 = vmatprep.subr.bf16.mxu0 0
      %4073 = vmatpush1.bf16.msra.mxu0 0
      %4074 = vmatprep.subr.bf16.mxu0 0
      %4075 = vmatpush1.bf16.msra.mxu0 0
      %4076 = vmatprep.subr.bf16.mxu0 0
      %4077 = vmatpush1.bf16.msra.mxu0 0
      %4078 = vmatprep.mubr.bf16.mxu0 0
      %4079 = vmatmul.mubr.bf16.gmra.mrb[0].mxu0 %v4020
      %v4080 = vpop.f32.mrb[0].mxu0
      %v4081 = vadd.f32 %v4006, %v4080
      %v4082 = vpop.f32.mrb[0].mxu0
      %v4083 = vadd.f32 %v4006, %v4082
      %v4084 = vpop.f32.mrb[0].mxu0
      %v4085 = vadd.f32 %v4011, %v4084
      %v4086 = vpop.f32.mrb[0].mxu0
      %v4087 = vadd.f32 %v4011, %v4086
      %4088 = vdwg.mxu0
      %4089 = vmatprep.subr.bf16.mxu0 %v3988
      %4090 = vmatpush1.bf16.msra.mxu0 %v3987
      %4091 = vmatprep.subr.bf16.mxu0 %v4032
      %4092 = vmatpush1.bf16.msra.mxu0 %v4029
      %4093 = vmatprep.subr.bf16.mxu0 0
      %4094 = vmatpush1.bf16.msra.mxu0 0
      %4095 = vmatprep.subr.bf16.mxu0 0
      %4096 = vmatpush1.bf16.msra.mxu0 0
      %4097 = vmatprep.subr.bf16.mxu0 0
      %4098 = vmatpush1.bf16.msra.mxu0 0
      %4099 = vmatprep.subr.bf16.mxu0 0
      %4100 = vmatpush1.bf16.msra.mxu0 0
      %4101 = vmatprep.subr.bf16.mxu0 0
      %4102 = vmatpush1.bf16.msra.mxu0 0
      %4103 = vmatprep.subr.bf16.mxu0 0
      %4104 = vmatpush1.bf16.msra.mxu0 0
      %4105 = vmatprep.subr.bf16.mxu0 0
      %4106 = vmatpush1.bf16.msra.mxu0 0
      %4107 = vmatprep.subr.bf16.mxu0 0
      %4108 = vmatpush1.bf16.msra.mxu0 0
      %4109 = vmatprep.subr.bf16.mxu0 0
      %4110 = vmatpush1.bf16.msra.mxu0 0
      %4111 = vmatprep.subr.bf16.mxu0 0
      %4112 = vmatpush1.bf16.msra.mxu0 0
      %4113 = vmatprep.subr.bf16.mxu0 0
      %4114 = vmatpush1.bf16.msra.mxu0 0
      %4115 = vmatprep.subr.bf16.mxu0 0
      %4116 = vmatpush1.bf16.msra.mxu0 0
      %4117 = vmatprep.subr.bf16.mxu0 0
      %4118 = vmatpush1.bf16.msra.mxu0 0
      %4119 = vmatprep.subr.bf16.mxu0 0
      %4120 = vmatpush1.bf16.msra.mxu0 0
      %4121 = vmatprep.mubr.bf16.mxu0 0
      %4122 = vmatmul.mubr.bf16.gmra.mrb[0].mxu0 %v4020
      %v4123 = vpop.f32.mrb[0].mxu0
      %v4124 = vadd.f32 %v4006, %v4123
      %v4125 = vpop.f32.mrb[0].mxu0
      %v4126 = vadd.f32 %v4006, %v4125
      %v4127 = vpop.f32.mrb[0].mxu0
      %v4128 = vadd.f32 %v4011, %v4127
      %v4129 = vpop.f32.mrb[0].mxu0
      %v4130 = vadd.f32 %v4011, %v4129
      %4131 = vdwg.mxu0
      %4132 = vmatprep.subr.bf16.mxu0 %v3990
      %4133 = vmatpush1.bf16.msra.mxu0 %v3989
      %4134 = vmatprep.subr.bf16.mxu0 %v4038
      %4135 = vmatpush1.bf16.msra.mxu0 %v4035
      %4136 = vmatprep.subr.bf16.mxu0 0
      %4137 = vmatpush1.bf16.msra.mxu0 0
      %4138 = vmatprep.subr.bf16.mxu0 0
      %4139 = vmatpush1.bf16.msra.mxu0 0
      %4140 = vmatprep.subr.bf16.mxu0 0
      %4141 = vmatpush1.bf16.msra.mxu0 0
      %4142 = vmatprep.subr.bf16.mxu0 0
      %4143 = vmatpush1.bf16.msra.mxu0 0
      %4144 = vmatprep.subr.bf16.mxu0 0
      %4145 = vmatpush1.bf16.msra.mxu0 0
      %4146 = vmatprep.subr.bf16.mxu0 0
      %4147 = vmatpush1.bf16.msra.mxu0 0
      %4148 = vmatprep.subr.bf16.mxu0 0
      %4149 = vmatpush1.bf16.msra.mxu0 0
      %4150 = vmatprep.subr.bf16.mxu0 0
      %4151 = vmatpush1.bf16.msra.mxu0 0
      %4152 = vmatprep.subr.bf16.mxu0 0
      %4153 = vmatpush1.bf16.msra.mxu0 0
      %4154 = vmatprep.subr.bf16.mxu0 0
      %4155 = vmatpush1.bf16.msra.mxu0 0
      %4156 = vmatprep.subr.bf16.mxu0 0
      %4157 = vmatpush1.bf16.msra.mxu0 0
      %4158 = vmatprep.subr.bf16.mxu0 0
      %4159 = vmatpush1.bf16.msra.mxu0 0
      %4160 = vmatprep.subr.bf16.mxu0 0
      %4161 = vmatpush1.bf16.msra.mxu0 0
      %4162 = vmatprep.subr.bf16.mxu0 0
      %4163 = vmatpush1.bf16.msra.mxu0 0
      %4164 = vmatprep.mubr.bf16.mxu0 0
      %4165 = vmatmul.mubr.bf16.gmra.mrb[0].mxu0 %v4020
      %v4166 = vpop.f32.mrb[0].mxu0
      %v4167 = vadd.f32 %v4006, %v4166
      %v4168 = vpop.f32.mrb[0].mxu0
      %v4169 = vadd.f32 %v4006, %v4168
      %v4170 = vpop.f32.mrb[0].mxu0
      %v4171 = vadd.f32 %v4011, %v4170
      %v4172 = vpop.f32.mrb[0].mxu0
      %v4173 = vadd.f32 %v4011, %v4172
      %4174 = vdwg.mxu0
      %4175 = vmatprep.subr.bf16.mxu0 %v3992
      %4176 = vmatpush1.bf16.msra.mxu0 %v3991
      %4177 = vmatprep.subr.bf16.mxu0 %v4044
      %4178 = vmatpush1.bf16.msra.mxu0 %v4041
      %4179 = vmatprep.subr.bf16.mxu0 0
      %4180 = vmatpush1.bf16.msra.mxu0 0
      %4181 = vmatprep.subr.bf16.mxu0 0
      %4182 = vmatpush1.bf16.msra.mxu0 0
      %4183 = vmatprep.subr.bf16.mxu0 0
      %4184 = vmatpush1.bf16.msra.mxu0 0
      %4185 = vmatprep.subr.bf16.mxu0 0
      %4186 = vmatpush1.bf16.msra.mxu0 0
      %4187 = vmatprep.subr.bf16.mxu0 0
      %4188 = vmatpush1.bf16.msra.mxu0 0
      %4189 = vmatprep.subr.bf16.mxu0 0
      %4190 = vmatpush1.bf16.msra.mxu0 0
      %4191 = vmatprep.subr.bf16.mxu0 0
      %4192 = vmatpush1.bf16.msra.mxu0 0
      %4193 = vmatprep.subr.bf16.mxu0 0
      %4194 = vmatpush1.bf16.msra.mxu0 0
      %4195 = vmatprep.subr.bf16.mxu0 0
      %4196 = vmatpush1.bf16.msra.mxu0 0
      %4197 = vmatprep.subr.bf16.mxu0 0
      %4198 = vmatpush1.bf16.msra.mxu0 0
      %4199 = vmatprep.subr.bf16.mxu0 0
      %4200 = vmatpush1.bf16.msra.mxu0 0
      %4201 = vmatprep.subr.bf16.mxu0 0
      %4202 = vmatpush1.bf16.msra.mxu0 0
      %4203 = vmatprep.subr.bf16.mxu0 0
      %4204 = vmatpush1.bf16.msra.mxu0 0
      %4205 = vmatprep.subr.bf16.mxu0 0
      %4206 = vmatpush1.bf16.msra.mxu0 0
      %4207 = vmatprep.mubr.bf16.mxu0 0
      %4208 = vmatmul.mubr.bf16.gmra.mrb[0].mxu0 %v4020
      %v4209 = vpop.f32.mrb[0].mxu0
      %v4210 = vadd.f32 %v4006, %v4209
      %v4211 = vpop.f32.mrb[0].mxu0
      %v4212 = vadd.f32 %v4006, %v4211
      %v4213 = vpop.f32.mrb[0].mxu0
      %v4214 = vadd.f32 %v4011, %v4213
      %v4215 = vpop.f32.mrb[0].mxu0
      %v4216 = vadd.f32 %v4011, %v4215
      %4217 = vdwg.mxu0
      %v4218 = vld [vmem:[%s13] sm:$0xf]
      %v4219 = vld [vmem:[%s13 + $0x4] sm:$0xf]
      %v4220 = vld [vmem:[%s13 + $0x8] sm:$0xf]
      %v4221 = vld [vmem:[%s13 + $0xc] sm:$0xf]
      %v4222 = vpack.c.bf16 %v4085, %v4081
      %v4223 = vpack.c.bf16 %v4087, %v4083
      %v4224 = vpack.c.bf16 %v4128, %v4124
      %v4225 = vpack.c.bf16 %v4130, %v4126
      %v4226 = vpack.c.bf16 %v4171, %v4167
      %v4227 = vpack.c.bf16 %v4173, %v4169
      %v4228 = vpack.c.bf16 %v4214, %v4210
      %v4229 = vpack.c.bf16 %v4216, %v4212
      %v4230 = vld [vmem:[%s14] sm:$0xff]
      %v4231 = vld [vmem:[%s14 + $0x8] sm:$0xff]
      %v4232 = vld [vmem:[%s14 + $0x10] sm:$0xff]
      %v4233 = vld [vmem:[%s14 + $0x18] sm:$0xff]
      %4235 = vset.pattern.permute.xlu0 0
      %4236 = vperm.xlu0 %4235, %v4230
      %v4237 = vpop.permute.xlu0 %4236
      %4240 = vset.pattern.permute.xlu0 0
      %4241 = vperm.xlu0 %4240, %v4231
      %v4242 = vpop.permute.xlu0 %4241
      %4245 = vset.pattern.permute.xlu0 0
      %4246 = vperm.xlu0 %4245, %v4232
      %v4247 = vpop.permute.xlu0 %4246
      %4250 = vset.pattern.permute.xlu0 0
      %4251 = vperm.xlu0 %4250, %v4233
      %v4252 = vpop.permute.xlu0 %4251
      %v4258 = vunpack.c.l.b16 %v4218
      %v4259 = vunpack.c.l.b16 %v4219
      %v4260 = vunpack.c.l.b16 %v4220
      %v4261 = vunpack.c.l.b16 %v4221
      %v4262 = vpack.c.b16 %v4259, %v4258
      %v4263 = vpack.c.b16 %v4261, %v4260
      %v4265 = vsel %vm2072, %v4262, 0
      %v4268 = vsel %vm2072, %v4263, 0
      %4270 = vmatprep.subr.bf16.mxu0 %v4223
      %4271 = vmatpush1.bf16.msra.mxu0 %v4222
      %4272 = vmatprep.subr.bf16.mxu0 0
      %4273 = vmatpush1.bf16.msra.mxu0 0
      %4274 = vmatprep.subr.bf16.mxu0 0
      %4275 = vmatpush1.bf16.msra.mxu0 0
      %4276 = vmatprep.subr.bf16.mxu0 0
      %4277 = vmatpush1.bf16.msra.mxu0 0
      %4278 = vmatprep.subr.bf16.mxu0 0
      %4279 = vmatpush1.bf16.msra.mxu0 0
      %4280 = vmatprep.subr.bf16.mxu0 0
      %4281 = vmatpush1.bf16.msra.mxu0 0
      %4282 = vmatprep.subr.bf16.mxu0 0
      %4283 = vmatpush1.bf16.msra.mxu0 0
      %4284 = vmatprep.subr.bf16.mxu0 0
      %4285 = vmatpush1.bf16.msra.mxu0 0
      %4286 = vmatprep.subr.bf16.mxu0 0
      %4287 = vmatpush1.bf16.msra.mxu0 0
      %4288 = vmatprep.subr.bf16.mxu0 0
      %4289 = vmatpush1.bf16.msra.mxu0 0
      %4290 = vmatprep.subr.bf16.mxu0 0
      %4291 = vmatpush1.bf16.msra.mxu0 0
      %4292 = vmatprep.subr.bf16.mxu0 0
      %4293 = vmatpush1.bf16.msra.mxu0 0
      %4294 = vmatprep.subr.bf16.mxu0 0
      %4295 = vmatpush1.bf16.msra.mxu0 0
      %4296 = vmatprep.subr.bf16.mxu0 0
      %4297 = vmatpush1.bf16.msra.mxu0 0
      %4298 = vmatprep.subr.bf16.mxu0 0
      %4299 = vmatpush1.bf16.msra.mxu0 0
      %4300 = vmatprep.subr.bf16.mxu0 0
      %4301 = vmatpush1.bf16.msra.mxu0 0
      %4302 = vmatprep.mubr.bf16.mxu0 0
      %4303 = vmatmul.mubr.bf16.gmra.mrb[0].mxu0 %v4265
      %v4304 = vpop.f32.mrb[0].mxu0
      %v4305 = vadd.f32 %v4237, %v4304
      %v4306 = vpop.f32.mrb[0].mxu0
      %v4307 = vadd.f32 %v4237, %v4306
      %v4308 = vpop.f32.mrb[0].mxu0
      %v4309 = vadd.f32 %v4242, %v4308
      %v4310 = vpop.f32.mrb[0].mxu0
      %v4311 = vadd.f32 %v4242, %v4310
      %4312 = vmatprep.mubr.bf16.mxu0 0
      %4313 = vmatmul.mubr.bf16.gmra.mrb[0].mxu0 %v4268
      %v4314 = vpop.f32.mrb[0].mxu0
      %v4315 = vadd.f32 %v4247, %v4314
      %v4316 = vpop.f32.mrb[0].mxu0
      %v4317 = vadd.f32 %v4247, %v4316
      %v4318 = vpop.f32.mrb[0].mxu0
      %v4319 = vadd.f32 %v4252, %v4318
      %v4320 = vpop.f32.mrb[0].mxu0
      %v4321 = vadd.f32 %v4252, %v4320
      %4322 = vdwg.mxu0
      %4323 = vmatprep.subr.bf16.mxu0 %v4225
      %4324 = vmatpush1.bf16.msra.mxu0 %v4224
      %4325 = vmatprep.subr.bf16.mxu0 0
      %4326 = vmatpush1.bf16.msra.mxu0 0
      %4327 = vmatprep.subr.bf16.mxu0 0
      %4328 = vmatpush1.bf16.msra.mxu0 0
      %4329 = vmatprep.subr.bf16.mxu0 0
      %4330 = vmatpush1.bf16.msra.mxu0 0
      %4331 = vmatprep.subr.bf16.mxu0 0
      %4332 = vmatpush1.bf16.msra.mxu0 0
      %4333 = vmatprep.subr.bf16.mxu0 0
      %4334 = vmatpush1.bf16.msra.mxu0 0
      %4335 = vmatprep.subr.bf16.mxu0 0
      %4336 = vmatpush1.bf16.msra.mxu0 0
      %4337 = vmatprep.subr.bf16.mxu0 0
      %4338 = vmatpush1.bf16.msra.mxu0 0
      %4339 = vmatprep.subr.bf16.mxu0 0
      %4340 = vmatpush1.bf16.msra.mxu0 0
      %4341 = vmatprep.subr.bf16.mxu0 0
      %4342 = vmatpush1.bf16.msra.mxu0 0
      %4343 = vmatprep.subr.bf16.mxu0 0
      %4344 = vmatpush1.bf16.msra.mxu0 0
      %4345 = vmatprep.subr.bf16.mxu0 0
      %4346 = vmatpush1.bf16.msra.mxu0 0
      %4347 = vmatprep.subr.bf16.mxu0 0
      %4348 = vmatpush1.bf16.msra.mxu0 0
      %4349 = vmatprep.subr.bf16.mxu0 0
      %4350 = vmatpush1.bf16.msra.mxu0 0
      %4351 = vmatprep.subr.bf16.mxu0 0
      %4352 = vmatpush1.bf16.msra.mxu0 0
      %4353 = vmatprep.subr.bf16.mxu0 0
      %4354 = vmatpush1.bf16.msra.mxu0 0
      %4355 = vmatprep.mubr.bf16.mxu0 0
      %4356 = vmatmul.mubr.bf16.gmra.mrb[0].mxu0 %v4265
      %v4357 = vpop.f32.mrb[0].mxu0
      %v4358 = vadd.f32 %v4237, %v4357
      %v4359 = vpop.f32.mrb[0].mxu0
      %v4360 = vadd.f32 %v4237, %v4359
      %v4361 = vpop.f32.mrb[0].mxu0
      %v4362 = vadd.f32 %v4242, %v4361
      %v4363 = vpop.f32.mrb[0].mxu0
      %v4364 = vadd.f32 %v4242, %v4363
      %4365 = vmatprep.mubr.bf16.mxu0 0
      %4366 = vmatmul.mubr.bf16.gmra.mrb[0].mxu0 %v4268
      %v4367 = vpop.f32.mrb[0].mxu0
      %v4368 = vadd.f32 %v4247, %v4367
      %v4369 = vpop.f32.mrb[0].mxu0
      %v4370 = vadd.f32 %v4247, %v4369
      %v4371 = vpop.f32.mrb[0].mxu0
      %v4372 = vadd.f32 %v4252, %v4371
      %v4373 = vpop.f32.mrb[0].mxu0
      %v4374 = vadd.f32 %v4252, %v4373
      %4375 = vdwg.mxu0
      %4376 = vmatprep.subr.bf16.mxu0 %v4227
      %4377 = vmatpush1.bf16.msra.mxu0 %v4226
      %4378 = vmatprep.subr.bf16.mxu0 0
      %4379 = vmatpush1.bf16.msra.mxu0 0
      %4380 = vmatprep.subr.bf16.mxu0 0
      %4381 = vmatpush1.bf16.msra.mxu0 0
      %4382 = vmatprep.subr.bf16.mxu0 0
      %4383 = vmatpush1.bf16.msra.mxu0 0
      %4384 = vmatprep.subr.bf16.mxu0 0
      %4385 = vmatpush1.bf16.msra.mxu0 0
      %4386 = vmatprep.subr.bf16.mxu0 0
      %4387 = vmatpush1.bf16.msra.mxu0 0
      %4388 = vmatprep.subr.bf16.mxu0 0
      %4389 = vmatpush1.bf16.msra.mxu0 0
      %4390 = vmatprep.subr.bf16.mxu0 0
      %4391 = vmatpush1.bf16.msra.mxu0 0
      %4392 = vmatprep.subr.bf16.mxu0 0
      %4393 = vmatpush1.bf16.msra.mxu0 0
      %4394 = vmatprep.subr.bf16.mxu0 0
      %4395 = vmatpush1.bf16.msra.mxu0 0
      %4396 = vmatprep.subr.bf16.mxu0 0
      %4397 = vmatpush1.bf16.msra.mxu0 0
      %4398 = vmatprep.subr.bf16.mxu0 0
      %4399 = vmatpush1.bf16.msra.mxu0 0
      %4400 = vmatprep.subr.bf16.mxu0 0
      %4401 = vmatpush1.bf16.msra.mxu0 0
      %4402 = vmatprep.subr.bf16.mxu0 0
      %4403 = vmatpush1.bf16.msra.mxu0 0
      %4404 = vmatprep.subr.bf16.mxu0 0
      %4405 = vmatpush1.bf16.msra.mxu0 0
      %4406 = vmatprep.subr.bf16.mxu0 0
      %4407 = vmatpush1.bf16.msra.mxu0 0
      %4408 = vmatprep.mubr.bf16.mxu0 0
      %4409 = vmatmul.mubr.bf16.gmra.mrb[0].mxu0 %v4265
      %v4410 = vpop.f32.mrb[0].mxu0
      %v4411 = vadd.f32 %v4237, %v4410
      %v4412 = vpop.f32.mrb[0].mxu0
      %v4413 = vadd.f32 %v4237, %v4412
      %v4414 = vpop.f32.mrb[0].mxu0
      %v4415 = vadd.f32 %v4242, %v4414
      %v4416 = vpop.f32.mrb[0].mxu0
      %v4417 = vadd.f32 %v4242, %v4416
      %4418 = vmatprep.mubr.bf16.mxu0 0
      %4419 = vmatmul.mubr.bf16.gmra.mrb[0].mxu0 %v4268
      %v4420 = vpop.f32.mrb[0].mxu0
      %v4421 = vadd.f32 %v4247, %v4420
      %v4422 = vpop.f32.mrb[0].mxu0
      %v4423 = vadd.f32 %v4247, %v4422
      %v4424 = vpop.f32.mrb[0].mxu0
      %v4425 = vadd.f32 %v4252, %v4424
      %v4426 = vpop.f32.mrb[0].mxu0
      %v4427 = vadd.f32 %v4252, %v4426
      %4428 = vdwg.mxu0
      %4429 = vmatprep.subr.bf16.mxu0 %v4229
      %4430 = vmatpush1.bf16.msra.mxu0 %v4228
      %4431 = vmatprep.subr.bf16.mxu0 0
      %4432 = vmatpush1.bf16.msra.mxu0 0
      %4433 = vmatprep.subr.bf16.mxu0 0
      %4434 = vmatpush1.bf16.msra.mxu0 0
      %4435 = vmatprep.subr.bf16.mxu0 0
      %4436 = vmatpush1.bf16.msra.mxu0 0
      %4437 = vmatprep.subr.bf16.mxu0 0
      %4438 = vmatpush1.bf16.msra.mxu0 0
      %4439 = vmatprep.subr.bf16.mxu0 0
      %4440 = vmatpush1.bf16.msra.mxu0 0
      %4441 = vmatprep.subr.bf16.mxu0 0
      %4442 = vmatpush1.bf16.msra.mxu0 0
      %4443 = vmatprep.subr.bf16.mxu0 0
      %4444 = vmatpush1.bf16.msra.mxu0 0
      %4445 = vmatprep.subr.bf16.mxu0 0
      %4446 = vmatpush1.bf16.msra.mxu0 0
      %4447 = vmatprep.subr.bf16.mxu0 0
      %4448 = vmatpush1.bf16.msra.mxu0 0
      %4449 = vmatprep.subr.bf16.mxu0 0
      %4450 = vmatpush1.bf16.msra.mxu0 0
      %4451 = vmatprep.subr.bf16.mxu0 0
      %4452 = vmatpush1.bf16.msra.mxu0 0
      %4453 = vmatprep.subr.bf16.mxu0 0
      %4454 = vmatpush1.bf16.msra.mxu0 0
      %4455 = vmatprep.subr.bf16.mxu0 0
      %4456 = vmatpush1.bf16.msra.mxu0 0
      %4457 = vmatprep.subr.bf16.mxu0 0
      %4458 = vmatpush1.bf16.msra.mxu0 0
      %4459 = vmatprep.subr.bf16.mxu0 0
      %4460 = vmatpush1.bf16.msra.mxu0 0
      %4461 = vmatprep.mubr.bf16.mxu0 0
      %4462 = vmatmul.mubr.bf16.gmra.mrb[0].mxu0 %v4265
      %v4463 = vpop.f32.mrb[0].mxu0
      %v4464 = vadd.f32 %v4237, %v4463
      %v4465 = vpop.f32.mrb[0].mxu0
      %v4466 = vadd.f32 %v4237, %v4465
      %v4467 = vpop.f32.mrb[0].mxu0
      %v4468 = vadd.f32 %v4242, %v4467
      %v4469 = vpop.f32.mrb[0].mxu0
      %v4470 = vadd.f32 %v4242, %v4469
      %4471 = vmatprep.mubr.bf16.mxu0 0
      %4472 = vmatmul.mubr.bf16.gmra.mrb[0].mxu0 %v4268
      %v4473 = vpop.f32.mrb[0].mxu0
      %v4474 = vadd.f32 %v4247, %v4473
      %v4475 = vpop.f32.mrb[0].mxu0
      %v4476 = vadd.f32 %v4247, %v4475
      %v4477 = vpop.f32.mrb[0].mxu0
      %v4478 = vadd.f32 %v4252, %v4477
      %v4479 = vpop.f32.mrb[0].mxu0
      %v4480 = vadd.f32 %v4252, %v4479
      %4481 = vdwg.mxu0
      %v4482 = vsub.f32 0.0, %v4305
      %v4483 = vsub.f32 0.0, %v4307
      %v4484 = vsub.f32 0.0, %v4358
      %v4485 = vsub.f32 0.0, %v4360
      %v4486 = vsub.f32 0.0, %v4411
      %v4487 = vsub.f32 0.0, %v4413
      %v4488 = vsub.f32 0.0, %v4464
      %v4489 = vsub.f32 0.0, %v4466
      %v4490 = vsub.f32 0.0, %v4309
      %v4491 = vsub.f32 0.0, %v4311
      %v4492 = vsub.f32 0.0, %v4362
      %v4493 = vsub.f32 0.0, %v4364
      %v4494 = vsub.f32 0.0, %v4415
      %v4495 = vsub.f32 0.0, %v4417
      %v4496 = vsub.f32 0.0, %v4468
      %v4497 = vsub.f32 0.0, %v4470
      %v4498 = vsub.f32 0.0, %v4315
      %v4499 = vsub.f32 0.0, %v4317
      %v4500 = vsub.f32 0.0, %v4368
      %v4501 = vsub.f32 0.0, %v4370
      %v4502 = vsub.f32 0.0, %v4421
      %v4503 = vsub.f32 0.0, %v4423
      %v4504 = vsub.f32 0.0, %v4474
      %v4505 = vsub.f32 0.0, %v4476
      %v4506 = vsub.f32 0.0, %v4319
      %v4507 = vsub.f32 0.0, %v4321
      %v4508 = vsub.f32 0.0, %v4372
      %v4509 = vsub.f32 0.0, %v4374
      %v4510 = vsub.f32 0.0, %v4425
      %v4511 = vsub.f32 0.0, %v4427
      %v4512 = vsub.f32 0.0, %v4478
      %v4513 = vsub.f32 0.0, %v4480
      %v4514 = vmul.f32 %v4482, 1.442695
      %v4515 = vpow.pop %v4514
      %v4516 = vmul.f32 %v4483, 1.442695
      %v4517 = vpow.pop %v4516
      %v4518 = vmul.f32 %v4484, 1.442695
      %v4519 = vpow.pop %v4518
      %v4520 = vmul.f32 %v4485, 1.442695
      %v4521 = vpow.pop %v4520
      %v4522 = vmul.f32 %v4486, 1.442695
      %v4523 = vpow.pop %v4522
      %v4524 = vmul.f32 %v4487, 1.442695
      %v4525 = vpow.pop %v4524
      %v4526 = vmul.f32 %v4488, 1.442695
      %v4527 = vpow.pop %v4526
      %v4528 = vmul.f32 %v4489, 1.442695
      %v4529 = vpow.pop %v4528
      %v4530 = vmul.f32 %v4490, 1.442695
      %v4531 = vpow.pop %v4530
      %v4532 = vmul.f32 %v4491, 1.442695
      %v4533 = vpow.pop %v4532
      %v4534 = vmul.f32 %v4492, 1.442695
      %v4535 = vpow.pop %v4534
      %v4536 = vmul.f32 %v4493, 1.442695
      %v4537 = vpow.pop %v4536
      %v4538 = vmul.f32 %v4494, 1.442695
      %v4539 = vpow.pop %v4538
      %v4540 = vmul.f32 %v4495, 1.442695
      %v4541 = vpow.pop %v4540
      %v4542 = vmul.f32 %v4496, 1.442695
      %v4543 = vpow.pop %v4542
      %v4544 = vmul.f32 %v4497, 1.442695
      %v4545 = vpow.pop %v4544
      %v4546 = vmul.f32 %v4498, 1.442695
      %v4547 = vpow.pop %v4546
      %v4548 = vmul.f32 %v4499, 1.442695
      %v4549 = vpow.pop %v4548
      %v4550 = vmul.f32 %v4500, 1.442695
      %v4551 = vpow.pop %v4550
      %v4552 = vmul.f32 %v4501, 1.442695
      %v4553 = vpow.pop %v4552
      %v4554 = vmul.f32 %v4502, 1.442695
      %v4555 = vpow.pop %v4554
      %v4556 = vmul.f32 %v4503, 1.442695
      %v4557 = vpow.pop %v4556
      %v4558 = vmul.f32 %v4504, 1.442695
      %v4559 = vpow.pop %v4558
      %v4560 = vmul.f32 %v4505, 1.442695
      %v4561 = vpow.pop %v4560
      %v4562 = vmul.f32 %v4506, 1.442695
      %v4563 = vpow.pop %v4562
      %v4564 = vmul.f32 %v4507, 1.442695
      %v4565 = vpow.pop %v4564
      %v4566 = vmul.f32 %v4508, 1.442695
      %v4567 = vpow.pop %v4566
      %v4568 = vmul.f32 %v4509, 1.442695
      %v4569 = vpow.pop %v4568
      %v4570 = vmul.f32 %v4510, 1.442695
      %v4571 = vpow.pop %v4570
      %v4572 = vmul.f32 %v4511, 1.442695
      %v4573 = vpow.pop %v4572
      %v4574 = vmul.f32 %v4512, 1.442695
      %v4575 = vpow.pop %v4574
      %v4576 = vmul.f32 %v4513, 1.442695
      %v4577 = vpow.pop %v4576
      %v4578 = vadd.f32 %v4515, 1.0
      %v4579 = vadd.f32 %v4517, 1.0
      %v4580 = vadd.f32 %v4519, 1.0
      %v4581 = vadd.f32 %v4521, 1.0
      %v4582 = vadd.f32 %v4523, 1.0
      %v4583 = vadd.f32 %v4525, 1.0
      %v4584 = vadd.f32 %v4527, 1.0
      %v4585 = vadd.f32 %v4529, 1.0
      %v4586 = vadd.f32 %v4531, 1.0
      %v4587 = vadd.f32 %v4533, 1.0
      %v4588 = vadd.f32 %v4535, 1.0
      %v4589 = vadd.f32 %v4537, 1.0
      %v4590 = vadd.f32 %v4539, 1.0
      %v4591 = vadd.f32 %v4541, 1.0
      %v4592 = vadd.f32 %v4543, 1.0
      %v4593 = vadd.f32 %v4545, 1.0
      %v4594 = vadd.f32 %v4547, 1.0
      %v4595 = vadd.f32 %v4549, 1.0
      %v4596 = vadd.f32 %v4551, 1.0
      %v4597 = vadd.f32 %v4553, 1.0
      %v4598 = vadd.f32 %v4555, 1.0
      %v4599 = vadd.f32 %v4557, 1.0
      %v4600 = vadd.f32 %v4559, 1.0
      %v4601 = vadd.f32 %v4561, 1.0
      %v4602 = vadd.f32 %v4563, 1.0
      %v4603 = vadd.f32 %v4565, 1.0
      %v4604 = vadd.f32 %v4567, 1.0
      %v4605 = vadd.f32 %v4569, 1.0
      %v4606 = vadd.f32 %v4571, 1.0
      %v4607 = vadd.f32 %v4573, 1.0
      %v4608 = vadd.f32 %v4575, 1.0
      %v4609 = vadd.f32 %v4577, 1.0
      %v4610 = vrcp.pop %v4578
      %v4611 = vrcp.pop %v4579
      %v4612 = vrcp.pop %v4580
      %v4613 = vrcp.pop %v4581
      %v4614 = vrcp.pop %v4582
      %v4615 = vrcp.pop %v4583
      %v4616 = vrcp.pop %v4584
      %v4617 = vrcp.pop %v4585
      %v4618 = vrcp.pop %v4586
      %v4619 = vrcp.pop %v4587
      %v4620 = vrcp.pop %v4588
      %v4621 = vrcp.pop %v4589
      %v4622 = vrcp.pop %v4590
      %v4623 = vrcp.pop %v4591
      %v4624 = vrcp.pop %v4592
      %v4625 = vrcp.pop %v4593
      %v4626 = vrcp.pop %v4594
      %v4627 = vrcp.pop %v4595
      %v4628 = vrcp.pop %v4596
      %v4629 = vrcp.pop %v4597
      %v4630 = vrcp.pop %v4598
      %v4631 = vrcp.pop %v4599
      %v4632 = vrcp.pop %v4600
      %v4633 = vrcp.pop %v4601
      %v4634 = vrcp.pop %v4602
      %v4635 = vrcp.pop %v4603
      %v4636 = vrcp.pop %v4604
      %v4637 = vrcp.pop %v4605
      %v4638 = vrcp.pop %v4606
      %v4639 = vrcp.pop %v4607
      %v4640 = vrcp.pop %v4608
      %v4641 = vrcp.pop %v4609
      %v4642 = vmul.f32 %v4305, %v4610
      %v4643 = vmul.f32 %v4307, %v4611
      %v4644 = vmul.f32 %v4358, %v4612
      %v4645 = vmul.f32 %v4360, %v4613
      %v4646 = vmul.f32 %v4411, %v4614
      %v4647 = vmul.f32 %v4413, %v4615
      %v4648 = vmul.f32 %v4464, %v4616
      %v4649 = vmul.f32 %v4466, %v4617
      %v4650 = vmul.f32 %v4309, %v4618
      %v4651 = vmul.f32 %v4311, %v4619
      %v4652 = vmul.f32 %v4362, %v4620
      %v4653 = vmul.f32 %v4364, %v4621
      %v4654 = vmul.f32 %v4415, %v4622
      %v4655 = vmul.f32 %v4417, %v4623
      %v4656 = vmul.f32 %v4468, %v4624
      %v4657 = vmul.f32 %v4470, %v4625
      %v4658 = vmul.f32 %v4315, %v4626
      %v4659 = vmul.f32 %v4317, %v4627
      %v4660 = vmul.f32 %v4368, %v4628
      %v4661 = vmul.f32 %v4370, %v4629
      %v4662 = vmul.f32 %v4421, %v4630
      %v4663 = vmul.f32 %v4423, %v4631
      %v4664 = vmul.f32 %v4474, %v4632
      %v4665 = vmul.f32 %v4476, %v4633
      %v4666 = vmul.f32 %v4319, %v4634
      %v4667 = vmul.f32 %v4321, %v4635
      %v4668 = vmul.f32 %v4372, %v4636
      %v4669 = vmul.f32 %v4374, %v4637
      %v4670 = vmul.f32 %v4425, %v4638
      %v4671 = vmul.f32 %v4427, %v4639
      %v4672 = vmul.f32 %v4478, %v4640
      %v4673 = vmul.f32 %v4480, %v4641
      %4674 = vrot.lane.b32.xlu0 %v4642, 66
      %v4675 = vpop.permute.xlu0 %4674
      %4676 = vrot.lane.b32.xlu0 %v4650, 66
      %v4677 = vpop.permute.xlu0 %4676
      %4678 = vrot.lane.b32.xlu0 %v4658, 66
      %v4679 = vpop.permute.xlu0 %4678
      %4680 = vrot.lane.b32.xlu0 %v4666, 66
      %v4681 = vpop.permute.xlu0 %4680
      %4682 = vrot.lane.b32.xlu0 %v4643, 66
      %v4683 = vpop.permute.xlu0 %4682
      %4684 = vrot.lane.b32.xlu0 %v4651, 66
      %v4685 = vpop.permute.xlu0 %4684
      %4686 = vrot.lane.b32.xlu0 %v4659, 66
      %v4687 = vpop.permute.xlu0 %4686
      %4688 = vrot.lane.b32.xlu0 %v4667, 66
      %v4689 = vpop.permute.xlu0 %4688
      %4690 = vrot.lane.b32.xlu0 %v4644, 66
      %v4691 = vpop.permute.xlu0 %4690
      %4692 = vrot.lane.b32.xlu0 %v4652, 66
      %v4693 = vpop.permute.xlu0 %4692
      %4694 = vrot.lane.b32.xlu0 %v4660, 66
      %v4695 = vpop.permute.xlu0 %4694
      %4696 = vrot.lane.b32.xlu0 %v4668, 66
      %v4697 = vpop.permute.xlu0 %4696
      %4698 = vrot.lane.b32.xlu0 %v4645, 66
      %v4699 = vpop.permute.xlu0 %4698
      %4700 = vrot.lane.b32.xlu0 %v4653, 66
      %v4701 = vpop.permute.xlu0 %4700
      %4702 = vrot.lane.b32.xlu0 %v4661, 66
      %v4703 = vpop.permute.xlu0 %4702
      %4704 = vrot.lane.b32.xlu0 %v4669, 66
      %v4705 = vpop.permute.xlu0 %4704
      %4706 = vrot.lane.b32.xlu0 %v4646, 66
      %v4707 = vpop.permute.xlu0 %4706
      %4708 = vrot.lane.b32.xlu0 %v4654, 66
      %v4709 = vpop.permute.xlu0 %4708
      %4710 = vrot.lane.b32.xlu0 %v4662, 66
      %v4711 = vpop.permute.xlu0 %4710
      %4712 = vrot.lane.b32.xlu0 %v4670, 66
      %v4713 = vpop.permute.xlu0 %4712
      %4714 = vrot.lane.b32.xlu0 %v4647, 66
      %v4715 = vpop.permute.xlu0 %4714
      %4716 = vrot.lane.b32.xlu0 %v4655, 66
      %v4717 = vpop.permute.xlu0 %4716
      %4718 = vrot.lane.b32.xlu0 %v4663, 66
      %v4719 = vpop.permute.xlu0 %4718
      %4720 = vrot.lane.b32.xlu0 %v4671, 66
      %v4721 = vpop.permute.xlu0 %4720
      %4722 = vrot.lane.b32.xlu0 %v4648, 66
      %v4723 = vpop.permute.xlu0 %4722
      %4724 = vrot.lane.b32.xlu0 %v4656, 66
      %v4725 = vpop.permute.xlu0 %4724
      %4726 = vrot.lane.b32.xlu0 %v4664, 66
      %v4727 = vpop.permute.xlu0 %4726
      %4728 = vrot.lane.b32.xlu0 %v4672, 66
      %v4729 = vpop.permute.xlu0 %4728
      %4730 = vrot.lane.b32.xlu0 %v4649, 66
      %v4731 = vpop.permute.xlu0 %4730
      %4732 = vrot.lane.b32.xlu0 %v4657, 66
      %v4733 = vpop.permute.xlu0 %4732
      %4734 = vrot.lane.b32.xlu0 %v4665, 66
      %v4735 = vpop.permute.xlu0 %4734
      %4736 = vrot.lane.b32.xlu0 %v4673, 66
      %v4737 = vpop.permute.xlu0 %4736
      %vm4738 = vcmp.lt.s32.totalorder %v740, 66
      %v4739 = vsel %vm4738, %v4723, %v4731
      %v4740 = vsel %vm4738, %v4725, %v4733
      %v4741 = vsel %vm4738, %v4727, %v4735
      %v4742 = vsel %vm4738, %v4729, %v4737
      %v4743 = vsel %vm4738, %v4715, %v4723
      %v4744 = vsel %vm4738, %v4717, %v4725
      %v4745 = vsel %vm4738, %v4719, %v4727
      %v4746 = vsel %vm4738, %v4721, %v4729
      %v4747 = vsel %vm4738, %v4707, %v4715
      %v4748 = vsel %vm4738, %v4709, %v4717
      %v4749 = vsel %vm4738, %v4711, %v4719
      %v4750 = vsel %vm4738, %v4713, %v4721
      %v4751 = vsel %vm4738, %v4699, %v4707
      %v4752 = vsel %vm4738, %v4701, %v4709
      %v4753 = vsel %vm4738, %v4703, %v4711
      %v4754 = vsel %vm4738, %v4705, %v4713
      %v4755 = vsel %vm4738, %v4691, %v4699
      %v4756 = vsel %vm4738, %v4693, %v4701
      %v4757 = vsel %vm4738, %v4695, %v4703
      %v4758 = vsel %vm4738, %v4697, %v4705
      %v4759 = vsel %vm4738, %v4683, %v4691
      %v4760 = vsel %vm4738, %v4685, %v4693
      %v4761 = vsel %vm4738, %v4687, %v4695
      %v4762 = vsel %vm4738, %v4689, %v4697
      %v4763 = vsel %vm4738, %v4675, %v4683
      %v4764 = vsel %vm4738, %v4677, %v4685
      %v4765 = vsel %vm4738, %v4679, %v4687
      %v4766 = vsel %vm4738, %v4681, %v4689
      %v4767 = vsel %vm4738, %v4731, %v4675
      %v4768 = vsel %vm4738, %v4733, %v4677
      %v4769 = vsel %vm4738, %v4735, %v4679
      %v4770 = vsel %vm4738, %v4737, %v4681
      %vm4771 = vcmp.ge.s32.totalorder %v748, 2
      %vm4772 = vcmp.ge.s32.totalorder %v749, 2
      %vm4773 = vcmp.ge.s32.totalorder %v750, 2
      %vm4774 = vcmp.ge.s32.totalorder %v751, 2
      %vm4775 = vcmp.ge.s32.totalorder %v752, 2
      %vm4776 = vcmp.ge.s32.totalorder %v753, 2
      %vm4777 = vcmp.ge.s32.totalorder %v754, 2
      %vm4778 = vcmp.ge.s32.totalorder %v755, 2
      %vm4779 = vcmp.ge.s32.totalorder %v756, 2
      %vm4780 = vcmp.ge.s32.totalorder %v757, 2
      %vm4781 = vcmp.ge.s32.totalorder %v758, 2
      %vm4782 = vcmp.ge.s32.totalorder %v759, 2
      %vm4783 = vcmp.ge.s32.totalorder %v760, 2
      %vm4784 = vcmp.ge.s32.totalorder %v761, 2
      %vm4785 = vcmp.ge.s32.totalorder %v762, 2
      %vm4786 = vcmp.ge.s32.totalorder %v763, 2
      %vm4787 = vmand %vm4771, %vm4779
      %vm4788 = vmand %vm4772, %vm4780
      %vm4789 = vmand %vm4773, %vm4781
      %vm4790 = vmand %vm4774, %vm4782
      %vm4791 = vmand %vm4775, %vm4783
      %vm4792 = vmand %vm4776, %vm4784
      %vm4793 = vmand %vm4777, %vm4785
      %vm4794 = vmand %vm4778, %vm4786
      %v4795 = vsel %vm4787, 1, 0
      %v4796 = vsel %vm4788, 1, 0
      %v4797 = vsel %vm4789, 1, 0
      %v4798 = vsel %vm4790, 1, 0
      %v4799 = vsel %vm4791, 1, 0
      %v4800 = vsel %vm4792, 1, 0
      %v4801 = vsel %vm4793, 1, 0
      %v4802 = vsel %vm4794, 1, 0
      %v4803 = vcvt.s32.f32 %v4795
      %v4804 = vcvt.s32.f32 %v4796
      %v4805 = vcvt.s32.f32 %v4797
      %v4806 = vcvt.s32.f32 %v4798
      %v4807 = vcvt.s32.f32 %v4799
      %v4808 = vcvt.s32.f32 %v4800
      %v4809 = vcvt.s32.f32 %v4801
      %v4810 = vcvt.s32.f32 %v4802
      %v4811 = vmul.f32 %v4767, %v4803
      %v4812 = vmul.f32 %v4763, %v4804
      %v4813 = vmul.f32 %v4759, %v4805
      %v4814 = vmul.f32 %v4755, %v4806
      %v4815 = vmul.f32 %v4751, %v4807
      %v4816 = vmul.f32 %v4747, %v4808
      %v4817 = vmul.f32 %v4743, %v4809
      %v4818 = vmul.f32 %v4739, %v4810
      %v4819 = vmul.f32 %v4768, %v4803
      %v4820 = vmul.f32 %v4764, %v4804
      %v4821 = vmul.f32 %v4760, %v4805
      %v4822 = vmul.f32 %v4756, %v4806
      %v4823 = vmul.f32 %v4752, %v4807
      %v4824 = vmul.f32 %v4748, %v4808
      %v4825 = vmul.f32 %v4744, %v4809
      %v4826 = vmul.f32 %v4740, %v4810
      %v4827 = vmul.f32 %v4769, %v4803
      %v4828 = vmul.f32 %v4765, %v4804
      %v4829 = vmul.f32 %v4761, %v4805
      %v4830 = vmul.f32 %v4757, %v4806
      %v4831 = vmul.f32 %v4753, %v4807
      %v4832 = vmul.f32 %v4749, %v4808
      %v4833 = vmul.f32 %v4745, %v4809
      %v4834 = vmul.f32 %v4741, %v4810
      %v4835 = vmul.f32 %v4770, %v4803
      %v4836 = vmul.f32 %v4766, %v4804
      %v4837 = vmul.f32 %v4762, %v4805
      %v4838 = vmul.f32 %v4758, %v4806
      %v4839 = vmul.f32 %v4754, %v4807
      %v4840 = vmul.f32 %v4750, %v4808
      %v4841 = vmul.f32 %v4746, %v4809
      %v4842 = vmul.f32 %v4742, %v4810
      %v4843 = vld [vmem:[%s15] sm:$0xff]
      %v4844 = vld [vmem:[%s15 + $0x8] sm:$0xff]
      %v4845 = vld [vmem:[%s15 + $0x10] sm:$0xff]
      %v4846 = vld [vmem:[%s15 + $0x18] sm:$0xff]
      %4848 = vset.pattern.permute.xlu0 0
      %4849 = vperm.xlu0 %4848, %v4843
      %v4850 = vpop.permute.xlu0 %4849
      %4853 = vset.pattern.permute.xlu0 0
      %4854 = vperm.xlu0 %4853, %v4844
      %v4855 = vpop.permute.xlu0 %4854
      %4858 = vset.pattern.permute.xlu0 0
      %4859 = vperm.xlu0 %4858, %v4845
      %v4860 = vpop.permute.xlu0 %4859
      %4863 = vset.pattern.permute.xlu0 0
      %4864 = vperm.xlu0 %4863, %v4846
      %v4865 = vpop.permute.xlu0 %4864
      %v4867 = vmul.f32 %v4811, %v4850
      %v4868 = vmul.f32 %v4812, %v4850
      %v4869 = vmul.f32 %v4813, %v4850
      %v4870 = vmul.f32 %v4814, %v4850
      %v4871 = vmul.f32 %v4815, %v4850
      %v4872 = vmul.f32 %v4816, %v4850
      %v4873 = vmul.f32 %v4817, %v4850
      %v4874 = vmul.f32 %v4818, %v4850
      %v4875 = vmul.f32 %v4819, %v4855
      %v4876 = vmul.f32 %v4820, %v4855
      %v4877 = vmul.f32 %v4821, %v4855
      %v4878 = vmul.f32 %v4822, %v4855
      %v4879 = vmul.f32 %v4823, %v4855
      %v4880 = vmul.f32 %v4824, %v4855
      %v4881 = vmul.f32 %v4825, %v4855
      %v4882 = vmul.f32 %v4826, %v4855
      %v4883 = vmul.f32 %v4827, %v4860
      %v4884 = vmul.f32 %v4828, %v4860
      %v4885 = vmul.f32 %v4829, %v4860
      %v4886 = vmul.f32 %v4830, %v4860
      %v4887 = vmul.f32 %v4831, %v4860
      %v4888 = vmul.f32 %v4832, %v4860
      %v4889 = vmul.f32 %v4833, %v4860
      %v4890 = vmul.f32 %v4834, %v4860
      %v4891 = vmul.f32 %v4835, %v4865
      %v4892 = vmul.f32 %v4836, %v4865
      %v4893 = vmul.f32 %v4837, %v4865
      %v4894 = vmul.f32 %v4838, %v4865
      %v4895 = vmul.f32 %v4839, %v4865
      %v4896 = vmul.f32 %v4840, %v4865
      %v4897 = vmul.f32 %v4841, %v4865
      %v4898 = vmul.f32 %v4842, %v4865
      %v4899 = vadd.f32 %v4867, 0.0
      %v4900 = vadd.f32 %v4868, 0.0
      %v4901 = vadd.f32 %v4869, 0.0
      %v4902 = vadd.f32 %v4870, 0.0
      %v4903 = vadd.f32 %v4871, 0.0
      %v4904 = vadd.f32 %v4872, 0.0
      %v4905 = vadd.f32 %v4873, 0.0
      %v4906 = vadd.f32 %v4874, 0.0
      %v4907 = vadd.f32 %v4875, 0.0
      %v4908 = vadd.f32 %v4876, 0.0
      %v4909 = vadd.f32 %v4877, 0.0
      %v4910 = vadd.f32 %v4878, 0.0
      %v4911 = vadd.f32 %v4879, 0.0
      %v4912 = vadd.f32 %v4880, 0.0
      %v4913 = vadd.f32 %v4881, 0.0
      %v4914 = vadd.f32 %v4882, 0.0
      %v4915 = vadd.f32 %v4883, 0.0
      %v4916 = vadd.f32 %v4884, 0.0
      %v4917 = vadd.f32 %v4885, 0.0
      %v4918 = vadd.f32 %v4886, 0.0
      %v4919 = vadd.f32 %v4887, 0.0
      %v4920 = vadd.f32 %v4888, 0.0
      %v4921 = vadd.f32 %v4889, 0.0
      %v4922 = vadd.f32 %v4890, 0.0
      %v4923 = vadd.f32 %v4891, 0.0
      %v4924 = vadd.f32 %v4892, 0.0
      %v4925 = vadd.f32 %v4893, 0.0
      %v4926 = vadd.f32 %v4894, 0.0
      %v4927 = vadd.f32 %v4895, 0.0
      %v4928 = vadd.f32 %v4896, 0.0
      %v4929 = vadd.f32 %v4897, 0.0
      %v4930 = vadd.f32 %v4898, 0.0
      %4931 = vrot.lane.b32.xlu0 %v4642, 64
      %v4932 = vpop.permute.xlu0 %4931
      %4933 = vrot.lane.b32.xlu0 %v4650, 64
      %v4934 = vpop.permute.xlu0 %4933
      %4935 = vrot.lane.b32.xlu0 %v4658, 64
      %v4936 = vpop.permute.xlu0 %4935
      %4937 = vrot.lane.b32.xlu0 %v4666, 64
      %v4938 = vpop.permute.xlu0 %4937
      %4939 = vrot.lane.b32.xlu0 %v4643, 64
      %v4940 = vpop.permute.xlu0 %4939
      %4941 = vrot.lane.b32.xlu0 %v4651, 64
      %v4942 = vpop.permute.xlu0 %4941
      %4943 = vrot.lane.b32.xlu0 %v4659, 64
      %v4944 = vpop.permute.xlu0 %4943
      %4945 = vrot.lane.b32.xlu0 %v4667, 64
      %v4946 = vpop.permute.xlu0 %4945
      %4947 = vrot.lane.b32.xlu0 %v4644, 64
      %v4948 = vpop.permute.xlu0 %4947
      %4949 = vrot.lane.b32.xlu0 %v4652, 64
      %v4950 = vpop.permute.xlu0 %4949
      %4951 = vrot.lane.b32.xlu0 %v4660, 64
      %v4952 = vpop.permute.xlu0 %4951
      %4953 = vrot.lane.b32.xlu0 %v4668, 64
      %v4954 = vpop.permute.xlu0 %4953
      %4955 = vrot.lane.b32.xlu0 %v4645, 64
      %v4956 = vpop.permute.xlu0 %4955
      %4957 = vrot.lane.b32.xlu0 %v4653, 64
      %v4958 = vpop.permute.xlu0 %4957
      %4959 = vrot.lane.b32.xlu0 %v4661, 64
      %v4960 = vpop.permute.xlu0 %4959
      %4961 = vrot.lane.b32.xlu0 %v4669, 64
      %v4962 = vpop.permute.xlu0 %4961
      %4963 = vrot.lane.b32.xlu0 %v4646, 64
      %v4964 = vpop.permute.xlu0 %4963
      %4965 = vrot.lane.b32.xlu0 %v4654, 64
      %v4966 = vpop.permute.xlu0 %4965
      %4967 = vrot.lane.b32.xlu0 %v4662, 64
      %v4968 = vpop.permute.xlu0 %4967
      %4969 = vrot.lane.b32.xlu0 %v4670, 64
      %v4970 = vpop.permute.xlu0 %4969
      %4971 = vrot.lane.b32.xlu0 %v4647, 64
      %v4972 = vpop.permute.xlu0 %4971
      %4973 = vrot.lane.b32.xlu0 %v4655, 64
      %v4974 = vpop.permute.xlu0 %4973
      %4975 = vrot.lane.b32.xlu0 %v4663, 64
      %v4976 = vpop.permute.xlu0 %4975
      %4977 = vrot.lane.b32.xlu0 %v4671, 64
      %v4978 = vpop.permute.xlu0 %4977
      %4979 = vrot.lane.b32.xlu0 %v4648, 64
      %v4980 = vpop.permute.xlu0 %4979
      %4981 = vrot.lane.b32.xlu0 %v4656, 64
      %v4982 = vpop.permute.xlu0 %4981
      %4983 = vrot.lane.b32.xlu0 %v4664, 64
      %v4984 = vpop.permute.xlu0 %4983
      %4985 = vrot.lane.b32.xlu0 %v4672, 64
      %v4986 = vpop.permute.xlu0 %4985
      %4987 = vrot.lane.b32.xlu0 %v4649, 64
      %v4988 = vpop.permute.xlu0 %4987
      %4989 = vrot.lane.b32.xlu0 %v4657, 64
      %v4990 = vpop.permute.xlu0 %4989
      %4991 = vrot.lane.b32.xlu0 %v4665, 64
      %v4992 = vpop.permute.xlu0 %4991
      %4993 = vrot.lane.b32.xlu0 %v4673, 64
      %v4994 = vpop.permute.xlu0 %4993
      %vm4995 = vcmp.lt.s32.totalorder %v740, 64
      %v4996 = vsel %vm4995, %v4980, %v4988
      %v4997 = vsel %vm4995, %v4982, %v4990
      %v4998 = vsel %vm4995, %v4984, %v4992
      %v4999 = vsel %vm4995, %v4986, %v4994
      %v5000 = vsel %vm4995, %v4972, %v4980
      %v5001 = vsel %vm4995, %v4974, %v4982
      %v5002 = vsel %vm4995, %v4976, %v4984
      %v5003 = vsel %vm4995, %v4978, %v4986
      %v5004 = vsel %vm4995, %v4964, %v4972
      %v5005 = vsel %vm4995, %v4966, %v4974
      %v5006 = vsel %vm4995, %v4968, %v4976
      %v5007 = vsel %vm4995, %v4970, %v4978
      %v5008 = vsel %vm4995, %v4956, %v4964
      %v5009 = vsel %vm4995, %v4958, %v4966
      %v5010 = vsel %vm4995, %v4960, %v4968
      %v5011 = vsel %vm4995, %v4962, %v4970
      %v5012 = vsel %vm4995, %v4948, %v4956
      %v5013 = vsel %vm4995, %v4950, %v4958
      %v5014 = vsel %vm4995, %v4952, %v4960
      %v5015 = vsel %vm4995, %v4954, %v4962
      %v5016 = vsel %vm4995, %v4940, %v4948
      %v5017 = vsel %vm4995, %v4942, %v4950
      %v5018 = vsel %vm4995, %v4944, %v4952
      %v5019 = vsel %vm4995, %v4946, %v4954
      %v5020 = vsel %vm4995, %v4932, %v4940
      %v5021 = vsel %vm4995, %v4934, %v4942
      %v5022 = vsel %vm4995, %v4936, %v4944
      %v5023 = vsel %vm4995, %v4938, %v4946
      %v5024 = vsel %vm4995, %v4988, %v4932
      %v5025 = vsel %vm4995, %v4990, %v4934
      %v5026 = vsel %vm4995, %v4992, %v4936
      %v5027 = vsel %vm4995, %v4994, %v4938
      %v5028 = vsel %vm4771, 1, 0
      %v5029 = vsel %vm4772, 1, 0
      %v5030 = vsel %vm4773, 1, 0
      %v5031 = vsel %vm4774, 1, 0
      %v5032 = vsel %vm4775, 1, 0
      %v5033 = vsel %vm4776, 1, 0
      %v5034 = vsel %vm4777, 1, 0
      %v5035 = vsel %vm4778, 1, 0
      %v5036 = vcvt.s32.f32 %v5028
      %v5037 = vcvt.s32.f32 %v5029
      %v5038 = vcvt.s32.f32 %v5030
      %v5039 = vcvt.s32.f32 %v5031
      %v5040 = vcvt.s32.f32 %v5032
      %v5041 = vcvt.s32.f32 %v5033
      %v5042 = vcvt.s32.f32 %v5034
      %v5043 = vcvt.s32.f32 %v5035
      %v5044 = vmul.f32 %v5024, %v5036
      %v5045 = vmul.f32 %v5020, %v5037
      %v5046 = vmul.f32 %v5016, %v5038
      %v5047 = vmul.f32 %v5012, %v5039
      %v5048 = vmul.f32 %v5008, %v5040
      %v5049 = vmul.f32 %v5004, %v5041
      %v5050 = vmul.f32 %v5000, %v5042
      %v5051 = vmul.f32 %v4996, %v5043
      %v5052 = vmul.f32 %v5025, %v5036
      %v5053 = vmul.f32 %v5021, %v5037
      %v5054 = vmul.f32 %v5017, %v5038
      %v5055 = vmul.f32 %v5013, %v5039
      %v5056 = vmul.f32 %v5009, %v5040
      %v5057 = vmul.f32 %v5005, %v5041
      %v5058 = vmul.f32 %v5001, %v5042
      %v5059 = vmul.f32 %v4997, %v5043
      %v5060 = vmul.f32 %v5026, %v5036
      %v5061 = vmul.f32 %v5022, %v5037
      %v5062 = vmul.f32 %v5018, %v5038
      %v5063 = vmul.f32 %v5014, %v5039
      %v5064 = vmul.f32 %v5010, %v5040
      %v5065 = vmul.f32 %v5006, %v5041
      %v5066 = vmul.f32 %v5002, %v5042
      %v5067 = vmul.f32 %v4998, %v5043
      %v5068 = vmul.f32 %v5027, %v5036
      %v5069 = vmul.f32 %v5023, %v5037
      %v5070 = vmul.f32 %v5019, %v5038
      %v5071 = vmul.f32 %v5015, %v5039
      %v5072 = vmul.f32 %v5011, %v5040
      %v5073 = vmul.f32 %v5007, %v5041
      %v5074 = vmul.f32 %v5003, %v5042
      %v5075 = vmul.f32 %v4999, %v5043
      %s5076 = scalar_lea.vmem %s15, 32
      %v5077 = vld [vmem:[%s5076] sm:$0xff]
      %v5078 = vld [vmem:[%s5076 + $0x8] sm:$0xff]
      %v5079 = vld [vmem:[%s5076 + $0x10] sm:$0xff]
      %v5080 = vld [vmem:[%s5076 + $0x18] sm:$0xff]
      %5082 = vset.pattern.permute.xlu0 0
      %5083 = vperm.xlu0 %5082, %v5077
      %v5084 = vpop.permute.xlu0 %5083
      %5087 = vset.pattern.permute.xlu0 0
      %5088 = vperm.xlu0 %5087, %v5078
      %v5089 = vpop.permute.xlu0 %5088
      %5092 = vset.pattern.permute.xlu0 0
      %5093 = vperm.xlu0 %5092, %v5079
      %v5094 = vpop.permute.xlu0 %5093
      %5097 = vset.pattern.permute.xlu0 0
      %5098 = vperm.xlu0 %5097, %v5080
      %v5099 = vpop.permute.xlu0 %5098
      %v5101 = vmul.f32 %v5044, %v5084
      %v5102 = vmul.f32 %v5045, %v5084
      %v5103 = vmul.f32 %v5046, %v5084
      %v5104 = vmul.f32 %v5047, %v5084
      %v5105 = vmul.f32 %v5048, %v5084
      %v5106 = vmul.f32 %v5049, %v5084
      %v5107 = vmul.f32 %v5050, %v5084
      %v5108 = vmul.f32 %v5051, %v5084
      %v5109 = vmul.f32 %v5052, %v5089
      %v5110 = vmul.f32 %v5053, %v5089
      %v5111 = vmul.f32 %v5054, %v5089
      %v5112 = vmul.f32 %v5055, %v5089
      %v5113 = vmul.f32 %v5056, %v5089
      %v5114 = vmul.f32 %v5057, %v5089
      %v5115 = vmul.f32 %v5058, %v5089
      %v5116 = vmul.f32 %v5059, %v5089
      %v5117 = vmul.f32 %v5060, %v5094
      %v5118 = vmul.f32 %v5061, %v5094
      %v5119 = vmul.f32 %v5062, %v5094
      %v5120 = vmul.f32 %v5063, %v5094
      %v5121 = vmul.f32 %v5064, %v5094
      %v5122 = vmul.f32 %v5065, %v5094
      %v5123 = vmul.f32 %v5066, %v5094
      %v5124 = vmul.f32 %v5067, %v5094
      %v5125 = vmul.f32 %v5068, %v5099
      %v5126 = vmul.f32 %v5069, %v5099
      %v5127 = vmul.f32 %v5070, %v5099
      %v5128 = vmul.f32 %v5071, %v5099
      %v5129 = vmul.f32 %v5072, %v5099
      %v5130 = vmul.f32 %v5073, %v5099
      %v5131 = vmul.f32 %v5074, %v5099
      %v5132 = vmul.f32 %v5075, %v5099
      %v5133 = vadd.f32 %v4899, %v5101
      %v5134 = vadd.f32 %v4900, %v5102
      %v5135 = vadd.f32 %v4901, %v5103
      %v5136 = vadd.f32 %v4902, %v5104
      %v5137 = vadd.f32 %v4903, %v5105
      %v5138 = vadd.f32 %v4904, %v5106
      %v5139 = vadd.f32 %v4905, %v5107
      %v5140 = vadd.f32 %v4906, %v5108
      %v5141 = vadd.f32 %v4907, %v5109
      %v5142 = vadd.f32 %v4908, %v5110
      %v5143 = vadd.f32 %v4909, %v5111
      %v5144 = vadd.f32 %v4910, %v5112
      %v5145 = vadd.f32 %v4911, %v5113
      %v5146 = vadd.f32 %v4912, %v5114
      %v5147 = vadd.f32 %v4913, %v5115
      %v5148 = vadd.f32 %v4914, %v5116
      %v5149 = vadd.f32 %v4915, %v5117
      %v5150 = vadd.f32 %v4916, %v5118
      %v5151 = vadd.f32 %v4917, %v5119
      %v5152 = vadd.f32 %v4918, %v5120
      %v5153 = vadd.f32 %v4919, %v5121
      %v5154 = vadd.f32 %v4920, %v5122
      %v5155 = vadd.f32 %v4921, %v5123
      %v5156 = vadd.f32 %v4922, %v5124
      %v5157 = vadd.f32 %v4923, %v5125
      %v5158 = vadd.f32 %v4924, %v5126
      %v5159 = vadd.f32 %v4925, %v5127
      %v5160 = vadd.f32 %v4926, %v5128
      %v5161 = vadd.f32 %v4927, %v5129
      %v5162 = vadd.f32 %v4928, %v5130
      %v5163 = vadd.f32 %v4929, %v5131
      %v5164 = vadd.f32 %v4930, %v5132
      %5165 = vrot.lane.b32.xlu0 %v4642, 62
      %v5166 = vpop.permute.xlu0 %5165
      %5167 = vrot.lane.b32.xlu0 %v4650, 62
      %v5168 = vpop.permute.xlu0 %5167
      %5169 = vrot.lane.b32.xlu0 %v4658, 62
      %v5170 = vpop.permute.xlu0 %5169
      %5171 = vrot.lane.b32.xlu0 %v4666, 62
      %v5172 = vpop.permute.xlu0 %5171
      %5173 = vrot.lane.b32.xlu0 %v4643, 62
      %v5174 = vpop.permute.xlu0 %5173
      %5175 = vrot.lane.b32.xlu0 %v4651, 62
      %v5176 = vpop.permute.xlu0 %5175
      %5177 = vrot.lane.b32.xlu0 %v4659, 62
      %v5178 = vpop.permute.xlu0 %5177
      %5179 = vrot.lane.b32.xlu0 %v4667, 62
      %v5180 = vpop.permute.xlu0 %5179
      %5181 = vrot.lane.b32.xlu0 %v4644, 62
      %v5182 = vpop.permute.xlu0 %5181
      %5183 = vrot.lane.b32.xlu0 %v4652, 62
      %v5184 = vpop.permute.xlu0 %5183
      %5185 = vrot.lane.b32.xlu0 %v4660, 62
      %v5186 = vpop.permute.xlu0 %5185
      %5187 = vrot.lane.b32.xlu0 %v4668, 62
      %v5188 = vpop.permute.xlu0 %5187
      %5189 = vrot.lane.b32.xlu0 %v4645, 62
      %v5190 = vpop.permute.xlu0 %5189
      %5191 = vrot.lane.b32.xlu0 %v4653, 62
      %v5192 = vpop.permute.xlu0 %5191
      %5193 = vrot.lane.b32.xlu0 %v4661, 62
      %v5194 = vpop.permute.xlu0 %5193
      %5195 = vrot.lane.b32.xlu0 %v4669, 62
      %v5196 = vpop.permute.xlu0 %5195
      %5197 = vrot.lane.b32.xlu0 %v4646, 62
      %v5198 = vpop.permute.xlu0 %5197
      %5199 = vrot.lane.b32.xlu0 %v4654, 62
      %v5200 = vpop.permute.xlu0 %5199
      %5201 = vrot.lane.b32.xlu0 %v4662, 62
      %v5202 = vpop.permute.xlu0 %5201
      %5203 = vrot.lane.b32.xlu0 %v4670, 62
      %v5204 = vpop.permute.xlu0 %5203
      %5205 = vrot.lane.b32.xlu0 %v4647, 62
      %v5206 = vpop.permute.xlu0 %5205
      %5207 = vrot.lane.b32.xlu0 %v4655, 62
      %v5208 = vpop.permute.xlu0 %5207
      %5209 = vrot.lane.b32.xlu0 %v4663, 62
      %v5210 = vpop.permute.xlu0 %5209
      %5211 = vrot.lane.b32.xlu0 %v4671, 62
      %v5212 = vpop.permute.xlu0 %5211
      %5213 = vrot.lane.b32.xlu0 %v4648, 62
      %v5214 = vpop.permute.xlu0 %5213
      %5215 = vrot.lane.b32.xlu0 %v4656, 62
      %v5216 = vpop.permute.xlu0 %5215
      %5217 = vrot.lane.b32.xlu0 %v4664, 62
      %v5218 = vpop.permute.xlu0 %5217
      %5219 = vrot.lane.b32.xlu0 %v4672, 62
      %v5220 = vpop.permute.xlu0 %5219
      %5221 = vrot.lane.b32.xlu0 %v4649, 62
      %v5222 = vpop.permute.xlu0 %5221
      %5223 = vrot.lane.b32.xlu0 %v4657, 62
      %v5224 = vpop.permute.xlu0 %5223
      %5225 = vrot.lane.b32.xlu0 %v4665, 62
      %v5226 = vpop.permute.xlu0 %5225
      %5227 = vrot.lane.b32.xlu0 %v4673, 62
      %v5228 = vpop.permute.xlu0 %5227
      %vm5229 = vcmp.lt.s32.totalorder %v740, 62
      %v5230 = vsel %vm5229, %v5214, %v5222
      %v5231 = vsel %vm5229, %v5216, %v5224
      %v5232 = vsel %vm5229, %v5218, %v5226
      %v5233 = vsel %vm5229, %v5220, %v5228
      %v5234 = vsel %vm5229, %v5206, %v5214
      %v5235 = vsel %vm5229, %v5208, %v5216
      %v5236 = vsel %vm5229, %v5210, %v5218
      %v5237 = vsel %vm5229, %v5212, %v5220
      %v5238 = vsel %vm5229, %v5198, %v5206
      %v5239 = vsel %vm5229, %v5200, %v5208
      %v5240 = vsel %vm5229, %v5202, %v5210
      %v5241 = vsel %vm5229, %v5204, %v5212
      %v5242 = vsel %vm5229, %v5190, %v5198
      %v5243 = vsel %vm5229, %v5192, %v5200
      %v5244 = vsel %vm5229, %v5194, %v5202
      %v5245 = vsel %vm5229, %v5196, %v5204
      %v5246 = vsel %vm5229, %v5182, %v5190
      %v5247 = vsel %vm5229, %v5184, %v5192
      %v5248 = vsel %vm5229, %v5186, %v5194
      %v5249 = vsel %vm5229, %v5188, %v5196
      %v5250 = vsel %vm5229, %v5174, %v5182
      %v5251 = vsel %vm5229, %v5176, %v5184
      %v5252 = vsel %vm5229, %v5178, %v5186
      %v5253 = vsel %vm5229, %v5180, %v5188
      %v5254 = vsel %vm5229, %v5166, %v5174
      %v5255 = vsel %vm5229, %v5168, %v5176
      %v5256 = vsel %vm5229, %v5170, %v5178
      %v5257 = vsel %vm5229, %v5172, %v5180
      %v5258 = vsel %vm5229, %v5222, %v5166
      %v5259 = vsel %vm5229, %v5224, %v5168
      %v5260 = vsel %vm5229, %v5226, %v5170
      %v5261 = vsel %vm5229, %v5228, %v5172
      %vm5262 = vcmp.lt.s32.totalorder %v756, 30
      %vm5263 = vcmp.lt.s32.totalorder %v757, 30
      %vm5264 = vcmp.lt.s32.totalorder %v758, 30
      %vm5265 = vcmp.lt.s32.totalorder %v759, 30
      %vm5266 = vcmp.lt.s32.totalorder %v760, 30
      %vm5267 = vcmp.lt.s32.totalorder %v761, 30
      %vm5268 = vcmp.lt.s32.totalorder %v762, 30
      %vm5269 = vcmp.lt.s32.totalorder %v763, 30
      %vm5270 = vmand %vm4771, %vm5262
      %vm5271 = vmand %vm4772, %vm5263
      %vm5272 = vmand %vm4773, %vm5264
      %vm5273 = vmand %vm4774, %vm5265
      %vm5274 = vmand %vm4775, %vm5266
      %vm5275 = vmand %vm4776, %vm5267
      %vm5276 = vmand %vm4777, %vm5268
      %vm5277 = vmand %vm4778, %vm5269
      %v5278 = vsel %vm5270, 1, 0
      %v5279 = vsel %vm5271, 1, 0
      %v5280 = vsel %vm5272, 1, 0
      %v5281 = vsel %vm5273, 1, 0
      %v5282 = vsel %vm5274, 1, 0
      %v5283 = vsel %vm5275, 1, 0
      %v5284 = vsel %vm5276, 1, 0
      %v5285 = vsel %vm5277, 1, 0
      %v5286 = vcvt.s32.f32 %v5278
      %v5287 = vcvt.s32.f32 %v5279
      %v5288 = vcvt.s32.f32 %v5280
      %v5289 = vcvt.s32.f32 %v5281
      %v5290 = vcvt.s32.f32 %v5282
      %v5291 = vcvt.s32.f32 %v5283
      %v5292 = vcvt.s32.f32 %v5284
      %v5293 = vcvt.s32.f32 %v5285
      %v5294 = vmul.f32 %v5258, %v5286
      %v5295 = vmul.f32 %v5254, %v5287
      %v5296 = vmul.f32 %v5250, %v5288
      %v5297 = vmul.f32 %v5246, %v5289
      %v5298 = vmul.f32 %v5242, %v5290
      %v5299 = vmul.f32 %v5238, %v5291
      %v5300 = vmul.f32 %v5234, %v5292
      %v5301 = vmul.f32 %v5230, %v5293
      %v5302 = vmul.f32 %v5259, %v5286
      %v5303 = vmul.f32 %v5255, %v5287
      %v5304 = vmul.f32 %v5251, %v5288
      %v5305 = vmul.f32 %v5247, %v5289
      %v5306 = vmul.f32 %v5243, %v5290
      %v5307 = vmul.f32 %v5239, %v5291
      %v5308 = vmul.f32 %v5235, %v5292
      %v5309 = vmul.f32 %v5231, %v5293
      %v5310 = vmul.f32 %v5260, %v5286
      %v5311 = vmul.f32 %v5256, %v5287
      %v5312 = vmul.f32 %v5252, %v5288
      %v5313 = vmul.f32 %v5248, %v5289
      %v5314 = vmul.f32 %v5244, %v5290
      %v5315 = vmul.f32 %v5240, %v5291
      %v5316 = vmul.f32 %v5236, %v5292
      %v5317 = vmul.f32 %v5232, %v5293
      %v5318 = vmul.f32 %v5261, %v5286
      %v5319 = vmul.f32 %v5257, %v5287
      %v5320 = vmul.f32 %v5253, %v5288
      %v5321 = vmul.f32 %v5249, %v5289
      %v5322 = vmul.f32 %v5245, %v5290
      %v5323 = vmul.f32 %v5241, %v5291
      %v5324 = vmul.f32 %v5237, %v5292
      %v5325 = vmul.f32 %v5233, %v5293
      %s5326 = scalar_lea.vmem %s15, 64
      %v5327 = vld [vmem:[%s5326] sm:$0xff]
      %v5328 = vld [vmem:[%s5326 + $0x8] sm:$0xff]
      %v5329 = vld [vmem:[%s5326 + $0x10] sm:$0xff]
      %v5330 = vld [vmem:[%s5326 + $0x18] sm:$0xff]
      %5332 = vset.pattern.permute.xlu0 0
      %5333 = vperm.xlu0 %5332, %v5327
      %v5334 = vpop.permute.xlu0 %5333
      %5337 = vset.pattern.permute.xlu0 0
      %5338 = vperm.xlu0 %5337, %v5328
      %v5339 = vpop.permute.xlu0 %5338
      %5342 = vset.pattern.permute.xlu0 0
      %5343 = vperm.xlu0 %5342, %v5329
      %v5344 = vpop.permute.xlu0 %5343
      %5347 = vset.pattern.permute.xlu0 0
      %5348 = vperm.xlu0 %5347, %v5330
      %v5349 = vpop.permute.xlu0 %5348
      %v5351 = vmul.f32 %v5294, %v5334
      %v5352 = vmul.f32 %v5295, %v5334
      %v5353 = vmul.f32 %v5296, %v5334
      %v5354 = vmul.f32 %v5297, %v5334
      %v5355 = vmul.f32 %v5298, %v5334
      %v5356 = vmul.f32 %v5299, %v5334
      %v5357 = vmul.f32 %v5300, %v5334
      %v5358 = vmul.f32 %v5301, %v5334
      %v5359 = vmul.f32 %v5302, %v5339
      %v5360 = vmul.f32 %v5303, %v5339
      %v5361 = vmul.f32 %v5304, %v5339
      %v5362 = vmul.f32 %v5305, %v5339
      %v5363 = vmul.f32 %v5306, %v5339
      %v5364 = vmul.f32 %v5307, %v5339
      %v5365 = vmul.f32 %v5308, %v5339
      %v5366 = vmul.f32 %v5309, %v5339
      %v5367 = vmul.f32 %v5310, %v5344
      %v5368 = vmul.f32 %v5311, %v5344
      %v5369 = vmul.f32 %v5312, %v5344
      %v5370 = vmul.f32 %v5313, %v5344
      %v5371 = vmul.f32 %v5314, %v5344
      %v5372 = vmul.f32 %v5315, %v5344
      %v5373 = vmul.f32 %v5316, %v5344
      %v5374 = vmul.f32 %v5317, %v5344
      %v5375 = vmul.f32 %v5318, %v5349
      %v5376 = vmul.f32 %v5319, %v5349
      %v5377 = vmul.f32 %v5320, %v5349
      %v5378 = vmul.f32 %v5321, %v5349
      %v5379 = vmul.f32 %v5322, %v5349
      %v5380 = vmul.f32 %v5323, %v5349
      %v5381 = vmul.f32 %v5324, %v5349
      %v5382 = vmul.f32 %v5325, %v5349
      %v5383 = vadd.f32 %v5133, %v5351
      %v5384 = vadd.f32 %v5134, %v5352
      %v5385 = vadd.f32 %v5135, %v5353
      %v5386 = vadd.f32 %v5136, %v5354
      %v5387 = vadd.f32 %v5137, %v5355
      %v5388 = vadd.f32 %v5138, %v5356
      %v5389 = vadd.f32 %v5139, %v5357
      %v5390 = vadd.f32 %v5140, %v5358
      %v5391 = vadd.f32 %v5141, %v5359
      %v5392 = vadd.f32 %v5142, %v5360
      %v5393 = vadd.f32 %v5143, %v5361
      %v5394 = vadd.f32 %v5144, %v5362
      %v5395 = vadd.f32 %v5145, %v5363
      %v5396 = vadd.f32 %v5146, %v5364
      %v5397 = vadd.f32 %v5147, %v5365
      %v5398 = vadd.f32 %v5148, %v5366
      %v5399 = vadd.f32 %v5149, %v5367
      %v5400 = vadd.f32 %v5150, %v5368
      %v5401 = vadd.f32 %v5151, %v5369
      %v5402 = vadd.f32 %v5152, %v5370
      %v5403 = vadd.f32 %v5153, %v5371
      %v5404 = vadd.f32 %v5154, %v5372
      %v5405 = vadd.f32 %v5155, %v5373
      %v5406 = vadd.f32 %v5156, %v5374
      %v5407 = vadd.f32 %v5157, %v5375
      %v5408 = vadd.f32 %v5158, %v5376
      %v5409 = vadd.f32 %v5159, %v5377
      %v5410 = vadd.f32 %v5160, %v5378
      %v5411 = vadd.f32 %v5161, %v5379
      %v5412 = vadd.f32 %v5162, %v5380
      %v5413 = vadd.f32 %v5163, %v5381
      %v5414 = vadd.f32 %v5164, %v5382
      %5415 = vrot.lane.b32.xlu0 %v4642, 2
      %v5416 = vpop.permute.xlu0 %5415
      %5417 = vrot.lane.b32.xlu0 %v4650, 2
      %v5418 = vpop.permute.xlu0 %5417
      %5419 = vrot.lane.b32.xlu0 %v4658, 2
      %v5420 = vpop.permute.xlu0 %5419
      %5421 = vrot.lane.b32.xlu0 %v4666, 2
      %v5422 = vpop.permute.xlu0 %5421
      %5423 = vrot.lane.b32.xlu0 %v4643, 2
      %v5424 = vpop.permute.xlu0 %5423
      %5425 = vrot.lane.b32.xlu0 %v4651, 2
      %v5426 = vpop.permute.xlu0 %5425
      %5427 = vrot.lane.b32.xlu0 %v4659, 2
      %v5428 = vpop.permute.xlu0 %5427
      %5429 = vrot.lane.b32.xlu0 %v4667, 2
      %v5430 = vpop.permute.xlu0 %5429
      %5431 = vrot.lane.b32.xlu0 %v4644, 2
      %v5432 = vpop.permute.xlu0 %5431
      %5433 = vrot.lane.b32.xlu0 %v4652, 2
      %v5434 = vpop.permute.xlu0 %5433
      %5435 = vrot.lane.b32.xlu0 %v4660, 2
      %v5436 = vpop.permute.xlu0 %5435
      %5437 = vrot.lane.b32.xlu0 %v4668, 2
      %v5438 = vpop.permute.xlu0 %5437
      %5439 = vrot.lane.b32.xlu0 %v4645, 2
      %v5440 = vpop.permute.xlu0 %5439
      %5441 = vrot.lane.b32.xlu0 %v4653, 2
      %v5442 = vpop.permute.xlu0 %5441
      %5443 = vrot.lane.b32.xlu0 %v4661, 2
      %v5444 = vpop.permute.xlu0 %5443
      %5445 = vrot.lane.b32.xlu0 %v4669, 2
      %v5446 = vpop.permute.xlu0 %5445
      %5447 = vrot.lane.b32.xlu0 %v4646, 2
      %v5448 = vpop.permute.xlu0 %5447
      %5449 = vrot.lane.b32.xlu0 %v4654, 2
      %v5450 = vpop.permute.xlu0 %5449
      %5451 = vrot.lane.b32.xlu0 %v4662, 2
      %v5452 = vpop.permute.xlu0 %5451
      %5453 = vrot.lane.b32.xlu0 %v4670, 2
      %v5454 = vpop.permute.xlu0 %5453
      %5455 = vrot.lane.b32.xlu0 %v4647, 2
      %v5456 = vpop.permute.xlu0 %5455
      %5457 = vrot.lane.b32.xlu0 %v4655, 2
      %v5458 = vpop.permute.xlu0 %5457
      %5459 = vrot.lane.b32.xlu0 %v4663, 2
      %v5460 = vpop.permute.xlu0 %5459
      %5461 = vrot.lane.b32.xlu0 %v4671, 2
      %v5462 = vpop.permute.xlu0 %5461
      %5463 = vrot.lane.b32.xlu0 %v4648, 2
      %v5464 = vpop.permute.xlu0 %5463
      %5465 = vrot.lane.b32.xlu0 %v4656, 2
      %v5466 = vpop.permute.xlu0 %5465
      %5467 = vrot.lane.b32.xlu0 %v4664, 2
      %v5468 = vpop.permute.xlu0 %5467
      %5469 = vrot.lane.b32.xlu0 %v4672, 2
      %v5470 = vpop.permute.xlu0 %5469
      %5471 = vrot.lane.b32.xlu0 %v4649, 2
      %v5472 = vpop.permute.xlu0 %5471
      %5473 = vrot.lane.b32.xlu0 %v4657, 2
      %v5474 = vpop.permute.xlu0 %5473
      %5475 = vrot.lane.b32.xlu0 %v4665, 2
      %v5476 = vpop.permute.xlu0 %5475
      %5477 = vrot.lane.b32.xlu0 %v4673, 2
      %v5478 = vpop.permute.xlu0 %5477
      %vm5479 = vcmp.lt.s32.totalorder %v740, 2
      %v5480 = vsel %vm5479, %v5464, %v5472
      %v5481 = vsel %vm5479, %v5466, %v5474
      %v5482 = vsel %vm5479, %v5468, %v5476
      %v5483 = vsel %vm5479, %v5470, %v5478
      %v5484 = vsel %vm5479, %v5456, %v5464
      %v5485 = vsel %vm5479, %v5458, %v5466
      %v5486 = vsel %vm5479, %v5460, %v5468
      %v5487 = vsel %vm5479, %v5462, %v5470
      %v5488 = vsel %vm5479, %v5448, %v5456
      %v5489 = vsel %vm5479, %v5450, %v5458
      %v5490 = vsel %vm5479, %v5452, %v5460
      %v5491 = vsel %vm5479, %v5454, %v5462
      %v5492 = vsel %vm5479, %v5440, %v5448
      %v5493 = vsel %vm5479, %v5442, %v5450
      %v5494 = vsel %vm5479, %v5444, %v5452
      %v5495 = vsel %vm5479, %v5446, %v5454
      %v5496 = vsel %vm5479, %v5432, %v5440
      %v5497 = vsel %vm5479, %v5434, %v5442
      %v5498 = vsel %vm5479, %v5436, %v5444
      %v5499 = vsel %vm5479, %v5438, %v5446
      %v5500 = vsel %vm5479, %v5424, %v5432
      %v5501 = vsel %vm5479, %v5426, %v5434
      %v5502 = vsel %vm5479, %v5428, %v5436
      %v5503 = vsel %vm5479, %v5430, %v5438
      %v5504 = vsel %vm5479, %v5416, %v5424
      %v5505 = vsel %vm5479, %v5418, %v5426
      %v5506 = vsel %vm5479, %v5420, %v5428
      %v5507 = vsel %vm5479, %v5422, %v5430
      %v5508 = vsel %vm5479, %v5472, %v5416
      %v5509 = vsel %vm5479, %v5474, %v5418
      %v5510 = vsel %vm5479, %v5476, %v5420
      %v5511 = vsel %vm5479, %v5478, %v5422
      %v5512 = vsel %vm4779, 1, 0
      %v5513 = vsel %vm4780, 1, 0
      %v5514 = vsel %vm4781, 1, 0
      %v5515 = vsel %vm4782, 1, 0
      %v5516 = vsel %vm4783, 1, 0
      %v5517 = vsel %vm4784, 1, 0
      %v5518 = vsel %vm4785, 1, 0
      %v5519 = vsel %vm4786, 1, 0
      %v5520 = vcvt.s32.f32 %v5512
      %v5521 = vcvt.s32.f32 %v5513
      %v5522 = vcvt.s32.f32 %v5514
      %v5523 = vcvt.s32.f32 %v5515
      %v5524 = vcvt.s32.f32 %v5516
      %v5525 = vcvt.s32.f32 %v5517
      %v5526 = vcvt.s32.f32 %v5518
      %v5527 = vcvt.s32.f32 %v5519
      %v5528 = vmul.f32 %v5508, %v5520
      %v5529 = vmul.f32 %v5504, %v5521
      %v5530 = vmul.f32 %v5500, %v5522
      %v5531 = vmul.f32 %v5496, %v5523
      %v5532 = vmul.f32 %v5492, %v5524
      %v5533 = vmul.f32 %v5488, %v5525
      %v5534 = vmul.f32 %v5484, %v5526
      %v5535 = vmul.f32 %v5480, %v5527
      %v5536 = vmul.f32 %v5509, %v5520
      %v5537 = vmul.f32 %v5505, %v5521
      %v5538 = vmul.f32 %v5501, %v5522
      %v5539 = vmul.f32 %v5497, %v5523
      %v5540 = vmul.f32 %v5493, %v5524
      %v5541 = vmul.f32 %v5489, %v5525
      %v5542 = vmul.f32 %v5485, %v5526
      %v5543 = vmul.f32 %v5481, %v5527
      %v5544 = vmul.f32 %v5510, %v5520
      %v5545 = vmul.f32 %v5506, %v5521
      %v5546 = vmul.f32 %v5502, %v5522
      %v5547 = vmul.f32 %v5498, %v5523
      %v5548 = vmul.f32 %v5494, %v5524
      %v5549 = vmul.f32 %v5490, %v5525
      %v5550 = vmul.f32 %v5486, %v5526
      %v5551 = vmul.f32 %v5482, %v5527
      %v5552 = vmul.f32 %v5511, %v5520
      %v5553 = vmul.f32 %v5507, %v5521
      %v5554 = vmul.f32 %v5503, %v5522
      %v5555 = vmul.f32 %v5499, %v5523
      %v5556 = vmul.f32 %v5495, %v5524
      %v5557 = vmul.f32 %v5491, %v5525
      %v5558 = vmul.f32 %v5487, %v5526
      %v5559 = vmul.f32 %v5483, %v5527
      %s5560 = scalar_lea.vmem %s15, 96
      %v5561 = vld [vmem:[%s5560] sm:$0xff]
      %v5562 = vld [vmem:[%s5560 + $0x8] sm:$0xff]
      %v5563 = vld [vmem:[%s5560 + $0x10] sm:$0xff]
      %v5564 = vld [vmem:[%s5560 + $0x18] sm:$0xff]
      %5566 = vset.pattern.permute.xlu0 0
      %5567 = vperm.xlu0 %5566, %v5561
      %v5568 = vpop.permute.xlu0 %5567
      %5571 = vset.pattern.permute.xlu0 0
      %5572 = vperm.xlu0 %5571, %v5562
      %v5573 = vpop.permute.xlu0 %5572
      %5576 = vset.pattern.permute.xlu0 0
      %5577 = vperm.xlu0 %5576, %v5563
      %v5578 = vpop.permute.xlu0 %5577
      %5581 = vset.pattern.permute.xlu0 0
      %5582 = vperm.xlu0 %5581, %v5564
      %v5583 = vpop.permute.xlu0 %5582
      %v5585 = vmul.f32 %v5528, %v5568
      %v5586 = vmul.f32 %v5529, %v5568
      %v5587 = vmul.f32 %v5530, %v5568
      %v5588 = vmul.f32 %v5531, %v5568
      %v5589 = vmul.f32 %v5532, %v5568
      %v5590 = vmul.f32 %v5533, %v5568
      %v5591 = vmul.f32 %v5534, %v5568
      %v5592 = vmul.f32 %v5535, %v5568
      %v5593 = vmul.f32 %v5536, %v5573
      %v5594 = vmul.f32 %v5537, %v5573
      %v5595 = vmul.f32 %v5538, %v5573
      %v5596 = vmul.f32 %v5539, %v5573
      %v5597 = vmul.f32 %v5540, %v5573
      %v5598 = vmul.f32 %v5541, %v5573
      %v5599 = vmul.f32 %v5542, %v5573
      %v5600 = vmul.f32 %v5543, %v5573
      %v5601 = vmul.f32 %v5544, %v5578
      %v5602 = vmul.f32 %v5545, %v5578
      %v5603 = vmul.f32 %v5546, %v5578
      %v5604 = vmul.f32 %v5547, %v5578
      %v5605 = vmul.f32 %v5548, %v5578
      %v5606 = vmul.f32 %v5549, %v5578
      %v5607 = vmul.f32 %v5550, %v5578
      %v5608 = vmul.f32 %v5551, %v5578
      %v5609 = vmul.f32 %v5552, %v5583
      %v5610 = vmul.f32 %v5553, %v5583
      %v5611 = vmul.f32 %v5554, %v5583
      %v5612 = vmul.f32 %v5555, %v5583
      %v5613 = vmul.f32 %v5556, %v5583
      %v5614 = vmul.f32 %v5557, %v5583
      %v5615 = vmul.f32 %v5558, %v5583
      %v5616 = vmul.f32 %v5559, %v5583
      %v5617 = vadd.f32 %v5383, %v5585
      %v5618 = vadd.f32 %v5384, %v5586
      %v5619 = vadd.f32 %v5385, %v5587
      %v5620 = vadd.f32 %v5386, %v5588
      %v5621 = vadd.f32 %v5387, %v5589
      %v5622 = vadd.f32 %v5388, %v5590
      %v5623 = vadd.f32 %v5389, %v5591
      %v5624 = vadd.f32 %v5390, %v5592
      %v5625 = vadd.f32 %v5391, %v5593
      %v5626 = vadd.f32 %v5392, %v5594
      %v5627 = vadd.f32 %v5393, %v5595
      %v5628 = vadd.f32 %v5394, %v5596
      %v5629 = vadd.f32 %v5395, %v5597
      %v5630 = vadd.f32 %v5396, %v5598
      %v5631 = vadd.f32 %v5397, %v5599
      %v5632 = vadd.f32 %v5398, %v5600
      %v5633 = vadd.f32 %v5399, %v5601
      %v5634 = vadd.f32 %v5400, %v5602
      %v5635 = vadd.f32 %v5401, %v5603
      %v5636 = vadd.f32 %v5402, %v5604
      %v5637 = vadd.f32 %v5403, %v5605
      %v5638 = vadd.f32 %v5404, %v5606
      %v5639 = vadd.f32 %v5405, %v5607
      %v5640 = vadd.f32 %v5406, %v5608
      %v5641 = vadd.f32 %v5407, %v5609
      %v5642 = vadd.f32 %v5408, %v5610
      %v5643 = vadd.f32 %v5409, %v5611
      %v5644 = vadd.f32 %v5410, %v5612
      %v5645 = vadd.f32 %v5411, %v5613
      %v5646 = vadd.f32 %v5412, %v5614
      %v5647 = vadd.f32 %v5413, %v5615
      %v5648 = vadd.f32 %v5414, %v5616
      %s5649 = scalar_lea.vmem %s15, 128
      %v5650 = vld [vmem:[%s5649] sm:$0xff]
      %v5651 = vld [vmem:[%s5649 + $0x8] sm:$0xff]
      %v5652 = vld [vmem:[%s5649 + $0x10] sm:$0xff]
      %v5653 = vld [vmem:[%s5649 + $0x18] sm:$0xff]
      %5655 = vset.pattern.permute.xlu0 0
      %5656 = vperm.xlu0 %5655, %v5650
      %v5657 = vpop.permute.xlu0 %5656
      %5660 = vset.pattern.permute.xlu0 0
      %5661 = vperm.xlu0 %5660, %v5651
      %v5662 = vpop.permute.xlu0 %5661
      %5665 = vset.pattern.permute.xlu0 0
      %5666 = vperm.xlu0 %5665, %v5652
      %v5667 = vpop.permute.xlu0 %5666
      %5670 = vset.pattern.permute.xlu0 0
      %5671 = vperm.xlu0 %5670, %v5653
      %v5672 = vpop.permute.xlu0 %5671
      %v5674 = vmul.f32 %v4642, %v5657
      %v5675 = vmul.f32 %v4643, %v5657
      %v5676 = vmul.f32 %v4644, %v5657
      %v5677 = vmul.f32 %v4645, %v5657
      %v5678 = vmul.f32 %v4646, %v5657
      %v5679 = vmul.f32 %v4647, %v5657
      %v5680 = vmul.f32 %v4648, %v5657
      %v5681 = vmul.f32 %v4649, %v5657
      %v5682 = vmul.f32 %v4650, %v5662
      %v5683 = vmul.f32 %v4651, %v5662
      %v5684 = vmul.f32 %v4652, %v5662
      %v5685 = vmul.f32 %v4653, %v5662
      %v5686 = vmul.f32 %v4654, %v5662
      %v5687 = vmul.f32 %v4655, %v5662
      %v5688 = vmul.f32 %v4656, %v5662
      %v5689 = vmul.f32 %v4657, %v5662
      %v5690 = vmul.f32 %v4658, %v5667
      %v5691 = vmul.f32 %v4659, %v5667
      %v5692 = vmul.f32 %v4660, %v5667
      %v5693 = vmul.f32 %v4661, %v5667
      %v5694 = vmul.f32 %v4662, %v5667
      %v5695 = vmul.f32 %v4663, %v5667
      %v5696 = vmul.f32 %v4664, %v5667
      %v5697 = vmul.f32 %v4665, %v5667
      %v5698 = vmul.f32 %v4666, %v5672
      %v5699 = vmul.f32 %v4667, %v5672
      %v5700 = vmul.f32 %v4668, %v5672
      %v5701 = vmul.f32 %v4669, %v5672
      %v5702 = vmul.f32 %v4670, %v5672
      %v5703 = vmul.f32 %v4671, %v5672
      %v5704 = vmul.f32 %v4672, %v5672
      %v5705 = vmul.f32 %v4673, %v5672
      %v5706 = vadd.f32 %v5617, %v5674
      %v5707 = vadd.f32 %v5618, %v5675
      %v5708 = vadd.f32 %v5619, %v5676
      %v5709 = vadd.f32 %v5620, %v5677
      %v5710 = vadd.f32 %v5621, %v5678
      %v5711 = vadd.f32 %v5622, %v5679
      %v5712 = vadd.f32 %v5623, %v5680
      %v5713 = vadd.f32 %v5624, %v5681
      %v5714 = vadd.f32 %v5625, %v5682
      %v5715 = vadd.f32 %v5626, %v5683
      %v5716 = vadd.f32 %v5627, %v5684
      %v5717 = vadd.f32 %v5628, %v5685
      %v5718 = vadd.f32 %v5629, %v5686
      %v5719 = vadd.f32 %v5630, %v5687
      %v5720 = vadd.f32 %v5631, %v5688
      %v5721 = vadd.f32 %v5632, %v5689
      %v5722 = vadd.f32 %v5633, %v5690
      %v5723 = vadd.f32 %v5634, %v5691
      %v5724 = vadd.f32 %v5635, %v5692
      %v5725 = vadd.f32 %v5636, %v5693
      %v5726 = vadd.f32 %v5637, %v5694
      %v5727 = vadd.f32 %v5638, %v5695
      %v5728 = vadd.f32 %v5639, %v5696
      %v5729 = vadd.f32 %v5640, %v5697
      %v5730 = vadd.f32 %v5641, %v5698
      %v5731 = vadd.f32 %v5642, %v5699
      %v5732 = vadd.f32 %v5643, %v5700
      %v5733 = vadd.f32 %v5644, %v5701
      %v5734 = vadd.f32 %v5645, %v5702
      %v5735 = vadd.f32 %v5646, %v5703
      %v5736 = vadd.f32 %v5647, %v5704
      %v5737 = vadd.f32 %v5648, %v5705
      %5738 = vrot.lane.b32.xlu0 %v4642, 126
      %v5739 = vpop.permute.xlu0 %5738
      %5740 = vrot.lane.b32.xlu0 %v4650, 126
      %v5741 = vpop.permute.xlu0 %5740
      %5742 = vrot.lane.b32.xlu0 %v4658, 126
      %v5743 = vpop.permute.xlu0 %5742
      %5744 = vrot.lane.b32.xlu0 %v4666, 126
      %v5745 = vpop.permute.xlu0 %5744
      %5746 = vrot.lane.b32.xlu0 %v4643, 126
      %v5747 = vpop.permute.xlu0 %5746
      %5748 = vrot.lane.b32.xlu0 %v4651, 126
      %v5749 = vpop.permute.xlu0 %5748
      %5750 = vrot.lane.b32.xlu0 %v4659, 126
      %v5751 = vpop.permute.xlu0 %5750
      %5752 = vrot.lane.b32.xlu0 %v4667, 126
      %v5753 = vpop.permute.xlu0 %5752
      %5754 = vrot.lane.b32.xlu0 %v4644, 126
      %v5755 = vpop.permute.xlu0 %5754
      %5756 = vrot.lane.b32.xlu0 %v4652, 126
      %v5757 = vpop.permute.xlu0 %5756
      %5758 = vrot.lane.b32.xlu0 %v4660, 126
      %v5759 = vpop.permute.xlu0 %5758
      %5760 = vrot.lane.b32.xlu0 %v4668, 126
      %v5761 = vpop.permute.xlu0 %5760
      %5762 = vrot.lane.b32.xlu0 %v4645, 126
      %v5763 = vpop.permute.xlu0 %5762
      %5764 = vrot.lane.b32.xlu0 %v4653, 126
      %v5765 = vpop.permute.xlu0 %5764
      %5766 = vrot.lane.b32.xlu0 %v4661, 126
      %v5767 = vpop.permute.xlu0 %5766
      %5768 = vrot.lane.b32.xlu0 %v4669, 126
      %v5769 = vpop.permute.xlu0 %5768
      %5770 = vrot.lane.b32.xlu0 %v4646, 126
      %v5771 = vpop.permute.xlu0 %5770
      %5772 = vrot.lane.b32.xlu0 %v4654, 126
      %v5773 = vpop.permute.xlu0 %5772
      %5774 = vrot.lane.b32.xlu0 %v4662, 126
      %v5775 = vpop.permute.xlu0 %5774
      %5776 = vrot.lane.b32.xlu0 %v4670, 126
      %v5777 = vpop.permute.xlu0 %5776
      %5778 = vrot.lane.b32.xlu0 %v4647, 126
      %v5779 = vpop.permute.xlu0 %5778
      %5780 = vrot.lane.b32.xlu0 %v4655, 126
      %v5781 = vpop.permute.xlu0 %5780
      %5782 = vrot.lane.b32.xlu0 %v4663, 126
      %v5783 = vpop.permute.xlu0 %5782
      %5784 = vrot.lane.b32.xlu0 %v4671, 126
      %v5785 = vpop.permute.xlu0 %5784
      %5786 = vrot.lane.b32.xlu0 %v4648, 126
      %v5787 = vpop.permute.xlu0 %5786
      %5788 = vrot.lane.b32.xlu0 %v4656, 126
      %v5789 = vpop.permute.xlu0 %5788
      %5790 = vrot.lane.b32.xlu0 %v4664, 126
      %v5791 = vpop.permute.xlu0 %5790
      %5792 = vrot.lane.b32.xlu0 %v4672, 126
      %v5793 = vpop.permute.xlu0 %5792
      %5794 = vrot.lane.b32.xlu0 %v4649, 126
      %v5795 = vpop.permute.xlu0 %5794
      %5796 = vrot.lane.b32.xlu0 %v4657, 126
      %v5797 = vpop.permute.xlu0 %5796
      %5798 = vrot.lane.b32.xlu0 %v4665, 126
      %v5799 = vpop.permute.xlu0 %5798
      %5800 = vrot.lane.b32.xlu0 %v4673, 126
      %v5801 = vpop.permute.xlu0 %5800
      %vm5802 = vcmp.lt.s32.totalorder %v740, 126
      %v5803 = vsel %vm5802, %v5787, %v5795
      %v5804 = vsel %vm5802, %v5789, %v5797
      %v5805 = vsel %vm5802, %v5791, %v5799
      %v5806 = vsel %vm5802, %v5793, %v5801
      %v5807 = vsel %vm5802, %v5779, %v5787
      %v5808 = vsel %vm5802, %v5781, %v5789
      %v5809 = vsel %vm5802, %v5783, %v5791
      %v5810 = vsel %vm5802, %v5785, %v5793
      %v5811 = vsel %vm5802, %v5771, %v5779
      %v5812 = vsel %vm5802, %v5773, %v5781
      %v5813 = vsel %vm5802, %v5775, %v5783
      %v5814 = vsel %vm5802, %v5777, %v5785
      %v5815 = vsel %vm5802, %v5763, %v5771
      %v5816 = vsel %vm5802, %v5765, %v5773
      %v5817 = vsel %vm5802, %v5767, %v5775
      %v5818 = vsel %vm5802, %v5769, %v5777
      %v5819 = vsel %vm5802, %v5755, %v5763
      %v5820 = vsel %vm5802, %v5757, %v5765
      %v5821 = vsel %vm5802, %v5759, %v5767
      %v5822 = vsel %vm5802, %v5761, %v5769
      %v5823 = vsel %vm5802, %v5747, %v5755
      %v5824 = vsel %vm5802, %v5749, %v5757
      %v5825 = vsel %vm5802, %v5751, %v5759
      %v5826 = vsel %vm5802, %v5753, %v5761
      %v5827 = vsel %vm5802, %v5739, %v5747
      %v5828 = vsel %vm5802, %v5741, %v5749
      %v5829 = vsel %vm5802, %v5743, %v5751
      %v5830 = vsel %vm5802, %v5745, %v5753
      %v5831 = vsel %vm5802, %v5795, %v5739
      %v5832 = vsel %vm5802, %v5797, %v5741
      %v5833 = vsel %vm5802, %v5799, %v5743
      %v5834 = vsel %vm5802, %v5801, %v5745
      %v5835 = vsel %vm5262, 1, 0
      %v5836 = vsel %vm5263, 1, 0
      %v5837 = vsel %vm5264, 1, 0
      %v5838 = vsel %vm5265, 1, 0
      %v5839 = vsel %vm5266, 1, 0
      %v5840 = vsel %vm5267, 1, 0
      %v5841 = vsel %vm5268, 1, 0
      %v5842 = vsel %vm5269, 1, 0
      %v5843 = vcvt.s32.f32 %v5835
      %v5844 = vcvt.s32.f32 %v5836
      %v5845 = vcvt.s32.f32 %v5837
      %v5846 = vcvt.s32.f32 %v5838
      %v5847 = vcvt.s32.f32 %v5839
      %v5848 = vcvt.s32.f32 %v5840
      %v5849 = vcvt.s32.f32 %v5841
      %v5850 = vcvt.s32.f32 %v5842
      %v5851 = vmul.f32 %v5827, %v5843
      %v5852 = vmul.f32 %v5823, %v5844
      %v5853 = vmul.f32 %v5819, %v5845
      %v5854 = vmul.f32 %v5815, %v5846
      %v5855 = vmul.f32 %v5811, %v5847
      %v5856 = vmul.f32 %v5807, %v5848
      %v5857 = vmul.f32 %v5803, %v5849
      %v5858 = vmul.f32 %v5831, %v5850
      %v5859 = vmul.f32 %v5828, %v5843
      %v5860 = vmul.f32 %v5824, %v5844
      %v5861 = vmul.f32 %v5820, %v5845
      %v5862 = vmul.f32 %v5816, %v5846
      %v5863 = vmul.f32 %v5812, %v5847
      %v5864 = vmul.f32 %v5808, %v5848
      %v5865 = vmul.f32 %v5804, %v5849
      %v5866 = vmul.f32 %v5832, %v5850
      %v5867 = vmul.f32 %v5829, %v5843
      %v5868 = vmul.f32 %v5825, %v5844
      %v5869 = vmul.f32 %v5821, %v5845
      %v5870 = vmul.f32 %v5817, %v5846
      %v5871 = vmul.f32 %v5813, %v5847
      %v5872 = vmul.f32 %v5809, %v5848
      %v5873 = vmul.f32 %v5805, %v5849
      %v5874 = vmul.f32 %v5833, %v5850
      %v5875 = vmul.f32 %v5830, %v5843
      %v5876 = vmul.f32 %v5826, %v5844
      %v5877 = vmul.f32 %v5822, %v5845
      %v5878 = vmul.f32 %v5818, %v5846
      %v5879 = vmul.f32 %v5814, %v5847
      %v5880 = vmul.f32 %v5810, %v5848
      %v5881 = vmul.f32 %v5806, %v5849
      %v5882 = vmul.f32 %v5834, %v5850
      %s5883 = scalar_lea.vmem %s15, 160
      %v5884 = vld [vmem:[%s5883] sm:$0xff]
      %v5885 = vld [vmem:[%s5883 + $0x8] sm:$0xff]
      %v5886 = vld [vmem:[%s5883 + $0x10] sm:$0xff]
      %v5887 = vld [vmem:[%s5883 + $0x18] sm:$0xff]
      %5889 = vset.pattern.permute.xlu0 0
      %5890 = vperm.xlu0 %5889, %v5884
      %v5891 = vpop.permute.xlu0 %5890
      %5894 = vset.pattern.permute.xlu0 0
      %5895 = vperm.xlu0 %5894, %v5885
      %v5896 = vpop.permute.xlu0 %5895
      %5899 = vset.pattern.permute.xlu0 0
      %5900 = vperm.xlu0 %5899, %v5886
      %v5901 = vpop.permute.xlu0 %5900
      %5904 = vset.pattern.permute.xlu0 0
      %5905 = vperm.xlu0 %5904, %v5887
      %v5906 = vpop.permute.xlu0 %5905
      %v5908 = vmul.f32 %v5851, %v5891
      %v5909 = vmul.f32 %v5852, %v5891
      %v5910 = vmul.f32 %v5853, %v5891
      %v5911 = vmul.f32 %v5854, %v5891
      %v5912 = vmul.f32 %v5855, %v5891
      %v5913 = vmul.f32 %v5856, %v5891
      %v5914 = vmul.f32 %v5857, %v5891
      %v5915 = vmul.f32 %v5858, %v5891
      %v5916 = vmul.f32 %v5859, %v5896
      %v5917 = vmul.f32 %v5860, %v5896
      %v5918 = vmul.f32 %v5861, %v5896
      %v5919 = vmul.f32 %v5862, %v5896
      %v5920 = vmul.f32 %v5863, %v5896
      %v5921 = vmul.f32 %v5864, %v5896
      %v5922 = vmul.f32 %v5865, %v5896
      %v5923 = vmul.f32 %v5866, %v5896
      %v5924 = vmul.f32 %v5867, %v5901
      %v5925 = vmul.f32 %v5868, %v5901
      %v5926 = vmul.f32 %v5869, %v5901
      %v5927 = vmul.f32 %v5870, %v5901
      %v5928 = vmul.f32 %v5871, %v5901
      %v5929 = vmul.f32 %v5872, %v5901
      %v5930 = vmul.f32 %v5873, %v5901
      %v5931 = vmul.f32 %v5874, %v5901
      %v5932 = vmul.f32 %v5875, %v5906
      %v5933 = vmul.f32 %v5876, %v5906
      %v5934 = vmul.f32 %v5877, %v5906
      %v5935 = vmul.f32 %v5878, %v5906
      %v5936 = vmul.f32 %v5879, %v5906
      %v5937 = vmul.f32 %v5880, %v5906
      %v5938 = vmul.f32 %v5881, %v5906
      %v5939 = vmul.f32 %v5882, %v5906
      %v5940 = vadd.f32 %v5706, %v5908
      %v5941 = vadd.f32 %v5707, %v5909
      %v5942 = vadd.f32 %v5708, %v5910
      %v5943 = vadd.f32 %v5709, %v5911
      %v5944 = vadd.f32 %v5710, %v5912
      %v5945 = vadd.f32 %v5711, %v5913
      %v5946 = vadd.f32 %v5712, %v5914
      %v5947 = vadd.f32 %v5713, %v5915
      %v5948 = vadd.f32 %v5714, %v5916
      %v5949 = vadd.f32 %v5715, %v5917
      %v5950 = vadd.f32 %v5716, %v5918
      %v5951 = vadd.f32 %v5717, %v5919
      %v5952 = vadd.f32 %v5718, %v5920
      %v5953 = vadd.f32 %v5719, %v5921
      %v5954 = vadd.f32 %v5720, %v5922
      %v5955 = vadd.f32 %v5721, %v5923
      %v5956 = vadd.f32 %v5722, %v5924
      %v5957 = vadd.f32 %v5723, %v5925
      %v5958 = vadd.f32 %v5724, %v5926
      %v5959 = vadd.f32 %v5725, %v5927
      %v5960 = vadd.f32 %v5726, %v5928
      %v5961 = vadd.f32 %v5727, %v5929
      %v5962 = vadd.f32 %v5728, %v5930
      %v5963 = vadd.f32 %v5729, %v5931
      %v5964 = vadd.f32 %v5730, %v5932
      %v5965 = vadd.f32 %v5731, %v5933
      %v5966 = vadd.f32 %v5732, %v5934
      %v5967 = vadd.f32 %v5733, %v5935
      %v5968 = vadd.f32 %v5734, %v5936
      %v5969 = vadd.f32 %v5735, %v5937
      %v5970 = vadd.f32 %v5736, %v5938
      %v5971 = vadd.f32 %v5737, %v5939
      %vm5972 = vcmp.lt.s32.totalorder %v748, 30
      %vm5973 = vcmp.lt.s32.totalorder %v749, 30
      %vm5974 = vcmp.lt.s32.totalorder %v750, 30
      %vm5975 = vcmp.lt.s32.totalorder %v751, 30
      %vm5976 = vcmp.lt.s32.totalorder %v752, 30
      %vm5977 = vcmp.lt.s32.totalorder %v753, 30
      %vm5978 = vcmp.lt.s32.totalorder %v754, 30
      %vm5979 = vcmp.lt.s32.totalorder %v755, 30
      %vm5980 = vmand %vm5972, %vm4779
      %vm5981 = vmand %vm5973, %vm4780
      %vm5982 = vmand %vm5974, %vm4781
      %vm5983 = vmand %vm5975, %vm4782
      %vm5984 = vmand %vm5976, %vm4783
      %vm5985 = vmand %vm5977, %vm4784
      %vm5986 = vmand %vm5978, %vm4785
      %vm5987 = vmand %vm5979, %vm4786
      %v5988 = vsel %vm5980, 1, 0
      %v5989 = vsel %vm5981, 1, 0
      %v5990 = vsel %vm5982, 1, 0
      %v5991 = vsel %vm5983, 1, 0
      %v5992 = vsel %vm5984, 1, 0
      %v5993 = vsel %vm5985, 1, 0
      %v5994 = vsel %vm5986, 1, 0
      %v5995 = vsel %vm5987, 1, 0
      %v5996 = vcvt.s32.f32 %v5988
      %v5997 = vcvt.s32.f32 %v5989
      %v5998 = vcvt.s32.f32 %v5990
      %v5999 = vcvt.s32.f32 %v5991
      %v6000 = vcvt.s32.f32 %v5992
      %v6001 = vcvt.s32.f32 %v5993
      %v6002 = vcvt.s32.f32 %v5994
      %v6003 = vcvt.s32.f32 %v5995
      %v6004 = vmul.f32 %v4763, %v5996
      %v6005 = vmul.f32 %v4759, %v5997
      %v6006 = vmul.f32 %v4755, %v5998
      %v6007 = vmul.f32 %v4751, %v5999
      %v6008 = vmul.f32 %v4747, %v6000
      %v6009 = vmul.f32 %v4743, %v6001
      %v6010 = vmul.f32 %v4739, %v6002
      %v6011 = vmul.f32 %v4767, %v6003
      %v6012 = vmul.f32 %v4764, %v5996
      %v6013 = vmul.f32 %v4760, %v5997
      %v6014 = vmul.f32 %v4756, %v5998
      %v6015 = vmul.f32 %v4752, %v5999
      %v6016 = vmul.f32 %v4748, %v6000
      %v6017 = vmul.f32 %v4744, %v6001
      %v6018 = vmul.f32 %v4740, %v6002
      %v6019 = vmul.f32 %v4768, %v6003
      %v6020 = vmul.f32 %v4765, %v5996
      %v6021 = vmul.f32 %v4761, %v5997
      %v6022 = vmul.f32 %v4757, %v5998
      %v6023 = vmul.f32 %v4753, %v5999
      %v6024 = vmul.f32 %v4749, %v6000
      %v6025 = vmul.f32 %v4745, %v6001
      %v6026 = vmul.f32 %v4741, %v6002
      %v6027 = vmul.f32 %v4769, %v6003
      %v6028 = vmul.f32 %v4766, %v5996
      %v6029 = vmul.f32 %v4762, %v5997
      %v6030 = vmul.f32 %v4758, %v5998
      %v6031 = vmul.f32 %v4754, %v5999
      %v6032 = vmul.f32 %v4750, %v6000
      %v6033 = vmul.f32 %v4746, %v6001
      %v6034 = vmul.f32 %v4742, %v6002
      %v6035 = vmul.f32 %v4770, %v6003
      %s6036 = scalar_lea.vmem %s15, 192
      %v6037 = vld [vmem:[%s6036] sm:$0xff]
      %v6038 = vld [vmem:[%s6036 + $0x8] sm:$0xff]
      %v6039 = vld [vmem:[%s6036 + $0x10] sm:$0xff]
      %v6040 = vld [vmem:[%s6036 + $0x18] sm:$0xff]
      %6042 = vset.pattern.permute.xlu0 0
      %6043 = vperm.xlu0 %6042, %v6037
      %v6044 = vpop.permute.xlu0 %6043
      %6047 = vset.pattern.permute.xlu0 0
      %6048 = vperm.xlu0 %6047, %v6038
      %v6049 = vpop.permute.xlu0 %6048
      %6052 = vset.pattern.permute.xlu0 0
      %6053 = vperm.xlu0 %6052, %v6039
      %v6054 = vpop.permute.xlu0 %6053
      %6057 = vset.pattern.permute.xlu0 0
      %6058 = vperm.xlu0 %6057, %v6040
      %v6059 = vpop.permute.xlu0 %6058
      %v6061 = vmul.f32 %v6004, %v6044
      %v6062 = vmul.f32 %v6005, %v6044
      %v6063 = vmul.f32 %v6006, %v6044
      %v6064 = vmul.f32 %v6007, %v6044
      %v6065 = vmul.f32 %v6008, %v6044
      %v6066 = vmul.f32 %v6009, %v6044
      %v6067 = vmul.f32 %v6010, %v6044
      %v6068 = vmul.f32 %v6011, %v6044
      %v6069 = vmul.f32 %v6012, %v6049
      %v6070 = vmul.f32 %v6013, %v6049
      %v6071 = vmul.f32 %v6014, %v6049
      %v6072 = vmul.f32 %v6015, %v6049
      %v6073 = vmul.f32 %v6016, %v6049
      %v6074 = vmul.f32 %v6017, %v6049
      %v6075 = vmul.f32 %v6018, %v6049
      %v6076 = vmul.f32 %v6019, %v6049
      %v6077 = vmul.f32 %v6020, %v6054
      %v6078 = vmul.f32 %v6021, %v6054
      %v6079 = vmul.f32 %v6022, %v6054
      %v6080 = vmul.f32 %v6023, %v6054
      %v6081 = vmul.f32 %v6024, %v6054
      %v6082 = vmul.f32 %v6025, %v6054
      %v6083 = vmul.f32 %v6026, %v6054
      %v6084 = vmul.f32 %v6027, %v6054
      %v6085 = vmul.f32 %v6028, %v6059
      %v6086 = vmul.f32 %v6029, %v6059
      %v6087 = vmul.f32 %v6030, %v6059
      %v6088 = vmul.f32 %v6031, %v6059
      %v6089 = vmul.f32 %v6032, %v6059
      %v6090 = vmul.f32 %v6033, %v6059
      %v6091 = vmul.f32 %v6034, %v6059
      %v6092 = vmul.f32 %v6035, %v6059
      %v6093 = vadd.f32 %v5940, %v6061
      %v6094 = vadd.f32 %v5941, %v6062
      %v6095 = vadd.f32 %v5942, %v6063
      %v6096 = vadd.f32 %v5943, %v6064
      %v6097 = vadd.f32 %v5944, %v6065
      %v6098 = vadd.f32 %v5945, %v6066
      %v6099 = vadd.f32 %v5946, %v6067
      %v6100 = vadd.f32 %v5947, %v6068
      %v6101 = vadd.f32 %v5948, %v6069
      %v6102 = vadd.f32 %v5949, %v6070
      %v6103 = vadd.f32 %v5950, %v6071
      %v6104 = vadd.f32 %v5951, %v6072
      %v6105 = vadd.f32 %v5952, %v6073
      %v6106 = vadd.f32 %v5953, %v6074
      %v6107 = vadd.f32 %v5954, %v6075
      %v6108 = vadd.f32 %v5955, %v6076
      %v6109 = vadd.f32 %v5956, %v6077
      %v6110 = vadd.f32 %v5957, %v6078
      %v6111 = vadd.f32 %v5958, %v6079
      %v6112 = vadd.f32 %v5959, %v6080
      %v6113 = vadd.f32 %v5960, %v6081
      %v6114 = vadd.f32 %v5961, %v6082
      %v6115 = vadd.f32 %v5962, %v6083
      %v6116 = vadd.f32 %v5963, %v6084
      %v6117 = vadd.f32 %v5964, %v6085
      %v6118 = vadd.f32 %v5965, %v6086
      %v6119 = vadd.f32 %v5966, %v6087
      %v6120 = vadd.f32 %v5967, %v6088
      %v6121 = vadd.f32 %v5968, %v6089
      %v6122 = vadd.f32 %v5969, %v6090
      %v6123 = vadd.f32 %v5970, %v6091
      %v6124 = vadd.f32 %v5971, %v6092
      %v6125 = vsel %vm5972, 1, 0
      %v6126 = vsel %vm5973, 1, 0
      %v6127 = vsel %vm5974, 1, 0
      %v6128 = vsel %vm5975, 1, 0
      %v6129 = vsel %vm5976, 1, 0
      %v6130 = vsel %vm5977, 1, 0
      %v6131 = vsel %vm5978, 1, 0
      %v6132 = vsel %vm5979, 1, 0
      %v6133 = vcvt.s32.f32 %v6125
      %v6134 = vcvt.s32.f32 %v6126
      %v6135 = vcvt.s32.f32 %v6127
      %v6136 = vcvt.s32.f32 %v6128
      %v6137 = vcvt.s32.f32 %v6129
      %v6138 = vcvt.s32.f32 %v6130
      %v6139 = vcvt.s32.f32 %v6131
      %v6140 = vcvt.s32.f32 %v6132
      %v6141 = vmul.f32 %v5020, %v6133
      %v6142 = vmul.f32 %v5016, %v6134
      %v6143 = vmul.f32 %v5012, %v6135
      %v6144 = vmul.f32 %v5008, %v6136
      %v6145 = vmul.f32 %v5004, %v6137
      %v6146 = vmul.f32 %v5000, %v6138
      %v6147 = vmul.f32 %v4996, %v6139
      %v6148 = vmul.f32 %v5024, %v6140
      %v6149 = vmul.f32 %v5021, %v6133
      %v6150 = vmul.f32 %v5017, %v6134
      %v6151 = vmul.f32 %v5013, %v6135
      %v6152 = vmul.f32 %v5009, %v6136
      %v6153 = vmul.f32 %v5005, %v6137
      %v6154 = vmul.f32 %v5001, %v6138
      %v6155 = vmul.f32 %v4997, %v6139
      %v6156 = vmul.f32 %v5025, %v6140
      %v6157 = vmul.f32 %v5022, %v6133
      %v6158 = vmul.f32 %v5018, %v6134
      %v6159 = vmul.f32 %v5014, %v6135
      %v6160 = vmul.f32 %v5010, %v6136
      %v6161 = vmul.f32 %v5006, %v6137
      %v6162 = vmul.f32 %v5002, %v6138
      %v6163 = vmul.f32 %v4998, %v6139
      %v6164 = vmul.f32 %v5026, %v6140
      %v6165 = vmul.f32 %v5023, %v6133
      %v6166 = vmul.f32 %v5019, %v6134
      %v6167 = vmul.f32 %v5015, %v6135
      %v6168 = vmul.f32 %v5011, %v6136
      %v6169 = vmul.f32 %v5007, %v6137
      %v6170 = vmul.f32 %v5003, %v6138
      %v6171 = vmul.f32 %v4999, %v6139
      %v6172 = vmul.f32 %v5027, %v6140
      %s6173 = scalar_lea.vmem %s15, 224
      %v6174 = vld [vmem:[%s6173] sm:$0xff]
      %v6175 = vld [vmem:[%s6173 + $0x8] sm:$0xff]
      %v6176 = vld [vmem:[%s6173 + $0x10] sm:$0xff]
      %v6177 = vld [vmem:[%s6173 + $0x18] sm:$0xff]
      %6179 = vset.pattern.permute.xlu0 0
      %6180 = vperm.xlu0 %6179, %v6174
      %v6181 = vpop.permute.xlu0 %6180
      %6184 = vset.pattern.permute.xlu0 0
      %6185 = vperm.xlu0 %6184, %v6175
      %v6186 = vpop.permute.xlu0 %6185
      %6189 = vset.pattern.permute.xlu0 0
      %6190 = vperm.xlu0 %6189, %v6176
      %v6191 = vpop.permute.xlu0 %6190
      %6194 = vset.pattern.permute.xlu0 0
      %6195 = vperm.xlu0 %6194, %v6177
      %v6196 = vpop.permute.xlu0 %6195
      %v6198 = vmul.f32 %v6141, %v6181
      %v6199 = vmul.f32 %v6142, %v6181
      %v6200 = vmul.f32 %v6143, %v6181
      %v6201 = vmul.f32 %v6144, %v6181
      %v6202 = vmul.f32 %v6145, %v6181
      %v6203 = vmul.f32 %v6146, %v6181
      %v6204 = vmul.f32 %v6147, %v6181
      %v6205 = vmul.f32 %v6148, %v6181
      %v6206 = vmul.f32 %v6149, %v6186
      %v6207 = vmul.f32 %v6150, %v6186
      %v6208 = vmul.f32 %v6151, %v6186
      %v6209 = vmul.f32 %v6152, %v6186
      %v6210 = vmul.f32 %v6153, %v6186
      %v6211 = vmul.f32 %v6154, %v6186
      %v6212 = vmul.f32 %v6155, %v6186
      %v6213 = vmul.f32 %v6156, %v6186
      %v6214 = vmul.f32 %v6157, %v6191
      %v6215 = vmul.f32 %v6158, %v6191
      %v6216 = vmul.f32 %v6159, %v6191
      %v6217 = vmul.f32 %v6160, %v6191
      %v6218 = vmul.f32 %v6161, %v6191
      %v6219 = vmul.f32 %v6162, %v6191
      %v6220 = vmul.f32 %v6163, %v6191
      %v6221 = vmul.f32 %v6164, %v6191
      %v6222 = vmul.f32 %v6165, %v6196
      %v6223 = vmul.f32 %v6166, %v6196
      %v6224 = vmul.f32 %v6167, %v6196
      %v6225 = vmul.f32 %v6168, %v6196
      %v6226 = vmul.f32 %v6169, %v6196
      %v6227 = vmul.f32 %v6170, %v6196
      %v6228 = vmul.f32 %v6171, %v6196
      %v6229 = vmul.f32 %v6172, %v6196
      %v6230 = vadd.f32 %v6093, %v6198
      %v6231 = vadd.f32 %v6094, %v6199
      %v6232 = vadd.f32 %v6095, %v6200
      %v6233 = vadd.f32 %v6096, %v6201
      %v6234 = vadd.f32 %v6097, %v6202
      %v6235 = vadd.f32 %v6098, %v6203
      %v6236 = vadd.f32 %v6099, %v6204
      %v6237 = vadd.f32 %v6100, %v6205
      %v6238 = vadd.f32 %v6101, %v6206
      %v6239 = vadd.f32 %v6102, %v6207
      %v6240 = vadd.f32 %v6103, %v6208
      %v6241 = vadd.f32 %v6104, %v6209
      %v6242 = vadd.f32 %v6105, %v6210
      %v6243 = vadd.f32 %v6106, %v6211
      %v6244 = vadd.f32 %v6107, %v6212
      %v6245 = vadd.f32 %v6108, %v6213
      %v6246 = vadd.f32 %v6109, %v6214
      %v6247 = vadd.f32 %v6110, %v6215
      %v6248 = vadd.f32 %v6111, %v6216
      %v6249 = vadd.f32 %v6112, %v6217
      %v6250 = vadd.f32 %v6113, %v6218
      %v6251 = vadd.f32 %v6114, %v6219
      %v6252 = vadd.f32 %v6115, %v6220
      %v6253 = vadd.f32 %v6116, %v6221
      %v6254 = vadd.f32 %v6117, %v6222
      %v6255 = vadd.f32 %v6118, %v6223
      %v6256 = vadd.f32 %v6119, %v6224
      %v6257 = vadd.f32 %v6120, %v6225
      %v6258 = vadd.f32 %v6121, %v6226
      %v6259 = vadd.f32 %v6122, %v6227
      %v6260 = vadd.f32 %v6123, %v6228
      %v6261 = vadd.f32 %v6124, %v6229
      %vm6262 = vmand %vm5972, %vm5262
      %vm6263 = vmand %vm5973, %vm5263
      %vm6264 = vmand %vm5974, %vm5264
      %vm6265 = vmand %vm5975, %vm5265
      %vm6266 = vmand %vm5976, %vm5266
      %vm6267 = vmand %vm5977, %vm5267
      %vm6268 = vmand %vm5978, %vm5268
      %vm6269 = vmand %vm5979, %vm5269
      %v6270 = vsel %vm6262, 1, 0
      %v6271 = vsel %vm6263, 1, 0
      %v6272 = vsel %vm6264, 1, 0
      %v6273 = vsel %vm6265, 1, 0
      %v6274 = vsel %vm6266, 1, 0
      %v6275 = vsel %vm6267, 1, 0
      %v6276 = vsel %vm6268, 1, 0
      %v6277 = vsel %vm6269, 1, 0
      %v6278 = vcvt.s32.f32 %v6270
      %v6279 = vcvt.s32.f32 %v6271
      %v6280 = vcvt.s32.f32 %v6272
      %v6281 = vcvt.s32.f32 %v6273
      %v6282 = vcvt.s32.f32 %v6274
      %v6283 = vcvt.s32.f32 %v6275
      %v6284 = vcvt.s32.f32 %v6276
      %v6285 = vcvt.s32.f32 %v6277
      %v6286 = vmul.f32 %v5254, %v6278
      %v6287 = vmul.f32 %v5250, %v6279
      %v6288 = vmul.f32 %v5246, %v6280
      %v6289 = vmul.f32 %v5242, %v6281
      %v6290 = vmul.f32 %v5238, %v6282
      %v6291 = vmul.f32 %v5234, %v6283
      %v6292 = vmul.f32 %v5230, %v6284
      %v6293 = vmul.f32 %v5258, %v6285
      %v6294 = vmul.f32 %v5255, %v6278
      %v6295 = vmul.f32 %v5251, %v6279
      %v6296 = vmul.f32 %v5247, %v6280
      %v6297 = vmul.f32 %v5243, %v6281
      %v6298 = vmul.f32 %v5239, %v6282
      %v6299 = vmul.f32 %v5235, %v6283
      %v6300 = vmul.f32 %v5231, %v6284
      %v6301 = vmul.f32 %v5259, %v6285
      %v6302 = vmul.f32 %v5256, %v6278
      %v6303 = vmul.f32 %v5252, %v6279
      %v6304 = vmul.f32 %v5248, %v6280
      %v6305 = vmul.f32 %v5244, %v6281
      %v6306 = vmul.f32 %v5240, %v6282
      %v6307 = vmul.f32 %v5236, %v6283
      %v6308 = vmul.f32 %v5232, %v6284
      %v6309 = vmul.f32 %v5260, %v6285
      %v6310 = vmul.f32 %v5257, %v6278
      %v6311 = vmul.f32 %v5253, %v6279
      %v6312 = vmul.f32 %v5249, %v6280
      %v6313 = vmul.f32 %v5245, %v6281
      %v6314 = vmul.f32 %v5241, %v6282
      %v6315 = vmul.f32 %v5237, %v6283
      %v6316 = vmul.f32 %v5233, %v6284
      %v6317 = vmul.f32 %v5261, %v6285
      %s6318 = scalar_lea.vmem %s15, 256
      %v6319 = vld [vmem:[%s6318] sm:$0xff]
      %v6320 = vld [vmem:[%s6318 + $0x8] sm:$0xff]
      %v6321 = vld [vmem:[%s6318 + $0x10] sm:$0xff]
      %v6322 = vld [vmem:[%s6318 + $0x18] sm:$0xff]
      %6324 = vset.pattern.permute.xlu0 0
      %6325 = vperm.xlu0 %6324, %v6319
      %v6326 = vpop.permute.xlu0 %6325
      %6329 = vset.pattern.permute.xlu0 0
      %6330 = vperm.xlu0 %6329, %v6320
      %v6331 = vpop.permute.xlu0 %6330
      %6334 = vset.pattern.permute.xlu0 0
      %6335 = vperm.xlu0 %6334, %v6321
      %v6336 = vpop.permute.xlu0 %6335
      %6339 = vset.pattern.permute.xlu0 0
      %6340 = vperm.xlu0 %6339, %v6322
      %v6341 = vpop.permute.xlu0 %6340
      %v6343 = vmul.f32 %v6286, %v6326
      %v6344 = vmul.f32 %v6287, %v6326
      %v6345 = vmul.f32 %v6288, %v6326
      %v6346 = vmul.f32 %v6289, %v6326
      %v6347 = vmul.f32 %v6290, %v6326
      %v6348 = vmul.f32 %v6291, %v6326
      %v6349 = vmul.f32 %v6292, %v6326
      %v6350 = vmul.f32 %v6293, %v6326
      %v6351 = vmul.f32 %v6294, %v6331
      %v6352 = vmul.f32 %v6295, %v6331
      %v6353 = vmul.f32 %v6296, %v6331
      %v6354 = vmul.f32 %v6297, %v6331
      %v6355 = vmul.f32 %v6298, %v6331
      %v6356 = vmul.f32 %v6299, %v6331
      %v6357 = vmul.f32 %v6300, %v6331
      %v6358 = vmul.f32 %v6301, %v6331
      %v6359 = vmul.f32 %v6302, %v6336
      %v6360 = vmul.f32 %v6303, %v6336
      %v6361 = vmul.f32 %v6304, %v6336
      %v6362 = vmul.f32 %v6305, %v6336
      %v6363 = vmul.f32 %v6306, %v6336
      %v6364 = vmul.f32 %v6307, %v6336
      %v6365 = vmul.f32 %v6308, %v6336
      %v6366 = vmul.f32 %v6309, %v6336
      %v6367 = vmul.f32 %v6310, %v6341
      %v6368 = vmul.f32 %v6311, %v6341
      %v6369 = vmul.f32 %v6312, %v6341
      %v6370 = vmul.f32 %v6313, %v6341
      %v6371 = vmul.f32 %v6314, %v6341
      %v6372 = vmul.f32 %v6315, %v6341
      %v6373 = vmul.f32 %v6316, %v6341
      %v6374 = vmul.f32 %v6317, %v6341
      %v6375 = vadd.f32 %v6230, %v6343
      %v6376 = vadd.f32 %v6231, %v6344
      %v6377 = vadd.f32 %v6232, %v6345
      %v6378 = vadd.f32 %v6233, %v6346
      %v6379 = vadd.f32 %v6234, %v6347
      %v6380 = vadd.f32 %v6235, %v6348
      %v6381 = vadd.f32 %v6236, %v6349
      %v6382 = vadd.f32 %v6237, %v6350
      %v6383 = vadd.f32 %v6238, %v6351
      %v6384 = vadd.f32 %v6239, %v6352
      %v6385 = vadd.f32 %v6240, %v6353
      %v6386 = vadd.f32 %v6241, %v6354
      %v6387 = vadd.f32 %v6242, %v6355
      %v6388 = vadd.f32 %v6243, %v6356
      %v6389 = vadd.f32 %v6244, %v6357
      %v6390 = vadd.f32 %v6245, %v6358
      %v6391 = vadd.f32 %v6246, %v6359
      %v6392 = vadd.f32 %v6247, %v6360
      %v6393 = vadd.f32 %v6248, %v6361
      %v6394 = vadd.f32 %v6249, %v6362
      %v6395 = vadd.f32 %v6250, %v6363
      %v6396 = vadd.f32 %v6251, %v6364
      %v6397 = vadd.f32 %v6252, %v6365
      %v6398 = vadd.f32 %v6253, %v6366
      %v6399 = vadd.f32 %v6254, %v6367
      %v6400 = vadd.f32 %v6255, %v6368
      %v6401 = vadd.f32 %v6256, %v6369
      %v6402 = vadd.f32 %v6257, %v6370
      %v6403 = vadd.f32 %v6258, %v6371
      %v6404 = vadd.f32 %v6259, %v6372
      %v6405 = vadd.f32 %v6260, %v6373
      %v6406 = vadd.f32 %v6261, %v6374
      %v6407 = vld [vmem:[%s16] sm:$0xff]
      %v6408 = vld [vmem:[%s16 + $0x8] sm:$0xff]
      %v6409 = vld [vmem:[%s16 + $0x10] sm:$0xff]
      %v6410 = vld [vmem:[%s16 + $0x18] sm:$0xff]
      %6412 = vset.pattern.permute.xlu0 0
      %6413 = vperm.xlu0 %6412, %v6407
      %v6414 = vpop.permute.xlu0 %6413
      %6417 = vset.pattern.permute.xlu0 0
      %6418 = vperm.xlu0 %6417, %v6408
      %v6419 = vpop.permute.xlu0 %6418
      %6422 = vset.pattern.permute.xlu0 0
      %6423 = vperm.xlu0 %6422, %v6409
      %v6424 = vpop.permute.xlu0 %6423
      %6427 = vset.pattern.permute.xlu0 0
      %6428 = vperm.xlu0 %6427, %v6410
      %v6429 = vpop.permute.xlu0 %6428
      %v6431 = vadd.f32 %v6375, %v6414
      %v6432 = vadd.f32 %v6376, %v6414
      %v6433 = vadd.f32 %v6377, %v6414
      %v6434 = vadd.f32 %v6378, %v6414
      %v6435 = vadd.f32 %v6379, %v6414
      %v6436 = vadd.f32 %v6380, %v6414
      %v6437 = vadd.f32 %v6381, %v6414
      %v6438 = vadd.f32 %v6382, %v6414
      %v6439 = vadd.f32 %v6383, %v6419
      %v6440 = vadd.f32 %v6384, %v6419
      %v6441 = vadd.f32 %v6385, %v6419
      %v6442 = vadd.f32 %v6386, %v6419
      %v6443 = vadd.f32 %v6387, %v6419
      %v6444 = vadd.f32 %v6388, %v6419
      %v6445 = vadd.f32 %v6389, %v6419
      %v6446 = vadd.f32 %v6390, %v6419
      %v6447 = vadd.f32 %v6391, %v6424
      %v6448 = vadd.f32 %v6392, %v6424
      %v6449 = vadd.f32 %v6393, %v6424
      %v6450 = vadd.f32 %v6394, %v6424
      %v6451 = vadd.f32 %v6395, %v6424
      %v6452 = vadd.f32 %v6396, %v6424
      %v6453 = vadd.f32 %v6397, %v6424
      %v6454 = vadd.f32 %v6398, %v6424
      %v6455 = vadd.f32 %v6399, %v6429
      %v6456 = vadd.f32 %v6400, %v6429
      %v6457 = vadd.f32 %v6401, %v6429
      %v6458 = vadd.f32 %v6402, %v6429
      %v6459 = vadd.f32 %v6403, %v6429
      %v6460 = vadd.f32 %v6404, %v6429
      %v6461 = vadd.f32 %v6405, %v6429
      %v6462 = vadd.f32 %v6406, %v6429
      %v6463 = vsub.f32 0.0, %v6431
      %v6464 = vsub.f32 0.0, %v6432
      %v6465 = vsub.f32 0.0, %v6433
      %v6466 = vsub.f32 0.0, %v6434
      %v6467 = vsub.f32 0.0, %v6435
      %v6468 = vsub.f32 0.0, %v6436
      %v6469 = vsub.f32 0.0, %v6437
      %v6470 = vsub.f32 0.0, %v6438
      %v6471 = vsub.f32 0.0, %v6439
      %v6472 = vsub.f32 0.0, %v6440
      %v6473 = vsub.f32 0.0, %v6441
      %v6474 = vsub.f32 0.0, %v6442
      %v6475 = vsub.f32 0.0, %v6443
      %v6476 = vsub.f32 0.0, %v6444
      %v6477 = vsub.f32 0.0, %v6445
      %v6478 = vsub.f32 0.0, %v6446
      %v6479 = vsub.f32 0.0, %v6447
      %v6480 = vsub.f32 0.0, %v6448
      %v6481 = vsub.f32 0.0, %v6449
      %v6482 = vsub.f32 0.0, %v6450
      %v6483 = vsub.f32 0.0, %v6451
      %v6484 = vsub.f32 0.0, %v6452
      %v6485 = vsub.f32 0.0, %v6453
      %v6486 = vsub.f32 0.0, %v6454
      %v6487 = vsub.f32 0.0, %v6455
      %v6488 = vsub.f32 0.0, %v6456
      %v6489 = vsub.f32 0.0, %v6457
      %v6490 = vsub.f32 0.0, %v6458
      %v6491 = vsub.f32 0.0, %v6459
      %v6492 = vsub.f32 0.0, %v6460
      %v6493 = vsub.f32 0.0, %v6461
      %v6494 = vsub.f32 0.0, %v6462
      %v6495 = vmul.f32 %v6463, 1.442695
      %v6496 = vpow.pop %v6495
      %v6497 = vmul.f32 %v6464, 1.442695
      %v6498 = vpow.pop %v6497
      %v6499 = vmul.f32 %v6465, 1.442695
      %v6500 = vpow.pop %v6499
      %v6501 = vmul.f32 %v6466, 1.442695
      %v6502 = vpow.pop %v6501
      %v6503 = vmul.f32 %v6467, 1.442695
      %v6504 = vpow.pop %v6503
      %v6505 = vmul.f32 %v6468, 1.442695
      %v6506 = vpow.pop %v6505
      %v6507 = vmul.f32 %v6469, 1.442695
      %v6508 = vpow.pop %v6507
      %v6509 = vmul.f32 %v6470, 1.442695
      %v6510 = vpow.pop %v6509
      %v6511 = vmul.f32 %v6471, 1.442695
      %v6512 = vpow.pop %v6511
      %v6513 = vmul.f32 %v6472, 1.442695
      %v6514 = vpow.pop %v6513
      %v6515 = vmul.f32 %v6473, 1.442695
      %v6516 = vpow.pop %v6515
      %v6517 = vmul.f32 %v6474, 1.442695
      %v6518 = vpow.pop %v6517
      %v6519 = vmul.f32 %v6475, 1.442695
      %v6520 = vpow.pop %v6519
      %v6521 = vmul.f32 %v6476, 1.442695
      %v6522 = vpow.pop %v6521
      %v6523 = vmul.f32 %v6477, 1.442695
      %v6524 = vpow.pop %v6523
      %v6525 = vmul.f32 %v6478, 1.442695
      %v6526 = vpow.pop %v6525
      %v6527 = vmul.f32 %v6479, 1.442695
      %v6528 = vpow.pop %v6527
      %v6529 = vmul.f32 %v6480, 1.442695
      %v6530 = vpow.pop %v6529
      %v6531 = vmul.f32 %v6481, 1.442695
      %v6532 = vpow.pop %v6531
      %v6533 = vmul.f32 %v6482, 1.442695
      %v6534 = vpow.pop %v6533
      %v6535 = vmul.f32 %v6483, 1.442695
      %v6536 = vpow.pop %v6535
      %v6537 = vmul.f32 %v6484, 1.442695
      %v6538 = vpow.pop %v6537
      %v6539 = vmul.f32 %v6485, 1.442695
      %v6540 = vpow.pop %v6539
      %v6541 = vmul.f32 %v6486, 1.442695
      %v6542 = vpow.pop %v6541
      %v6543 = vmul.f32 %v6487, 1.442695
      %v6544 = vpow.pop %v6543
      %v6545 = vmul.f32 %v6488, 1.442695
      %v6546 = vpow.pop %v6545
      %v6547 = vmul.f32 %v6489, 1.442695
      %v6548 = vpow.pop %v6547
      %v6549 = vmul.f32 %v6490, 1.442695
      %v6550 = vpow.pop %v6549
      %v6551 = vmul.f32 %v6491, 1.442695
      %v6552 = vpow.pop %v6551
      %v6553 = vmul.f32 %v6492, 1.442695
      %v6554 = vpow.pop %v6553
      %v6555 = vmul.f32 %v6493, 1.442695
      %v6556 = vpow.pop %v6555
      %v6557 = vmul.f32 %v6494, 1.442695
      %v6558 = vpow.pop %v6557
      %v6559 = vadd.f32 %v6496, 1.0
      %v6560 = vadd.f32 %v6498, 1.0
      %v6561 = vadd.f32 %v6500, 1.0
      %v6562 = vadd.f32 %v6502, 1.0
      %v6563 = vadd.f32 %v6504, 1.0
      %v6564 = vadd.f32 %v6506, 1.0
      %v6565 = vadd.f32 %v6508, 1.0
      %v6566 = vadd.f32 %v6510, 1.0
      %v6567 = vadd.f32 %v6512, 1.0
      %v6568 = vadd.f32 %v6514, 1.0
      %v6569 = vadd.f32 %v6516, 1.0
      %v6570 = vadd.f32 %v6518, 1.0
      %v6571 = vadd.f32 %v6520, 1.0
      %v6572 = vadd.f32 %v6522, 1.0
      %v6573 = vadd.f32 %v6524, 1.0
      %v6574 = vadd.f32 %v6526, 1.0
      %v6575 = vadd.f32 %v6528, 1.0
      %v6576 = vadd.f32 %v6530, 1.0
      %v6577 = vadd.f32 %v6532, 1.0
      %v6578 = vadd.f32 %v6534, 1.0
      %v6579 = vadd.f32 %v6536, 1.0
      %v6580 = vadd.f32 %v6538, 1.0
      %v6581 = vadd.f32 %v6540, 1.0
      %v6582 = vadd.f32 %v6542, 1.0
      %v6583 = vadd.f32 %v6544, 1.0
      %v6584 = vadd.f32 %v6546, 1.0
      %v6585 = vadd.f32 %v6548, 1.0
      %v6586 = vadd.f32 %v6550, 1.0
      %v6587 = vadd.f32 %v6552, 1.0
      %v6588 = vadd.f32 %v6554, 1.0
      %v6589 = vadd.f32 %v6556, 1.0
      %v6590 = vadd.f32 %v6558, 1.0
      %v6591 = vrcp.pop %v6559
      %v6592 = vrcp.pop %v6560
      %v6593 = vrcp.pop %v6561
      %v6594 = vrcp.pop %v6562
      %v6595 = vrcp.pop %v6563
      %v6596 = vrcp.pop %v6564
      %v6597 = vrcp.pop %v6565
      %v6598 = vrcp.pop %v6566
      %v6599 = vrcp.pop %v6567
      %v6600 = vrcp.pop %v6568
      %v6601 = vrcp.pop %v6569
      %v6602 = vrcp.pop %v6570
      %v6603 = vrcp.pop %v6571
      %v6604 = vrcp.pop %v6572
      %v6605 = vrcp.pop %v6573
      %v6606 = vrcp.pop %v6574
      %v6607 = vrcp.pop %v6575
      %v6608 = vrcp.pop %v6576
      %v6609 = vrcp.pop %v6577
      %v6610 = vrcp.pop %v6578
      %v6611 = vrcp.pop %v6579
      %v6612 = vrcp.pop %v6580
      %v6613 = vrcp.pop %v6581
      %v6614 = vrcp.pop %v6582
      %v6615 = vrcp.pop %v6583
      %v6616 = vrcp.pop %v6584
      %v6617 = vrcp.pop %v6585
      %v6618 = vrcp.pop %v6586
      %v6619 = vrcp.pop %v6587
      %v6620 = vrcp.pop %v6588
      %v6621 = vrcp.pop %v6589
      %v6622 = vrcp.pop %v6590
      %v6623 = vmul.f32 %v6431, %v6591
      %v6624 = vmul.f32 %v6432, %v6592
      %v6625 = vmul.f32 %v6433, %v6593
      %v6626 = vmul.f32 %v6434, %v6594
      %v6627 = vmul.f32 %v6435, %v6595
      %v6628 = vmul.f32 %v6436, %v6596
      %v6629 = vmul.f32 %v6437, %v6597
      %v6630 = vmul.f32 %v6438, %v6598
      %v6631 = vmul.f32 %v6439, %v6599
      %v6632 = vmul.f32 %v6440, %v6600
      %v6633 = vmul.f32 %v6441, %v6601
      %v6634 = vmul.f32 %v6442, %v6602
      %v6635 = vmul.f32 %v6443, %v6603
      %v6636 = vmul.f32 %v6444, %v6604
      %v6637 = vmul.f32 %v6445, %v6605
      %v6638 = vmul.f32 %v6446, %v6606
      %v6639 = vmul.f32 %v6447, %v6607
      %v6640 = vmul.f32 %v6448, %v6608
      %v6641 = vmul.f32 %v6449, %v6609
      %v6642 = vmul.f32 %v6450, %v6610
      %v6643 = vmul.f32 %v6451, %v6611
      %v6644 = vmul.f32 %v6452, %v6612
      %v6645 = vmul.f32 %v6453, %v6613
      %v6646 = vmul.f32 %v6454, %v6614
      %v6647 = vmul.f32 %v6455, %v6615
      %v6648 = vmul.f32 %v6456, %v6616
      %v6649 = vmul.f32 %v6457, %v6617
      %v6650 = vmul.f32 %v6458, %v6618
      %v6651 = vmul.f32 %v6459, %v6619
      %v6652 = vmul.f32 %v6460, %v6620
      %v6653 = vmul.f32 %v6461, %v6621
      %v6654 = vmul.f32 %v6462, %v6622
      %v6655 = vld [vmem:[%s17] sm:$0xf]
      %v6656 = vld [vmem:[%s17 + $0x4] sm:$0xf]
      %v6657 = vpack.c.bf16 %v6631, %v6623
      %v6658 = vpack.c.bf16 %v6632, %v6624
      %v6659 = vpack.c.bf16 %v6633, %v6625
      %v6660 = vpack.c.bf16 %v6634, %v6626
      %v6661 = vpack.c.bf16 %v6635, %v6627
      %v6662 = vpack.c.bf16 %v6636, %v6628
      %v6663 = vpack.c.bf16 %v6637, %v6629
      %v6664 = vpack.c.bf16 %v6638, %v6630
      %v6665 = vpack.c.bf16 %v6647, %v6639
      %v6666 = vpack.c.bf16 %v6648, %v6640
      %v6667 = vpack.c.bf16 %v6649, %v6641
      %v6668 = vpack.c.bf16 %v6650, %v6642
      %v6669 = vpack.c.bf16 %v6651, %v6643
      %v6670 = vpack.c.bf16 %v6652, %v6644
      %v6671 = vpack.c.bf16 %v6653, %v6645
      %v6672 = vpack.c.bf16 %v6654, %v6646
      %v6673 = vld [vmem:[%s18] sm:$0xff]
      %v6674 = vld [vmem:[%s18 + $0x8] sm:$0xff]
      %6676 = vset.pattern.permute.xlu0 0
      %6677 = vperm.xlu0 %6676, %v6673
      %v6678 = vpop.permute.xlu0 %6677
      %6681 = vset.pattern.permute.xlu0 0
      %6682 = vperm.xlu0 %6681, %v6674
      %v6683 = vpop.permute.xlu0 %6682
      %v6687 = vunpack.c.l.b16 %v6655
      %v6688 = vunpack.c.l.b16 %v6656
      %v6689 = vpack.c.b16 %v6688, %v6687
      %v6691 = vsel %vm867, %v6689, 0
      %6693 = vmatprep.subr.bf16.mxu0 %v6658
      %6694 = vmatpush1.bf16.msra.mxu0 %v6657
      %6695 = vmatprep.subr.bf16.mxu0 %v6666
      %6696 = vmatpush1.bf16.msra.mxu0 %v6665
      %6697 = vmatprep.subr.bf16.mxu0 0
      %6698 = vmatpush1.bf16.msra.mxu0 0
      %6699 = vmatprep.subr.bf16.mxu0 0
      %6700 = vmatpush1.bf16.msra.mxu0 0
      %6701 = vmatprep.subr.bf16.mxu0 0
      %6702 = vmatpush1.bf16.msra.mxu0 0
      %6703 = vmatprep.subr.bf16.mxu0 0
      %6704 = vmatpush1.bf16.msra.mxu0 0
      %6705 = vmatprep.subr.bf16.mxu0 0
      %6706 = vmatpush1.bf16.msra.mxu0 0
      %6707 = vmatprep.subr.bf16.mxu0 0
      %6708 = vmatpush1.bf16.msra.mxu0 0
      %6709 = vmatprep.subr.bf16.mxu0 0
      %6710 = vmatpush1.bf16.msra.mxu0 0
      %6711 = vmatprep.subr.bf16.mxu0 0
      %6712 = vmatpush1.bf16.msra.mxu0 0
      %6713 = vmatprep.subr.bf16.mxu0 0
      %6714 = vmatpush1.bf16.msra.mxu0 0
      %6715 = vmatprep.subr.bf16.mxu0 0
      %6716 = vmatpush1.bf16.msra.mxu0 0
      %6717 = vmatprep.subr.bf16.mxu0 0
      %6718 = vmatpush1.bf16.msra.mxu0 0
      %6719 = vmatprep.subr.bf16.mxu0 0
      %6720 = vmatpush1.bf16.msra.mxu0 0
      %6721 = vmatprep.subr.bf16.mxu0 0
      %6722 = vmatpush1.bf16.msra.mxu0 0
      %6723 = vmatprep.subr.bf16.mxu0 0
      %6724 = vmatpush1.bf16.msra.mxu0 0
      %6725 = vmatprep.mubr.bf16.mxu0 0
      %6726 = vmatmul.mubr.bf16.gmra.mrb[0].mxu0 %v6691
      %v6727 = vpop.f32.mrb[0].mxu0
      %v6728 = vadd.f32 %v6678, %v6727
      %v6729 = vpop.f32.mrb[0].mxu0
      %v6730 = vadd.f32 %v6678, %v6729
      %v6731 = vpop.f32.mrb[0].mxu0
      %v6732 = vadd.f32 %v6683, %v6731
      %v6733 = vpop.f32.mrb[0].mxu0
      %v6734 = vadd.f32 %v6683, %v6733
      %6735 = vdwg.mxu0
      %6736 = vmatprep.subr.bf16.mxu0 %v6660
      %6737 = vmatpush1.bf16.msra.mxu0 %v6659
      %6738 = vmatprep.subr.bf16.mxu0 %v6668
      %6739 = vmatpush1.bf16.msra.mxu0 %v6667
      %6740 = vmatprep.subr.bf16.mxu0 0
      %6741 = vmatpush1.bf16.msra.mxu0 0
      %6742 = vmatprep.subr.bf16.mxu0 0
      %6743 = vmatpush1.bf16.msra.mxu0 0
      %6744 = vmatprep.subr.bf16.mxu0 0
      %6745 = vmatpush1.bf16.msra.mxu0 0
      %6746 = vmatprep.subr.bf16.mxu0 0
      %6747 = vmatpush1.bf16.msra.mxu0 0
      %6748 = vmatprep.subr.bf16.mxu0 0
      %6749 = vmatpush1.bf16.msra.mxu0 0
      %6750 = vmatprep.subr.bf16.mxu0 0
      %6751 = vmatpush1.bf16.msra.mxu0 0
      %6752 = vmatprep.subr.bf16.mxu0 0
      %6753 = vmatpush1.bf16.msra.mxu0 0
      %6754 = vmatprep.subr.bf16.mxu0 0
      %6755 = vmatpush1.bf16.msra.mxu0 0
      %6756 = vmatprep.subr.bf16.mxu0 0
      %6757 = vmatpush1.bf16.msra.mxu0 0
      %6758 = vmatprep.subr.bf16.mxu0 0
      %6759 = vmatpush1.bf16.msra.mxu0 0
      %6760 = vmatprep.subr.bf16.mxu0 0
      %6761 = vmatpush1.bf16.msra.mxu0 0
      %6762 = vmatprep.subr.bf16.mxu0 0
      %6763 = vmatpush1.bf16.msra.mxu0 0
      %6764 = vmatprep.subr.bf16.mxu0 0
      %6765 = vmatpush1.bf16.msra.mxu0 0
      %6766 = vmatprep.subr.bf16.mxu0 0
      %6767 = vmatpush1.bf16.msra.mxu0 0
      %6768 = vmatprep.mubr.bf16.mxu0 0
      %6769 = vmatmul.mubr.bf16.gmra.mrb[0].mxu0 %v6691
      %v6770 = vpop.f32.mrb[0].mxu0
      %v6771 = vadd.f32 %v6678, %v6770
      %v6772 = vpop.f32.mrb[0].mxu0
      %v6773 = vadd.f32 %v6678, %v6772
      %v6774 = vpop.f32.mrb[0].mxu0
      %v6775 = vadd.f32 %v6683, %v6774
      %v6776 = vpop.f32.mrb[0].mxu0
      %v6777 = vadd.f32 %v6683, %v6776
      %6778 = vdwg.mxu0
      %6779 = vmatprep.subr.bf16.mxu0 %v6662
      %6780 = vmatpush1.bf16.msra.mxu0 %v6661
      %6781 = vmatprep.subr.bf16.mxu0 %v6670
      %6782 = vmatpush1.bf16.msra.mxu0 %v6669
      %6783 = vmatprep.subr.bf16.mxu0 0
      %6784 = vmatpush1.bf16.msra.mxu0 0
      %6785 = vmatprep.subr.bf16.mxu0 0
      %6786 = vmatpush1.bf16.msra.mxu0 0
      %6787 = vmatprep.subr.bf16.mxu0 0
      %6788 = vmatpush1.bf16.msra.mxu0 0
      %6789 = vmatprep.subr.bf16.mxu0 0
      %6790 = vmatpush1.bf16.msra.mxu0 0
      %6791 = vmatprep.subr.bf16.mxu0 0
      %6792 = vmatpush1.bf16.msra.mxu0 0
      %6793 = vmatprep.subr.bf16.mxu0 0
      %6794 = vmatpush1.bf16.msra.mxu0 0
      %6795 = vmatprep.subr.bf16.mxu0 0
      %6796 = vmatpush1.bf16.msra.mxu0 0
      %6797 = vmatprep.subr.bf16.mxu0 0
      %6798 = vmatpush1.bf16.msra.mxu0 0
      %6799 = vmatprep.subr.bf16.mxu0 0
      %6800 = vmatpush1.bf16.msra.mxu0 0
      %6801 = vmatprep.subr.bf16.mxu0 0
      %6802 = vmatpush1.bf16.msra.mxu0 0
      %6803 = vmatprep.subr.bf16.mxu0 0
      %6804 = vmatpush1.bf16.msra.mxu0 0
      %6805 = vmatprep.subr.bf16.mxu0 0
      %6806 = vmatpush1.bf16.msra.mxu0 0
      %6807 = vmatprep.subr.bf16.mxu0 0
      %6808 = vmatpush1.bf16.msra.mxu0 0
      %6809 = vmatprep.subr.bf16.mxu0 0
      %6810 = vmatpush1.bf16.msra.mxu0 0
      %6811 = vmatprep.mubr.bf16.mxu0 0
      %6812 = vmatmul.mubr.bf16.gmra.mrb[0].mxu0 %v6691
      %v6813 = vpop.f32.mrb[0].mxu0
      %v6814 = vadd.f32 %v6678, %v6813
      %v6815 = vpop.f32.mrb[0].mxu0
      %v6816 = vadd.f32 %v6678, %v6815
      %v6817 = vpop.f32.mrb[0].mxu0
      %v6818 = vadd.f32 %v6683, %v6817
      %v6819 = vpop.f32.mrb[0].mxu0
      %v6820 = vadd.f32 %v6683, %v6819
      %6821 = vdwg.mxu0
      %6822 = vmatprep.subr.bf16.mxu0 %v6664
      %6823 = vmatpush1.bf16.msra.mxu0 %v6663
      %6824 = vmatprep.subr.bf16.mxu0 %v6672
      %6825 = vmatpush1.bf16.msra.mxu0 %v6671
      %6826 = vmatprep.subr.bf16.mxu0 0
      %6827 = vmatpush1.bf16.msra.mxu0 0
      %6828 = vmatprep.subr.bf16.mxu0 0
      %6829 = vmatpush1.bf16.msra.mxu0 0
      %6830 = vmatprep.subr.bf16.mxu0 0
      %6831 = vmatpush1.bf16.msra.mxu0 0
      %6832 = vmatprep.subr.bf16.mxu0 0
      %6833 = vmatpush1.bf16.msra.mxu0 0
      %6834 = vmatprep.subr.bf16.mxu0 0
      %6835 = vmatpush1.bf16.msra.mxu0 0
      %6836 = vmatprep.subr.bf16.mxu0 0
      %6837 = vmatpush1.bf16.msra.mxu0 0
      %6838 = vmatprep.subr.bf16.mxu0 0
      %6839 = vmatpush1.bf16.msra.mxu0 0
      %6840 = vmatprep.subr.bf16.mxu0 0
      %6841 = vmatpush1.bf16.msra.mxu0 0
      %6842 = vmatprep.subr.bf16.mxu0 0
      %6843 = vmatpush1.bf16.msra.mxu0 0
      %6844 = vmatprep.subr.bf16.mxu0 0
      %6845 = vmatpush1.bf16.msra.mxu0 0
      %6846 = vmatprep.subr.bf16.mxu0 0
      %6847 = vmatpush1.bf16.msra.mxu0 0
      %6848 = vmatprep.subr.bf16.mxu0 0
      %6849 = vmatpush1.bf16.msra.mxu0 0
      %6850 = vmatprep.subr.bf16.mxu0 0
      %6851 = vmatpush1.bf16.msra.mxu0 0
      %6852 = vmatprep.subr.bf16.mxu0 0
      %6853 = vmatpush1.bf16.msra.mxu0 0
      %6854 = vmatprep.mubr.bf16.mxu0 0
      %6855 = vmatmul.mubr.bf16.gmra.mrb[0].mxu0 %v6691
      %v6856 = vpop.f32.mrb[0].mxu0
      %v6857 = vadd.f32 %v6678, %v6856
      %v6858 = vpop.f32.mrb[0].mxu0
      %v6859 = vadd.f32 %v6678, %v6858
      %v6860 = vpop.f32.mrb[0].mxu0
      %v6861 = vadd.f32 %v6683, %v6860
      %v6862 = vpop.f32.mrb[0].mxu0
      %v6863 = vadd.f32 %v6683, %v6862
      %6864 = vdwg.mxu0
      %v6865 = vld [vmem:[%s19] sm:$0xf]
      %v6866 = vld [vmem:[%s19 + $0x4] sm:$0xf]
      %v6869 = vunpack.c.l.b16 %v6865
      %v6870 = vunpack.c.l.b16 %v6866
      %v6871 = vpack.c.b16 %v6870, %v6869
      %v6873 = vsel %vm2072, %v6871, 0
      %6875 = vmatprep.subr.bf16.mxu0 %v4223
      %6876 = vmatpush1.bf16.msra.mxu0 %v4222
      %6877 = vmatprep.subr.bf16.mxu0 0
      %6878 = vmatpush1.bf16.msra.mxu0 0
      %6879 = vmatprep.subr.bf16.mxu0 0
      %6880 = vmatpush1.bf16.msra.mxu0 0
      %6881 = vmatprep.subr.bf16.mxu0 0
      %6882 = vmatpush1.bf16.msra.mxu0 0
      %6883 = vmatprep.subr.bf16.mxu0 0
      %6884 = vmatpush1.bf16.msra.mxu0 0
      %6885 = vmatprep.subr.bf16.mxu0 0
      %6886 = vmatpush1.bf16.msra.mxu0 0
      %6887 = vmatprep.subr.bf16.mxu0 0
      %6888 = vmatpush1.bf16.msra.mxu0 0
      %6889 = vmatprep.subr.bf16.mxu0 0
      %6890 = vmatpush1.bf16.msra.mxu0 0
      %6891 = vmatprep.subr.bf16.mxu0 0
      %6892 = vmatpush1.bf16.msra.mxu0 0
      %6893 = vmatprep.subr.bf16.mxu0 0
      %6894 = vmatpush1.bf16.msra.mxu0 0
      %6895 = vmatprep.subr.bf16.mxu0 0
      %6896 = vmatpush1.bf16.msra.mxu0 0
      %6897 = vmatprep.subr.bf16.mxu0 0
      %6898 = vmatpush1.bf16.msra.mxu0 0
      %6899 = vmatprep.subr.bf16.mxu0 0
      %6900 = vmatpush1.bf16.msra.mxu0 0
      %6901 = vmatprep.subr.bf16.mxu0 0
      %6902 = vmatpush1.bf16.msra.mxu0 0
      %6903 = vmatprep.subr.bf16.mxu0 0
      %6904 = vmatpush1.bf16.msra.mxu0 0
      %6905 = vmatprep.subr.bf16.mxu0 0
      %6906 = vmatpush1.bf16.msra.mxu0 0
      %6907 = vmatprep.mubr.bf16.mxu0 0
      %6908 = vmatmul.mubr.bf16.gmra.mrb[0].mxu0 %v6873
      %v6909 = vpop.f32.mrb[0].mxu0
      %v6910 = vadd.f32 0.0, %v6909
      %v6911 = vpop.f32.mrb[0].mxu0
      %v6912 = vadd.f32 0.0, %v6911
      %v6913 = vpop.f32.mrb[0].mxu0
      %v6914 = vadd.f32 0.0, %v6913
      %v6915 = vpop.f32.mrb[0].mxu0
      %v6916 = vadd.f32 0.0, %v6915
      %6917 = vdwg.mxu0
      %6918 = vmatprep.subr.bf16.mxu0 %v4225
      %6919 = vmatpush1.bf16.msra.mxu0 %v4224
      %6920 = vmatprep.subr.bf16.mxu0 0
      %6921 = vmatpush1.bf16.msra.mxu0 0
      %6922 = vmatprep.subr.bf16.mxu0 0
      %6923 = vmatpush1.bf16.msra.mxu0 0
      %6924 = vmatprep.subr.bf16.mxu0 0
      %6925 = vmatpush1.bf16.msra.mxu0 0
      %6926 = vmatprep.subr.bf16.mxu0 0
      %6927 = vmatpush1.bf16.msra.mxu0 0
      %6928 = vmatprep.subr.bf16.mxu0 0
      %6929 = vmatpush1.bf16.msra.mxu0 0
      %6930 = vmatprep.subr.bf16.mxu0 0
      %6931 = vmatpush1.bf16.msra.mxu0 0
      %6932 = vmatprep.subr.bf16.mxu0 0
      %6933 = vmatpush1.bf16.msra.mxu0 0
      %6934 = vmatprep.subr.bf16.mxu0 0
      %6935 = vmatpush1.bf16.msra.mxu0 0
      %6936 = vmatprep.subr.bf16.mxu0 0
      %6937 = vmatpush1.bf16.msra.mxu0 0
      %6938 = vmatprep.subr.bf16.mxu0 0
      %6939 = vmatpush1.bf16.msra.mxu0 0
      %6940 = vmatprep.subr.bf16.mxu0 0
      %6941 = vmatpush1.bf16.msra.mxu0 0
      %6942 = vmatprep.subr.bf16.mxu0 0
      %6943 = vmatpush1.bf16.msra.mxu0 0
      %6944 = vmatprep.subr.bf16.mxu0 0
      %6945 = vmatpush1.bf16.msra.mxu0 0
      %6946 = vmatprep.subr.bf16.mxu0 0
      %6947 = vmatpush1.bf16.msra.mxu0 0
      %6948 = vmatprep.subr.bf16.mxu0 0
      %6949 = vmatpush1.bf16.msra.mxu0 0
      %6950 = vmatprep.mubr.bf16.mxu0 0
      %6951 = vmatmul.mubr.bf16.gmra.mrb[0].mxu0 %v6873
      %v6952 = vpop.f32.mrb[0].mxu0
      %v6953 = vadd.f32 0.0, %v6952
      %v6954 = vpop.f32.mrb[0].mxu0
      %v6955 = vadd.f32 0.0, %v6954
      %v6956 = vpop.f32.mrb[0].mxu0
      %v6957 = vadd.f32 0.0, %v6956
      %v6958 = vpop.f32.mrb[0].mxu0
      %v6959 = vadd.f32 0.0, %v6958
      %6960 = vdwg.mxu0
      %6961 = vmatprep.subr.bf16.mxu0 %v4227
      %6962 = vmatpush1.bf16.msra.mxu0 %v4226
      %6963 = vmatprep.subr.bf16.mxu0 0
      %6964 = vmatpush1.bf16.msra.mxu0 0
      %6965 = vmatprep.subr.bf16.mxu0 0
      %6966 = vmatpush1.bf16.msra.mxu0 0
      %6967 = vmatprep.subr.bf16.mxu0 0
      %6968 = vmatpush1.bf16.msra.mxu0 0
      %6969 = vmatprep.subr.bf16.mxu0 0
      %6970 = vmatpush1.bf16.msra.mxu0 0
      %6971 = vmatprep.subr.bf16.mxu0 0
      %6972 = vmatpush1.bf16.msra.mxu0 0
      %6973 = vmatprep.subr.bf16.mxu0 0
      %6974 = vmatpush1.bf16.msra.mxu0 0
      %6975 = vmatprep.subr.bf16.mxu0 0
      %6976 = vmatpush1.bf16.msra.mxu0 0
      %6977 = vmatprep.subr.bf16.mxu0 0
      %6978 = vmatpush1.bf16.msra.mxu0 0
      %6979 = vmatprep.subr.bf16.mxu0 0
      %6980 = vmatpush1.bf16.msra.mxu0 0
      %6981 = vmatprep.subr.bf16.mxu0 0
      %6982 = vmatpush1.bf16.msra.mxu0 0
      %6983 = vmatprep.subr.bf16.mxu0 0
      %6984 = vmatpush1.bf16.msra.mxu0 0
      %6985 = vmatprep.subr.bf16.mxu0 0
      %6986 = vmatpush1.bf16.msra.mxu0 0
      %6987 = vmatprep.subr.bf16.mxu0 0
      %6988 = vmatpush1.bf16.msra.mxu0 0
      %6989 = vmatprep.subr.bf16.mxu0 0
      %6990 = vmatpush1.bf16.msra.mxu0 0
      %6991 = vmatprep.subr.bf16.mxu0 0
      %6992 = vmatpush1.bf16.msra.mxu0 0
      %6993 = vmatprep.mubr.bf16.mxu0 0
      %6994 = vmatmul.mubr.bf16.gmra.mrb[0].mxu0 %v6873
      %v6995 = vpop.f32.mrb[0].mxu0
      %v6996 = vadd.f32 0.0, %v6995
      %v6997 = vpop.f32.mrb[0].mxu0
      %v6998 = vadd.f32 0.0, %v6997
      %v6999 = vpop.f32.mrb[0].mxu0
      %v7000 = vadd.f32 0.0, %v6999
      %v7001 = vpop.f32.mrb[0].mxu0
      %v7002 = vadd.f32 0.0, %v7001
      %7003 = vdwg.mxu0
      %7004 = vmatprep.subr.bf16.mxu0 %v4229
      %7005 = vmatpush1.bf16.msra.mxu0 %v4228
      %7006 = vmatprep.subr.bf16.mxu0 0
      %7007 = vmatpush1.bf16.msra.mxu0 0
      %7008 = vmatprep.subr.bf16.mxu0 0
      %7009 = vmatpush1.bf16.msra.mxu0 0
      %7010 = vmatprep.subr.bf16.mxu0 0
      %7011 = vmatpush1.bf16.msra.mxu0 0
      %7012 = vmatprep.subr.bf16.mxu0 0
      %7013 = vmatpush1.bf16.msra.mxu0 0
      %7014 = vmatprep.subr.bf16.mxu0 0
      %7015 = vmatpush1.bf16.msra.mxu0 0
      %7016 = vmatprep.subr.bf16.mxu0 0
      %7017 = vmatpush1.bf16.msra.mxu0 0
      %7018 = vmatprep.subr.bf16.mxu0 0
      %7019 = vmatpush1.bf16.msra.mxu0 0
      %7020 = vmatprep.subr.bf16.mxu0 0
      %7021 = vmatpush1.bf16.msra.mxu0 0
      %7022 = vmatprep.subr.bf16.mxu0 0
      %7023 = vmatpush1.bf16.msra.mxu0 0
      %7024 = vmatprep.subr.bf16.mxu0 0
      %7025 = vmatpush1.bf16.msra.mxu0 0
      %7026 = vmatprep.subr.bf16.mxu0 0
      %7027 = vmatpush1.bf16.msra.mxu0 0
      %7028 = vmatprep.subr.bf16.mxu0 0
      %7029 = vmatpush1.bf16.msra.mxu0 0
      %7030 = vmatprep.subr.bf16.mxu0 0
      %7031 = vmatpush1.bf16.msra.mxu0 0
      %7032 = vmatprep.subr.bf16.mxu0 0
      %7033 = vmatpush1.bf16.msra.mxu0 0
      %7034 = vmatprep.subr.bf16.mxu0 0
      %7035 = vmatpush1.bf16.msra.mxu0 0
      %7036 = vmatprep.mubr.bf16.mxu0 0
      %7037 = vmatmul.mubr.bf16.gmra.mrb[0].mxu0 %v6873
      %v7038 = vpop.f32.mrb[0].mxu0
      %v7039 = vadd.f32 0.0, %v7038
      %v7040 = vpop.f32.mrb[0].mxu0
      %v7041 = vadd.f32 0.0, %v7040
      %v7042 = vpop.f32.mrb[0].mxu0
      %v7043 = vadd.f32 0.0, %v7042
      %v7044 = vpop.f32.mrb[0].mxu0
      %v7045 = vadd.f32 0.0, %v7044
      %7046 = vdwg.mxu0
      %v7047 = vadd.f32 %v6728, %v6910
      %v7048 = vadd.f32 %v6730, %v6912
      %v7049 = vadd.f32 %v6771, %v6953
      %v7050 = vadd.f32 %v6773, %v6955
      %v7051 = vadd.f32 %v6814, %v6996
      %v7052 = vadd.f32 %v6816, %v6998
      %v7053 = vadd.f32 %v6857, %v7039
      %v7054 = vadd.f32 %v6859, %v7041
      %v7055 = vadd.f32 %v6732, %v6914
      %v7056 = vadd.f32 %v6734, %v6916
      %v7057 = vadd.f32 %v6775, %v6957
      %v7058 = vadd.f32 %v6777, %v6959
      %v7059 = vadd.f32 %v6818, %v7000
      %v7060 = vadd.f32 %v6820, %v7002
      %v7061 = vadd.f32 %v6861, %v7043
      %v7062 = vadd.f32 %v6863, %v7045
      %v7063 = vld [vmem:[%s20] sm:$0xf]
      %v7064 = vld [vmem:[%s20 + $0x4] sm:$0xf]
      %v7065 = vld [vmem:[%s20 + $0x8] sm:$0xf]
      %v7066 = vld [vmem:[%s20 + $0xc] sm:$0xf]
      %v7067 = vpack.c.bf16 %v7055, %v7047
      %v7068 = vpack.c.bf16 %v7056, %v7048
      %v7069 = vpack.c.bf16 %v7057, %v7049
      %v7070 = vpack.c.bf16 %v7058, %v7050
      %v7071 = vpack.c.bf16 %v7059, %v7051
      %v7072 = vpack.c.bf16 %v7060, %v7052
      %v7073 = vpack.c.bf16 %v7061, %v7053
      %v7074 = vpack.c.bf16 %v7062, %v7054
      %v7075 = vld [vmem:[%s21] sm:$0xff]
      %v7076 = vld [vmem:[%s21 + $0x8] sm:$0xff]
      %v7077 = vld [vmem:[%s21 + $0x10] sm:$0xff]
      %v7078 = vld [vmem:[%s21 + $0x18] sm:$0xff]
      %7080 = vset.pattern.permute.xlu0 0
      %7081 = vperm.xlu0 %7080, %v7075
      %v7082 = vpop.permute.xlu0 %7081
      %7085 = vset.pattern.permute.xlu0 0
      %7086 = vperm.xlu0 %7085, %v7076
      %v7087 = vpop.permute.xlu0 %7086
      %7090 = vset.pattern.permute.xlu0 0
      %7091 = vperm.xlu0 %7090, %v7077
      %v7092 = vpop.permute.xlu0 %7091
      %7095 = vset.pattern.permute.xlu0 0
      %7096 = vperm.xlu0 %7095, %v7078
      %v7097 = vpop.permute.xlu0 %7096
      %v7103 = vunpack.c.l.b16 %v7063
      %v7104 = vunpack.c.l.b16 %v7064
      %v7105 = vunpack.c.l.b16 %v7065
      %v7106 = vunpack.c.l.b16 %v7066
      %v7107 = vpack.c.b16 %v7104, %v7103
      %v7108 = vpack.c.b16 %v7106, %v7105
      %v7110 = vsel %vm2072, %v7107, 0
      %v7113 = vsel %vm2072, %v7108, 0
      %7115 = vmatprep.subr.bf16.mxu0 %v7068
      %7116 = vmatpush1.bf16.msra.mxu0 %v7067
      %7117 = vmatprep.subr.bf16.mxu0 0
      %7118 = vmatpush1.bf16.msra.mxu0 0
      %7119 = vmatprep.subr.bf16.mxu0 0
      %7120 = vmatpush1.bf16.msra.mxu0 0
      %7121 = vmatprep.subr.bf16.mxu0 0
      %7122 = vmatpush1.bf16.msra.mxu0 0
      %7123 = vmatprep.subr.bf16.mxu0 0
      %7124 = vmatpush1.bf16.msra.mxu0 0
      %7125 = vmatprep.subr.bf16.mxu0 0
      %7126 = vmatpush1.bf16.msra.mxu0 0
      %7127 = vmatprep.subr.bf16.mxu0 0
      %7128 = vmatpush1.bf16.msra.mxu0 0
      %7129 = vmatprep.subr.bf16.mxu0 0
      %7130 = vmatpush1.bf16.msra.mxu0 0
      %7131 = vmatprep.subr.bf16.mxu0 0
      %7132 = vmatpush1.bf16.msra.mxu0 0
      %7133 = vmatprep.subr.bf16.mxu0 0
      %7134 = vmatpush1.bf16.msra.mxu0 0
      %7135 = vmatprep.subr.bf16.mxu0 0
      %7136 = vmatpush1.bf16.msra.mxu0 0
      %7137 = vmatprep.subr.bf16.mxu0 0
      %7138 = vmatpush1.bf16.msra.mxu0 0
      %7139 = vmatprep.subr.bf16.mxu0 0
      %7140 = vmatpush1.bf16.msra.mxu0 0
      %7141 = vmatprep.subr.bf16.mxu0 0
      %7142 = vmatpush1.bf16.msra.mxu0 0
      %7143 = vmatprep.subr.bf16.mxu0 0
      %7144 = vmatpush1.bf16.msra.mxu0 0
      %7145 = vmatprep.subr.bf16.mxu0 0
      %7146 = vmatpush1.bf16.msra.mxu0 0
      %7147 = vmatprep.mubr.bf16.mxu0 0
      %7148 = vmatmul.mubr.bf16.gmra.mrb[0].mxu0 %v7110
      %v7149 = vpop.f32.mrb[0].mxu0
      %v7150 = vadd.f32 %v7082, %v7149
      %v7151 = vpop.f32.mrb[0].mxu0
      %v7152 = vadd.f32 %v7082, %v7151
      %v7153 = vpop.f32.mrb[0].mxu0
      %v7154 = vadd.f32 %v7087, %v7153
      %v7155 = vpop.f32.mrb[0].mxu0
      %v7156 = vadd.f32 %v7087, %v7155
      %7157 = vmatprep.mubr.bf16.mxu0 0
      %7158 = vmatmul.mubr.bf16.gmra.mrb[0].mxu0 %v7113
      %v7159 = vpop.f32.mrb[0].mxu0
      %v7160 = vadd.f32 %v7092, %v7159
      %v7161 = vpop.f32.mrb[0].mxu0
      %v7162 = vadd.f32 %v7092, %v7161
      %v7163 = vpop.f32.mrb[0].mxu0
      %v7164 = vadd.f32 %v7097, %v7163
      %v7165 = vpop.f32.mrb[0].mxu0
      %v7166 = vadd.f32 %v7097, %v7165
      %7167 = vdwg.mxu0
      %7168 = vmatprep.subr.bf16.mxu0 %v7070
      %7169 = vmatpush1.bf16.msra.mxu0 %v7069
      %7170 = vmatprep.subr.bf16.mxu0 0
      %7171 = vmatpush1.bf16.msra.mxu0 0
      %7172 = vmatprep.subr.bf16.mxu0 0
      %7173 = vmatpush1.bf16.msra.mxu0 0
      %7174 = vmatprep.subr.bf16.mxu0 0
      %7175 = vmatpush1.bf16.msra.mxu0 0
      %7176 = vmatprep.subr.bf16.mxu0 0
      %7177 = vmatpush1.bf16.msra.mxu0 0
      %7178 = vmatprep.subr.bf16.mxu0 0
      %7179 = vmatpush1.bf16.msra.mxu0 0
      %7180 = vmatprep.subr.bf16.mxu0 0
      %7181 = vmatpush1.bf16.msra.mxu0 0
      %7182 = vmatprep.subr.bf16.mxu0 0
      %7183 = vmatpush1.bf16.msra.mxu0 0
      %7184 = vmatprep.subr.bf16.mxu0 0
      %7185 = vmatpush1.bf16.msra.mxu0 0
      %7186 = vmatprep.subr.bf16.mxu0 0
      %7187 = vmatpush1.bf16.msra.mxu0 0
      %7188 = vmatprep.subr.bf16.mxu0 0
      %7189 = vmatpush1.bf16.msra.mxu0 0
      %7190 = vmatprep.subr.bf16.mxu0 0
      %7191 = vmatpush1.bf16.msra.mxu0 0
      %7192 = vmatprep.subr.bf16.mxu0 0
      %7193 = vmatpush1.bf16.msra.mxu0 0
      %7194 = vmatprep.subr.bf16.mxu0 0
      %7195 = vmatpush1.bf16.msra.mxu0 0
      %7196 = vmatprep.subr.bf16.mxu0 0
      %7197 = vmatpush1.bf16.msra.mxu0 0
      %7198 = vmatprep.subr.bf16.mxu0 0
      %7199 = vmatpush1.bf16.msra.mxu0 0
      %7200 = vmatprep.mubr.bf16.mxu0 0
      %7201 = vmatmul.mubr.bf16.gmra.mrb[0].mxu0 %v7110
      %v7202 = vpop.f32.mrb[0].mxu0
      %v7203 = vadd.f32 %v7082, %v7202
      %v7204 = vpop.f32.mrb[0].mxu0
      %v7205 = vadd.f32 %v7082, %v7204
      %v7206 = vpop.f32.mrb[0].mxu0
      %v7207 = vadd.f32 %v7087, %v7206
      %v7208 = vpop.f32.mrb[0].mxu0
      %v7209 = vadd.f32 %v7087, %v7208
      %7210 = vmatprep.mubr.bf16.mxu0 0
      %7211 = vmatmul.mubr.bf16.gmra.mrb[0].mxu0 %v7113
      %v7212 = vpop.f32.mrb[0].mxu0
      %v7213 = vadd.f32 %v7092, %v7212
      %v7214 = vpop.f32.mrb[0].mxu0
      %v7215 = vadd.f32 %v7092, %v7214
      %v7216 = vpop.f32.mrb[0].mxu0
      %v7217 = vadd.f32 %v7097, %v7216
      %v7218 = vpop.f32.mrb[0].mxu0
      %v7219 = vadd.f32 %v7097, %v7218
      %7220 = vdwg.mxu0
      %7221 = vmatprep.subr.bf16.mxu0 %v7072
      %7222 = vmatpush1.bf16.msra.mxu0 %v7071
      %7223 = vmatprep.subr.bf16.mxu0 0
      %7224 = vmatpush1.bf16.msra.mxu0 0
      %7225 = vmatprep.subr.bf16.mxu0 0
      %7226 = vmatpush1.bf16.msra.mxu0 0
      %7227 = vmatprep.subr.bf16.mxu0 0
      %7228 = vmatpush1.bf16.msra.mxu0 0
      %7229 = vmatprep.subr.bf16.mxu0 0
      %7230 = vmatpush1.bf16.msra.mxu0 0
      %7231 = vmatprep.subr.bf16.mxu0 0
      %7232 = vmatpush1.bf16.msra.mxu0 0
      %7233 = vmatprep.subr.bf16.mxu0 0
      %7234 = vmatpush1.bf16.msra.mxu0 0
      %7235 = vmatprep.subr.bf16.mxu0 0
      %7236 = vmatpush1.bf16.msra.mxu0 0
      %7237 = vmatprep.subr.bf16.mxu0 0
      %7238 = vmatpush1.bf16.msra.mxu0 0
      %7239 = vmatprep.subr.bf16.mxu0 0
      %7240 = vmatpush1.bf16.msra.mxu0 0
      %7241 = vmatprep.subr.bf16.mxu0 0
      %7242 = vmatpush1.bf16.msra.mxu0 0
      %7243 = vmatprep.subr.bf16.mxu0 0
      %7244 = vmatpush1.bf16.msra.mxu0 0
      %7245 = vmatprep.subr.bf16.mxu0 0
      %7246 = vmatpush1.bf16.msra.mxu0 0
      %7247 = vmatprep.subr.bf16.mxu0 0
      %7248 = vmatpush1.bf16.msra.mxu0 0
      %7249 = vmatprep.subr.bf16.mxu0 0
      %7250 = vmatpush1.bf16.msra.mxu0 0
      %7251 = vmatprep.subr.bf16.mxu0 0
      %7252 = vmatpush1.bf16.msra.mxu0 0
      %7253 = vmatprep.mubr.bf16.mxu0 0
      %7254 = vmatmul.mubr.bf16.gmra.mrb[0].mxu0 %v7110
      %v7255 = vpop.f32.mrb[0].mxu0
      %v7256 = vadd.f32 %v7082, %v7255
      %v7257 = vpop.f32.mrb[0].mxu0
      %v7258 = vadd.f32 %v7082, %v7257
      %v7259 = vpop.f32.mrb[0].mxu0
      %v7260 = vadd.f32 %v7087, %v7259
      %v7261 = vpop.f32.mrb[0].mxu0
      %v7262 = vadd.f32 %v7087, %v7261
      %7263 = vmatprep.mubr.bf16.mxu0 0
      %7264 = vmatmul.mubr.bf16.gmra.mrb[0].mxu0 %v7113
      %v7265 = vpop.f32.mrb[0].mxu0
      %v7266 = vadd.f32 %v7092, %v7265
      %v7267 = vpop.f32.mrb[0].mxu0
      %v7268 = vadd.f32 %v7092, %v7267
      %v7269 = vpop.f32.mrb[0].mxu0
      %v7270 = vadd.f32 %v7097, %v7269
      %v7271 = vpop.f32.mrb[0].mxu0
      %v7272 = vadd.f32 %v7097, %v7271
      %7273 = vdwg.mxu0
      %7274 = vmatprep.subr.bf16.mxu0 %v7074
      %7275 = vmatpush1.bf16.msra.mxu0 %v7073
      %7276 = vmatprep.subr.bf16.mxu0 0
      %7277 = vmatpush1.bf16.msra.mxu0 0
      %7278 = vmatprep.subr.bf16.mxu0 0
      %7279 = vmatpush1.bf16.msra.mxu0 0
      %7280 = vmatprep.subr.bf16.mxu0 0
      %7281 = vmatpush1.bf16.msra.mxu0 0
      %7282 = vmatprep.subr.bf16.mxu0 0
      %7283 = vmatpush1.bf16.msra.mxu0 0
      %7284 = vmatprep.subr.bf16.mxu0 0
      %7285 = vmatpush1.bf16.msra.mxu0 0
      %7286 = vmatprep.subr.bf16.mxu0 0
      %7287 = vmatpush1.bf16.msra.mxu0 0
      %7288 = vmatprep.subr.bf16.mxu0 0
      %7289 = vmatpush1.bf16.msra.mxu0 0
      %7290 = vmatprep.subr.bf16.mxu0 0
      %7291 = vmatpush1.bf16.msra.mxu0 0
      %7292 = vmatprep.subr.bf16.mxu0 0
      %7293 = vmatpush1.bf16.msra.mxu0 0
      %7294 = vmatprep.subr.bf16.mxu0 0
      %7295 = vmatpush1.bf16.msra.mxu0 0
      %7296 = vmatprep.subr.bf16.mxu0 0
      %7297 = vmatpush1.bf16.msra.mxu0 0
      %7298 = vmatprep.subr.bf16.mxu0 0
      %7299 = vmatpush1.bf16.msra.mxu0 0
      %7300 = vmatprep.subr.bf16.mxu0 0
      %7301 = vmatpush1.bf16.msra.mxu0 0
      %7302 = vmatprep.subr.bf16.mxu0 0
      %7303 = vmatpush1.bf16.msra.mxu0 0
      %7304 = vmatprep.subr.bf16.mxu0 0
      %7305 = vmatpush1.bf16.msra.mxu0 0
      %7306 = vmatprep.mubr.bf16.mxu0 0
      %7307 = vmatmul.mubr.bf16.gmra.mrb[0].mxu0 %v7110
      %v7308 = vpop.f32.mrb[0].mxu0
      %v7309 = vadd.f32 %v7082, %v7308
      %v7310 = vpop.f32.mrb[0].mxu0
      %v7311 = vadd.f32 %v7082, %v7310
      %v7312 = vpop.f32.mrb[0].mxu0
      %v7313 = vadd.f32 %v7087, %v7312
      %v7314 = vpop.f32.mrb[0].mxu0
      %v7315 = vadd.f32 %v7087, %v7314
      %7316 = vmatprep.mubr.bf16.mxu0 0
      %7317 = vmatmul.mubr.bf16.gmra.mrb[0].mxu0 %v7113
      %v7318 = vpop.f32.mrb[0].mxu0
      %v7319 = vadd.f32 %v7092, %v7318
      %v7320 = vpop.f32.mrb[0].mxu0
      %v7321 = vadd.f32 %v7092, %v7320
      %v7322 = vpop.f32.mrb[0].mxu0
      %v7323 = vadd.f32 %v7097, %v7322
      %v7324 = vpop.f32.mrb[0].mxu0
      %v7325 = vadd.f32 %v7097, %v7324
      %7326 = vdwg.mxu0
      %v7327 = vsub.f32 0.0, %v7150
      %v7328 = vsub.f32 0.0, %v7152
      %v7329 = vsub.f32 0.0, %v7203
      %v7330 = vsub.f32 0.0, %v7205
      %v7331 = vsub.f32 0.0, %v7256
      %v7332 = vsub.f32 0.0, %v7258
      %v7333 = vsub.f32 0.0, %v7309
      %v7334 = vsub.f32 0.0, %v7311
      %v7335 = vsub.f32 0.0, %v7154
      %v7336 = vsub.f32 0.0, %v7156
      %v7337 = vsub.f32 0.0, %v7207
      %v7338 = vsub.f32 0.0, %v7209
      %v7339 = vsub.f32 0.0, %v7260
      %v7340 = vsub.f32 0.0, %v7262
      %v7341 = vsub.f32 0.0, %v7313
      %v7342 = vsub.f32 0.0, %v7315
      %v7343 = vsub.f32 0.0, %v7160
      %v7344 = vsub.f32 0.0, %v7162
      %v7345 = vsub.f32 0.0, %v7213
      %v7346 = vsub.f32 0.0, %v7215
      %v7347 = vsub.f32 0.0, %v7266
      %v7348 = vsub.f32 0.0, %v7268
      %v7349 = vsub.f32 0.0, %v7319
      %v7350 = vsub.f32 0.0, %v7321
      %v7351 = vsub.f32 0.0, %v7164
      %v7352 = vsub.f32 0.0, %v7166
      %v7353 = vsub.f32 0.0, %v7217
      %v7354 = vsub.f32 0.0, %v7219
      %v7355 = vsub.f32 0.0, %v7270
      %v7356 = vsub.f32 0.0, %v7272
      %v7357 = vsub.f32 0.0, %v7323
      %v7358 = vsub.f32 0.0, %v7325
      %v7359 = vmul.f32 %v7327, 1.442695
      %v7360 = vpow.pop %v7359
      %v7361 = vmul.f32 %v7328, 1.442695
      %v7362 = vpow.pop %v7361
      %v7363 = vmul.f32 %v7329, 1.442695
      %v7364 = vpow.pop %v7363
      %v7365 = vmul.f32 %v7330, 1.442695
      %v7366 = vpow.pop %v7365
      %v7367 = vmul.f32 %v7331, 1.442695
      %v7368 = vpow.pop %v7367
      %v7369 = vmul.f32 %v7332, 1.442695
      %v7370 = vpow.pop %v7369
      %v7371 = vmul.f32 %v7333, 1.442695
      %v7372 = vpow.pop %v7371
      %v7373 = vmul.f32 %v7334, 1.442695
      %v7374 = vpow.pop %v7373
      %v7375 = vmul.f32 %v7335, 1.442695
      %v7376 = vpow.pop %v7375
      %v7377 = vmul.f32 %v7336, 1.442695
      %v7378 = vpow.pop %v7377
      %v7379 = vmul.f32 %v7337, 1.442695
      %v7380 = vpow.pop %v7379
      %v7381 = vmul.f32 %v7338, 1.442695
      %v7382 = vpow.pop %v7381
      %v7383 = vmul.f32 %v7339, 1.442695
      %v7384 = vpow.pop %v7383
      %v7385 = vmul.f32 %v7340, 1.442695
      %v7386 = vpow.pop %v7385
      %v7387 = vmul.f32 %v7341, 1.442695
      %v7388 = vpow.pop %v7387
      %v7389 = vmul.f32 %v7342, 1.442695
      %v7390 = vpow.pop %v7389
      %v7391 = vmul.f32 %v7343, 1.442695
      %v7392 = vpow.pop %v7391
      %v7393 = vmul.f32 %v7344, 1.442695
      %v7394 = vpow.pop %v7393
      %v7395 = vmul.f32 %v7345, 1.442695
      %v7396 = vpow.pop %v7395
      %v7397 = vmul.f32 %v7346, 1.442695
      %v7398 = vpow.pop %v7397
      %v7399 = vmul.f32 %v7347, 1.442695
      %v7400 = vpow.pop %v7399
      %v7401 = vmul.f32 %v7348, 1.442695
      %v7402 = vpow.pop %v7401
      %v7403 = vmul.f32 %v7349, 1.442695
      %v7404 = vpow.pop %v7403
      %v7405 = vmul.f32 %v7350, 1.442695
      %v7406 = vpow.pop %v7405
      %v7407 = vmul.f32 %v7351, 1.442695
      %v7408 = vpow.pop %v7407
      %v7409 = vmul.f32 %v7352, 1.442695
      %v7410 = vpow.pop %v7409
      %v7411 = vmul.f32 %v7353, 1.442695
      %v7412 = vpow.pop %v7411
      %v7413 = vmul.f32 %v7354, 1.442695
      %v7414 = vpow.pop %v7413
      %v7415 = vmul.f32 %v7355, 1.442695
      %v7416 = vpow.pop %v7415
      %v7417 = vmul.f32 %v7356, 1.442695
      %v7418 = vpow.pop %v7417
      %v7419 = vmul.f32 %v7357, 1.442695
      %v7420 = vpow.pop %v7419
      %v7421 = vmul.f32 %v7358, 1.442695
      %v7422 = vpow.pop %v7421
      %v7423 = vadd.f32 %v7360, 1.0
      %v7424 = vadd.f32 %v7362, 1.0
      %v7425 = vadd.f32 %v7364, 1.0
      %v7426 = vadd.f32 %v7366, 1.0
      %v7427 = vadd.f32 %v7368, 1.0
      %v7428 = vadd.f32 %v7370, 1.0
      %v7429 = vadd.f32 %v7372, 1.0
      %v7430 = vadd.f32 %v7374, 1.0
      %v7431 = vadd.f32 %v7376, 1.0
      %v7432 = vadd.f32 %v7378, 1.0
      %v7433 = vadd.f32 %v7380, 1.0
      %v7434 = vadd.f32 %v7382, 1.0
      %v7435 = vadd.f32 %v7384, 1.0
      %v7436 = vadd.f32 %v7386, 1.0
      %v7437 = vadd.f32 %v7388, 1.0
      %v7438 = vadd.f32 %v7390, 1.0
      %v7439 = vadd.f32 %v7392, 1.0
      %v7440 = vadd.f32 %v7394, 1.0
      %v7441 = vadd.f32 %v7396, 1.0
      %v7442 = vadd.f32 %v7398, 1.0
      %v7443 = vadd.f32 %v7400, 1.0
      %v7444 = vadd.f32 %v7402, 1.0
      %v7445 = vadd.f32 %v7404, 1.0
      %v7446 = vadd.f32 %v7406, 1.0
      %v7447 = vadd.f32 %v7408, 1.0
      %v7448 = vadd.f32 %v7410, 1.0
      %v7449 = vadd.f32 %v7412, 1.0
      %v7450 = vadd.f32 %v7414, 1.0
      %v7451 = vadd.f32 %v7416, 1.0
      %v7452 = vadd.f32 %v7418, 1.0
      %v7453 = vadd.f32 %v7420, 1.0
      %v7454 = vadd.f32 %v7422, 1.0
      %v7455 = vrcp.pop %v7423
      %v7456 = vrcp.pop %v7424
      %v7457 = vrcp.pop %v7425
      %v7458 = vrcp.pop %v7426
      %v7459 = vrcp.pop %v7427
      %v7460 = vrcp.pop %v7428
      %v7461 = vrcp.pop %v7429
      %v7462 = vrcp.pop %v7430
      %v7463 = vrcp.pop %v7431
      %v7464 = vrcp.pop %v7432
      %v7465 = vrcp.pop %v7433
      %v7466 = vrcp.pop %v7434
      %v7467 = vrcp.pop %v7435
      %v7468 = vrcp.pop %v7436
      %v7469 = vrcp.pop %v7437
      %v7470 = vrcp.pop %v7438
      %v7471 = vrcp.pop %v7439
      %v7472 = vrcp.pop %v7440
      %v7473 = vrcp.pop %v7441
      %v7474 = vrcp.pop %v7442
      %v7475 = vrcp.pop %v7443
      %v7476 = vrcp.pop %v7444
      %v7477 = vrcp.pop %v7445
      %v7478 = vrcp.pop %v7446
      %v7479 = vrcp.pop %v7447
      %v7480 = vrcp.pop %v7448
      %v7481 = vrcp.pop %v7449
      %v7482 = vrcp.pop %v7450
      %v7483 = vrcp.pop %v7451
      %v7484 = vrcp.pop %v7452
      %v7485 = vrcp.pop %v7453
      %v7486 = vrcp.pop %v7454
      %v7487 = vmul.f32 %v7150, %v7455
      %v7488 = vmul.f32 %v7152, %v7456
      %v7489 = vmul.f32 %v7203, %v7457
      %v7490 = vmul.f32 %v7205, %v7458
      %v7491 = vmul.f32 %v7256, %v7459
      %v7492 = vmul.f32 %v7258, %v7460
      %v7493 = vmul.f32 %v7309, %v7461
      %v7494 = vmul.f32 %v7311, %v7462
      %v7495 = vmul.f32 %v7154, %v7463
      %v7496 = vmul.f32 %v7156, %v7464
      %v7497 = vmul.f32 %v7207, %v7465
      %v7498 = vmul.f32 %v7209, %v7466
      %v7499 = vmul.f32 %v7260, %v7467
      %v7500 = vmul.f32 %v7262, %v7468
      %v7501 = vmul.f32 %v7313, %v7469
      %v7502 = vmul.f32 %v7315, %v7470
      %v7503 = vmul.f32 %v7160, %v7471
      %v7504 = vmul.f32 %v7162, %v7472
      %v7505 = vmul.f32 %v7213, %v7473
      %v7506 = vmul.f32 %v7215, %v7474
      %v7507 = vmul.f32 %v7266, %v7475
      %v7508 = vmul.f32 %v7268, %v7476
      %v7509 = vmul.f32 %v7319, %v7477
      %v7510 = vmul.f32 %v7321, %v7478
      %v7511 = vmul.f32 %v7164, %v7479
      %v7512 = vmul.f32 %v7166, %v7480
      %v7513 = vmul.f32 %v7217, %v7481
      %v7514 = vmul.f32 %v7219, %v7482
      %v7515 = vmul.f32 %v7270, %v7483
      %v7516 = vmul.f32 %v7272, %v7484
      %v7517 = vmul.f32 %v7323, %v7485
      %v7518 = vmul.f32 %v7325, %v7486
      %v7519 = vand.u32 %v748, 3
      %v7520 = vand.u32 %v749, 3
      %v7521 = vand.u32 %v750, 3
      %v7522 = vand.u32 %v751, 3
      %v7523 = vand.u32 %v752, 3
      %v7524 = vand.u32 %v753, 3
      %v7525 = vand.u32 %v754, 3
      %v7526 = vand.u32 %v755, 3
      %vm7527 = vcmp.eq.s32.totalorder %v7519, 0
      %vm7528 = vcmp.eq.s32.totalorder %v7520, 0
      %vm7529 = vcmp.eq.s32.totalorder %v7521, 0
      %vm7530 = vcmp.eq.s32.totalorder %v7522, 0
      %vm7531 = vcmp.eq.s32.totalorder %v7523, 0
      %vm7532 = vcmp.eq.s32.totalorder %v7524, 0
      %vm7533 = vcmp.eq.s32.totalorder %v7525, 0
      %vm7534 = vcmp.eq.s32.totalorder %v7526, 0
      %v7535 = vand.u32 %v756, 3
      %v7536 = vand.u32 %v757, 3
      %v7537 = vand.u32 %v758, 3
      %v7538 = vand.u32 %v759, 3
      %v7539 = vand.u32 %v760, 3
      %v7540 = vand.u32 %v761, 3
      %v7541 = vand.u32 %v762, 3
      %v7542 = vand.u32 %v763, 3
      %vm7543 = vcmp.eq.s32.totalorder %v7535, 0
      %vm7544 = vcmp.eq.s32.totalorder %v7536, 0
      %vm7545 = vcmp.eq.s32.totalorder %v7537, 0
      %vm7546 = vcmp.eq.s32.totalorder %v7538, 0
      %vm7547 = vcmp.eq.s32.totalorder %v7539, 0
      %vm7548 = vcmp.eq.s32.totalorder %v7540, 0
      %vm7549 = vcmp.eq.s32.totalorder %v7541, 0
      %vm7550 = vcmp.eq.s32.totalorder %v7542, 0
      %vm7551 = vmand %vm7527, %vm7543
      %vm7552 = vmand %vm7528, %vm7544
      %vm7553 = vmand %vm7529, %vm7545
      %vm7554 = vmand %vm7530, %vm7546
      %vm7555 = vmand %vm7531, %vm7547
      %vm7556 = vmand %vm7532, %vm7548
      %vm7557 = vmand %vm7533, %vm7549
      %vm7558 = vmand %vm7534, %vm7550
      %vm7559 = vcmp.lt.s32.totalorder %v748, 28
      %vm7560 = vcmp.lt.s32.totalorder %v749, 28
      %vm7561 = vcmp.lt.s32.totalorder %v750, 28
      %vm7562 = vcmp.lt.s32.totalorder %v751, 28
      %vm7563 = vcmp.lt.s32.totalorder %v752, 28
      %vm7564 = vcmp.lt.s32.totalorder %v753, 28
      %vm7565 = vcmp.lt.s32.totalorder %v754, 28
      %vm7566 = vcmp.lt.s32.totalorder %v755, 28
      %vm7567 = vmand %vm7551, %vm7559
      %vm7568 = vmand %vm7552, %vm7560
      %vm7569 = vmand %vm7553, %vm7561
      %vm7570 = vmand %vm7554, %vm7562
      %vm7571 = vmand %vm7555, %vm7563
      %vm7572 = vmand %vm7556, %vm7564
      %vm7573 = vmand %vm7557, %vm7565
      %vm7574 = vmand %vm7558, %vm7566
      %vm7575 = vcmp.lt.s32.totalorder %v756, 28
      %vm7576 = vcmp.lt.s32.totalorder %v757, 28
      %vm7577 = vcmp.lt.s32.totalorder %v758, 28
      %vm7578 = vcmp.lt.s32.totalorder %v759, 28
      %vm7579 = vcmp.lt.s32.totalorder %v760, 28
      %vm7580 = vcmp.lt.s32.totalorder %v761, 28
      %vm7581 = vcmp.lt.s32.totalorder %v762, 28
      %vm7582 = vcmp.lt.s32.totalorder %v763, 28
      %vm7583 = vmand %vm7567, %vm7575
      %vm7584 = vmand %vm7568, %vm7576
      %vm7585 = vmand %vm7569, %vm7577
      %vm7586 = vmand %vm7570, %vm7578
      %vm7587 = vmand %vm7571, %vm7579
      %vm7588 = vmand %vm7572, %vm7580
      %vm7589 = vmand %vm7573, %vm7581
      %vm7590 = vmand %vm7574, %vm7582
      %v7591 = vsel %vm7583, 1, 0
      %v7592 = vsel %vm7584, 1, 0
      %v7593 = vsel %vm7585, 1, 0
      %v7594 = vsel %vm7586, 1, 0
      %v7595 = vsel %vm7587, 1, 0
      %v7596 = vsel %vm7588, 1, 0
      %v7597 = vsel %vm7589, 1, 0
      %v7598 = vsel %vm7590, 1, 0
      %v7599 = vcvt.s32.f32 %v7591
      %v7600 = vcvt.s32.f32 %v7592
      %v7601 = vcvt.s32.f32 %v7593
      %v7602 = vcvt.s32.f32 %v7594
      %v7603 = vcvt.s32.f32 %v7595
      %v7604 = vcvt.s32.f32 %v7596
      %v7605 = vcvt.s32.f32 %v7597
      %v7606 = vcvt.s32.f32 %v7598
      %v7607 = vmul.f32 %v7487, %v7599
      %v7608 = vmul.f32 %v7488, %v7600
      %v7609 = vmul.f32 %v7489, %v7601
      %v7610 = vmul.f32 %v7490, %v7602
      %v7611 = vmul.f32 %v7491, %v7603
      %v7612 = vmul.f32 %v7492, %v7604
      %v7613 = vmul.f32 %v7493, %v7605
      %v7614 = vmul.f32 %v7494, %v7606
      %v7615 = vmul.f32 %v7495, %v7599
      %v7616 = vmul.f32 %v7496, %v7600
      %v7617 = vmul.f32 %v7497, %v7601
      %v7618 = vmul.f32 %v7498, %v7602
      %v7619 = vmul.f32 %v7499, %v7603
      %v7620 = vmul.f32 %v7500, %v7604
      %v7621 = vmul.f32 %v7501, %v7605
      %v7622 = vmul.f32 %v7502, %v7606
      %v7623 = vmul.f32 %v7503, %v7599
      %v7624 = vmul.f32 %v7504, %v7600
      %v7625 = vmul.f32 %v7505, %v7601
      %v7626 = vmul.f32 %v7506, %v7602
      %v7627 = vmul.f32 %v7507, %v7603
      %v7628 = vmul.f32 %v7508, %v7604
      %v7629 = vmul.f32 %v7509, %v7605
      %v7630 = vmul.f32 %v7510, %v7606
      %v7631 = vmul.f32 %v7511, %v7599
      %v7632 = vmul.f32 %v7512, %v7600
      %v7633 = vmul.f32 %v7513, %v7601
      %v7634 = vmul.f32 %v7514, %v7602
      %v7635 = vmul.f32 %v7515, %v7603
      %v7636 = vmul.f32 %v7516, %v7604
      %v7637 = vmul.f32 %v7517, %v7605
      %v7638 = vmul.f32 %v7518, %v7606
      %v7639 = vadd.f32 %v7607, %v7608
      %v7640 = vadd.f32 %v7639, %v7609
      %v7641 = vadd.f32 %v7640, %v7610
      %v7642 = vadd.f32 %v7641, %v7611
      %v7643 = vadd.f32 %v7642, %v7612
      %v7644 = vadd.f32 %v7643, %v7613
      %v7645 = vadd.f32 %v7644, %v7614
      %7646 = vadd.xlane.f32.xlu0 %v7645
      %v7647 = vpop.xlane.xlu0 %7646
      %v7648 = vadd.f32 %v7615, %v7616
      %v7649 = vadd.f32 %v7648, %v7617
      %v7650 = vadd.f32 %v7649, %v7618
      %v7651 = vadd.f32 %v7650, %v7619
      %v7652 = vadd.f32 %v7651, %v7620
      %v7653 = vadd.f32 %v7652, %v7621
      %v7654 = vadd.f32 %v7653, %v7622
      %7655 = vadd.xlane.f32.xlu0 %v7654
      %v7656 = vpop.xlane.xlu0 %7655
      %v7657 = vadd.f32 %v7623, %v7624
      %v7658 = vadd.f32 %v7657, %v7625
      %v7659 = vadd.f32 %v7658, %v7626
      %v7660 = vadd.f32 %v7659, %v7627
      %v7661 = vadd.f32 %v7660, %v7628
      %v7662 = vadd.f32 %v7661, %v7629
      %v7663 = vadd.f32 %v7662, %v7630
      %7664 = vadd.xlane.f32.xlu0 %v7663
      %v7665 = vpop.xlane.xlu0 %7664
      %v7666 = vadd.f32 %v7631, %v7632
      %v7667 = vadd.f32 %v7666, %v7633
      %v7668 = vadd.f32 %v7667, %v7634
      %v7669 = vadd.f32 %v7668, %v7635
      %v7670 = vadd.f32 %v7669, %v7636
      %v7671 = vadd.f32 %v7670, %v7637
      %v7672 = vadd.f32 %v7671, %v7638
      %7673 = vadd.xlane.f32.xlu0 %v7672
      %v7674 = vpop.xlane.xlu0 %7673
      %v7675 = vmul.f32 %v7647, 0.020408163
      %v7676 = vmul.f32 %v7656, 0.020408163
      %v7677 = vmul.f32 %v7665, 0.020408163
      %v7678 = vmul.f32 %v7674, 0.020408163
      %v7679 = vld [vmem:[%s22] sm:$0xf]
      %v7680 = vld [vmem:[%s22 + $0x4] sm:$0xf]
      %v7681 = vld [vmem:[%s22 + $0x8] sm:$0xf]
      %v7682 = vld [vmem:[%s22 + $0xc] sm:$0xf]
      %v7683 = vld [vmem:[%s22 + $0x10] sm:$0xf]
      %v7684 = vld [vmem:[%s22 + $0x14] sm:$0xf]
      %v7685 = vld [vmem:[%s22 + $0x18] sm:$0xf]
      %v7686 = vld [vmem:[%s22 + $0x1c] sm:$0xf]
      %v7687 = vld [vmem:[%s22 + $0x20] sm:$0xf]
      %v7688 = vld [vmem:[%s22 + $0x24] sm:$0xf]
      %v7689 = vld [vmem:[%s22 + $0x28] sm:$0xf]
      %v7690 = vld [vmem:[%s22 + $0x2c] sm:$0xf]
      %v7691 = vld [vmem:[%s22 + $0x30] sm:$0xf]
      %v7692 = vld [vmem:[%s22 + $0x34] sm:$0xf]
      %v7693 = vld [vmem:[%s22 + $0x38] sm:$0xf]
      %v7694 = vld [vmem:[%s22 + $0x3c] sm:$0xf]
      %v7695 = vld [vmem:[%s22 + $0x40] sm:$0xf]
      %v7696 = vld [vmem:[%s22 + $0x44] sm:$0xf]
      %v7697 = vld [vmem:[%s22 + $0x48] sm:$0xf]
      %v7698 = vld [vmem:[%s22 + $0x4c] sm:$0xf]
      %v7699 = vld [vmem:[%s22 + $0x50] sm:$0xf]
      %v7700 = vld [vmem:[%s22 + $0x54] sm:$0xf]
      %v7701 = vld [vmem:[%s22 + $0x58] sm:$0xf]
      %v7702 = vld [vmem:[%s22 + $0x5c] sm:$0xf]
      %v7703 = vld [vmem:[%s22 + $0x60] sm:$0xf]
      %v7704 = vld [vmem:[%s22 + $0x64] sm:$0xf]
      %v7705 = vld [vmem:[%s22 + $0x68] sm:$0xf]
      %v7706 = vld [vmem:[%s22 + $0x6c] sm:$0xf]
      %v7707 = vld [vmem:[%s22 + $0x70] sm:$0xf]
      %v7708 = vld [vmem:[%s22 + $0x74] sm:$0xf]
      %v7709 = vld [vmem:[%s22 + $0x78] sm:$0xf]
      %v7710 = vld [vmem:[%s22 + $0x7c] sm:$0xf]
      %v7711 = vld [vmem:[%s22 + $0x80] sm:$0xf]
      %v7712 = vld [vmem:[%s22 + $0x84] sm:$0xf]
      %v7713 = vld [vmem:[%s22 + $0x88] sm:$0xf]
      %v7714 = vld [vmem:[%s22 + $0x8c] sm:$0xf]
      %v7715 = vld [vmem:[%s22 + $0x90] sm:$0xf]
      %v7716 = vld [vmem:[%s22 + $0x94] sm:$0xf]
      %v7717 = vld [vmem:[%s22 + $0x98] sm:$0xf]
      %v7718 = vld [vmem:[%s22 + $0x9c] sm:$0xf]
      %v7719 = vld [vmem:[%s22 + $0xa0] sm:$0xf]
      %v7720 = vld [vmem:[%s22 + $0xa4] sm:$0xf]
      %v7721 = vld [vmem:[%s22 + $0xa8] sm:$0xf]
      %v7722 = vld [vmem:[%s22 + $0xac] sm:$0xf]
      %v7723 = vld [vmem:[%s22 + $0xb0] sm:$0xf]
      %v7724 = vld [vmem:[%s22 + $0xb4] sm:$0xf]
      %v7725 = vld [vmem:[%s22 + $0xb8] sm:$0xf]
      %v7726 = vld [vmem:[%s22 + $0xbc] sm:$0xf]
      %v7727 = vld [vmem:[%s22 + $0xc0] sm:$0xf]
      %v7728 = vld [vmem:[%s22 + $0xc4] sm:$0xf]
      %v7729 = vld [vmem:[%s22 + $0xc8] sm:$0xf]
      %v7730 = vld [vmem:[%s22 + $0xcc] sm:$0xf]
      %v7731 = vld [vmem:[%s22 + $0xd0] sm:$0xf]
      %v7732 = vld [vmem:[%s22 + $0xd4] sm:$0xf]
      %v7733 = vld [vmem:[%s22 + $0xd8] sm:$0xf]
      %v7734 = vld [vmem:[%s22 + $0xdc] sm:$0xf]
      %v7735 = vld [vmem:[%s22 + $0xe0] sm:$0xf]
      %v7736 = vld [vmem:[%s22 + $0xe4] sm:$0xf]
      %v7737 = vld [vmem:[%s22 + $0xe8] sm:$0xf]
      %v7738 = vld [vmem:[%s22 + $0xec] sm:$0xf]
      %v7739 = vld [vmem:[%s22 + $0xf0] sm:$0xf]
      %v7740 = vld [vmem:[%s22 + $0xf4] sm:$0xf]
      %v7741 = vld [vmem:[%s22 + $0xf8] sm:$0xf]
      %v7742 = vld [vmem:[%s22 + $0xfc] sm:$0xf]
      %v7743 = vld [vmem:[%s22 + $0x100] sm:$0xf]
      %v7744 = vld [vmem:[%s22 + $0x104] sm:$0xf]
      %v7745 = vld [vmem:[%s22 + $0x108] sm:$0xf]
      %v7746 = vld [vmem:[%s22 + $0x10c] sm:$0xf]
      %v7747 = vld [vmem:[%s22 + $0x110] sm:$0xf]
      %v7748 = vld [vmem:[%s22 + $0x114] sm:$0xf]
      %v7749 = vld [vmem:[%s22 + $0x118] sm:$0xf]
      %v7750 = vld [vmem:[%s22 + $0x11c] sm:$0xf]
      %v7751 = vld [vmem:[%s22 + $0x120] sm:$0xf]
      %v7752 = vld [vmem:[%s22 + $0x124] sm:$0xf]
      %v7753 = vld [vmem:[%s22 + $0x128] sm:$0xf]
      %v7754 = vld [vmem:[%s22 + $0x12c] sm:$0xf]
      %v7755 = vld [vmem:[%s22 + $0x130] sm:$0xf]
      %v7756 = vld [vmem:[%s22 + $0x134] sm:$0xf]
      %v7757 = vld [vmem:[%s22 + $0x138] sm:$0xf]
      %v7758 = vld [vmem:[%s22 + $0x13c] sm:$0xf]
      %v7759 = vld [vmem:[%s22 + $0x140] sm:$0xf]
      %v7760 = vld [vmem:[%s22 + $0x144] sm:$0xf]
      %v7761 = vld [vmem:[%s22 + $0x148] sm:$0xf]
      %v7762 = vld [vmem:[%s22 + $0x14c] sm:$0xf]
      %v7763 = vld [vmem:[%s22 + $0x150] sm:$0xf]
      %v7764 = vld [vmem:[%s22 + $0x154] sm:$0xf]
      %v7765 = vld [vmem:[%s22 + $0x158] sm:$0xf]
      %v7766 = vld [vmem:[%s22 + $0x15c] sm:$0xf]
      %v7767 = vld [vmem:[%s22 + $0x160] sm:$0xf]
      %v7768 = vld [vmem:[%s22 + $0x164] sm:$0xf]
      %v7769 = vld [vmem:[%s22 + $0x168] sm:$0xf]
      %v7770 = vld [vmem:[%s22 + $0x16c] sm:$0xf]
      %v7771 = vld [vmem:[%s22 + $0x170] sm:$0xf]
      %v7772 = vld [vmem:[%s22 + $0x174] sm:$0xf]
      %v7773 = vld [vmem:[%s22 + $0x178] sm:$0xf]
      %v7774 = vld [vmem:[%s22 + $0x17c] sm:$0xf]
      %v7775 = vld [vmem:[%s22 + $0x180] sm:$0xf]
      %v7776 = vld [vmem:[%s22 + $0x184] sm:$0xf]
      %v7777 = vld [vmem:[%s22 + $0x188] sm:$0xf]
      %v7778 = vld [vmem:[%s22 + $0x18c] sm:$0xf]
      %v7779 = vld [vmem:[%s22 + $0x190] sm:$0xf]
      %v7780 = vld [vmem:[%s22 + $0x194] sm:$0xf]
      %v7781 = vld [vmem:[%s22 + $0x198] sm:$0xf]
      %v7782 = vld [vmem:[%s22 + $0x19c] sm:$0xf]
      %v7783 = vld [vmem:[%s22 + $0x1a0] sm:$0xf]
      %v7784 = vld [vmem:[%s22 + $0x1a4] sm:$0xf]
      %v7785 = vld [vmem:[%s22 + $0x1a8] sm:$0xf]
      %v7786 = vld [vmem:[%s22 + $0x1ac] sm:$0xf]
      %v7787 = vld [vmem:[%s22 + $0x1b0] sm:$0xf]
      %v7788 = vld [vmem:[%s22 + $0x1b4] sm:$0xf]
      %v7789 = vld [vmem:[%s22 + $0x1b8] sm:$0xf]
      %v7790 = vld [vmem:[%s22 + $0x1bc] sm:$0xf]
      %v7791 = vld [vmem:[%s22 + $0x1c0] sm:$0xf]
      %v7792 = vld [vmem:[%s22 + $0x1c4] sm:$0xf]
      %v7793 = vld [vmem:[%s22 + $0x1c8] sm:$0xf]
      %v7794 = vld [vmem:[%s22 + $0x1cc] sm:$0xf]
      %v7795 = vld [vmem:[%s22 + $0x1d0] sm:$0xf]
      %v7796 = vld [vmem:[%s22 + $0x1d4] sm:$0xf]
      %v7797 = vld [vmem:[%s22 + $0x1d8] sm:$0xf]
      %v7798 = vld [vmem:[%s22 + $0x1dc] sm:$0xf]
      %v7799 = vld [vmem:[%s22 + $0x1e0] sm:$0xf]
      %v7800 = vld [vmem:[%s22 + $0x1e4] sm:$0xf]
      %v7801 = vld [vmem:[%s22 + $0x1e8] sm:$0xf]
      %v7802 = vld [vmem:[%s22 + $0x1ec] sm:$0xf]
      %v7803 = vld [vmem:[%s22 + $0x1f0] sm:$0xf]
      %v7804 = vpack.c.bf16 %v7676, %v7675
      %v7805 = vpack.c.bf16 %v7678, %v7677
      %v7806 = vld [vmem:[%s23] sm:$0xff]
      %v7807 = vld [vmem:[%s23 + $0x8] sm:$0xff]
      %v7808 = vld [vmem:[%s23 + $0x10] sm:$0xff]
      %v7809 = vld [vmem:[%s23 + $0x18] sm:$0xff]
      %v7810 = vld [vmem:[%s23 + $0x20] sm:$0xff]
      %v7811 = vld [vmem:[%s23 + $0x28] sm:$0xff]
      %v7812 = vld [vmem:[%s23 + $0x30] sm:$0xff]
      %v7813 = vld [vmem:[%s23 + $0x38] sm:$0xff]
      %v7814 = vld [vmem:[%s23 + $0x40] sm:$0xff]
      %v7815 = vld [vmem:[%s23 + $0x48] sm:$0xff]
      %v7816 = vld [vmem:[%s23 + $0x50] sm:$0xff]
      %v7817 = vld [vmem:[%s23 + $0x58] sm:$0xff]
      %v7818 = vld [vmem:[%s23 + $0x60] sm:$0xff]
      %v7819 = vld [vmem:[%s23 + $0x68] sm:$0xff]
      %v7820 = vld [vmem:[%s23 + $0x70] sm:$0xff]
      %v7821 = vld [vmem:[%s23 + $0x78] sm:$0xff]
      %v7822 = vld [vmem:[%s23 + $0x80] sm:$0xff]
      %v7823 = vld [vmem:[%s23 + $0x88] sm:$0xff]
      %v7824 = vld [vmem:[%s23 + $0x90] sm:$0xff]
      %v7825 = vld [vmem:[%s23 + $0x98] sm:$0xff]
      %v7826 = vld [vmem:[%s23 + $0xa0] sm:$0xff]
      %v7827 = vld [vmem:[%s23 + $0xa8] sm:$0xff]
      %v7828 = vld [vmem:[%s23 + $0xb0] sm:$0xff]
      %v7829 = vld [vmem:[%s23 + $0xb8] sm:$0xff]
      %v7830 = vld [vmem:[%s23 + $0xc0] sm:$0xff]
      %v7831 = vld [vmem:[%s23 + $0xc8] sm:$0xff]
      %v7832 = vld [vmem:[%s23 + $0xd0] sm:$0xff]
      %v7833 = vld [vmem:[%s23 + $0xd8] sm:$0xff]
      %v7834 = vld [vmem:[%s23 + $0xe0] sm:$0xff]
      %v7835 = vld [vmem:[%s23 + $0xe8] sm:$0xff]
      %v7836 = vld [vmem:[%s23 + $0xf0] sm:$0xff]
      %v7837 = vld [vmem:[%s23 + $0xf8] sm:$0xff]
      %v7838 = vld [vmem:[%s23 + $0x100] sm:$0xff]
      %v7839 = vld [vmem:[%s23 + $0x108] sm:$0xff]
      %v7840 = vld [vmem:[%s23 + $0x110] sm:$0xff]
      %v7841 = vld [vmem:[%s23 + $0x118] sm:$0xff]
      %v7842 = vld [vmem:[%s23 + $0x120] sm:$0xff]
      %v7843 = vld [vmem:[%s23 + $0x128] sm:$0xff]
      %v7844 = vld [vmem:[%s23 + $0x130] sm:$0xff]
      %v7845 = vld [vmem:[%s23 + $0x138] sm:$0xff]
      %v7846 = vld [vmem:[%s23 + $0x140] sm:$0xff]
      %v7847 = vld [vmem:[%s23 + $0x148] sm:$0xff]
      %v7848 = vld [vmem:[%s23 + $0x150] sm:$0xff]
      %v7849 = vld [vmem:[%s23 + $0x158] sm:$0xff]
      %v7850 = vld [vmem:[%s23 + $0x160] sm:$0xff]
      %v7851 = vld [vmem:[%s23 + $0x168] sm:$0xff]
      %v7852 = vld [vmem:[%s23 + $0x170] sm:$0xff]
      %v7853 = vld [vmem:[%s23 + $0x178] sm:$0xff]
      %v7854 = vld [vmem:[%s23 + $0x180] sm:$0xff]
      %v7855 = vld [vmem:[%s23 + $0x188] sm:$0xff]
      %v7856 = vld [vmem:[%s23 + $0x190] sm:$0xff]
      %v7857 = vld [vmem:[%s23 + $0x198] sm:$0xff]
      %v7858 = vld [vmem:[%s23 + $0x1a0] sm:$0xff]
      %v7859 = vld [vmem:[%s23 + $0x1a8] sm:$0xff]
      %v7860 = vld [vmem:[%s23 + $0x1b0] sm:$0xff]
      %v7861 = vld [vmem:[%s23 + $0x1b8] sm:$0xff]
      %v7862 = vld [vmem:[%s23 + $0x1c0] sm:$0xff]
      %v7863 = vld [vmem:[%s23 + $0x1c8] sm:$0xff]
      %v7864 = vld [vmem:[%s23 + $0x1d0] sm:$0xff]
      %v7865 = vld [vmem:[%s23 + $0x1d8] sm:$0xff]
      %v7866 = vld [vmem:[%s23 + $0x1e0] sm:$0xff]
      %v7867 = vld [vmem:[%s23 + $0x1e8] sm:$0xff]
      %v7868 = vld [vmem:[%s23 + $0x1f0] sm:$0xff]
      %v7869 = vld [vmem:[%s23 + $0x1f8] sm:$0xff]
      %v7870 = vld [vmem:[%s23 + $0x200] sm:$0xff]
      %v7871 = vld [vmem:[%s23 + $0x208] sm:$0xff]
      %v7872 = vld [vmem:[%s23 + $0x210] sm:$0xff]
      %v7873 = vld [vmem:[%s23 + $0x218] sm:$0xff]
      %v7874 = vld [vmem:[%s23 + $0x220] sm:$0xff]
      %v7875 = vld [vmem:[%s23 + $0x228] sm:$0xff]
      %v7876 = vld [vmem:[%s23 + $0x230] sm:$0xff]
      %v7877 = vld [vmem:[%s23 + $0x238] sm:$0xff]
      %v7878 = vld [vmem:[%s23 + $0x240] sm:$0xff]
      %v7879 = vld [vmem:[%s23 + $0x248] sm:$0xff]
      %v7880 = vld [vmem:[%s23 + $0x250] sm:$0xff]
      %v7881 = vld [vmem:[%s23 + $0x258] sm:$0xff]
      %v7882 = vld [vmem:[%s23 + $0x260] sm:$0xff]
      %v7883 = vld [vmem:[%s23 + $0x268] sm:$0xff]
      %v7884 = vld [vmem:[%s23 + $0x270] sm:$0xff]
      %v7885 = vld [vmem:[%s23 + $0x278] sm:$0xff]
      %v7886 = vld [vmem:[%s23 + $0x280] sm:$0xff]
      %v7887 = vld [vmem:[%s23 + $0x288] sm:$0xff]
      %v7888 = vld [vmem:[%s23 + $0x290] sm:$0xff]
      %v7889 = vld [vmem:[%s23 + $0x298] sm:$0xff]
      %v7890 = vld [vmem:[%s23 + $0x2a0] sm:$0xff]
      %v7891 = vld [vmem:[%s23 + $0x2a8] sm:$0xff]
      %v7892 = vld [vmem:[%s23 + $0x2b0] sm:$0xff]
      %v7893 = vld [vmem:[%s23 + $0x2b8] sm:$0xff]
      %v7894 = vld [vmem:[%s23 + $0x2c0] sm:$0xff]
      %v7895 = vld [vmem:[%s23 + $0x2c8] sm:$0xff]
      %v7896 = vld [vmem:[%s23 + $0x2d0] sm:$0xff]
      %v7897 = vld [vmem:[%s23 + $0x2d8] sm:$0xff]
      %v7898 = vld [vmem:[%s23 + $0x2e0] sm:$0xff]
      %v7899 = vld [vmem:[%s23 + $0x2e8] sm:$0xff]
      %v7900 = vld [vmem:[%s23 + $0x2f0] sm:$0xff]
      %v7901 = vld [vmem:[%s23 + $0x2f8] sm:$0xff]
      %v7902 = vld [vmem:[%s23 + $0x300] sm:$0xff]
      %v7903 = vld [vmem:[%s23 + $0x308] sm:$0xff]
      %v7904 = vld [vmem:[%s23 + $0x310] sm:$0xff]
      %v7905 = vld [vmem:[%s23 + $0x318] sm:$0xff]
      %v7906 = vld [vmem:[%s23 + $0x320] sm:$0xff]
      %v7907 = vld [vmem:[%s23 + $0x328] sm:$0xff]
      %v7908 = vld [vmem:[%s23 + $0x330] sm:$0xff]
      %v7909 = vld [vmem:[%s23 + $0x338] sm:$0xff]
      %v7910 = vld [vmem:[%s23 + $0x340] sm:$0xff]
      %v7911 = vld [vmem:[%s23 + $0x348] sm:$0xff]
      %v7912 = vld [vmem:[%s23 + $0x350] sm:$0xff]
      %v7913 = vld [vmem:[%s23 + $0x358] sm:$0xff]
      %v7914 = vld [vmem:[%s23 + $0x360] sm:$0xff]
      %v7915 = vld [vmem:[%s23 + $0x368] sm:$0xff]
      %v7916 = vld [vmem:[%s23 + $0x370] sm:$0xff]
      %v7917 = vld [vmem:[%s23 + $0x378] sm:$0xff]
      %v7918 = vld [vmem:[%s23 + $0x380] sm:$0xff]
      %v7919 = vld [vmem:[%s23 + $0x388] sm:$0xff]
      %v7920 = vld [vmem:[%s23 + $0x390] sm:$0xff]
      %v7921 = vld [vmem:[%s23 + $0x398] sm:$0xff]
      %v7922 = vld [vmem:[%s23 + $0x3a0] sm:$0xff]
      %v7923 = vld [vmem:[%s23 + $0x3a8] sm:$0xff]
      %v7924 = vld [vmem:[%s23 + $0x3b0] sm:$0xff]
      %v7925 = vld [vmem:[%s23 + $0x3b8] sm:$0xff]
      %v7926 = vld [vmem:[%s23 + $0x3c0] sm:$0xff]
      %v7927 = vld [vmem:[%s23 + $0x3c8] sm:$0xff]
      %v7928 = vld [vmem:[%s23 + $0x3d0] sm:$0xff]
      %v7929 = vld [vmem:[%s23 + $0x3d8] sm:$0xff]
      %v7930 = vld [vmem:[%s23 + $0x3e0] sm:$0xff]
      %v8056 = vunpack.c.l.b16 %v7679
      %v8057 = vunpack.c.l.b16 %v7680
      %v8058 = vunpack.c.l.b16 %v7681
      %v8059 = vunpack.c.l.b16 %v7682
      %v8060 = vunpack.c.l.b16 %v7683
      %v8061 = vunpack.c.l.b16 %v7684
      %v8062 = vunpack.c.l.b16 %v7685
      %v8063 = vunpack.c.l.b16 %v7686
      %v8064 = vunpack.c.l.b16 %v7687
      %v8065 = vunpack.c.l.b16 %v7688
      %v8066 = vunpack.c.l.b16 %v7689
      %v8067 = vunpack.c.l.b16 %v7690
      %v8068 = vunpack.c.l.b16 %v7691
      %v8069 = vunpack.c.l.b16 %v7692
      %v8070 = vunpack.c.l.b16 %v7693
      %v8071 = vunpack.c.l.b16 %v7694
      %v8072 = vunpack.c.l.b16 %v7695
      %v8073 = vunpack.c.l.b16 %v7696
      %v8074 = vunpack.c.l.b16 %v7697
      %v8075 = vunpack.c.l.b16 %v7698
      %v8076 = vunpack.c.l.b16 %v7699
      %v8077 = vunpack.c.l.b16 %v7700
      %v8078 = vunpack.c.l.b16 %v7701
      %v8079 = vunpack.c.l.b16 %v7702
      %v8080 = vunpack.c.l.b16 %v7703
      %v8081 = vunpack.c.l.b16 %v7704
      %v8082 = vunpack.c.l.b16 %v7705
      %v8083 = vunpack.c.l.b16 %v7706
      %v8084 = vunpack.c.l.b16 %v7707
      %v8085 = vunpack.c.l.b16 %v7708
      %v8086 = vunpack.c.l.b16 %v7709
      %v8087 = vunpack.c.l.b16 %v7710
      %v8088 = vunpack.c.l.b16 %v7711
      %v8089 = vunpack.c.l.b16 %v7712
      %v8090 = vunpack.c.l.b16 %v7713
      %v8091 = vunpack.c.l.b16 %v7714
      %v8092 = vunpack.c.l.b16 %v7715
      %v8093 = vunpack.c.l.b16 %v7716
      %v8094 = vunpack.c.l.b16 %v7717
      %v8095 = vunpack.c.l.b16 %v7718
      %v8096 = vunpack.c.l.b16 %v7719
      %v8097 = vunpack.c.l.b16 %v7720
      %v8098 = vunpack.c.l.b16 %v7721
      %v8099 = vunpack.c.l.b16 %v7722
      %v8100 = vunpack.c.l.b16 %v7723
      %v8101 = vunpack.c.l.b16 %v7724
      %v8102 = vunpack.c.l.b16 %v7725
      %v8103 = vunpack.c.l.b16 %v7726
      %v8104 = vunpack.c.l.b16 %v7727
      %v8105 = vunpack.c.l.b16 %v7728
      %v8106 = vunpack.c.l.b16 %v7729
      %v8107 = vunpack.c.l.b16 %v7730
      %v8108 = vunpack.c.l.b16 %v7731
      %v8109 = vunpack.c.l.b16 %v7732
      %v8110 = vunpack.c.l.b16 %v7733
      %v8111 = vunpack.c.l.b16 %v7734
      %v8112 = vunpack.c.l.b16 %v7735
      %v8113 = vunpack.c.l.b16 %v7736
      %v8114 = vunpack.c.l.b16 %v7737
      %v8115 = vunpack.c.l.b16 %v7738
      %v8116 = vunpack.c.l.b16 %v7739
      %v8117 = vunpack.c.l.b16 %v7740
      %v8118 = vunpack.c.l.b16 %v7741
      %v8119 = vunpack.c.l.b16 %v7742
      %v8120 = vunpack.c.l.b16 %v7743
      %v8121 = vunpack.c.l.b16 %v7744
      %v8122 = vunpack.c.l.b16 %v7745
      %v8123 = vunpack.c.l.b16 %v7746
      %v8124 = vunpack.c.l.b16 %v7747
      %v8125 = vunpack.c.l.b16 %v7748
      %v8126 = vunpack.c.l.b16 %v7749
      %v8127 = vunpack.c.l.b16 %v7750
      %v8128 = vunpack.c.l.b16 %v7751
      %v8129 = vunpack.c.l.b16 %v7752
      %v8130 = vunpack.c.l.b16 %v7753
      %v8131 = vunpack.c.l.b16 %v7754
      %v8132 = vunpack.c.l.b16 %v7755
      %v8133 = vunpack.c.l.b16 %v7756
      %v8134 = vunpack.c.l.b16 %v7757
      %v8135 = vunpack.c.l.b16 %v7758
      %v8136 = vunpack.c.l.b16 %v7759
      %v8137 = vunpack.c.l.b16 %v7760
      %v8138 = vunpack.c.l.b16 %v7761
      %v8139 = vunpack.c.l.b16 %v7762
      %v8140 = vunpack.c.l.b16 %v7763
      %v8141 = vunpack.c.l.b16 %v7764
      %v8142 = vunpack.c.l.b16 %v7765
      %v8143 = vunpack.c.l.b16 %v7766
      %v8144 = vunpack.c.l.b16 %v7767
      %v8145 = vunpack.c.l.b16 %v7768
      %v8146 = vunpack.c.l.b16 %v7769
      %v8147 = vunpack.c.l.b16 %v7770
      %v8148 = vunpack.c.l.b16 %v7771
      %v8149 = vunpack.c.l.b16 %v7772
      %v8150 = vunpack.c.l.b16 %v7773
      %v8151 = vunpack.c.l.b16 %v7774
      %v8152 = vunpack.c.l.b16 %v7775
      %v8153 = vunpack.c.l.b16 %v7776
      %v8154 = vunpack.c.l.b16 %v7777
      %v8155 = vunpack.c.l.b16 %v7778
      %v8156 = vunpack.c.l.b16 %v7779
      %v8157 = vunpack.c.l.b16 %v7780
      %v8158 = vunpack.c.l.b16 %v7781
      %v8159 = vunpack.c.l.b16 %v7782
      %v8160 = vunpack.c.l.b16 %v7783
      %v8161 = vunpack.c.l.b16 %v7784
      %v8162 = vunpack.c.l.b16 %v7785
      %v8163 = vunpack.c.l.b16 %v7786
      %v8164 = vunpack.c.l.b16 %v7787
      %v8165 = vunpack.c.l.b16 %v7788
      %v8166 = vunpack.c.l.b16 %v7789
      %v8167 = vunpack.c.l.b16 %v7790
      %v8168 = vunpack.c.l.b16 %v7791
      %v8169 = vunpack.c.l.b16 %v7792
      %v8170 = vunpack.c.l.b16 %v7793
      %v8171 = vunpack.c.l.b16 %v7794
      %v8172 = vunpack.c.l.b16 %v7795
      %v8173 = vunpack.c.l.b16 %v7796
      %v8174 = vunpack.c.l.b16 %v7797
      %v8175 = vunpack.c.l.b16 %v7798
      %v8176 = vunpack.c.l.b16 %v7799
      %v8177 = vunpack.c.l.b16 %v7800
      %v8178 = vunpack.c.l.b16 %v7801
      %v8179 = vunpack.c.l.b16 %v7802
      %v8180 = vunpack.c.l.b16 %v7803
      %v8181 = vpack.c.b16 %v8057, %v8056
      %v8182 = vpack.c.b16 %v8059, %v8058
      %v8183 = vpack.c.b16 %v8061, %v8060
      %v8184 = vpack.c.b16 %v8063, %v8062
      %v8185 = vpack.c.b16 %v8065, %v8064
      %v8186 = vpack.c.b16 %v8067, %v8066
      %v8187 = vpack.c.b16 %v8069, %v8068
      %v8188 = vpack.c.b16 %v8071, %v8070
      %v8189 = vpack.c.b16 %v8073, %v8072
      %v8190 = vpack.c.b16 %v8075, %v8074
      %v8191 = vpack.c.b16 %v8077, %v8076
      %v8192 = vpack.c.b16 %v8079, %v8078
      %v8193 = vpack.c.b16 %v8081, %v8080
      %v8194 = vpack.c.b16 %v8083, %v8082
      %v8195 = vpack.c.b16 %v8085, %v8084
      %v8196 = vpack.c.b16 %v8087, %v8086
      %v8197 = vpack.c.b16 %v8089, %v8088
      %v8198 = vpack.c.b16 %v8091, %v8090
      %v8199 = vpack.c.b16 %v8093, %v8092
      %v8200 = vpack.c.b16 %v8095, %v8094
      %v8201 = vpack.c.b16 %v8097, %v8096
      %v8202 = vpack.c.b16 %v8099, %v8098
      %v8203 = vpack.c.b16 %v8101, %v8100
      %v8204 = vpack.c.b16 %v8103, %v8102
      %v8205 = vpack.c.b16 %v8105, %v8104
      %v8206 = vpack.c.b16 %v8107, %v8106
      %v8207 = vpack.c.b16 %v8109, %v8108
      %v8208 = vpack.c.b16 %v8111, %v8110
      %v8209 = vpack.c.b16 %v8113, %v8112
      %v8210 = vpack.c.b16 %v8115, %v8114
      %v8211 = vpack.c.b16 %v8117, %v8116
      %v8212 = vpack.c.b16 %v8119, %v8118
      %v8213 = vpack.c.b16 %v8121, %v8120
      %v8214 = vpack.c.b16 %v8123, %v8122
      %v8215 = vpack.c.b16 %v8125, %v8124
      %v8216 = vpack.c.b16 %v8127, %v8126
      %v8217 = vpack.c.b16 %v8129, %v8128
      %v8218 = vpack.c.b16 %v8131, %v8130
      %v8219 = vpack.c.b16 %v8133, %v8132
      %v8220 = vpack.c.b16 %v8135, %v8134
      %v8221 = vpack.c.b16 %v8137, %v8136
      %v8222 = vpack.c.b16 %v8139, %v8138
      %v8223 = vpack.c.b16 %v8141, %v8140
      %v8224 = vpack.c.b16 %v8143, %v8142
      %v8225 = vpack.c.b16 %v8145, %v8144
      %v8226 = vpack.c.b16 %v8147, %v8146
      %v8227 = vpack.c.b16 %v8149, %v8148
      %v8228 = vpack.c.b16 %v8151, %v8150
      %v8229 = vpack.c.b16 %v8153, %v8152
      %v8230 = vpack.c.b16 %v8155, %v8154
      %v8231 = vpack.c.b16 %v8157, %v8156
      %v8232 = vpack.c.b16 %v8159, %v8158
      %v8233 = vpack.c.b16 %v8161, %v8160
      %v8234 = vpack.c.b16 %v8163, %v8162
      %v8235 = vpack.c.b16 %v8165, %v8164
      %v8236 = vpack.c.b16 %v8167, %v8166
      %v8237 = vpack.c.b16 %v8169, %v8168
      %v8238 = vpack.c.b16 %v8171, %v8170
      %v8239 = vpack.c.b16 %v8173, %v8172
      %v8240 = vpack.c.b16 %v8175, %v8174
      %v8241 = vpack.c.b16 %v8177, %v8176
      %v8242 = vpack.c.b16 %v8179, %v8178
      %v8243 = vpack.c.b16 %v8180, %v8180
      %v8245 = vsel %vm867, %v8181, 0
      %v8248 = vsel %vm867, %v8182, 0
      %v8251 = vsel %vm867, %v8183, 0
      %v8254 = vsel %vm867, %v8184, 0
      %v8257 = vsel %vm867, %v8185, 0
      %v8260 = vsel %vm867, %v8186, 0
      %v8263 = vsel %vm867, %v8187, 0
      %v8266 = vsel %vm867, %v8188, 0
      %v8269 = vsel %vm867, %v8189, 0
      %v8272 = vsel %vm867, %v8190, 0
      %v8275 = vsel %vm867, %v8191, 0
      %v8278 = vsel %vm867, %v8192, 0
      %v8281 = vsel %vm867, %v8193, 0
      %v8284 = vsel %vm867, %v8194, 0
      %v8287 = vsel %vm867, %v8195, 0
      %v8290 = vsel %vm867, %v8196, 0
      %v8293 = vsel %vm867, %v8197, 0
      %v8296 = vsel %vm867, %v8198, 0
      %v8299 = vsel %vm867, %v8199, 0
      %v8302 = vsel %vm867, %v8200, 0
      %v8305 = vsel %vm867, %v8201, 0
      %v8308 = vsel %vm867, %v8202, 0
      %v8311 = vsel %vm867, %v8203, 0
      %v8314 = vsel %vm867, %v8204, 0
      %v8317 = vsel %vm867, %v8205, 0
      %v8320 = vsel %vm867, %v8206, 0
      %v8323 = vsel %vm867, %v8207, 0
      %v8326 = vsel %vm867, %v8208, 0
      %v8329 = vsel %vm867, %v8209, 0
      %v8332 = vsel %vm867, %v8210, 0
      %v8335 = vsel %vm867, %v8211, 0
      %v8338 = vsel %vm867, %v8212, 0
      %v8341 = vsel %vm867, %v8213, 0
      %v8344 = vsel %vm867, %v8214, 0
      %v8347 = vsel %vm867, %v8215, 0
      %v8350 = vsel %vm867, %v8216, 0
      %v8353 = vsel %vm867, %v8217, 0
      %v8356 = vsel %vm867, %v8218, 0
      %v8359 = vsel %vm867, %v8219, 0
      %v8362 = vsel %vm867, %v8220, 0
      %v8365 = vsel %vm867, %v8221, 0
      %v8368 = vsel %vm867, %v8222, 0
      %v8371 = vsel %vm867, %v8223, 0
      %v8374 = vsel %vm867, %v8224, 0
      %v8377 = vsel %vm867, %v8225, 0
      %v8380 = vsel %vm867, %v8226, 0
      %v8383 = vsel %vm867, %v8227, 0
      %v8386 = vsel %vm867, %v8228, 0
      %v8389 = vsel %vm867, %v8229, 0
      %v8392 = vsel %vm867, %v8230, 0
      %v8395 = vsel %vm867, %v8231, 0
      %v8398 = vsel %vm867, %v8232, 0
      %v8401 = vsel %vm867, %v8233, 0
      %v8404 = vsel %vm867, %v8234, 0
      %v8407 = vsel %vm867, %v8235, 0
      %v8410 = vsel %vm867, %v8236, 0
      %v8413 = vsel %vm867, %v8237, 0
      %v8416 = vsel %vm867, %v8238, 0
      %v8419 = vsel %vm867, %v8239, 0
      %v8422 = vsel %vm867, %v8240, 0
      %v8425 = vsel %vm867, %v8241, 0
      %v8428 = vsel %vm867, %v8242, 0
      %v8431 = vsel %vm867, %v8243, 0
      %8433 = vmatprep.subr.bf16.mxu0 0
      %8434 = vmatpush1.bf16.msra.mxu0 %v7804
      %8435 = vmatprep.subr.bf16.mxu0 0
      %8436 = vmatpush1.bf16.msra.mxu0 %v7805
      %8437 = vmatprep.subr.bf16.mxu0 0
      %8438 = vmatpush1.bf16.msra.mxu0 0
      %8439 = vmatprep.subr.bf16.mxu0 0
      %8440 = vmatpush1.bf16.msra.mxu0 0
      %8441 = vmatprep.subr.bf16.mxu0 0
      %8442 = vmatpush1.bf16.msra.mxu0 0
      %8443 = vmatprep.subr.bf16.mxu0 0
      %8444 = vmatpush1.bf16.msra.mxu0 0
      %8445 = vmatprep.subr.bf16.mxu0 0
      %8446 = vmatpush1.bf16.msra.mxu0 0
      %8447 = vmatprep.subr.bf16.mxu0 0
      %8448 = vmatpush1.bf16.msra.mxu0 0
      %8449 = vmatprep.subr.bf16.mxu0 0
      %8450 = vmatpush1.bf16.msra.mxu0 0
      %8451 = vmatprep.subr.bf16.mxu0 0
      %8452 = vmatpush1.bf16.msra.mxu0 0
      %8453 = vmatprep.subr.bf16.mxu0 0
      %8454 = vmatpush1.bf16.msra.mxu0 0
      %8455 = vmatprep.subr.bf16.mxu0 0
      %8456 = vmatpush1.bf16.msra.mxu0 0
      %8457 = vmatprep.subr.bf16.mxu0 0
      %8458 = vmatpush1.bf16.msra.mxu0 0
      %8459 = vmatprep.subr.bf16.mxu0 0
      %8460 = vmatpush1.bf16.msra.mxu0 0
      %8461 = vmatprep.subr.bf16.mxu0 0
      %8462 = vmatpush1.bf16.msra.mxu0 0
      %8463 = vmatprep.subr.bf16.mxu0 0
      %8464 = vmatpush1.bf16.msra.mxu0 0
      %8465 = vmatprep.mubr.bf16.mxu0 0
      %8466 = vmatmul.mubr.bf16.gmra.mrb[0].mxu0 %v8245
      %v8467 = vpop.f32.mrb[0].mxu0
      %v8468 = vadd.f32 %v7806, %v8467
      %v8469 = vpop.f32.mrb[0].mxu0
      %v8470 = vpop.f32.mrb[0].mxu0
      %v8471 = vadd.f32 %v7807, %v8470
      %v8472 = vpop.f32.mrb[0].mxu0
      %8473 = vmatprep.mubr.bf16.mxu0 0
      %8474 = vmatmul.mubr.bf16.gmra.mrb[0].mxu0 %v8248
      %v8475 = vpop.f32.mrb[0].mxu0
      %v8476 = vadd.f32 %v7808, %v8475
      %v8477 = vpop.f32.mrb[0].mxu0
      %v8478 = vpop.f32.mrb[0].mxu0
      %v8479 = vadd.f32 %v7809, %v8478
      %v8480 = vpop.f32.mrb[0].mxu0
      %8481 = vmatprep.mubr.bf16.mxu0 0
      %8482 = vmatmul.mubr.bf16.gmra.mrb[0].mxu0 %v8251
      %v8483 = vpop.f32.mrb[0].mxu0
      %v8484 = vadd.f32 %v7810, %v8483
      %v8485 = vpop.f32.mrb[0].mxu0
      %v8486 = vpop.f32.mrb[0].mxu0
      %v8487 = vadd.f32 %v7811, %v8486
      %v8488 = vpop.f32.mrb[0].mxu0
      %8489 = vmatprep.mubr.bf16.mxu0 0
      %8490 = vmatmul.mubr.bf16.gmra.mrb[0].mxu0 %v8254
      %v8491 = vpop.f32.mrb[0].mxu0
      %v8492 = vadd.f32 %v7812, %v8491
      %v8493 = vpop.f32.mrb[0].mxu0
      %v8494 = vpop.f32.mrb[0].mxu0
      %v8495 = vadd.f32 %v7813, %v8494
      %v8496 = vpop.f32.mrb[0].mxu0
      %8497 = vmatprep.mubr.bf16.mxu0 0
      %8498 = vmatmul.mubr.bf16.gmra.mrb[0].mxu0 %v8257
      %v8499 = vpop.f32.mrb[0].mxu0
      %v8500 = vadd.f32 %v7814, %v8499
      %v8501 = vpop.f32.mrb[0].mxu0
      %v8502 = vpop.f32.mrb[0].mxu0
      %v8503 = vadd.f32 %v7815, %v8502
      %v8504 = vpop.f32.mrb[0].mxu0
      %8505 = vmatprep.mubr.bf16.mxu0 0
      %8506 = vmatmul.mubr.bf16.gmra.mrb[0].mxu0 %v8260
      %v8507 = vpop.f32.mrb[0].mxu0
      %v8508 = vadd.f32 %v7816, %v8507
      %v8509 = vpop.f32.mrb[0].mxu0
      %v8510 = vpop.f32.mrb[0].mxu0
      %v8511 = vadd.f32 %v7817, %v8510
      %v8512 = vpop.f32.mrb[0].mxu0
      %8513 = vmatprep.mubr.bf16.mxu0 0
      %8514 = vmatmul.mubr.bf16.gmra.mrb[0].mxu0 %v8263
      %v8515 = vpop.f32.mrb[0].mxu0
      %v8516 = vadd.f32 %v7818, %v8515
      %v8517 = vpop.f32.mrb[0].mxu0
      %v8518 = vpop.f32.mrb[0].mxu0
      %v8519 = vadd.f32 %v7819, %v8518
      %v8520 = vpop.f32.mrb[0].mxu0
      %8521 = vmatprep.mubr.bf16.mxu0 0
      %8522 = vmatmul.mubr.bf16.gmra.mrb[0].mxu0 %v8266
      %v8523 = vpop.f32.mrb[0].mxu0
      %v8524 = vadd.f32 %v7820, %v8523
      %v8525 = vpop.f32.mrb[0].mxu0
      %v8526 = vpop.f32.mrb[0].mxu0
      %v8527 = vadd.f32 %v7821, %v8526
      %v8528 = vpop.f32.mrb[0].mxu0
      %8529 = vmatprep.mubr.bf16.mxu0 0
      %8530 = vmatmul.mubr.bf16.gmra.mrb[0].mxu0 %v8269
      %v8531 = vpop.f32.mrb[0].mxu0
      %v8532 = vadd.f32 %v7822, %v8531
      %v8533 = vpop.f32.mrb[0].mxu0
      %v8534 = vpop.f32.mrb[0].mxu0
      %v8535 = vadd.f32 %v7823, %v8534
      %v8536 = vpop.f32.mrb[0].mxu0
      %8537 = vmatprep.mubr.bf16.mxu0 0
      %8538 = vmatmul.mubr.bf16.gmra.mrb[0].mxu0 %v8272
      %v8539 = vpop.f32.mrb[0].mxu0
      %v8540 = vadd.f32 %v7824, %v8539
      %v8541 = vpop.f32.mrb[0].mxu0
      %v8542 = vpop.f32.mrb[0].mxu0
      %v8543 = vadd.f32 %v7825, %v8542
      %v8544 = vpop.f32.mrb[0].mxu0
      %8545 = vmatprep.mubr.bf16.mxu0 0
      %8546 = vmatmul.mubr.bf16.gmra.mrb[0].mxu0 %v8275
      %v8547 = vpop.f32.mrb[0].mxu0
      %v8548 = vadd.f32 %v7826, %v8547
      %v8549 = vpop.f32.mrb[0].mxu0
      %v8550 = vpop.f32.mrb[0].mxu0
      %v8551 = vadd.f32 %v7827, %v8550
      %v8552 = vpop.f32.mrb[0].mxu0
      %8553 = vmatprep.mubr.bf16.mxu0 0
      %8554 = vmatmul.mubr.bf16.gmra.mrb[0].mxu0 %v8278
      %v8555 = vpop.f32.mrb[0].mxu0
      %v8556 = vadd.f32 %v7828, %v8555
      %v8557 = vpop.f32.mrb[0].mxu0
      %v8558 = vpop.f32.mrb[0].mxu0
      %v8559 = vadd.f32 %v7829, %v8558
      %v8560 = vpop.f32.mrb[0].mxu0
      %8561 = vmatprep.mubr.bf16.mxu0 0
      %8562 = vmatmul.mubr.bf16.gmra.mrb[0].mxu0 %v8281
      %v8563 = vpop.f32.mrb[0].mxu0
      %v8564 = vadd.f32 %v7830, %v8563
      %v8565 = vpop.f32.mrb[0].mxu0
      %v8566 = vpop.f32.mrb[0].mxu0
      %v8567 = vadd.f32 %v7831, %v8566
      %v8568 = vpop.f32.mrb[0].mxu0
      %8569 = vmatprep.mubr.bf16.mxu0 0
      %8570 = vmatmul.mubr.bf16.gmra.mrb[0].mxu0 %v8284
      %v8571 = vpop.f32.mrb[0].mxu0
      %v8572 = vadd.f32 %v7832, %v8571
      %v8573 = vpop.f32.mrb[0].mxu0
      %v8574 = vpop.f32.mrb[0].mxu0
      %v8575 = vadd.f32 %v7833, %v8574
      %v8576 = vpop.f32.mrb[0].mxu0
      %8577 = vmatprep.mubr.bf16.mxu0 0
      %8578 = vmatmul.mubr.bf16.gmra.mrb[0].mxu0 %v8287
      %v8579 = vpop.f32.mrb[0].mxu0
      %v8580 = vadd.f32 %v7834, %v8579
      %v8581 = vpop.f32.mrb[0].mxu0
      %v8582 = vpop.f32.mrb[0].mxu0
      %v8583 = vadd.f32 %v7835, %v8582
      %v8584 = vpop.f32.mrb[0].mxu0
      %8585 = vmatprep.mubr.bf16.mxu0 0
      %8586 = vmatmul.mubr.bf16.gmra.mrb[0].mxu0 %v8290
      %v8587 = vpop.f32.mrb[0].mxu0
      %v8588 = vadd.f32 %v7836, %v8587
      %v8589 = vpop.f32.mrb[0].mxu0
      %v8590 = vpop.f32.mrb[0].mxu0
      %v8591 = vadd.f32 %v7837, %v8590
      %v8592 = vpop.f32.mrb[0].mxu0
      %8593 = vmatprep.mubr.bf16.mxu0 0
      %8594 = vmatmul.mubr.bf16.gmra.mrb[0].mxu0 %v8293
      %v8595 = vpop.f32.mrb[0].mxu0
      %v8596 = vadd.f32 %v7838, %v8595
      %v8597 = vpop.f32.mrb[0].mxu0
      %v8598 = vpop.f32.mrb[0].mxu0
      %v8599 = vadd.f32 %v7839, %v8598
      %v8600 = vpop.f32.mrb[0].mxu0
      %8601 = vmatprep.mubr.bf16.mxu0 0
      %8602 = vmatmul.mubr.bf16.gmra.mrb[0].mxu0 %v8296
      %v8603 = vpop.f32.mrb[0].mxu0
      %v8604 = vadd.f32 %v7840, %v8603
      %v8605 = vpop.f32.mrb[0].mxu0
      %v8606 = vpop.f32.mrb[0].mxu0
      %v8607 = vadd.f32 %v7841, %v8606
      %v8608 = vpop.f32.mrb[0].mxu0
      %8609 = vmatprep.mubr.bf16.mxu0 0
      %8610 = vmatmul.mubr.bf16.gmra.mrb[0].mxu0 %v8299
      %v8611 = vpop.f32.mrb[0].mxu0
      %v8612 = vadd.f32 %v7842, %v8611
      %v8613 = vpop.f32.mrb[0].mxu0
      %v8614 = vpop.f32.mrb[0].mxu0
      %v8615 = vadd.f32 %v7843, %v8614
      %v8616 = vpop.f32.mrb[0].mxu0
      %8617 = vmatprep.mubr.bf16.mxu0 0
      %8618 = vmatmul.mubr.bf16.gmra.mrb[0].mxu0 %v8302
      %v8619 = vpop.f32.mrb[0].mxu0
      %v8620 = vadd.f32 %v7844, %v8619
      %v8621 = vpop.f32.mrb[0].mxu0
      %v8622 = vpop.f32.mrb[0].mxu0
      %v8623 = vadd.f32 %v7845, %v8622
      %v8624 = vpop.f32.mrb[0].mxu0
      %8625 = vmatprep.mubr.bf16.mxu0 0
      %8626 = vmatmul.mubr.bf16.gmra.mrb[0].mxu0 %v8305
      %v8627 = vpop.f32.mrb[0].mxu0
      %v8628 = vadd.f32 %v7846, %v8627
      %v8629 = vpop.f32.mrb[0].mxu0
      %v8630 = vpop.f32.mrb[0].mxu0
      %v8631 = vadd.f32 %v7847, %v8630
      %v8632 = vpop.f32.mrb[0].mxu0
      %8633 = vmatprep.mubr.bf16.mxu0 0
      %8634 = vmatmul.mubr.bf16.gmra.mrb[0].mxu0 %v8308
      %v8635 = vpop.f32.mrb[0].mxu0
      %v8636 = vadd.f32 %v7848, %v8635
      %v8637 = vpop.f32.mrb[0].mxu0
      %v8638 = vpop.f32.mrb[0].mxu0
      %v8639 = vadd.f32 %v7849, %v8638
      %v8640 = vpop.f32.mrb[0].mxu0
      %8641 = vmatprep.mubr.bf16.mxu0 0
      %8642 = vmatmul.mubr.bf16.gmra.mrb[0].mxu0 %v8311
      %v8643 = vpop.f32.mrb[0].mxu0
      %v8644 = vadd.f32 %v7850, %v8643
      %v8645 = vpop.f32.mrb[0].mxu0
      %v8646 = vpop.f32.mrb[0].mxu0
      %v8647 = vadd.f32 %v7851, %v8646
      %v8648 = vpop.f32.mrb[0].mxu0
      %8649 = vmatprep.mubr.bf16.mxu0 0
      %8650 = vmatmul.mubr.bf16.gmra.mrb[0].mxu0 %v8314
      %v8651 = vpop.f32.mrb[0].mxu0
      %v8652 = vadd.f32 %v7852, %v8651
      %v8653 = vpop.f32.mrb[0].mxu0
      %v8654 = vpop.f32.mrb[0].mxu0
      %v8655 = vadd.f32 %v7853, %v8654
      %v8656 = vpop.f32.mrb[0].mxu0
      %8657 = vmatprep.mubr.bf16.mxu0 0
      %8658 = vmatmul.mubr.bf16.gmra.mrb[0].mxu0 %v8317
      %v8659 = vpop.f32.mrb[0].mxu0
      %v8660 = vadd.f32 %v7854, %v8659
      %v8661 = vpop.f32.mrb[0].mxu0
      %v8662 = vpop.f32.mrb[0].mxu0
      %v8663 = vadd.f32 %v7855, %v8662
      %v8664 = vpop.f32.mrb[0].mxu0
      %8665 = vmatprep.mubr.bf16.mxu0 0
      %8666 = vmatmul.mubr.bf16.gmra.mrb[0].mxu0 %v8320
      %v8667 = vpop.f32.mrb[0].mxu0
      %v8668 = vadd.f32 %v7856, %v8667
      %v8669 = vpop.f32.mrb[0].mxu0
      %v8670 = vpop.f32.mrb[0].mxu0
      %v8671 = vadd.f32 %v7857, %v8670
      %v8672 = vpop.f32.mrb[0].mxu0
      %8673 = vmatprep.mubr.bf16.mxu0 0
      %8674 = vmatmul.mubr.bf16.gmra.mrb[0].mxu0 %v8323
      %v8675 = vpop.f32.mrb[0].mxu0
      %v8676 = vadd.f32 %v7858, %v8675
      %v8677 = vpop.f32.mrb[0].mxu0
      %v8678 = vpop.f32.mrb[0].mxu0
      %v8679 = vadd.f32 %v7859, %v8678
      %v8680 = vpop.f32.mrb[0].mxu0
      %8681 = vmatprep.mubr.bf16.mxu0 0
      %8682 = vmatmul.mubr.bf16.gmra.mrb[0].mxu0 %v8326
      %v8683 = vpop.f32.mrb[0].mxu0
      %v8684 = vadd.f32 %v7860, %v8683
      %v8685 = vpop.f32.mrb[0].mxu0
      %v8686 = vpop.f32.mrb[0].mxu0
      %v8687 = vadd.f32 %v7861, %v8686
      %v8688 = vpop.f32.mrb[0].mxu0
      %8689 = vmatprep.mubr.bf16.mxu0 0
      %8690 = vmatmul.mubr.bf16.gmra.mrb[0].mxu0 %v8329
      %v8691 = vpop.f32.mrb[0].mxu0
      %v8692 = vadd.f32 %v7862, %v8691
      %v8693 = vpop.f32.mrb[0].mxu0
      %v8694 = vpop.f32.mrb[0].mxu0
      %v8695 = vadd.f32 %v7863, %v8694
      %v8696 = vpop.f32.mrb[0].mxu0
      %8697 = vmatprep.mubr.bf16.mxu0 0
      %8698 = vmatmul.mubr.bf16.gmra.mrb[0].mxu0 %v8332
      %v8699 = vpop.f32.mrb[0].mxu0
      %v8700 = vadd.f32 %v7864, %v8699
      %v8701 = vpop.f32.mrb[0].mxu0
      %v8702 = vpop.f32.mrb[0].mxu0
      %v8703 = vadd.f32 %v7865, %v8702
      %v8704 = vpop.f32.mrb[0].mxu0
      %8705 = vmatprep.mubr.bf16.mxu0 0
      %8706 = vmatmul.mubr.bf16.gmra.mrb[0].mxu0 %v8335
      %v8707 = vpop.f32.mrb[0].mxu0
      %v8708 = vadd.f32 %v7866, %v8707
      %v8709 = vpop.f32.mrb[0].mxu0
      %v8710 = vpop.f32.mrb[0].mxu0
      %v8711 = vadd.f32 %v7867, %v8710
      %v8712 = vpop.f32.mrb[0].mxu0
      %8713 = vmatprep.mubr.bf16.mxu0 0
      %8714 = vmatmul.mubr.bf16.gmra.mrb[0].mxu0 %v8338
      %v8715 = vpop.f32.mrb[0].mxu0
      %v8716 = vadd.f32 %v7868, %v8715
      %v8717 = vpop.f32.mrb[0].mxu0
      %v8718 = vpop.f32.mrb[0].mxu0
      %v8719 = vadd.f32 %v7869, %v8718
      %v8720 = vpop.f32.mrb[0].mxu0
      %8721 = vmatprep.mubr.bf16.mxu0 0
      %8722 = vmatmul.mubr.bf16.gmra.mrb[0].mxu0 %v8341
      %v8723 = vpop.f32.mrb[0].mxu0
      %v8724 = vadd.f32 %v7870, %v8723
      %v8725 = vpop.f32.mrb[0].mxu0
      %v8726 = vpop.f32.mrb[0].mxu0
      %v8727 = vadd.f32 %v7871, %v8726
      %v8728 = vpop.f32.mrb[0].mxu0
      %8729 = vmatprep.mubr.bf16.mxu0 0
      %8730 = vmatmul.mubr.bf16.gmra.mrb[0].mxu0 %v8344
      %v8731 = vpop.f32.mrb[0].mxu0
      %v8732 = vadd.f32 %v7872, %v8731
      %v8733 = vpop.f32.mrb[0].mxu0
      %v8734 = vpop.f32.mrb[0].mxu0
      %v8735 = vadd.f32 %v7873, %v8734
      %v8736 = vpop.f32.mrb[0].mxu0
      %8737 = vmatprep.mubr.bf16.mxu0 0
      %8738 = vmatmul.mubr.bf16.gmra.mrb[0].mxu0 %v8347
      %v8739 = vpop.f32.mrb[0].mxu0
      %v8740 = vadd.f32 %v7874, %v8739
      %v8741 = vpop.f32.mrb[0].mxu0
      %v8742 = vpop.f32.mrb[0].mxu0
      %v8743 = vadd.f32 %v7875, %v8742
      %v8744 = vpop.f32.mrb[0].mxu0
      %8745 = vmatprep.mubr.bf16.mxu0 0
      %8746 = vmatmul.mubr.bf16.gmra.mrb[0].mxu0 %v8350
      %v8747 = vpop.f32.mrb[0].mxu0
      %v8748 = vadd.f32 %v7876, %v8747
      %v8749 = vpop.f32.mrb[0].mxu0
      %v8750 = vpop.f32.mrb[0].mxu0
      %v8751 = vadd.f32 %v7877, %v8750
      %v8752 = vpop.f32.mrb[0].mxu0
      %8753 = vmatprep.mubr.bf16.mxu0 0
      %8754 = vmatmul.mubr.bf16.gmra.mrb[0].mxu0 %v8353
      %v8755 = vpop.f32.mrb[0].mxu0
      %v8756 = vadd.f32 %v7878, %v8755
      %v8757 = vpop.f32.mrb[0].mxu0
      %v8758 = vpop.f32.mrb[0].mxu0
      %v8759 = vadd.f32 %v7879, %v8758
      %v8760 = vpop.f32.mrb[0].mxu0
      %8761 = vmatprep.mubr.bf16.mxu0 0
      %8762 = vmatmul.mubr.bf16.gmra.mrb[0].mxu0 %v8356
      %v8763 = vpop.f32.mrb[0].mxu0
      %v8764 = vadd.f32 %v7880, %v8763
      %v8765 = vpop.f32.mrb[0].mxu0
      %v8766 = vpop.f32.mrb[0].mxu0
      %v8767 = vadd.f32 %v7881, %v8766
      %v8768 = vpop.f32.mrb[0].mxu0
      %8769 = vmatprep.mubr.bf16.mxu0 0
      %8770 = vmatmul.mubr.bf16.gmra.mrb[0].mxu0 %v8359
      %v8771 = vpop.f32.mrb[0].mxu0
      %v8772 = vadd.f32 %v7882, %v8771
      %v8773 = vpop.f32.mrb[0].mxu0
      %v8774 = vpop.f32.mrb[0].mxu0
      %v8775 = vadd.f32 %v7883, %v8774
      %v8776 = vpop.f32.mrb[0].mxu0
      %8777 = vmatprep.mubr.bf16.mxu0 0
      %8778 = vmatmul.mubr.bf16.gmra.mrb[0].mxu0 %v8362
      %v8779 = vpop.f32.mrb[0].mxu0
      %v8780 = vadd.f32 %v7884, %v8779
      %v8781 = vpop.f32.mrb[0].mxu0
      %v8782 = vpop.f32.mrb[0].mxu0
      %v8783 = vadd.f32 %v7885, %v8782
      %v8784 = vpop.f32.mrb[0].mxu0
      %8785 = vmatprep.mubr.bf16.mxu0 0
      %8786 = vmatmul.mubr.bf16.gmra.mrb[0].mxu0 %v8365
      %v8787 = vpop.f32.mrb[0].mxu0
      %v8788 = vadd.f32 %v7886, %v8787
      %v8789 = vpop.f32.mrb[0].mxu0
      %v8790 = vpop.f32.mrb[0].mxu0
      %v8791 = vadd.f32 %v7887, %v8790
      %v8792 = vpop.f32.mrb[0].mxu0
      %8793 = vmatprep.mubr.bf16.mxu0 0
      %8794 = vmatmul.mubr.bf16.gmra.mrb[0].mxu0 %v8368
      %v8795 = vpop.f32.mrb[0].mxu0
      %v8796 = vadd.f32 %v7888, %v8795
      %v8797 = vpop.f32.mrb[0].mxu0
      %v8798 = vpop.f32.mrb[0].mxu0
      %v8799 = vadd.f32 %v7889, %v8798
      %v8800 = vpop.f32.mrb[0].mxu0
      %8801 = vmatprep.mubr.bf16.mxu0 0
      %8802 = vmatmul.mubr.bf16.gmra.mrb[0].mxu0 %v8371
      %v8803 = vpop.f32.mrb[0].mxu0
      %v8804 = vadd.f32 %v7890, %v8803
      %v8805 = vpop.f32.mrb[0].mxu0
      %v8806 = vpop.f32.mrb[0].mxu0
      %v8807 = vadd.f32 %v7891, %v8806
      %v8808 = vpop.f32.mrb[0].mxu0
      %8809 = vmatprep.mubr.bf16.mxu0 0
      %8810 = vmatmul.mubr.bf16.gmra.mrb[0].mxu0 %v8374
      %v8811 = vpop.f32.mrb[0].mxu0
      %v8812 = vadd.f32 %v7892, %v8811
      %v8813 = vpop.f32.mrb[0].mxu0
      %v8814 = vpop.f32.mrb[0].mxu0
      %v8815 = vadd.f32 %v7893, %v8814
      %v8816 = vpop.f32.mrb[0].mxu0
      %8817 = vmatprep.mubr.bf16.mxu0 0
      %8818 = vmatmul.mubr.bf16.gmra.mrb[0].mxu0 %v8377
      %v8819 = vpop.f32.mrb[0].mxu0
      %v8820 = vadd.f32 %v7894, %v8819
      %v8821 = vpop.f32.mrb[0].mxu0
      %v8822 = vpop.f32.mrb[0].mxu0
      %v8823 = vadd.f32 %v7895, %v8822
      %v8824 = vpop.f32.mrb[0].mxu0
      %8825 = vmatprep.mubr.bf16.mxu0 0
      %8826 = vmatmul.mubr.bf16.gmra.mrb[0].mxu0 %v8380
      %v8827 = vpop.f32.mrb[0].mxu0
      %v8828 = vadd.f32 %v7896, %v8827
      %v8829 = vpop.f32.mrb[0].mxu0
      %v8830 = vpop.f32.mrb[0].mxu0
      %v8831 = vadd.f32 %v7897, %v8830
      %v8832 = vpop.f32.mrb[0].mxu0
      %8833 = vmatprep.mubr.bf16.mxu0 0
      %8834 = vmatmul.mubr.bf16.gmra.mrb[0].mxu0 %v8383
      %v8835 = vpop.f32.mrb[0].mxu0
      %v8836 = vadd.f32 %v7898, %v8835
      %v8837 = vpop.f32.mrb[0].mxu0
      %v8838 = vpop.f32.mrb[0].mxu0
      %v8839 = vadd.f32 %v7899, %v8838
      %v8840 = vpop.f32.mrb[0].mxu0
      %8841 = vmatprep.mubr.bf16.mxu0 0
      %8842 = vmatmul.mubr.bf16.gmra.mrb[0].mxu0 %v8386
      %v8843 = vpop.f32.mrb[0].mxu0
      %v8844 = vadd.f32 %v7900, %v8843
      %v8845 = vpop.f32.mrb[0].mxu0
      %v8846 = vpop.f32.mrb[0].mxu0
      %v8847 = vadd.f32 %v7901, %v8846
      %v8848 = vpop.f32.mrb[0].mxu0
      %8849 = vmatprep.mubr.bf16.mxu0 0
      %8850 = vmatmul.mubr.bf16.gmra.mrb[0].mxu0 %v8389
      %v8851 = vpop.f32.mrb[0].mxu0
      %v8852 = vadd.f32 %v7902, %v8851
      %v8853 = vpop.f32.mrb[0].mxu0
      %v8854 = vpop.f32.mrb[0].mxu0
      %v8855 = vadd.f32 %v7903, %v8854
      %v8856 = vpop.f32.mrb[0].mxu0
      %8857 = vmatprep.mubr.bf16.mxu0 0
      %8858 = vmatmul.mubr.bf16.gmra.mrb[0].mxu0 %v8392
      %v8859 = vpop.f32.mrb[0].mxu0
      %v8860 = vadd.f32 %v7904, %v8859
      %v8861 = vpop.f32.mrb[0].mxu0
      %v8862 = vpop.f32.mrb[0].mxu0
      %v8863 = vadd.f32 %v7905, %v8862
      %v8864 = vpop.f32.mrb[0].mxu0
      %8865 = vmatprep.mubr.bf16.mxu0 0
      %8866 = vmatmul.mubr.bf16.gmra.mrb[0].mxu0 %v8395
      %v8867 = vpop.f32.mrb[0].mxu0
      %v8868 = vadd.f32 %v7906, %v8867
      %v8869 = vpop.f32.mrb[0].mxu0
      %v8870 = vpop.f32.mrb[0].mxu0
      %v8871 = vadd.f32 %v7907, %v8870
      %v8872 = vpop.f32.mrb[0].mxu0
      %8873 = vmatprep.mubr.bf16.mxu0 0
      %8874 = vmatmul.mubr.bf16.gmra.mrb[0].mxu0 %v8398
      %v8875 = vpop.f32.mrb[0].mxu0
      %v8876 = vadd.f32 %v7908, %v8875
      %v8877 = vpop.f32.mrb[0].mxu0
      %v8878 = vpop.f32.mrb[0].mxu0
      %v8879 = vadd.f32 %v7909, %v8878
      %v8880 = vpop.f32.mrb[0].mxu0
      %8881 = vmatprep.mubr.bf16.mxu0 0
      %8882 = vmatmul.mubr.bf16.gmra.mrb[0].mxu0 %v8401
      %v8883 = vpop.f32.mrb[0].mxu0
      %v8884 = vadd.f32 %v7910, %v8883
      %v8885 = vpop.f32.mrb[0].mxu0
      %v8886 = vpop.f32.mrb[0].mxu0
      %v8887 = vadd.f32 %v7911, %v8886
      %v8888 = vpop.f32.mrb[0].mxu0
      %8889 = vmatprep.mubr.bf16.mxu0 0
      %8890 = vmatmul.mubr.bf16.gmra.mrb[0].mxu0 %v8404
      %v8891 = vpop.f32.mrb[0].mxu0
      %v8892 = vadd.f32 %v7912, %v8891
      %v8893 = vpop.f32.mrb[0].mxu0
      %v8894 = vpop.f32.mrb[0].mxu0
      %v8895 = vadd.f32 %v7913, %v8894
      %v8896 = vpop.f32.mrb[0].mxu0
      %8897 = vmatprep.mubr.bf16.mxu0 0
      %8898 = vmatmul.mubr.bf16.gmra.mrb[0].mxu0 %v8407
      %v8899 = vpop.f32.mrb[0].mxu0
      %v8900 = vadd.f32 %v7914, %v8899
      %v8901 = vpop.f32.mrb[0].mxu0
      %v8902 = vpop.f32.mrb[0].mxu0
      %v8903 = vadd.f32 %v7915, %v8902
      %v8904 = vpop.f32.mrb[0].mxu0
      %8905 = vmatprep.mubr.bf16.mxu0 0
      %8906 = vmatmul.mubr.bf16.gmra.mrb[0].mxu0 %v8410
      %v8907 = vpop.f32.mrb[0].mxu0
      %v8908 = vadd.f32 %v7916, %v8907
      %v8909 = vpop.f32.mrb[0].mxu0
      %v8910 = vpop.f32.mrb[0].mxu0
      %v8911 = vadd.f32 %v7917, %v8910
      %v8912 = vpop.f32.mrb[0].mxu0
      %8913 = vmatprep.mubr.bf16.mxu0 0
      %8914 = vmatmul.mubr.bf16.gmra.mrb[0].mxu0 %v8413
      %v8915 = vpop.f32.mrb[0].mxu0
      %v8916 = vadd.f32 %v7918, %v8915
      %v8917 = vpop.f32.mrb[0].mxu0
      %v8918 = vpop.f32.mrb[0].mxu0
      %v8919 = vadd.f32 %v7919, %v8918
      %v8920 = vpop.f32.mrb[0].mxu0
      %8921 = vmatprep.mubr.bf16.mxu0 0
      %8922 = vmatmul.mubr.bf16.gmra.mrb[0].mxu0 %v8416
      %v8923 = vpop.f32.mrb[0].mxu0
      %v8924 = vadd.f32 %v7920, %v8923
      %v8925 = vpop.f32.mrb[0].mxu0
      %v8926 = vpop.f32.mrb[0].mxu0
      %v8927 = vadd.f32 %v7921, %v8926
      %v8928 = vpop.f32.mrb[0].mxu0
      %8929 = vmatprep.mubr.bf16.mxu0 0
      %8930 = vmatmul.mubr.bf16.gmra.mrb[0].mxu0 %v8419
      %v8931 = vpop.f32.mrb[0].mxu0
      %v8932 = vadd.f32 %v7922, %v8931
      %v8933 = vpop.f32.mrb[0].mxu0
      %v8934 = vpop.f32.mrb[0].mxu0
      %v8935 = vadd.f32 %v7923, %v8934
      %v8936 = vpop.f32.mrb[0].mxu0
      %8937 = vmatprep.mubr.bf16.mxu0 0
      %8938 = vmatmul.mubr.bf16.gmra.mrb[0].mxu0 %v8422
      %v8939 = vpop.f32.mrb[0].mxu0
      %v8940 = vadd.f32 %v7924, %v8939
      %v8941 = vpop.f32.mrb[0].mxu0
      %v8942 = vpop.f32.mrb[0].mxu0
      %v8943 = vadd.f32 %v7925, %v8942
      %v8944 = vpop.f32.mrb[0].mxu0
      %8945 = vmatprep.mubr.bf16.mxu0 0
      %8946 = vmatmul.mubr.bf16.gmra.mrb[0].mxu0 %v8425
      %v8947 = vpop.f32.mrb[0].mxu0
      %v8948 = vadd.f32 %v7926, %v8947
      %v8949 = vpop.f32.mrb[0].mxu0
      %v8950 = vpop.f32.mrb[0].mxu0
      %v8951 = vadd.f32 %v7927, %v8950
      %v8952 = vpop.f32.mrb[0].mxu0
      %8953 = vmatprep.mubr.bf16.mxu0 0
      %8954 = vmatmul.mubr.bf16.gmra.mrb[0].mxu0 %v8428
      %v8955 = vpop.f32.mrb[0].mxu0
      %v8956 = vadd.f32 %v7928, %v8955
      %v8957 = vpop.f32.mrb[0].mxu0
      %v8958 = vpop.f32.mrb[0].mxu0
      %v8959 = vadd.f32 %v7929, %v8958
      %v8960 = vpop.f32.mrb[0].mxu0
      %8961 = vmatprep.mubr.bf16.mxu0 0
      %8962 = vmatmul.mubr.bf16.gmra.mrb[0].mxu0 %v8431
      %v8963 = vpop.f32.mrb[0].mxu0
      %v8964 = vadd.f32 %v7930, %v8963
      %v8965 = vpop.f32.mrb[0].mxu0
      %v8966 = vpop.f32.mrb[0].mxu0
      %v8967 = vpop.f32.mrb[0].mxu0
      %8968 = vdwg.mxu0
      %vm8969 = vcmask 7168
      %8970 = vst.msk [vmem:[%s737] sm:$0xff] %vm8969, %v8468
      %8971 = vst.msk [vmem:[%s737 + $0x8] sm:$0xff] %vm8969, %v8471
      %8972 = vst.msk [vmem:[%s737 + $0x10] sm:$0xff] %vm8969, %v8476
      %8973 = vst.msk [vmem:[%s737 + $0x18] sm:$0xff] %vm8969, %v8479
      %8974 = vst.msk [vmem:[%s737 + $0x20] sm:$0xff] %vm8969, %v8484
      %8975 = vst.msk [vmem:[%s737 + $0x28] sm:$0xff] %vm8969, %v8487
      %8976 = vst.msk [vmem:[%s737 + $0x30] sm:$0xff] %vm8969, %v8492
      %8977 = vst.msk [vmem:[%s737 + $0x38] sm:$0xff] %vm8969, %v8495
      %8978 = vst.msk [vmem:[%s737 + $0x40] sm:$0xff] %vm8969, %v8500
      %8979 = vst.msk [vmem:[%s737 + $0x48] sm:$0xff] %vm8969, %v8503
      %8980 = vst.msk [vmem:[%s737 + $0x50] sm:$0xff] %vm8969, %v8508
      %8981 = vst.msk [vmem:[%s737 + $0x58] sm:$0xff] %vm8969, %v8511
      %8982 = vst.msk [vmem:[%s737 + $0x60] sm:$0xff] %vm8969, %v8516
      %8983 = vst.msk [vmem:[%s737 + $0x68] sm:$0xff] %vm8969, %v8519
      %8984 = vst.msk [vmem:[%s737 + $0x70] sm:$0xff] %vm8969, %v8524
      %8985 = vst.msk [vmem:[%s737 + $0x78] sm:$0xff] %vm8969, %v8527
      %8986 = vst.msk [vmem:[%s737 + $0x80] sm:$0xff] %vm8969, %v8532
      %8987 = vst.msk [vmem:[%s737 + $0x88] sm:$0xff] %vm8969, %v8535
      %8988 = vst.msk [vmem:[%s737 + $0x90] sm:$0xff] %vm8969, %v8540
      %8989 = vst.msk [vmem:[%s737 + $0x98] sm:$0xff] %vm8969, %v8543
      %8990 = vst.msk [vmem:[%s737 + $0xa0] sm:$0xff] %vm8969, %v8548
      %8991 = vst.msk [vmem:[%s737 + $0xa8] sm:$0xff] %vm8969, %v8551
      %8992 = vst.msk [vmem:[%s737 + $0xb0] sm:$0xff] %vm8969, %v8556
      %8993 = vst.msk [vmem:[%s737 + $0xb8] sm:$0xff] %vm8969, %v8559
      %8994 = vst.msk [vmem:[%s737 + $0xc0] sm:$0xff] %vm8969, %v8564
      %8995 = vst.msk [vmem:[%s737 + $0xc8] sm:$0xff] %vm8969, %v8567
      %8996 = vst.msk [vmem:[%s737 + $0xd0] sm:$0xff] %vm8969, %v8572
      %8997 = vst.msk [vmem:[%s737 + $0xd8] sm:$0xff] %vm8969, %v8575
      %8998 = vst.msk [vmem:[%s737 + $0xe0] sm:$0xff] %vm8969, %v8580
      %8999 = vst.msk [vmem:[%s737 + $0xe8] sm:$0xff] %vm8969, %v8583
      %9000 = vst.msk [vmem:[%s737 + $0xf0] sm:$0xff] %vm8969, %v8588
      %9001 = vst.msk [vmem:[%s737 + $0xf8] sm:$0xff] %vm8969, %v8591
      %9002 = vst.msk [vmem:[%s737 + $0x100] sm:$0xff] %vm8969, %v8596
      %9003 = vst.msk [vmem:[%s737 + $0x108] sm:$0xff] %vm8969, %v8599
      %9004 = vst.msk [vmem:[%s737 + $0x110] sm:$0xff] %vm8969, %v8604
      %9005 = vst.msk [vmem:[%s737 + $0x118] sm:$0xff] %vm8969, %v8607
      %9006 = vst.msk [vmem:[%s737 + $0x120] sm:$0xff] %vm8969, %v8612
      %9007 = vst.msk [vmem:[%s737 + $0x128] sm:$0xff] %vm8969, %v8615
      %9008 = vst.msk [vmem:[%s737 + $0x130] sm:$0xff] %vm8969, %v8620
      %9009 = vst.msk [vmem:[%s737 + $0x138] sm:$0xff] %vm8969, %v8623
      %9010 = vst.msk [vmem:[%s737 + $0x140] sm:$0xff] %vm8969, %v8628
      %9011 = vst.msk [vmem:[%s737 + $0x148] sm:$0xff] %vm8969, %v8631
      %9012 = vst.msk [vmem:[%s737 + $0x150] sm:$0xff] %vm8969, %v8636
      %9013 = vst.msk [vmem:[%s737 + $0x158] sm:$0xff] %vm8969, %v8639
      %9014 = vst.msk [vmem:[%s737 + $0x160] sm:$0xff] %vm8969, %v8644
      %9015 = vst.msk [vmem:[%s737 + $0x168] sm:$0xff] %vm8969, %v8647
      %9016 = vst.msk [vmem:[%s737 + $0x170] sm:$0xff] %vm8969, %v8652
      %9017 = vst.msk [vmem:[%s737 + $0x178] sm:$0xff] %vm8969, %v8655
      %9018 = vst.msk [vmem:[%s737 + $0x180] sm:$0xff] %vm8969, %v8660
      %9019 = vst.msk [vmem:[%s737 + $0x188] sm:$0xff] %vm8969, %v8663
      %9020 = vst.msk [vmem:[%s737 + $0x190] sm:$0xff] %vm8969, %v8668
      %9021 = vst.msk [vmem:[%s737 + $0x198] sm:$0xff] %vm8969, %v8671
      %9022 = vst.msk [vmem:[%s737 + $0x1a0] sm:$0xff] %vm8969, %v8676
      %9023 = vst.msk [vmem:[%s737 + $0x1a8] sm:$0xff] %vm8969, %v8679
      %9024 = vst.msk [vmem:[%s737 + $0x1b0] sm:$0xff] %vm8969, %v8684
      %9025 = vst.msk [vmem:[%s737 + $0x1b8] sm:$0xff] %vm8969, %v8687
      %9026 = vst.msk [vmem:[%s737 + $0x1c0] sm:$0xff] %vm8969, %v8692
      %9027 = vst.msk [vmem:[%s737 + $0x1c8] sm:$0xff] %vm8969, %v8695
      %9028 = vst.msk [vmem:[%s737 + $0x1d0] sm:$0xff] %vm8969, %v8700
      %9029 = vst.msk [vmem:[%s737 + $0x1d8] sm:$0xff] %vm8969, %v8703
      %9030 = vst.msk [vmem:[%s737 + $0x1e0] sm:$0xff] %vm8969, %v8708
      %9031 = vst.msk [vmem:[%s737 + $0x1e8] sm:$0xff] %vm8969, %v8711
      %9032 = vst.msk [vmem:[%s737 + $0x1f0] sm:$0xff] %vm8969, %v8716
      %9033 = vst.msk [vmem:[%s737 + $0x1f8] sm:$0xff] %vm8969, %v8719
      %9034 = vst.msk [vmem:[%s737 + $0x200] sm:$0xff] %vm8969, %v8724
      %9035 = vst.msk [vmem:[%s737 + $0x208] sm:$0xff] %vm8969, %v8727
      %9036 = vst.msk [vmem:[%s737 + $0x210] sm:$0xff] %vm8969, %v8732
      %9037 = vst.msk [vmem:[%s737 + $0x218] sm:$0xff] %vm8969, %v8735
      %9038 = vst.msk [vmem:[%s737 + $0x220] sm:$0xff] %vm8969, %v8740
      %9039 = vst.msk [vmem:[%s737 + $0x228] sm:$0xff] %vm8969, %v8743
      %9040 = vst.msk [vmem:[%s737 + $0x230] sm:$0xff] %vm8969, %v8748
      %9041 = vst.msk [vmem:[%s737 + $0x238] sm:$0xff] %vm8969, %v8751
      %9042 = vst.msk [vmem:[%s737 + $0x240] sm:$0xff] %vm8969, %v8756
      %9043 = vst.msk [vmem:[%s737 + $0x248] sm:$0xff] %vm8969, %v8759
      %9044 = vst.msk [vmem:[%s737 + $0x250] sm:$0xff] %vm8969, %v8764
      %9045 = vst.msk [vmem:[%s737 + $0x258] sm:$0xff] %vm8969, %v8767
      %9046 = vst.msk [vmem:[%s737 + $0x260] sm:$0xff] %vm8969, %v8772
      %9047 = vst.msk [vmem:[%s737 + $0x268] sm:$0xff] %vm8969, %v8775
      %9048 = vst.msk [vmem:[%s737 + $0x270] sm:$0xff] %vm8969, %v8780
      %9049 = vst.msk [vmem:[%s737 + $0x278] sm:$0xff] %vm8969, %v8783
      %9050 = vst.msk [vmem:[%s737 + $0x280] sm:$0xff] %vm8969, %v8788
      %9051 = vst.msk [vmem:[%s737 + $0x288] sm:$0xff] %vm8969, %v8791
      %9052 = vst.msk [vmem:[%s737 + $0x290] sm:$0xff] %vm8969, %v8796
      %9053 = vst.msk [vmem:[%s737 + $0x298] sm:$0xff] %vm8969, %v8799
      %9054 = vst.msk [vmem:[%s737 + $0x2a0] sm:$0xff] %vm8969, %v8804
      %9055 = vst.msk [vmem:[%s737 + $0x2a8] sm:$0xff] %vm8969, %v8807
      %9056 = vst.msk [vmem:[%s737 + $0x2b0] sm:$0xff] %vm8969, %v8812
      %9057 = vst.msk [vmem:[%s737 + $0x2b8] sm:$0xff] %vm8969, %v8815
      %9058 = vst.msk [vmem:[%s737 + $0x2c0] sm:$0xff] %vm8969, %v8820
      %9059 = vst.msk [vmem:[%s737 + $0x2c8] sm:$0xff] %vm8969, %v8823
      %9060 = vst.msk [vmem:[%s737 + $0x2d0] sm:$0xff] %vm8969, %v8828
      %9061 = vst.msk [vmem:[%s737 + $0x2d8] sm:$0xff] %vm8969, %v8831
      %9062 = vst.msk [vmem:[%s737 + $0x2e0] sm:$0xff] %vm8969, %v8836
      %9063 = vst.msk [vmem:[%s737 + $0x2e8] sm:$0xff] %vm8969, %v8839
      %9064 = vst.msk [vmem:[%s737 + $0x2f0] sm:$0xff] %vm8969, %v8844
      %9065 = vst.msk [vmem:[%s737 + $0x2f8] sm:$0xff] %vm8969, %v8847
      %9066 = vst.msk [vmem:[%s737 + $0x300] sm:$0xff] %vm8969, %v8852
      %9067 = vst.msk [vmem:[%s737 + $0x308] sm:$0xff] %vm8969, %v8855
      %9068 = vst.msk [vmem:[%s737 + $0x310] sm:$0xff] %vm8969, %v8860
      %9069 = vst.msk [vmem:[%s737 + $0x318] sm:$0xff] %vm8969, %v8863
      %9070 = vst.msk [vmem:[%s737 + $0x320] sm:$0xff] %vm8969, %v8868
      %9071 = vst.msk [vmem:[%s737 + $0x328] sm:$0xff] %vm8969, %v8871
      %9072 = vst.msk [vmem:[%s737 + $0x330] sm:$0xff] %vm8969, %v8876
      %9073 = vst.msk [vmem:[%s737 + $0x338] sm:$0xff] %vm8969, %v8879
      %9074 = vst.msk [vmem:[%s737 + $0x340] sm:$0xff] %vm8969, %v8884
      %9075 = vst.msk [vmem:[%s737 + $0x348] sm:$0xff] %vm8969, %v8887
      %9076 = vst.msk [vmem:[%s737 + $0x350] sm:$0xff] %vm8969, %v8892
      %9077 = vst.msk [vmem:[%s737 + $0x358] sm:$0xff] %vm8969, %v8895
      %9078 = vst.msk [vmem:[%s737 + $0x360] sm:$0xff] %vm8969, %v8900
      %9079 = vst.msk [vmem:[%s737 + $0x368] sm:$0xff] %vm8969, %v8903
      %9080 = vst.msk [vmem:[%s737 + $0x370] sm:$0xff] %vm8969, %v8908
      %9081 = vst.msk [vmem:[%s737 + $0x378] sm:$0xff] %vm8969, %v8911
      %9082 = vst.msk [vmem:[%s737 + $0x380] sm:$0xff] %vm8969, %v8916
      %9083 = vst.msk [vmem:[%s737 + $0x388] sm:$0xff] %vm8969, %v8919
      %9084 = vst.msk [vmem:[%s737 + $0x390] sm:$0xff] %vm8969, %v8924
      %9085 = vst.msk [vmem:[%s737 + $0x398] sm:$0xff] %vm8969, %v8927
      %9086 = vst.msk [vmem:[%s737 + $0x3a0] sm:$0xff] %vm8969, %v8932
      %9087 = vst.msk [vmem:[%s737 + $0x3a8] sm:$0xff] %vm8969, %v8935
      %9088 = vst.msk [vmem:[%s737 + $0x3b0] sm:$0xff] %vm8969, %v8940
      %9089 = vst.msk [vmem:[%s737 + $0x3b8] sm:$0xff] %vm8969, %v8943
      %9090 = vst.msk [vmem:[%s737 + $0x3c0] sm:$0xff] %vm8969, %v8948
      %9091 = vst.msk [vmem:[%s737 + $0x3c8] sm:$0xff] %vm8969, %v8951
      %9092 = vst.msk [vmem:[%s737 + $0x3d0] sm:$0xff] %vm8969, %v8956
      %9093 = vst.msk [vmem:[%s737 + $0x3d8] sm:$0xff] %vm8969, %v8959
      %9094 = vst.msk [vmem:[%s737 + $0x3e0] sm:$0xff] %vm8969, %v8964
      %p9095 = scmp.lt.s32.totalorder %s35, 1
      %s9096 = scalar_select %p9095, %s35, 1
      %s9097 = smul.addr %s9096, 125
      %s9098 = smul.addr %s9097, 8
      %s9099 = scalar_lea.vmem %s24, %s9098
      // Predicated region
      $region117: #{forward.1} parent=115 // pred_check
        %p9100 = pneg %p562
      $region118: #{forward.1} parent=115 // pred_check_branch
        %9102 = sbr.rel (%p9100) target = $region120
      $region119: #{forward.1} parent=115 // pred_region
        _
      $region120: #{forward.1} parent=115 // pred_fallthru
        _
    $region116: #{forward.1} parent=5 // pred_fallthru
      _
    %p9103 = scmp.le.s32.totalorder 2, %s30
    // Predicated region
    $region121: #{forward.1} parent=5 // pred_check
      %p9104 = pneg %p9103
    $region122: #{forward.1} parent=5 // pred_check_branch
      %9106 = sbr.rel (%p9104) target = $region124
    $region123: #{forward.1} parent=5 // pred_region
      %s9107 = ssub.s32 %s30, 2
      // Predicated region
      $region125: #{forward.1} parent=123 // pred_check
        %p9108 = pneg %p568
      $region126: #{forward.1} parent=123 // pred_check_branch
        %9110 = sbr.rel (%p9108) target = $region128
      $region127: #{forward.1} parent=123 // pred_region
        %p9111 = scmp.lt.s32.totalorder %s36, 1
        %s9112 = scalar_select %p9111, %s36, 1
        %s9113 = smul.addr %s9112, 125
        %s9114 = smul.addr %s9113, 8
        %s9115 = scalar_lea.vmem %s24, %s9114
      $region128: #{forward.1} parent=123 // pred_fallthru
        _
    $region124: #{forward.1} parent=5 // pred_fallthru
      _
  $region6: #{forward.1} parent=0 // loop_footer
    %s34 = sadd.s32 1, %s30
  $region7: #{forward.1} parent=0 // loop_footer_branch
    %29 = sbr.rel target = $region3
  $region8: #{forward.1} parent=0 // loop_exit
    _

</llo_original>
